<compile_context>
chip_gen: v6e
topology: v6e:2x2x1
jax: 0.10.0
libtpu: 0.0.40
codegen_flags: <defaults>
</compile_context>

<pallas_src>
import math

import jax
import jax.numpy as jnp
from jax import lax
from jax.experimental import pallas as pl
from jax.experimental.pallas import tpu as pltpu

# ----- model hyper-parameters (small, consistent with the module) -----
VOCAB_SIZE = 50
EMBEDDING_DIM = 32
HIDDEN_DIM = 32            # BiLSTM hidden (per-direction = 16)
LABEL_SIZE = 8
DROPOUT_P = 0.1            # unused at inference (identity)
B, T = 2, 8                # batch, sequence length
HD = HIDDEN_DIM // 2       # per-direction hidden size


# ======================================================================
# Fused kernel: embedding + 2-layer BiLSTM + classifier + CRF Viterbi
# ======================================================================
def ner_fused_kernel(ids_ref, tw0_ref, whh0_ref, b0_ref, wih1_ref, whh1_ref,
                     b1_ref, wc_ref, bc_ref, start_ref, end_ref, trans_t_ref,
                     em_ref, tags_ref,
                     out0_ref, out1_ref, gx_ref, hist_ref):
    # ids_ref:     [T*B, 1] int32      time-major flattened token ids (row = t*B + b)
    # tw0_ref:     [V, 8*HD]           embedding table @ combined layer-0 input weight
    # whh0_ref:    [2*HD, 8*HD]        block-diagonal combined recurrent weight, layer 0
    # b0_ref:      [1, 8*HD]           combined (b_ih + b_hh), layer 0
    # wih1_ref:    [2*HD, 8*HD]        combined layer-1 input weight
    # whh1_ref:    [2*HD, 8*HD]
    # b1_ref:      [1, 8*HD]
    # wc_ref:      [2*HD, L]           classifier weight (pre-transposed)
    # bc_ref:      [1, L]
    # start_ref:   [1, L]              CRF start transitions
    # end_ref:     [1, L]              CRF end transitions
    # trans_t_ref: [L, L]              CRF transitions TRANSPOSED: trans_t[j, i] = trans[i, j]
    # em_ref:      [T*B, L]            output emissions (time-major flattened)
    # tags_ref:    [T, B, 1] int32     output best tags (time-major)
    # scratch: out0/out1 [T*B, 2*HD], gx [T*B, 8*HD], hist [T, B, L] int32
    TB = ids_ref.shape[0]
    Bn = tags_ref.shape[1]
    Tn = TB // Bn
    G = tw0_ref.shape[1]          # 8*HD = 128 (lane-dense)
    H2 = G // 4                   # 2*HD
    Hd = H2 // 2                  # per-direction hidden
    L = em_ref.shape[1]
    V = tw0_ref.shape[0]
    f32 = jnp.float32

    # ---- embedding lookup fused with the layer-0 input projection: ONE matmul ----
    ids = ids_ref[...]                                           # (T*B, 1) int32
    iota_v = lax.broadcasted_iota(jnp.int32, (TB, V), 1)
    onehot = (iota_v == ids).astype(f32)                         # (T*B, V)
    gx_ref[...] = jnp.dot(onehot, tw0_ref[...],
                          preferred_element_type=f32)            # (T*B, 8*HD)

    # lane masks for the combined-gate layout, hoisted out of the recurrence
    # lanes [q*2HD, q*2HD+HD) = gate q forward dir, [q*2HD+HD, (q+1)*2HD) = backward dir
    lane = lax.broadcasted_iota(jnp.int32, (Bn, G), 1)
    fwd_mask = (lane % H2) < Hd                                  # forward-direction lanes
    g_mask = (lane >= 2 * H2) & (lane < 3 * H2)                  # tanh ("g") gate lanes

    def run_layer(whh, bias, out_buf):
        # Both directions interleaved in one time loop; h/c carried in registers.
        h = jnp.zeros((Bn, H2), f32)                             # [h_fwd | h_bwd]
        c = jnp.zeros((Bn, H2), f32)
        for step in range(Tn):                                   # fully unrolled (Tn=8)
            rf = step * Bn                                       # forward dir time index
            rb = (Tn - 1 - step) * Bn                            # backward dir time index
            gf = gx_ref[rf:rf + Bn, :]                           # (B, 8*HD)
            gb = gx_ref[rb:rb + Bn, :]
            gxa = jnp.where(fwd_mask, gf, gb)                    # align per-direction inputs
            gates = gxa + jnp.dot(h, whh, preferred_element_type=f32) + bias
            sg = jax.nn.sigmoid(gates)                           # one full-width EUP sweep
            th = jnp.tanh(gates)                                 # one full-width EUP sweep
            act = jnp.where(g_mask, th, sg)
            i_g = act[:, 0 * H2:1 * H2]                          # [i_fwd | i_bwd]
            f_g = act[:, 1 * H2:2 * H2]
            g_g = act[:, 2 * H2:3 * H2]
            o_g = act[:, 3 * H2:4 * H2]
            c = f_g * c + i_g * g_g
            h = o_g * jnp.tanh(c)
            # forward output at time `step`, backward output at time Tn-1-step
            out_buf[rf:rf + Bn, 0:Hd] = h[:, 0:Hd]
            out_buf[rb:rb + Bn, Hd:H2] = h[:, Hd:H2]

    # ---- layer 0 ----
    run_layer(whh0_ref[...], b0_ref[...], out0_ref)
    # ---- layer-1 input projection: ONE lane-dense matmul ----
    gx_ref[...] = jnp.dot(out0_ref[...], wih1_ref[...], preferred_element_type=f32)
    # ---- layer 1 ----
    run_layer(whh1_ref[...], b1_ref[...], out1_ref)

    # ---- dropout == identity (eval); classifier: ONE matmul ----
    em = jnp.dot(out1_ref[...], wc_ref[...], preferred_element_type=f32) + bc_ref[...]
    em_ref[...] = em                                             # (T*B, L)

    # ---- CRF Viterbi decode (mask = all ones), torchcrf semantics ----
    trans_t = trans_t_ref[...]                                   # trans_t[j, i] = trans[i, j]
    iota_prev = lax.broadcasted_iota(jnp.int32, (Bn, L, L), 2)
    iota_l = lax.broadcasted_iota(jnp.int32, (Bn, L), 1)

    score = start_ref[...] + em[0:Bn, :]                         # (B, L)
    for t in range(1, Tn):                                       # forward recursion
        e_t = em[t * Bn:(t + 1) * Bn, :]
        # a[b, j, i] = score[b, i] + trans[i, j]
        a = score[:, None, :] + trans_t[None, :, :]
        max_val = jnp.max(a, axis=-1)                            # (B, L)
        idx = jnp.min(jnp.where(a == max_val[:, :, None], iota_prev, L), axis=-1)
        hist_ref[t] = idx.astype(jnp.int32)
        score = max_val + e_t

    final = score + end_ref[...]
    max_f = jnp.max(final, axis=-1, keepdims=True)
    best = jnp.min(jnp.where(final == max_f, iota_l, L),
                   axis=-1, keepdims=True).astype(jnp.int32)     # (B, 1)
    tags_ref[Tn - 1] = best
    for s in range(1, Tn):                                       # backtrack
        t = Tn - 1 - s
        hist = hist_ref[t + 1]                                   # (B, L)
        onehot_b = (iota_l == best).astype(jnp.int32)
        best = jnp.sum(hist * onehot_b, axis=-1, keepdims=True).astype(jnp.int32)
        tags_ref[t] = best


# ======================================================================
# Parameter init (deterministic, matching the module's shapes)
# ======================================================================
def init_params(key):
    ks = jax.random.split(key, 12)
    p = {}
    # nn.Embedding(VOCAB_SIZE, EMBEDDING_DIM, padding_idx=0): N(0,1), row 0 zero
    emb = jax.random.normal(ks[0], (VOCAB_SIZE, EMBEDDING_DIM), jnp.float32)
    p["embedding"] = emb.at[0].set(0.0)

    # nn.LSTM: uniform(-1/sqrt(HD), 1/sqrt(HD)); layers=2, bidirectional
    k_lstm = 1.0 / math.sqrt(HD)
    # layer0 input = EMBEDDING_DIM (=32), layer1 input = 2*HD (=32)
    p["w_ih"] = jax.random.uniform(ks[1], (2, 2, 4 * HD, EMBEDDING_DIM),
                                   jnp.float32, -k_lstm, k_lstm)
    p["w_hh"] = jax.random.uniform(ks[2], (2, 2, 4 * HD, HD),
                                   jnp.float32, -k_lstm, k_lstm)
    b_ih = jax.random.uniform(ks[3], (2, 2, 4 * HD), jnp.float32, -k_lstm, k_lstm)
    b_hh = jax.random.uniform(ks[4], (2, 2, 4 * HD), jnp.float32, -k_lstm, k_lstm)
    p["b_sum"] = b_ih + b_hh                                   # (2, 2, 4*HD)

    # nn.Linear(HIDDEN_DIM, LABEL_SIZE)
    k_cls = 1.0 / math.sqrt(HIDDEN_DIM)
    p["w_cls"] = jax.random.uniform(ks[5], (LABEL_SIZE, HIDDEN_DIM),
                                    jnp.float32, -k_cls, k_cls)
    p["b_cls"] = jax.random.uniform(ks[6], (LABEL_SIZE,), jnp.float32, -k_cls, k_cls)

    # CRF(LABEL_SIZE): uniform(-0.1, 0.1)
    p["crf_start"] = jax.random.uniform(ks[7], (LABEL_SIZE,), jnp.float32, -0.1, 0.1)
    p["crf_end"] = jax.random.uniform(ks[8], (LABEL_SIZE,), jnp.float32, -0.1, 0.1)
    p["crf_trans"] = jax.random.uniform(ks[9], (LABEL_SIZE, LABEL_SIZE),
                                        jnp.float32, -0.1, 0.1)
    return p


# ======================================================================
# One-time weight re-layout into the fused, lane-dense kernel format
# ======================================================================
def prepare_params(p):
    """Re-pack PyTorch-layout weights into the combined-direction kernel layout.

    Combined gate lanes (width 8*HD = 128):
      [i_fwd | i_bwd | f_fwd | f_bwd | g_fwd | g_bwd | o_fwd | o_bwd], each HD wide.
    Hidden/cell state layout: (B, 2*HD) = [fwd | bwd].
    """
    def combine_ih(w_f, w_b):              # each (4*HD, In) torch layout
        wf, wb = w_f.T, w_b.T              # (In, 4*HD), gate order i,f,g,o
        cols = []
        for q in range(4):
            cols.append(wf[:, q * HD:(q + 1) * HD])
            cols.append(wb[:, q * HD:(q + 1) * HD])
        return jnp.concatenate(cols, axis=1)            # (In, 8*HD)

    def combine_hh(w_f, w_b):              # each (4*HD, HD)
        wf, wb = w_f.T, w_b.T              # (HD, 4*HD)
        z = jnp.zeros((HD, HD), jnp.float32)
        cols = []
        for q in range(4):
            cols.append(jnp.concatenate([wf[:, q * HD:(q + 1) * HD], z], axis=0))
            cols.append(jnp.concatenate([z, wb[:, q * HD:(q + 1) * HD]], axis=0))
        return jnp.concatenate(cols, axis=1)            # (2*HD, 8*HD) block-diagonal

    def combine_b(b_f, b_b):               # each (4*HD,)
        segs = []
        for q in range(4):
            segs.append(b_f[q * HD:(q + 1) * HD])
            segs.append(b_b[q * HD:(q + 1) * HD])
        return jnp.concatenate(segs)[None, :]           # (1, 8*HD)

    wih0 = combine_ih(p["w_ih"][0, 0], p["w_ih"][0, 1])          # (E, 128)
    prep = {
        # embedding table pre-multiplied with the layer-0 input weights:
        # one-hot(ids) @ tw0 == embed(ids) @ W_ih0 for both directions at once.
        "tw0": jnp.dot(p["embedding"], wih0),                    # (V, 128)
        "whh0": combine_hh(p["w_hh"][0, 0], p["w_hh"][0, 1]),
        "b0": combine_b(p["b_sum"][0, 0], p["b_sum"][0, 1]),
        "wih1": combine_ih(p["w_ih"][1, 0], p["w_ih"][1, 1]),
        "whh1": combine_hh(p["w_hh"][1, 0], p["w_hh"][1, 1]),
        "b1": combine_b(p["b_sum"][1, 0], p["b_sum"][1, 1]),
        "wc": p["w_cls"].T,                                      # (2*HD, L)
        "bc": p["b_cls"][None, :],                               # (1, L)
        "start": p["crf_start"][None, :],                        # (1, L)
        "end": p["crf_end"][None, :],                            # (1, L)
        "trans_t": p["crf_trans"].T,                             # (L, L) transposed
    }
    return prep


# ======================================================================
# Wrapper: one fused pallas_call (whole-array VMEM, no grid)
# ======================================================================
def ner_bilstm_crf_forward(input_ids, prep):
    """input_ids: [B, T] int32. Returns (tags [B, T] int32, emissions [B, T, L])."""
    Bn, Tn = input_ids.shape

    # tiny time-major flattening of the int ids (row = t*B + b)
    ids_col = jnp.transpose(input_ids).reshape(Tn * Bn, 1).astype(jnp.int32)

    vmem = pl.BlockSpec(memory_space=pltpu.MemorySpace.VMEM)

    em_flat, tags_tm = pl.pallas_call(
        ner_fused_kernel,
        out_shape=(jax.ShapeDtypeStruct((Tn * Bn, LABEL_SIZE), jnp.float32),
                   jax.ShapeDtypeStruct((Tn, Bn, 1), jnp.int32)),
        in_specs=[vmem] * 12,
        out_specs=(vmem, vmem),
        scratch_shapes=[
            pltpu.VMEM((Tn * Bn, HIDDEN_DIM), jnp.float32),      # layer-0 output slab
            pltpu.VMEM((Tn * Bn, HIDDEN_DIM), jnp.float32),      # layer-1 output slab
            pltpu.VMEM((Tn * Bn, 4 * HIDDEN_DIM), jnp.float32),  # hoisted input-gate projections
            pltpu.VMEM((Tn, Bn, LABEL_SIZE), jnp.int32),         # Viterbi backpointers
        ],
    )(ids_col, prep["tw0"], prep["whh0"], prep["b0"],
      prep["wih1"], prep["whh1"], prep["b1"],
      prep["wc"], prep["bc"], prep["start"], prep["end"], prep["trans_t"])

    tags = jnp.transpose(tags_tm[..., 0], (1, 0))                       # [B, T]
    emissions = jnp.transpose(em_flat.reshape(Tn, Bn, LABEL_SIZE),
                              (1, 0, 2))                                # [B, T, L]
    return tags, emissions


# TODO(synk): training branch (compute_loss=True, CRF negative log-likelihood)
# is not implemented; only the decode/inference path is covered.

if __name__ == "__main__":
    key = jax.random.PRNGKey(0)
    k_param, k_ids = jax.random.split(key)
    params = init_params(k_param)
    prep = prepare_params(params)
    input_ids = jax.random.randint(k_ids, (B, T), 0, VOCAB_SIZE, dtype=jnp.int32)

    fwd = jax.jit(ner_bilstm_crf_forward)
    tags, emissions = fwd(input_ids, prep)
    tags = jax.block_until_ready(tags)
    emissions = jax.block_until_ready(emissions)

    assert tags.shape == (B, T) and tags.dtype == jnp.int32
    assert emissions.shape == (B, T, LABEL_SIZE)
    assert bool(jnp.all((tags >= 0) & (tags < LABEL_SIZE)))
    assert bool(jnp.all(jnp.isfinite(emissions)))
    print("KERNEL_OK")
</pallas_src>

<mosaic_0001>
module attributes {stable_mosaic.version = 11 : i64} {
  func.func @ner_fused_kernel(%arg0: memref<16x1xi32, #tpu.memory_space<vmem>>, %arg1: memref<50x128xf32, #tpu.memory_space<vmem>>, %arg2: memref<32x128xf32, #tpu.memory_space<vmem>>, %arg3: memref<1x128xf32, #tpu.memory_space<vmem>>, %arg4: memref<32x128xf32, #tpu.memory_space<vmem>>, %arg5: memref<32x128xf32, #tpu.memory_space<vmem>>, %arg6: memref<1x128xf32, #tpu.memory_space<vmem>>, %arg7: memref<32x8xf32, #tpu.memory_space<vmem>>, %arg8: memref<1x8xf32, #tpu.memory_space<vmem>>, %arg9: memref<1x8xf32, #tpu.memory_space<vmem>>, %arg10: memref<1x8xf32, #tpu.memory_space<vmem>>, %arg11: memref<8x8xf32, #tpu.memory_space<vmem>>, %arg12: memref<16x8xf32, #tpu.memory_space<vmem>>, %arg13: memref<8x2x1xi32, #tpu.memory_space<vmem>>, %arg14: memref<16x32xf32, #tpu.memory_space<vmem>>, %arg15: memref<16x32xf32, #tpu.memory_space<vmem>>, %arg16: memref<16x128xf32, #tpu.memory_space<vmem>>, %arg17: memref<8x2x8xi32, #tpu.memory_space<vmem>>) attributes {dimension_semantics = [], scalar_prefetch = 0 : i64, scratch_operands = 4 : i64, tpu.core_type = #tpu.core_type<tc>} {
    %c0 = arith.constant 0 : index
    %c0_0 = arith.constant 0 : index
    %0 = vector.load %arg0[%c0, %c0_0] : memref<16x1xi32, #tpu.memory_space<vmem>>, vector<16x1xi32>
    %1 = tpu.iota {dimensions = array<i32: 1>} : vector<16x50xi32>
    %2 = vector.broadcast %0 : vector<16x1xi32> to vector<16x50xi32>
    %3 = arith.cmpi eq, %1, %2 : vector<16x50xi32>
    %4 = arith.extui %3 : vector<16x50xi1> to vector<16x50xi32>
    %5 = arith.sitofp %4 : vector<16x50xi32> to vector<16x50xf32>
    %c0_1 = arith.constant 0 : index
    %c0_2 = arith.constant 0 : index
    %6 = vector.load %arg1[%c0_1, %c0_2] : memref<50x128xf32, #tpu.memory_space<vmem>>, vector<50x128xf32>
    %cst = arith.constant dense<0.000000e+00> : vector<16x128xf32>
    %7 = tpu.matmul %5, %6, %cst {dimension_numbers = #tpu.dot_dimension_numbers<[1], [0], [0], [1], [0, 0, 1, 1], [], []>} : vector<16x50xf32>, vector<50x128xf32>, vector<16x128xf32> -> vector<16x128xf32>
    %c0_3 = arith.constant 0 : index
    %c0_4 = arith.constant 0 : index
    %8 = vector.load %arg16[%c0_3, %c0_4] : memref<16x128xf32, #tpu.memory_space<vmem>>, vector<16x128xf32>
    tpu.vector_store %arg16[%c0_3, %c0_4], %7 {strides = array<i32>} : memref<16x128xf32, #tpu.memory_space<vmem>>, vector<16x128xf32>,
    %9 = tpu.iota {dimensions = array<i32: 1>} : vector<2x128xi32>
    %c32_i32 = arith.constant 32 : i32
    %c0_i32 = arith.constant 0 : i32
    %10 = arith.cmpi eq, %c32_i32, %c0_i32 : i32
    %c1_i32 = arith.constant 1 : i32
    %11 = arith.select %10, %c1_i32, %c32_i32 : i32
    %12 = vector.broadcast %11 : i32 to vector<2x128xi32>
    %13 = arith.remsi %9, %12 : vector<2x128xi32>
    %c0_i32_5 = arith.constant 0 : i32
    %14 = vector.broadcast %c0_i32_5 : i32 to vector<2x128xi32>
    %15 = arith.cmpi ne, %13, %14 : vector<2x128xi32>
    %c0_i32_6 = arith.constant 0 : i32
    %16 = vector.broadcast %c0_i32_6 : i32 to vector<2x128xi32>
    %17 = arith.cmpi slt, %13, %16 : vector<2x128xi32>
    %c0_i32_7 = arith.constant 0 : i32
    %18 = arith.cmpi slt, %11, %c0_i32_7 : i32
    %19 = vector.broadcast %18 : i1 to vector<2x128xi1>
    %20 = vector.broadcast %19 : vector<2x128xi1> to vector<2x128xi1>
    %21 = arith.xori %17, %20 : vector<2x128xi1>
    %22 = arith.andi %21, %15 : vector<2x128xi1>
    %23 = vector.broadcast %11 : i32 to vector<2x128xi32>
    %24 = arith.addi %13, %23 : vector<2x128xi32>
    %25 = arith.select %22, %24, %13 : vector<2x128xi1>, vector<2x128xi32>
    %c16_i32 = arith.constant 16 : i32
    %26 = vector.broadcast %c16_i32 : i32 to vector<2x128xi32>
    %27 = arith.cmpi slt, %25, %26 : vector<2x128xi32>
    %c64_i32 = arith.constant 64 : i32
    %28 = vector.broadcast %c64_i32 : i32 to vector<2x128xi32>
    %29 = arith.cmpi sge, %9, %28 : vector<2x128xi32>
    %c96_i32 = arith.constant 96 : i32
    %30 = vector.broadcast %c96_i32 : i32 to vector<2x128xi32>
    %31 = arith.cmpi slt, %9, %30 : vector<2x128xi32>
    %32 = arith.andi %29, %31 : vector<2x128xi1>
    %c0_8 = arith.constant 0 : index
    %c0_9 = arith.constant 0 : index
    %33 = vector.load %arg2[%c0_8, %c0_9] : memref<32x128xf32, #tpu.memory_space<vmem>>, vector<32x128xf32>
    %c0_10 = arith.constant 0 : index
    %c0_11 = arith.constant 0 : index
    %34 = vector.load %arg3[%c0_10, %c0_11] : memref<1x128xf32, #tpu.memory_space<vmem>>, vector<1x128xf32>
    %cst_12 = arith.constant 0.000000e+00 : f32
    %35 = vector.broadcast %cst_12 : f32 to vector<2x32xf32>
    %cst_13 = arith.constant 0.000000e+00 : f32
    %36 = vector.broadcast %cst_13 : f32 to vector<2x32xf32>
    %c0_14 = arith.constant 0 : index
    %c0_15 = arith.constant 0 : index
    %37 = vector.load %arg16[%c0_14, %c0_15] : memref<16x128xf32, #tpu.memory_space<vmem>>, vector<2x128xf32>
    %c14 = arith.constant 14 : index
    %c0_16 = arith.constant 0 : index
    %38 = vector.load %arg16[%c14, %c0_16] : memref<16x128xf32, #tpu.memory_space<vmem>>, vector<2x128xf32>
    %39 = arith.select %27, %37, %38 : vector<2x128xi1>, vector<2x128xf32>
    %cst_17 = arith.constant dense<0.000000e+00> : vector<2x128xf32>
    %40 = tpu.matmul %35, %33, %cst_17 {dimension_numbers = #tpu.dot_dimension_numbers<[1], [0], [0], [1], [0, 0, 1, 1], [], []>} : vector<2x32xf32>, vector<32x128xf32>, vector<2x128xf32> -> vector<2x128xf32>
    %41 = arith.addf %39, %40 : vector<2x128xf32>
    %42 = vector.broadcast %34 : vector<1x128xf32> to vector<2x128xf32>
    %43 = arith.addf %41, %42 : vector<2x128xf32>
    %44 = arith.negf %43 : vector<2x128xf32>
    %45 = math.exp %44 : vector<2x128xf32>
    %cst_18 = arith.constant 1.000000e+00 : f32
    %46 = vector.broadcast %cst_18 : f32 to vector<2x128xf32>
    %47 = arith.addf %46, %45 : vector<2x128xf32>
    %48 = arith.divf %46, %47 : vector<2x128xf32>
    %49 = math.tanh %43 : vector<2x128xf32>
    %50 = arith.select %32, %49, %48 : vector<2x128xi1>, vector<2x128xf32>
    %51 = vector.extract_strided_slice %50 {offsets = [0, 0], sizes = [2, 32], strides = [1, 1]} : vector<2x128xf32> to vector<2x32xf32>
    %52 = vector.extract_strided_slice %50 {offsets = [0, 32], sizes = [2, 32], strides = [1, 1]} : vector<2x128xf32> to vector<2x32xf32>
    %53 = vector.extract_strided_slice %50 {offsets = [0, 64], sizes = [2, 32], strides = [1, 1]} : vector<2x128xf32> to vector<2x32xf32>
    %54 = vector.extract_strided_slice %50 {offsets = [0, 96], sizes = [2, 32], strides = [1, 1]} : vector<2x128xf32> to vector<2x32xf32>
    %55 = arith.mulf %52, %36 : vector<2x32xf32>
    %56 = arith.mulf %51, %53 : vector<2x32xf32>
    %57 = arith.addf %55, %56 : vector<2x32xf32>
    %58 = math.tanh %57 : vector<2x32xf32>
    %59 = arith.mulf %54, %58 : vector<2x32xf32>
    %60 = vector.extract_strided_slice %59 {offsets = [0, 0], sizes = [2, 16], strides = [1, 1]} : vector<2x32xf32> to vector<2x16xf32>
    %c0_19 = arith.constant 0 : index
    %c0_20 = arith.constant 0 : index
    %61 = vector.load %arg14[%c0_19, %c0_20] : memref<16x32xf32, #tpu.memory_space<vmem>>, vector<2x16xf32>
    tpu.vector_store %arg14[%c0_19, %c0_20], %60 {strides = array<i32>} : memref<16x32xf32, #tpu.memory_space<vmem>>, vector<2x16xf32>,
    %62 = vector.extract_strided_slice %59 {offsets = [0, 16], sizes = [2, 16], strides = [1, 1]} : vector<2x32xf32> to vector<2x16xf32>
    %c14_21 = arith.constant 14 : index
    %c16 = arith.constant 16 : index
    %63 = vector.load %arg14[%c14_21, %c16] : memref<16x32xf32, #tpu.memory_space<vmem>>, vector<2x16xf32>
    tpu.vector_store %arg14[%c14_21, %c16], %62 {strides = array<i32>} : memref<16x32xf32, #tpu.memory_space<vmem>>, vector<2x16xf32>,
    %c2 = arith.constant 2 : index
    %c0_22 = arith.constant 0 : index
    %64 = vector.load %arg16[%c2, %c0_22] : memref<16x128xf32, #tpu.memory_space<vmem>>, vector<2x128xf32>
    %c12 = arith.constant 12 : index
    %c0_23 = arith.constant 0 : index
    %65 = vector.load %arg16[%c12, %c0_23] : memref<16x128xf32, #tpu.memory_space<vmem>>, vector<2x128xf32>
    %66 = arith.select %27, %64, %65 : vector<2x128xi1>, vector<2x128xf32>
    %cst_24 = arith.constant dense<0.000000e+00> : vector<2x128xf32>
    %67 = tpu.matmul %59, %33, %cst_24 {dimension_numbers = #tpu.dot_dimension_numbers<[1], [0], [0], [1], [0, 0, 1, 1], [], []>} : vector<2x32xf32>, vector<32x128xf32>, vector<2x128xf32> -> vector<2x128xf32>
    %68 = arith.addf %66, %67 : vector<2x128xf32>
    %69 = vector.broadcast %34 : vector<1x128xf32> to vector<2x128xf32>
    %70 = arith.addf %68, %69 : vector<2x128xf32>
    %71 = arith.negf %70 : vector<2x128xf32>
    %72 = math.exp %71 : vector<2x128xf32>
    %cst_25 = arith.constant 1.000000e+00 : f32
    %73 = vector.broadcast %cst_25 : f32 to vector<2x128xf32>
    %74 = arith.addf %73, %72 : vector<2x128xf32>
    %75 = arith.divf %73, %74 : vector<2x128xf32>
    %76 = math.tanh %70 : vector<2x128xf32>
    %77 = arith.select %32, %76, %75 : vector<2x128xi1>, vector<2x128xf32>
    %78 = vector.extract_strided_slice %77 {offsets = [0, 0], sizes = [2, 32], strides = [1, 1]} : vector<2x128xf32> to vector<2x32xf32>
    %79 = vector.extract_strided_slice %77 {offsets = [0, 32], sizes = [2, 32], strides = [1, 1]} : vector<2x128xf32> to vector<2x32xf32>
    %80 = vector.extract_strided_slice %77 {offsets = [0, 64], sizes = [2, 32], strides = [1, 1]} : vector<2x128xf32> to vector<2x32xf32>
    %81 = vector.extract_strided_slice %77 {offsets = [0, 96], sizes = [2, 32], strides = [1, 1]} : vector<2x128xf32> to vector<2x32xf32>
    %82 = arith.mulf %79, %57 : vector<2x32xf32>
    %83 = arith.mulf %78, %80 : vector<2x32xf32>
    %84 = arith.addf %82, %83 : vector<2x32xf32>
    %85 = math.tanh %84 : vector<2x32xf32>
    %86 = arith.mulf %81, %85 : vector<2x32xf32>
    %87 = vector.extract_strided_slice %86 {offsets = [0, 0], sizes = [2, 16], strides = [1, 1]} : vector<2x32xf32> to vector<2x16xf32>
    %c2_26 = arith.constant 2 : index
    %c0_27 = arith.constant 0 : index
    %88 = vector.load %arg14[%c2_26, %c0_27] : memref<16x32xf32, #tpu.memory_space<vmem>>, vector<2x16xf32>
    tpu.vector_store %arg14[%c2_26, %c0_27], %87 {strides = array<i32>} : memref<16x32xf32, #tpu.memory_space<vmem>>, vector<2x16xf32>,
    %89 = vector.extract_strided_slice %86 {offsets = [0, 16], sizes = [2, 16], strides = [1, 1]} : vector<2x32xf32> to vector<2x16xf32>
    %c12_28 = arith.constant 12 : index
    %c16_29 = arith.constant 16 : index
    %90 = vector.load %arg14[%c12_28, %c16_29] : memref<16x32xf32, #tpu.memory_space<vmem>>, vector<2x16xf32>
    tpu.vector_store %arg14[%c12_28, %c16_29], %89 {strides = array<i32>} : memref<16x32xf32, #tpu.memory_space<vmem>>, vector<2x16xf32>,
    %c4 = arith.constant 4 : index
    %c0_30 = arith.constant 0 : index
    %91 = vector.load %arg16[%c4, %c0_30] : memref<16x128xf32, #tpu.memory_space<vmem>>, vector<2x128xf32>
    %c10 = arith.constant 10 : index
    %c0_31 = arith.constant 0 : index
    %92 = vector.load %arg16[%c10, %c0_31] : memref<16x128xf32, #tpu.memory_space<vmem>>, vector<2x128xf32>
    %93 = arith.select %27, %91, %92 : vector<2x128xi1>, vector<2x128xf32>
    %cst_32 = arith.constant dense<0.000000e+00> : vector<2x128xf32>
    %94 = tpu.matmul %86, %33, %cst_32 {dimension_numbers = #tpu.dot_dimension_numbers<[1], [0], [0], [1], [0, 0, 1, 1], [], []>} : vector<2x32xf32>, vector<32x128xf32>, vector<2x128xf32> -> vector<2x128xf32>
    %95 = arith.addf %93, %94 : vector<2x128xf32>
    %96 = vector.broadcast %34 : vector<1x128xf32> to vector<2x128xf32>
    %97 = arith.addf %95, %96 : vector<2x128xf32>
    %98 = arith.negf %97 : vector<2x128xf32>
    %99 = math.exp %98 : vector<2x128xf32>
    %cst_33 = arith.constant 1.000000e+00 : f32
    %100 = vector.broadcast %cst_33 : f32 to vector<2x128xf32>
    %101 = arith.addf %100, %99 : vector<2x128xf32>
    %102 = arith.divf %100, %101 : vector<2x128xf32>
    %103 = math.tanh %97 : vector<2x128xf32>
    %104 = arith.select %32, %103, %102 : vector<2x128xi1>, vector<2x128xf32>
    %105 = vector.extract_strided_slice %104 {offsets = [0, 0], sizes = [2, 32], strides = [1, 1]} : vector<2x128xf32> to vector<2x32xf32>
    %106 = vector.extract_strided_slice %104 {offsets = [0, 32], sizes = [2, 32], strides = [1, 1]} : vector<2x128xf32> to vector<2x32xf32>
    %107 = vector.extract_strided_slice %104 {offsets = [0, 64], sizes = [2, 32], strides = [1, 1]} : vector<2x128xf32> to vector<2x32xf32>
    %108 = vector.extract_strided_slice %104 {offsets = [0, 96], sizes = [2, 32], strides = [1, 1]} : vector<2x128xf32> to vector<2x32xf32>
    %109 = arith.mulf %106, %84 : vector<2x32xf32>
    %110 = arith.mulf %105, %107 : vector<2x32xf32>
    %111 = arith.addf %109, %110 : vector<2x32xf32>
    %112 = math.tanh %111 : vector<2x32xf32>
    %113 = arith.mulf %108, %112 : vector<2x32xf32>
    %114 = vector.extract_strided_slice %113 {offsets = [0, 0], sizes = [2, 16], strides = [1, 1]} : vector<2x32xf32> to vector<2x16xf32>
    %c4_34 = arith.constant 4 : index
    %c0_35 = arith.constant 0 : index
    %115 = vector.load %arg14[%c4_34, %c0_35] : memref<16x32xf32, #tpu.memory_space<vmem>>, vector<2x16xf32>
    tpu.vector_store %arg14[%c4_34, %c0_35], %114 {strides = array<i32>} : memref<16x32xf32, #tpu.memory_space<vmem>>, vector<2x16xf32>,
    %116 = vector.extract_strided_slice %113 {offsets = [0, 16], sizes = [2, 16], strides = [1, 1]} : vector<2x32xf32> to vector<2x16xf32>
    %c10_36 = arith.constant 10 : index
    %c16_37 = arith.constant 16 : index
    %117 = vector.load %arg14[%c10_36, %c16_37] : memref<16x32xf32, #tpu.memory_space<vmem>>, vector<2x16xf32>
    tpu.vector_store %arg14[%c10_36, %c16_37], %116 {strides = array<i32>} : memref<16x32xf32, #tpu.memory_space<vmem>>, vector<2x16xf32>,
    %c6 = arith.constant 6 : index
    %c0_38 = arith.constant 0 : index
    %118 = vector.load %arg16[%c6, %c0_38] : memref<16x128xf32, #tpu.memory_space<vmem>>, vector<2x128xf32>
    %c8 = arith.constant 8 : index
    %c0_39 = arith.constant 0 : index
    %119 = vector.load %arg16[%c8, %c0_39] : memref<16x128xf32, #tpu.memory_space<vmem>>, vector<2x128xf32>
    %120 = arith.select %27, %118, %119 : vector<2x128xi1>, vector<2x128xf32>
    %cst_40 = arith.constant dense<0.000000e+00> : vector<2x128xf32>
    %121 = tpu.matmul %113, %33, %cst_40 {dimension_numbers = #tpu.dot_dimension_numbers<[1], [0], [0], [1], [0, 0, 1, 1], [], []>} : vector<2x32xf32>, vector<32x128xf32>, vector<2x128xf32> -> vector<2x128xf32>
    %122 = arith.addf %120, %121 : vector<2x128xf32>
    %123 = vector.broadcast %34 : vector<1x128xf32> to vector<2x128xf32>
    %124 = arith.addf %122, %123 : vector<2x128xf32>
    %125 = arith.negf %124 : vector<2x128xf32>
    %126 = math.exp %125 : vector<2x128xf32>
    %cst_41 = arith.constant 1.000000e+00 : f32
    %127 = vector.broadcast %cst_41 : f32 to vector<2x128xf32>
    %128 = arith.addf %127, %126 : vector<2x128xf32>
    %129 = arith.divf %127, %128 : vector<2x128xf32>
    %130 = math.tanh %124 : vector<2x128xf32>
    %131 = arith.select %32, %130, %129 : vector<2x128xi1>, vector<2x128xf32>
    %132 = vector.extract_strided_slice %131 {offsets = [0, 0], sizes = [2, 32], strides = [1, 1]} : vector<2x128xf32> to vector<2x32xf32>
    %133 = vector.extract_strided_slice %131 {offsets = [0, 32], sizes = [2, 32], strides = [1, 1]} : vector<2x128xf32> to vector<2x32xf32>
    %134 = vector.extract_strided_slice %131 {offsets = [0, 64], sizes = [2, 32], strides = [1, 1]} : vector<2x128xf32> to vector<2x32xf32>
    %135 = vector.extract_strided_slice %131 {offsets = [0, 96], sizes = [2, 32], strides = [1, 1]} : vector<2x128xf32> to vector<2x32xf32>
    %136 = arith.mulf %133, %111 : vector<2x32xf32>
    %137 = arith.mulf %132, %134 : vector<2x32xf32>
    %138 = arith.addf %136, %137 : vector<2x32xf32>
    %139 = math.tanh %138 : vector<2x32xf32>
    %140 = arith.mulf %135, %139 : vector<2x32xf32>
    %141 = vector.extract_strided_slice %140 {offsets = [0, 0], sizes = [2, 16], strides = [1, 1]} : vector<2x32xf32> to vector<2x16xf32>
    %c6_42 = arith.constant 6 : index
    %c0_43 = arith.constant 0 : index
    %142 = vector.load %arg14[%c6_42, %c0_43] : memref<16x32xf32, #tpu.memory_space<vmem>>, vector<2x16xf32>
    tpu.vector_store %arg14[%c6_42, %c0_43], %141 {strides = array<i32>} : memref<16x32xf32, #tpu.memory_space<vmem>>, vector<2x16xf32>,
    %143 = vector.extract_strided_slice %140 {offsets = [0, 16], sizes = [2, 16], strides = [1, 1]} : vector<2x32xf32> to vector<2x16xf32>
    %c8_44 = arith.constant 8 : index
    %c16_45 = arith.constant 16 : index
    %144 = vector.load %arg14[%c8_44, %c16_45] : memref<16x32xf32, #tpu.memory_space<vmem>>, vector<2x16xf32>
    tpu.vector_store %arg14[%c8_44, %c16_45], %143 {strides = array<i32>} : memref<16x32xf32, #tpu.memory_space<vmem>>, vector<2x16xf32>,
    %c8_46 = arith.constant 8 : index
    %c0_47 = arith.constant 0 : index
    %145 = vector.load %arg16[%c8_46, %c0_47] : memref<16x128xf32, #tpu.memory_space<vmem>>, vector<2x128xf32>
    %c6_48 = arith.constant 6 : index
    %c0_49 = arith.constant 0 : index
    %146 = vector.load %arg16[%c6_48, %c0_49] : memref<16x128xf32, #tpu.memory_space<vmem>>, vector<2x128xf32>
    %147 = arith.select %27, %145, %146 : vector<2x128xi1>, vector<2x128xf32>
    %cst_50 = arith.constant dense<0.000000e+00> : vector<2x128xf32>
    %148 = tpu.matmul %140, %33, %cst_50 {dimension_numbers = #tpu.dot_dimension_numbers<[1], [0], [0], [1], [0, 0, 1, 1], [], []>} : vector<2x32xf32>, vector<32x128xf32>, vector<2x128xf32> -> vector<2x128xf32>
    %149 = arith.addf %147, %148 : vector<2x128xf32>
    %150 = vector.broadcast %34 : vector<1x128xf32> to vector<2x128xf32>
    %151 = arith.addf %149, %150 : vector<2x128xf32>
    %152 = arith.negf %151 : vector<2x128xf32>
    %153 = math.exp %152 : vector<2x128xf32>
    %cst_51 = arith.constant 1.000000e+00 : f32
    %154 = vector.broadcast %cst_51 : f32 to vector<2x128xf32>
    %155 = arith.addf %154, %153 : vector<2x128xf32>
    %156 = arith.divf %154, %155 : vector<2x128xf32>
    %157 = math.tanh %151 : vector<2x128xf32>
    %158 = arith.select %32, %157, %156 : vector<2x128xi1>, vector<2x128xf32>
    %159 = vector.extract_strided_slice %158 {offsets = [0, 0], sizes = [2, 32], strides = [1, 1]} : vector<2x128xf32> to vector<2x32xf32>
    %160 = vector.extract_strided_slice %158 {offsets = [0, 32], sizes = [2, 32], strides = [1, 1]} : vector<2x128xf32> to vector<2x32xf32>
    %161 = vector.extract_strided_slice %158 {offsets = [0, 64], sizes = [2, 32], strides = [1, 1]} : vector<2x128xf32> to vector<2x32xf32>
    %162 = vector.extract_strided_slice %158 {offsets = [0, 96], sizes = [2, 32], strides = [1, 1]} : vector<2x128xf32> to vector<2x32xf32>
    %163 = arith.mulf %160, %138 : vector<2x32xf32>
    %164 = arith.mulf %159, %161 : vector<2x32xf32>
    %165 = arith.addf %163, %164 : vector<2x32xf32>
    %166 = math.tanh %165 : vector<2x32xf32>
    %167 = arith.mulf %162, %166 : vector<2x32xf32>
    %168 = vector.extract_strided_slice %167 {offsets = [0, 0], sizes = [2, 16], strides = [1, 1]} : vector<2x32xf32> to vector<2x16xf32>
    %c8_52 = arith.constant 8 : index
    %c0_53 = arith.constant 0 : index
    %169 = vector.load %arg14[%c8_52, %c0_53] : memref<16x32xf32, #tpu.memory_space<vmem>>, vector<2x16xf32>
    tpu.vector_store %arg14[%c8_52, %c0_53], %168 {strides = array<i32>} : memref<16x32xf32, #tpu.memory_space<vmem>>, vector<2x16xf32>,
    %170 = vector.extract_strided_slice %167 {offsets = [0, 16], sizes = [2, 16], strides = [1, 1]} : vector<2x32xf32> to vector<2x16xf32>
    %c6_54 = arith.constant 6 : index
    %c16_55 = arith.constant 16 : index
    %171 = vector.load %arg14[%c6_54, %c16_55] : memref<16x32xf32, #tpu.memory_space<vmem>>, vector<2x16xf32>
    tpu.vector_store %arg14[%c6_54, %c16_55], %170 {strides = array<i32>} : memref<16x32xf32, #tpu.memory_space<vmem>>, vector<2x16xf32>,
    %c10_56 = arith.constant 10 : index
    %c0_57 = arith.constant 0 : index
    %172 = vector.load %arg16[%c10_56, %c0_57] : memref<16x128xf32, #tpu.memory_space<vmem>>, vector<2x128xf32>
    %c4_58 = arith.constant 4 : index
    %c0_59 = arith.constant 0 : index
    %173 = vector.load %arg16[%c4_58, %c0_59] : memref<16x128xf32, #tpu.memory_space<vmem>>, vector<2x128xf32>
    %174 = arith.select %27, %172, %173 : vector<2x128xi1>, vector<2x128xf32>
    %cst_60 = arith.constant dense<0.000000e+00> : vector<2x128xf32>
    %175 = tpu.matmul %167, %33, %cst_60 {dimension_numbers = #tpu.dot_dimension_numbers<[1], [0], [0], [1], [0, 0, 1, 1], [], []>} : vector<2x32xf32>, vector<32x128xf32>, vector<2x128xf32> -> vector<2x128xf32>
    %176 = arith.addf %174, %175 : vector<2x128xf32>
    %177 = vector.broadcast %34 : vector<1x128xf32> to vector<2x128xf32>
    %178 = arith.addf %176, %177 : vector<2x128xf32>
    %179 = arith.negf %178 : vector<2x128xf32>
    %180 = math.exp %179 : vector<2x128xf32>
    %cst_61 = arith.constant 1.000000e+00 : f32
    %181 = vector.broadcast %cst_61 : f32 to vector<2x128xf32>
    %182 = arith.addf %181, %180 : vector<2x128xf32>
    %183 = arith.divf %181, %182 : vector<2x128xf32>
    %184 = math.tanh %178 : vector<2x128xf32>
    %185 = arith.select %32, %184, %183 : vector<2x128xi1>, vector<2x128xf32>
    %186 = vector.extract_strided_slice %185 {offsets = [0, 0], sizes = [2, 32], strides = [1, 1]} : vector<2x128xf32> to vector<2x32xf32>
    %187 = vector.extract_strided_slice %185 {offsets = [0, 32], sizes = [2, 32], strides = [1, 1]} : vector<2x128xf32> to vector<2x32xf32>
    %188 = vector.extract_strided_slice %185 {offsets = [0, 64], sizes = [2, 32], strides = [1, 1]} : vector<2x128xf32> to vector<2x32xf32>
    %189 = vector.extract_strided_slice %185 {offsets = [0, 96], sizes = [2, 32], strides = [1, 1]} : vector<2x128xf32> to vector<2x32xf32>
    %190 = arith.mulf %187, %165 : vector<2x32xf32>
    %191 = arith.mulf %186, %188 : vector<2x32xf32>
    %192 = arith.addf %190, %191 : vector<2x32xf32>
    %193 = math.tanh %192 : vector<2x32xf32>
    %194 = arith.mulf %189, %193 : vector<2x32xf32>
    %195 = vector.extract_strided_slice %194 {offsets = [0, 0], sizes = [2, 16], strides = [1, 1]} : vector<2x32xf32> to vector<2x16xf32>
    %c10_62 = arith.constant 10 : index
    %c0_63 = arith.constant 0 : index
    %196 = vector.load %arg14[%c10_62, %c0_63] : memref<16x32xf32, #tpu.memory_space<vmem>>, vector<2x16xf32>
    tpu.vector_store %arg14[%c10_62, %c0_63], %195 {strides = array<i32>} : memref<16x32xf32, #tpu.memory_space<vmem>>, vector<2x16xf32>,
    %197 = vector.extract_strided_slice %194 {offsets = [0, 16], sizes = [2, 16], strides = [1, 1]} : vector<2x32xf32> to vector<2x16xf32>
    %c4_64 = arith.constant 4 : index
    %c16_65 = arith.constant 16 : index
    %198 = vector.load %arg14[%c4_64, %c16_65] : memref<16x32xf32, #tpu.memory_space<vmem>>, vector<2x16xf32>
    tpu.vector_store %arg14[%c4_64, %c16_65], %197 {strides = array<i32>} : memref<16x32xf32, #tpu.memory_space<vmem>>, vector<2x16xf32>,
    %c12_66 = arith.constant 12 : index
    %c0_67 = arith.constant 0 : index
    %199 = vector.load %arg16[%c12_66, %c0_67] : memref<16x128xf32, #tpu.memory_space<vmem>>, vector<2x128xf32>
    %c2_68 = arith.constant 2 : index
    %c0_69 = arith.constant 0 : index
    %200 = vector.load %arg16[%c2_68, %c0_69] : memref<16x128xf32, #tpu.memory_space<vmem>>, vector<2x128xf32>
    %201 = arith.select %27, %199, %200 : vector<2x128xi1>, vector<2x128xf32>
    %cst_70 = arith.constant dense<0.000000e+00> : vector<2x128xf32>
    %202 = tpu.matmul %194, %33, %cst_70 {dimension_numbers = #tpu.dot_dimension_numbers<[1], [0], [0], [1], [0, 0, 1, 1], [], []>} : vector<2x32xf32>, vector<32x128xf32>, vector<2x128xf32> -> vector<2x128xf32>
    %203 = arith.addf %201, %202 : vector<2x128xf32>
    %204 = vector.broadcast %34 : vector<1x128xf32> to vector<2x128xf32>
    %205 = arith.addf %203, %204 : vector<2x128xf32>
    %206 = arith.negf %205 : vector<2x128xf32>
    %207 = math.exp %206 : vector<2x128xf32>
    %cst_71 = arith.constant 1.000000e+00 : f32
    %208 = vector.broadcast %cst_71 : f32 to vector<2x128xf32>
    %209 = arith.addf %208, %207 : vector<2x128xf32>
    %210 = arith.divf %208, %209 : vector<2x128xf32>
    %211 = math.tanh %205 : vector<2x128xf32>
    %212 = arith.select %32, %211, %210 : vector<2x128xi1>, vector<2x128xf32>
    %213 = vector.extract_strided_slice %212 {offsets = [0, 0], sizes = [2, 32], strides = [1, 1]} : vector<2x128xf32> to vector<2x32xf32>
    %214 = vector.extract_strided_slice %212 {offsets = [0, 32], sizes = [2, 32], strides = [1, 1]} : vector<2x128xf32> to vector<2x32xf32>
    %215 = vector.extract_strided_slice %212 {offsets = [0, 64], sizes = [2, 32], strides = [1, 1]} : vector<2x128xf32> to vector<2x32xf32>
    %216 = vector.extract_strided_slice %212 {offsets = [0, 96], sizes = [2, 32], strides = [1, 1]} : vector<2x128xf32> to vector<2x32xf32>
    %217 = arith.mulf %214, %192 : vector<2x32xf32>
    %218 = arith.mulf %213, %215 : vector<2x32xf32>
    %219 = arith.addf %217, %218 : vector<2x32xf32>
    %220 = math.tanh %219 : vector<2x32xf32>
    %221 = arith.mulf %216, %220 : vector<2x32xf32>
    %222 = vector.extract_strided_slice %221 {offsets = [0, 0], sizes = [2, 16], strides = [1, 1]} : vector<2x32xf32> to vector<2x16xf32>
    %c12_72 = arith.constant 12 : index
    %c0_73 = arith.constant 0 : index
    %223 = vector.load %arg14[%c12_72, %c0_73] : memref<16x32xf32, #tpu.memory_space<vmem>>, vector<2x16xf32>
    tpu.vector_store %arg14[%c12_72, %c0_73], %222 {strides = array<i32>} : memref<16x32xf32, #tpu.memory_space<vmem>>, vector<2x16xf32>,
    %224 = vector.extract_strided_slice %221 {offsets = [0, 16], sizes = [2, 16], strides = [1, 1]} : vector<2x32xf32> to vector<2x16xf32>
    %c2_74 = arith.constant 2 : index
    %c16_75 = arith.constant 16 : index
    %225 = vector.load %arg14[%c2_74, %c16_75] : memref<16x32xf32, #tpu.memory_space<vmem>>, vector<2x16xf32>
    tpu.vector_store %arg14[%c2_74, %c16_75], %224 {strides = array<i32>} : memref<16x32xf32, #tpu.memory_space<vmem>>, vector<2x16xf32>,
    %c14_76 = arith.constant 14 : index
    %c0_77 = arith.constant 0 : index
    %226 = vector.load %arg16[%c14_76, %c0_77] : memref<16x128xf32, #tpu.memory_space<vmem>>, vector<2x128xf32>
    %c0_78 = arith.constant 0 : index
    %c0_79 = arith.constant 0 : index
    %227 = vector.load %arg16[%c0_78, %c0_79] : memref<16x128xf32, #tpu.memory_space<vmem>>, vector<2x128xf32>
    %228 = arith.select %27, %226, %227 : vector<2x128xi1>, vector<2x128xf32>
    %cst_80 = arith.constant dense<0.000000e+00> : vector<2x128xf32>
    %229 = tpu.matmul %221, %33, %cst_80 {dimension_numbers = #tpu.dot_dimension_numbers<[1], [0], [0], [1], [0, 0, 1, 1], [], []>} : vector<2x32xf32>, vector<32x128xf32>, vector<2x128xf32> -> vector<2x128xf32>
    %230 = arith.addf %228, %229 : vector<2x128xf32>
    %231 = vector.broadcast %34 : vector<1x128xf32> to vector<2x128xf32>
    %232 = arith.addf %230, %231 : vector<2x128xf32>
    %233 = arith.negf %232 : vector<2x128xf32>
    %234 = math.exp %233 : vector<2x128xf32>
    %cst_81 = arith.constant 1.000000e+00 : f32
    %235 = vector.broadcast %cst_81 : f32 to vector<2x128xf32>
    %236 = arith.addf %235, %234 : vector<2x128xf32>
    %237 = arith.divf %235, %236 : vector<2x128xf32>
    %238 = math.tanh %232 : vector<2x128xf32>
    %239 = arith.select %32, %238, %237 : vector<2x128xi1>, vector<2x128xf32>
    %240 = vector.extract_strided_slice %239 {offsets = [0, 0], sizes = [2, 32], strides = [1, 1]} : vector<2x128xf32> to vector<2x32xf32>
    %241 = vector.extract_strided_slice %239 {offsets = [0, 32], sizes = [2, 32], strides = [1, 1]} : vector<2x128xf32> to vector<2x32xf32>
    %242 = vector.extract_strided_slice %239 {offsets = [0, 64], sizes = [2, 32], strides = [1, 1]} : vector<2x128xf32> to vector<2x32xf32>
    %243 = vector.extract_strided_slice %239 {offsets = [0, 96], sizes = [2, 32], strides = [1, 1]} : vector<2x128xf32> to vector<2x32xf32>
    %244 = arith.mulf %241, %219 : vector<2x32xf32>
    %245 = arith.mulf %240, %242 : vector<2x32xf32>
    %246 = arith.addf %244, %245 : vector<2x32xf32>
    %247 = math.tanh %246 : vector<2x32xf32>
    %248 = arith.mulf %243, %247 : vector<2x32xf32>
    %249 = vector.extract_strided_slice %248 {offsets = [0, 0], sizes = [2, 16], strides = [1, 1]} : vector<2x32xf32> to vector<2x16xf32>
    %c14_82 = arith.constant 14 : index
    %c0_83 = arith.constant 0 : index
    %250 = vector.load %arg14[%c14_82, %c0_83] : memref<16x32xf32, #tpu.memory_space<vmem>>, vector<2x16xf32>
    tpu.vector_store %arg14[%c14_82, %c0_83], %249 {strides = array<i32>} : memref<16x32xf32, #tpu.memory_space<vmem>>, vector<2x16xf32>,
    %251 = vector.extract_strided_slice %248 {offsets = [0, 16], sizes = [2, 16], strides = [1, 1]} : vector<2x32xf32> to vector<2x16xf32>
    %c0_84 = arith.constant 0 : index
    %c16_85 = arith.constant 16 : index
    %252 = vector.load %arg14[%c0_84, %c16_85] : memref<16x32xf32, #tpu.memory_space<vmem>>, vector<2x16xf32>
    tpu.vector_store %arg14[%c0_84, %c16_85], %251 {strides = array<i32>} : memref<16x32xf32, #tpu.memory_space<vmem>>, vector<2x16xf32>,
    %c0_86 = arith.constant 0 : index
    %c0_87 = arith.constant 0 : index
    %253 = vector.load %arg14[%c0_86, %c0_87] : memref<16x32xf32, #tpu.memory_space<vmem>>, vector<16x32xf32>
    %c0_88 = arith.constant 0 : index
    %c0_89 = arith.constant 0 : index
    %254 = vector.load %arg4[%c0_88, %c0_89] : memref<32x128xf32, #tpu.memory_space<vmem>>, vector<32x128xf32>
    %cst_90 = arith.constant dense<0.000000e+00> : vector<16x128xf32>
    %255 = tpu.matmul %253, %254, %cst_90 {dimension_numbers = #tpu.dot_dimension_numbers<[1], [0], [0], [1], [0, 0, 1, 1], [], []>} : vector<16x32xf32>, vector<32x128xf32>, vector<16x128xf32> -> vector<16x128xf32>
    %c0_91 = arith.constant 0 : index
    %c0_92 = arith.constant 0 : index
    %256 = vector.load %arg16[%c0_91, %c0_92] : memref<16x128xf32, #tpu.memory_space<vmem>>, vector<16x128xf32>
    tpu.vector_store %arg16[%c0_91, %c0_92], %255 {strides = array<i32>} : memref<16x128xf32, #tpu.memory_space<vmem>>, vector<16x128xf32>,
    %c0_93 = arith.constant 0 : index
    %c0_94 = arith.constant 0 : index
    %257 = vector.load %arg5[%c0_93, %c0_94] : memref<32x128xf32, #tpu.memory_space<vmem>>, vector<32x128xf32>
    %c0_95 = arith.constant 0 : index
    %c0_96 = arith.constant 0 : index
    %258 = vector.load %arg6[%c0_95, %c0_96] : memref<1x128xf32, #tpu.memory_space<vmem>>, vector<1x128xf32>
    %cst_97 = arith.constant 0.000000e+00 : f32
    %259 = vector.broadcast %cst_97 : f32 to vector<2x32xf32>
    %cst_98 = arith.constant 0.000000e+00 : f32
    %260 = vector.broadcast %cst_98 : f32 to vector<2x32xf32>
    %c0_99 = arith.constant 0 : index
    %c0_100 = arith.constant 0 : index
    %261 = vector.load %arg16[%c0_99, %c0_100] : memref<16x128xf32, #tpu.memory_space<vmem>>, vector<2x128xf32>
    %c14_101 = arith.constant 14 : index
    %c0_102 = arith.constant 0 : index
    %262 = vector.load %arg16[%c14_101, %c0_102] : memref<16x128xf32, #tpu.memory_space<vmem>>, vector<2x128xf32>
    %263 = arith.select %27, %261, %262 : vector<2x128xi1>, vector<2x128xf32>
    %cst_103 = arith.constant dense<0.000000e+00> : vector<2x128xf32>
    %264 = tpu.matmul %259, %257, %cst_103 {dimension_numbers = #tpu.dot_dimension_numbers<[1], [0], [0], [1], [0, 0, 1, 1], [], []>} : vector<2x32xf32>, vector<32x128xf32>, vector<2x128xf32> -> vector<2x128xf32>
    %265 = arith.addf %263, %264 : vector<2x128xf32>
    %266 = vector.broadcast %258 : vector<1x128xf32> to vector<2x128xf32>
    %267 = arith.addf %265, %266 : vector<2x128xf32>
    %268 = arith.negf %267 : vector<2x128xf32>
    %269 = math.exp %268 : vector<2x128xf32>
    %cst_104 = arith.constant 1.000000e+00 : f32
    %270 = vector.broadcast %cst_104 : f32 to vector<2x128xf32>
    %271 = arith.addf %270, %269 : vector<2x128xf32>
    %272 = arith.divf %270, %271 : vector<2x128xf32>
    %273 = math.tanh %267 : vector<2x128xf32>
    %274 = arith.select %32, %273, %272 : vector<2x128xi1>, vector<2x128xf32>
    %275 = vector.extract_strided_slice %274 {offsets = [0, 0], sizes = [2, 32], strides = [1, 1]} : vector<2x128xf32> to vector<2x32xf32>
    %276 = vector.extract_strided_slice %274 {offsets = [0, 32], sizes = [2, 32], strides = [1, 1]} : vector<2x128xf32> to vector<2x32xf32>
    %277 = vector.extract_strided_slice %274 {offsets = [0, 64], sizes = [2, 32], strides = [1, 1]} : vector<2x128xf32> to vector<2x32xf32>
    %278 = vector.extract_strided_slice %274 {offsets = [0, 96], sizes = [2, 32], strides = [1, 1]} : vector<2x128xf32> to vector<2x32xf32>
    %279 = arith.mulf %276, %260 : vector<2x32xf32>
    %280 = arith.mulf %275, %277 : vector<2x32xf32>
    %281 = arith.addf %279, %280 : vector<2x32xf32>
    %282 = math.tanh %281 : vector<2x32xf32>
    %283 = arith.mulf %278, %282 : vector<2x32xf32>
    %284 = vector.extract_strided_slice %283 {offsets = [0, 0], sizes = [2, 16], strides = [1, 1]} : vector<2x32xf32> to vector<2x16xf32>
    %c0_105 = arith.constant 0 : index
    %c0_106 = arith.constant 0 : index
    %285 = vector.load %arg15[%c0_105, %c0_106] : memref<16x32xf32, #tpu.memory_space<vmem>>, vector<2x16xf32>
    tpu.vector_store %arg15[%c0_105, %c0_106], %284 {strides = array<i32>} : memref<16x32xf32, #tpu.memory_space<vmem>>, vector<2x16xf32>,
    %286 = vector.extract_strided_slice %283 {offsets = [0, 16], sizes = [2, 16], strides = [1, 1]} : vector<2x32xf32> to vector<2x16xf32>
    %c14_107 = arith.constant 14 : index
    %c16_108 = arith.constant 16 : index
    %287 = vector.load %arg15[%c14_107, %c16_108] : memref<16x32xf32, #tpu.memory_space<vmem>>, vector<2x16xf32>
    tpu.vector_store %arg15[%c14_107, %c16_108], %286 {strides = array<i32>} : memref<16x32xf32, #tpu.memory_space<vmem>>, vector<2x16xf32>,
    %c2_109 = arith.constant 2 : index
    %c0_110 = arith.constant 0 : index
    %288 = vector.load %arg16[%c2_109, %c0_110] : memref<16x128xf32, #tpu.memory_space<vmem>>, vector<2x128xf32>
    %c12_111 = arith.constant 12 : index
    %c0_112 = arith.constant 0 : index
    %289 = vector.load %arg16[%c12_111, %c0_112] : memref<16x128xf32, #tpu.memory_space<vmem>>, vector<2x128xf32>
    %290 = arith.select %27, %288, %289 : vector<2x128xi1>, vector<2x128xf32>
    %cst_113 = arith.constant dense<0.000000e+00> : vector<2x128xf32>
    %291 = tpu.matmul %283, %257, %cst_113 {dimension_numbers = #tpu.dot_dimension_numbers<[1], [0], [0], [1], [0, 0, 1, 1], [], []>} : vector<2x32xf32>, vector<32x128xf32>, vector<2x128xf32> -> vector<2x128xf32>
    %292 = arith.addf %290, %291 : vector<2x128xf32>
    %293 = vector.broadcast %258 : vector<1x128xf32> to vector<2x128xf32>
    %294 = arith.addf %292, %293 : vector<2x128xf32>
    %295 = arith.negf %294 : vector<2x128xf32>
    %296 = math.exp %295 : vector<2x128xf32>
    %cst_114 = arith.constant 1.000000e+00 : f32
    %297 = vector.broadcast %cst_114 : f32 to vector<2x128xf32>
    %298 = arith.addf %297, %296 : vector<2x128xf32>
    %299 = arith.divf %297, %298 : vector<2x128xf32>
    %300 = math.tanh %294 : vector<2x128xf32>
    %301 = arith.select %32, %300, %299 : vector<2x128xi1>, vector<2x128xf32>
    %302 = vector.extract_strided_slice %301 {offsets = [0, 0], sizes = [2, 32], strides = [1, 1]} : vector<2x128xf32> to vector<2x32xf32>
    %303 = vector.extract_strided_slice %301 {offsets = [0, 32], sizes = [2, 32], strides = [1, 1]} : vector<2x128xf32> to vector<2x32xf32>
    %304 = vector.extract_strided_slice %301 {offsets = [0, 64], sizes = [2, 32], strides = [1, 1]} : vector<2x128xf32> to vector<2x32xf32>
    %305 = vector.extract_strided_slice %301 {offsets = [0, 96], sizes = [2, 32], strides = [1, 1]} : vector<2x128xf32> to vector<2x32xf32>
    %306 = arith.mulf %303, %281 : vector<2x32xf32>
    %307 = arith.mulf %302, %304 : vector<2x32xf32>
    %308 = arith.addf %306, %307 : vector<2x32xf32>
    %309 = math.tanh %308 : vector<2x32xf32>
    %310 = arith.mulf %305, %309 : vector<2x32xf32>
    %311 = vector.extract_strided_slice %310 {offsets = [0, 0], sizes = [2, 16], strides = [1, 1]} : vector<2x32xf32> to vector<2x16xf32>
    %c2_115 = arith.constant 2 : index
    %c0_116 = arith.constant 0 : index
    %312 = vector.load %arg15[%c2_115, %c0_116] : memref<16x32xf32, #tpu.memory_space<vmem>>, vector<2x16xf32>
    tpu.vector_store %arg15[%c2_115, %c0_116], %311 {strides = array<i32>} : memref<16x32xf32, #tpu.memory_space<vmem>>, vector<2x16xf32>,
    %313 = vector.extract_strided_slice %310 {offsets = [0, 16], sizes = [2, 16], strides = [1, 1]} : vector<2x32xf32> to vector<2x16xf32>
    %c12_117 = arith.constant 12 : index
    %c16_118 = arith.constant 16 : index
    %314 = vector.load %arg15[%c12_117, %c16_118] : memref<16x32xf32, #tpu.memory_space<vmem>>, vector<2x16xf32>
    tpu.vector_store %arg15[%c12_117, %c16_118], %313 {strides = array<i32>} : memref<16x32xf32, #tpu.memory_space<vmem>>, vector<2x16xf32>,
    %c4_119 = arith.constant 4 : index
    %c0_120 = arith.constant 0 : index
    %315 = vector.load %arg16[%c4_119, %c0_120] : memref<16x128xf32, #tpu.memory_space<vmem>>, vector<2x128xf32>
    %c10_121 = arith.constant 10 : index
    %c0_122 = arith.constant 0 : index
    %316 = vector.load %arg16[%c10_121, %c0_122] : memref<16x128xf32, #tpu.memory_space<vmem>>, vector<2x128xf32>
    %317 = arith.select %27, %315, %316 : vector<2x128xi1>, vector<2x128xf32>
    %cst_123 = arith.constant dense<0.000000e+00> : vector<2x128xf32>
    %318 = tpu.matmul %310, %257, %cst_123 {dimension_numbers = #tpu.dot_dimension_numbers<[1], [0], [0], [1], [0, 0, 1, 1], [], []>} : vector<2x32xf32>, vector<32x128xf32>, vector<2x128xf32> -> vector<2x128xf32>
    %319 = arith.addf %317, %318 : vector<2x128xf32>
    %320 = vector.broadcast %258 : vector<1x128xf32> to vector<2x128xf32>
    %321 = arith.addf %319, %320 : vector<2x128xf32>
    %322 = arith.negf %321 : vector<2x128xf32>
    %323 = math.exp %322 : vector<2x128xf32>
    %cst_124 = arith.constant 1.000000e+00 : f32
    %324 = vector.broadcast %cst_124 : f32 to vector<2x128xf32>
    %325 = arith.addf %324, %323 : vector<2x128xf32>
    %326 = arith.divf %324, %325 : vector<2x128xf32>
    %327 = math.tanh %321 : vector<2x128xf32>
    %328 = arith.select %32, %327, %326 : vector<2x128xi1>, vector<2x128xf32>
    %329 = vector.extract_strided_slice %328 {offsets = [0, 0], sizes = [2, 32], strides = [1, 1]} : vector<2x128xf32> to vector<2x32xf32>
    %330 = vector.extract_strided_slice %328 {offsets = [0, 32], sizes = [2, 32], strides = [1, 1]} : vector<2x128xf32> to vector<2x32xf32>
    %331 = vector.extract_strided_slice %328 {offsets = [0, 64], sizes = [2, 32], strides = [1, 1]} : vector<2x128xf32> to vector<2x32xf32>
    %332 = vector.extract_strided_slice %328 {offsets = [0, 96], sizes = [2, 32], strides = [1, 1]} : vector<2x128xf32> to vector<2x32xf32>
    %333 = arith.mulf %330, %308 : vector<2x32xf32>
    %334 = arith.mulf %329, %331 : vector<2x32xf32>
    %335 = arith.addf %333, %334 : vector<2x32xf32>
    %336 = math.tanh %335 : vector<2x32xf32>
    %337 = arith.mulf %332, %336 : vector<2x32xf32>
    %338 = vector.extract_strided_slice %337 {offsets = [0, 0], sizes = [2, 16], strides = [1, 1]} : vector<2x32xf32> to vector<2x16xf32>
    %c4_125 = arith.constant 4 : index
    %c0_126 = arith.constant 0 : index
    %339 = vector.load %arg15[%c4_125, %c0_126] : memref<16x32xf32, #tpu.memory_space<vmem>>, vector<2x16xf32>
    tpu.vector_store %arg15[%c4_125, %c0_126], %338 {strides = array<i32>} : memref<16x32xf32, #tpu.memory_space<vmem>>, vector<2x16xf32>,
    %340 = vector.extract_strided_slice %337 {offsets = [0, 16], sizes = [2, 16], strides = [1, 1]} : vector<2x32xf32> to vector<2x16xf32>
    %c10_127 = arith.constant 10 : index
    %c16_128 = arith.constant 16 : index
    %341 = vector.load %arg15[%c10_127, %c16_128] : memref<16x32xf32, #tpu.memory_space<vmem>>, vector<2x16xf32>
    tpu.vector_store %arg15[%c10_127, %c16_128], %340 {strides = array<i32>} : memref<16x32xf32, #tpu.memory_space<vmem>>, vector<2x16xf32>,
    %c6_129 = arith.constant 6 : index
    %c0_130 = arith.constant 0 : index
    %342 = vector.load %arg16[%c6_129, %c0_130] : memref<16x128xf32, #tpu.memory_space<vmem>>, vector<2x128xf32>
    %c8_131 = arith.constant 8 : index
    %c0_132 = arith.constant 0 : index
    %343 = vector.load %arg16[%c8_131, %c0_132] : memref<16x128xf32, #tpu.memory_space<vmem>>, vector<2x128xf32>
    %344 = arith.select %27, %342, %343 : vector<2x128xi1>, vector<2x128xf32>
    %cst_133 = arith.constant dense<0.000000e+00> : vector<2x128xf32>
    %345 = tpu.matmul %337, %257, %cst_133 {dimension_numbers = #tpu.dot_dimension_numbers<[1], [0], [0], [1], [0, 0, 1, 1], [], []>} : vector<2x32xf32>, vector<32x128xf32>, vector<2x128xf32> -> vector<2x128xf32>
    %346 = arith.addf %344, %345 : vector<2x128xf32>
    %347 = vector.broadcast %258 : vector<1x128xf32> to vector<2x128xf32>
    %348 = arith.addf %346, %347 : vector<2x128xf32>
    %349 = arith.negf %348 : vector<2x128xf32>
    %350 = math.exp %349 : vector<2x128xf32>
    %cst_134 = arith.constant 1.000000e+00 : f32
    %351 = vector.broadcast %cst_134 : f32 to vector<2x128xf32>
    %352 = arith.addf %351, %350 : vector<2x128xf32>
    %353 = arith.divf %351, %352 : vector<2x128xf32>
    %354 = math.tanh %348 : vector<2x128xf32>
    %355 = arith.select %32, %354, %353 : vector<2x128xi1>, vector<2x128xf32>
    %356 = vector.extract_strided_slice %355 {offsets = [0, 0], sizes = [2, 32], strides = [1, 1]} : vector<2x128xf32> to vector<2x32xf32>
    %357 = vector.extract_strided_slice %355 {offsets = [0, 32], sizes = [2, 32], strides = [1, 1]} : vector<2x128xf32> to vector<2x32xf32>
    %358 = vector.extract_strided_slice %355 {offsets = [0, 64], sizes = [2, 32], strides = [1, 1]} : vector<2x128xf32> to vector<2x32xf32>
    %359 = vector.extract_strided_slice %355 {offsets = [0, 96], sizes = [2, 32], strides = [1, 1]} : vector<2x128xf32> to vector<2x32xf32>
    %360 = arith.mulf %357, %335 : vector<2x32xf32>
    %361 = arith.mulf %356, %358 : vector<2x32xf32>
    %362 = arith.addf %360, %361 : vector<2x32xf32>
    %363 = math.tanh %362 : vector<2x32xf32>
    %364 = arith.mulf %359, %363 : vector<2x32xf32>
    %365 = vector.extract_strided_slice %364 {offsets = [0, 0], sizes = [2, 16], strides = [1, 1]} : vector<2x32xf32> to vector<2x16xf32>
    %c6_135 = arith.constant 6 : index
    %c0_136 = arith.constant 0 : index
    %366 = vector.load %arg15[%c6_135, %c0_136] : memref<16x32xf32, #tpu.memory_space<vmem>>, vector<2x16xf32>
    tpu.vector_store %arg15[%c6_135, %c0_136], %365 {strides = array<i32>} : memref<16x32xf32, #tpu.memory_space<vmem>>, vector<2x16xf32>,
    %367 = vector.extract_strided_slice %364 {offsets = [0, 16], sizes = [2, 16], strides = [1, 1]} : vector<2x32xf32> to vector<2x16xf32>
    %c8_137 = arith.constant 8 : index
    %c16_138 = arith.constant 16 : index
    %368 = vector.load %arg15[%c8_137, %c16_138] : memref<16x32xf32, #tpu.memory_space<vmem>>, vector<2x16xf32>
    tpu.vector_store %arg15[%c8_137, %c16_138], %367 {strides = array<i32>} : memref<16x32xf32, #tpu.memory_space<vmem>>, vector<2x16xf32>,
    %c8_139 = arith.constant 8 : index
    %c0_140 = arith.constant 0 : index
    %369 = vector.load %arg16[%c8_139, %c0_140] : memref<16x128xf32, #tpu.memory_space<vmem>>, vector<2x128xf32>
    %c6_141 = arith.constant 6 : index
    %c0_142 = arith.constant 0 : index
    %370 = vector.load %arg16[%c6_141, %c0_142] : memref<16x128xf32, #tpu.memory_space<vmem>>, vector<2x128xf32>
    %371 = arith.select %27, %369, %370 : vector<2x128xi1>, vector<2x128xf32>
    %cst_143 = arith.constant dense<0.000000e+00> : vector<2x128xf32>
    %372 = tpu.matmul %364, %257, %cst_143 {dimension_numbers = #tpu.dot_dimension_numbers<[1], [0], [0], [1], [0, 0, 1, 1], [], []>} : vector<2x32xf32>, vector<32x128xf32>, vector<2x128xf32> -> vector<2x128xf32>
    %373 = arith.addf %371, %372 : vector<2x128xf32>
    %374 = vector.broadcast %258 : vector<1x128xf32> to vector<2x128xf32>
    %375 = arith.addf %373, %374 : vector<2x128xf32>
    %376 = arith.negf %375 : vector<2x128xf32>
    %377 = math.exp %376 : vector<2x128xf32>
    %cst_144 = arith.constant 1.000000e+00 : f32
    %378 = vector.broadcast %cst_144 : f32 to vector<2x128xf32>
    %379 = arith.addf %378, %377 : vector<2x128xf32>
    %380 = arith.divf %378, %379 : vector<2x128xf32>
    %381 = math.tanh %375 : vector<2x128xf32>
    %382 = arith.select %32, %381, %380 : vector<2x128xi1>, vector<2x128xf32>
    %383 = vector.extract_strided_slice %382 {offsets = [0, 0], sizes = [2, 32], strides = [1, 1]} : vector<2x128xf32> to vector<2x32xf32>
    %384 = vector.extract_strided_slice %382 {offsets = [0, 32], sizes = [2, 32], strides = [1, 1]} : vector<2x128xf32> to vector<2x32xf32>
    %385 = vector.extract_strided_slice %382 {offsets = [0, 64], sizes = [2, 32], strides = [1, 1]} : vector<2x128xf32> to vector<2x32xf32>
    %386 = vector.extract_strided_slice %382 {offsets = [0, 96], sizes = [2, 32], strides = [1, 1]} : vector<2x128xf32> to vector<2x32xf32>
    %387 = arith.mulf %384, %362 : vector<2x32xf32>
    %388 = arith.mulf %383, %385 : vector<2x32xf32>
    %389 = arith.addf %387, %388 : vector<2x32xf32>
    %390 = math.tanh %389 : vector<2x32xf32>
    %391 = arith.mulf %386, %390 : vector<2x32xf32>
    %392 = vector.extract_strided_slice %391 {offsets = [0, 0], sizes = [2, 16], strides = [1, 1]} : vector<2x32xf32> to vector<2x16xf32>
    %c8_145 = arith.constant 8 : index
    %c0_146 = arith.constant 0 : index
    %393 = vector.load %arg15[%c8_145, %c0_146] : memref<16x32xf32, #tpu.memory_space<vmem>>, vector<2x16xf32>
    tpu.vector_store %arg15[%c8_145, %c0_146], %392 {strides = array<i32>} : memref<16x32xf32, #tpu.memory_space<vmem>>, vector<2x16xf32>,
    %394 = vector.extract_strided_slice %391 {offsets = [0, 16], sizes = [2, 16], strides = [1, 1]} : vector<2x32xf32> to vector<2x16xf32>
    %c6_147 = arith.constant 6 : index
    %c16_148 = arith.constant 16 : index
    %395 = vector.load %arg15[%c6_147, %c16_148] : memref<16x32xf32, #tpu.memory_space<vmem>>, vector<2x16xf32>
    tpu.vector_store %arg15[%c6_147, %c16_148], %394 {strides = array<i32>} : memref<16x32xf32, #tpu.memory_space<vmem>>, vector<2x16xf32>,
    %c10_149 = arith.constant 10 : index
    %c0_150 = arith.constant 0 : index
    %396 = vector.load %arg16[%c10_149, %c0_150] : memref<16x128xf32, #tpu.memory_space<vmem>>, vector<2x128xf32>
    %c4_151 = arith.constant 4 : index
    %c0_152 = arith.constant 0 : index
    %397 = vector.load %arg16[%c4_151, %c0_152] : memref<16x128xf32, #tpu.memory_space<vmem>>, vector<2x128xf32>
    %398 = arith.select %27, %396, %397 : vector<2x128xi1>, vector<2x128xf32>
    %cst_153 = arith.constant dense<0.000000e+00> : vector<2x128xf32>
    %399 = tpu.matmul %391, %257, %cst_153 {dimension_numbers = #tpu.dot_dimension_numbers<[1], [0], [0], [1], [0, 0, 1, 1], [], []>} : vector<2x32xf32>, vector<32x128xf32>, vector<2x128xf32> -> vector<2x128xf32>
    %400 = arith.addf %398, %399 : vector<2x128xf32>
    %401 = vector.broadcast %258 : vector<1x128xf32> to vector<2x128xf32>
    %402 = arith.addf %400, %401 : vector<2x128xf32>
    %403 = arith.negf %402 : vector<2x128xf32>
    %404 = math.exp %403 : vector<2x128xf32>
    %cst_154 = arith.constant 1.000000e+00 : f32
    %405 = vector.broadcast %cst_154 : f32 to vector<2x128xf32>
    %406 = arith.addf %405, %404 : vector<2x128xf32>
    %407 = arith.divf %405, %406 : vector<2x128xf32>
    %408 = math.tanh %402 : vector<2x128xf32>
    %409 = arith.select %32, %408, %407 : vector<2x128xi1>, vector<2x128xf32>
    %410 = vector.extract_strided_slice %409 {offsets = [0, 0], sizes = [2, 32], strides = [1, 1]} : vector<2x128xf32> to vector<2x32xf32>
    %411 = vector.extract_strided_slice %409 {offsets = [0, 32], sizes = [2, 32], strides = [1, 1]} : vector<2x128xf32> to vector<2x32xf32>
    %412 = vector.extract_strided_slice %409 {offsets = [0, 64], sizes = [2, 32], strides = [1, 1]} : vector<2x128xf32> to vector<2x32xf32>
    %413 = vector.extract_strided_slice %409 {offsets = [0, 96], sizes = [2, 32], strides = [1, 1]} : vector<2x128xf32> to vector<2x32xf32>
    %414 = arith.mulf %411, %389 : vector<2x32xf32>
    %415 = arith.mulf %410, %412 : vector<2x32xf32>
    %416 = arith.addf %414, %415 : vector<2x32xf32>
    %417 = math.tanh %416 : vector<2x32xf32>
    %418 = arith.mulf %413, %417 : vector<2x32xf32>
    %419 = vector.extract_strided_slice %418 {offsets = [0, 0], sizes = [2, 16], strides = [1, 1]} : vector<2x32xf32> to vector<2x16xf32>
    %c10_155 = arith.constant 10 : index
    %c0_156 = arith.constant 0 : index
    %420 = vector.load %arg15[%c10_155, %c0_156] : memref<16x32xf32, #tpu.memory_space<vmem>>, vector<2x16xf32>
    tpu.vector_store %arg15[%c10_155, %c0_156], %419 {strides = array<i32>} : memref<16x32xf32, #tpu.memory_space<vmem>>, vector<2x16xf32>,
    %421 = vector.extract_strided_slice %418 {offsets = [0, 16], sizes = [2, 16], strides = [1, 1]} : vector<2x32xf32> to vector<2x16xf32>
    %c4_157 = arith.constant 4 : index
    %c16_158 = arith.constant 16 : index
    %422 = vector.load %arg15[%c4_157, %c16_158] : memref<16x32xf32, #tpu.memory_space<vmem>>, vector<2x16xf32>
    tpu.vector_store %arg15[%c4_157, %c16_158], %421 {strides = array<i32>} : memref<16x32xf32, #tpu.memory_space<vmem>>, vector<2x16xf32>,
    %c12_159 = arith.constant 12 : index
    %c0_160 = arith.constant 0 : index
    %423 = vector.load %arg16[%c12_159, %c0_160] : memref<16x128xf32, #tpu.memory_space<vmem>>, vector<2x128xf32>
    %c2_161 = arith.constant 2 : index
    %c0_162 = arith.constant 0 : index
    %424 = vector.load %arg16[%c2_161, %c0_162] : memref<16x128xf32, #tpu.memory_space<vmem>>, vector<2x128xf32>
    %425 = arith.select %27, %423, %424 : vector<2x128xi1>, vector<2x128xf32>
    %cst_163 = arith.constant dense<0.000000e+00> : vector<2x128xf32>
    %426 = tpu.matmul %418, %257, %cst_163 {dimension_numbers = #tpu.dot_dimension_numbers<[1], [0], [0], [1], [0, 0, 1, 1], [], []>} : vector<2x32xf32>, vector<32x128xf32>, vector<2x128xf32> -> vector<2x128xf32>
    %427 = arith.addf %425, %426 : vector<2x128xf32>
    %428 = vector.broadcast %258 : vector<1x128xf32> to vector<2x128xf32>
    %429 = arith.addf %427, %428 : vector<2x128xf32>
    %430 = arith.negf %429 : vector<2x128xf32>
    %431 = math.exp %430 : vector<2x128xf32>
    %cst_164 = arith.constant 1.000000e+00 : f32
    %432 = vector.broadcast %cst_164 : f32 to vector<2x128xf32>
    %433 = arith.addf %432, %431 : vector<2x128xf32>
    %434 = arith.divf %432, %433 : vector<2x128xf32>
    %435 = math.tanh %429 : vector<2x128xf32>
    %436 = arith.select %32, %435, %434 : vector<2x128xi1>, vector<2x128xf32>
    %437 = vector.extract_strided_slice %436 {offsets = [0, 0], sizes = [2, 32], strides = [1, 1]} : vector<2x128xf32> to vector<2x32xf32>
    %438 = vector.extract_strided_slice %436 {offsets = [0, 32], sizes = [2, 32], strides = [1, 1]} : vector<2x128xf32> to vector<2x32xf32>
    %439 = vector.extract_strided_slice %436 {offsets = [0, 64], sizes = [2, 32], strides = [1, 1]} : vector<2x128xf32> to vector<2x32xf32>
    %440 = vector.extract_strided_slice %436 {offsets = [0, 96], sizes = [2, 32], strides = [1, 1]} : vector<2x128xf32> to vector<2x32xf32>
    %441 = arith.mulf %438, %416 : vector<2x32xf32>
    %442 = arith.mulf %437, %439 : vector<2x32xf32>
    %443 = arith.addf %441, %442 : vector<2x32xf32>
    %444 = math.tanh %443 : vector<2x32xf32>
    %445 = arith.mulf %440, %444 : vector<2x32xf32>
    %446 = vector.extract_strided_slice %445 {offsets = [0, 0], sizes = [2, 16], strides = [1, 1]} : vector<2x32xf32> to vector<2x16xf32>
    %c12_165 = arith.constant 12 : index
    %c0_166 = arith.constant 0 : index
    %447 = vector.load %arg15[%c12_165, %c0_166] : memref<16x32xf32, #tpu.memory_space<vmem>>, vector<2x16xf32>
    tpu.vector_store %arg15[%c12_165, %c0_166], %446 {strides = array<i32>} : memref<16x32xf32, #tpu.memory_space<vmem>>, vector<2x16xf32>,
    %448 = vector.extract_strided_slice %445 {offsets = [0, 16], sizes = [2, 16], strides = [1, 1]} : vector<2x32xf32> to vector<2x16xf32>
    %c2_167 = arith.constant 2 : index
    %c16_168 = arith.constant 16 : index
    %449 = vector.load %arg15[%c2_167, %c16_168] : memref<16x32xf32, #tpu.memory_space<vmem>>, vector<2x16xf32>
    tpu.vector_store %arg15[%c2_167, %c16_168], %448 {strides = array<i32>} : memref<16x32xf32, #tpu.memory_space<vmem>>, vector<2x16xf32>,
    %c14_169 = arith.constant 14 : index
    %c0_170 = arith.constant 0 : index
    %450 = vector.load %arg16[%c14_169, %c0_170] : memref<16x128xf32, #tpu.memory_space<vmem>>, vector<2x128xf32>
    %c0_171 = arith.constant 0 : index
    %c0_172 = arith.constant 0 : index
    %451 = vector.load %arg16[%c0_171, %c0_172] : memref<16x128xf32, #tpu.memory_space<vmem>>, vector<2x128xf32>
    %452 = arith.select %27, %450, %451 : vector<2x128xi1>, vector<2x128xf32>
    %cst_173 = arith.constant dense<0.000000e+00> : vector<2x128xf32>
    %453 = tpu.matmul %445, %257, %cst_173 {dimension_numbers = #tpu.dot_dimension_numbers<[1], [0], [0], [1], [0, 0, 1, 1], [], []>} : vector<2x32xf32>, vector<32x128xf32>, vector<2x128xf32> -> vector<2x128xf32>
    %454 = arith.addf %452, %453 : vector<2x128xf32>
    %455 = vector.broadcast %258 : vector<1x128xf32> to vector<2x128xf32>
    %456 = arith.addf %454, %455 : vector<2x128xf32>
    %457 = arith.negf %456 : vector<2x128xf32>
    %458 = math.exp %457 : vector<2x128xf32>
    %cst_174 = arith.constant 1.000000e+00 : f32
    %459 = vector.broadcast %cst_174 : f32 to vector<2x128xf32>
    %460 = arith.addf %459, %458 : vector<2x128xf32>
    %461 = arith.divf %459, %460 : vector<2x128xf32>
    %462 = math.tanh %456 : vector<2x128xf32>
    %463 = arith.select %32, %462, %461 : vector<2x128xi1>, vector<2x128xf32>
    %464 = vector.extract_strided_slice %463 {offsets = [0, 0], sizes = [2, 32], strides = [1, 1]} : vector<2x128xf32> to vector<2x32xf32>
    %465 = vector.extract_strided_slice %463 {offsets = [0, 32], sizes = [2, 32], strides = [1, 1]} : vector<2x128xf32> to vector<2x32xf32>
    %466 = vector.extract_strided_slice %463 {offsets = [0, 64], sizes = [2, 32], strides = [1, 1]} : vector<2x128xf32> to vector<2x32xf32>
    %467 = vector.extract_strided_slice %463 {offsets = [0, 96], sizes = [2, 32], strides = [1, 1]} : vector<2x128xf32> to vector<2x32xf32>
    %468 = arith.mulf %465, %443 : vector<2x32xf32>
    %469 = arith.mulf %464, %466 : vector<2x32xf32>
    %470 = arith.addf %468, %469 : vector<2x32xf32>
    %471 = math.tanh %470 : vector<2x32xf32>
    %472 = arith.mulf %467, %471 : vector<2x32xf32>
    %473 = vector.extract_strided_slice %472 {offsets = [0, 0], sizes = [2, 16], strides = [1, 1]} : vector<2x32xf32> to vector<2x16xf32>
    %c14_175 = arith.constant 14 : index
    %c0_176 = arith.constant 0 : index
    %474 = vector.load %arg15[%c14_175, %c0_176] : memref<16x32xf32, #tpu.memory_space<vmem>>, vector<2x16xf32>
    tpu.vector_store %arg15[%c14_175, %c0_176], %473 {strides = array<i32>} : memref<16x32xf32, #tpu.memory_space<vmem>>, vector<2x16xf32>,
    %475 = vector.extract_strided_slice %472 {offsets = [0, 16], sizes = [2, 16], strides = [1, 1]} : vector<2x32xf32> to vector<2x16xf32>
    %c0_177 = arith.constant 0 : index
    %c16_178 = arith.constant 16 : index
    %476 = vector.load %arg15[%c0_177, %c16_178] : memref<16x32xf32, #tpu.memory_space<vmem>>, vector<2x16xf32>
    tpu.vector_store %arg15[%c0_177, %c16_178], %475 {strides = array<i32>} : memref<16x32xf32, #tpu.memory_space<vmem>>, vector<2x16xf32>,
    %c0_179 = arith.constant 0 : index
    %c0_180 = arith.constant 0 : index
    %477 = vector.load %arg15[%c0_179, %c0_180] : memref<16x32xf32, #tpu.memory_space<vmem>>, vector<16x32xf32>
    %c0_181 = arith.constant 0 : index
    %c0_182 = arith.constant 0 : index
    %478 = vector.load %arg7[%c0_181, %c0_182] : memref<32x8xf32, #tpu.memory_space<vmem>>, vector<32x8xf32>
    %cst_183 = arith.constant dense<0.000000e+00> : vector<16x8xf32>
    %479 = tpu.matmul %477, %478, %cst_183 {dimension_numbers = #tpu.dot_dimension_numbers<[1], [0], [0], [1], [0, 0, 1, 1], [], []>} : vector<16x32xf32>, vector<32x8xf32>, vector<16x8xf32> -> vector<16x8xf32>
    %c0_184 = arith.constant 0 : index
    %c0_185 = arith.constant 0 : index
    %480 = vector.load %arg8[%c0_184, %c0_185] : memref<1x8xf32, #tpu.memory_space<vmem>>, vector<1x8xf32>
    %481 = vector.broadcast %480 : vector<1x8xf32> to vector<16x8xf32>
    %482 = arith.addf %479, %481 : vector<16x8xf32>
    %c0_186 = arith.constant 0 : index
    %c0_187 = arith.constant 0 : index
    %483 = vector.load %arg12[%c0_186, %c0_187] : memref<16x8xf32, #tpu.memory_space<vmem>>, vector<16x8xf32>
    tpu.vector_store %arg12[%c0_186, %c0_187], %482 {strides = array<i32>} : memref<16x8xf32, #tpu.memory_space<vmem>>, vector<16x8xf32>,
    %c0_188 = arith.constant 0 : index
    %c0_189 = arith.constant 0 : index
    %484 = vector.load %arg11[%c0_188, %c0_189] : memref<8x8xf32, #tpu.memory_space<vmem>>, vector<8x8xf32>
    %485 = tpu.iota {dimensions = array<i32: 2>} : vector<2x8x8xi32>
    %486 = tpu.iota {dimensions = array<i32: 1>} : vector<2x8xi32>
    %c0_190 = arith.constant 0 : index
    %c0_191 = arith.constant 0 : index
    %487 = vector.load %arg9[%c0_190, %c0_191] : memref<1x8xf32, #tpu.memory_space<vmem>>, vector<1x8xf32>
    %488 = vector.extract_strided_slice %482 {offsets = [0, 0], sizes = [2, 8], strides = [1, 1]} : vector<16x8xf32> to vector<2x8xf32>
    %489 = vector.broadcast %487 : vector<1x8xf32> to vector<2x8xf32>
    %490 = arith.addf %489, %488 : vector<2x8xf32>
    %491 = vector.extract_strided_slice %482 {offsets = [2, 0], sizes = [2, 8], strides = [1, 1]} : vector<16x8xf32> to vector<2x8xf32>
    %492 = vector.shape_cast %490 : vector<2x8xf32> to vector<2x1x8xf32>
    %493 = vector.shape_cast %484 : vector<8x8xf32> to vector<1x8x8xf32>
    %494 = vector.broadcast %492 : vector<2x1x8xf32> to vector<2x8x8xf32>
    %495 = vector.broadcast %493 : vector<1x8x8xf32> to vector<2x8x8xf32>
    %496 = arith.addf %494, %495 : vector<2x8x8xf32>
    %cst_192 = arith.constant dense<0xFF800000> : vector<2x8xf32>
    %497 = vector.multi_reduction <maximumf>, %496, %cst_192 [2] : vector<2x8x8xf32> to vector<2x8xf32>
    %498 = vector.shape_cast %497 : vector<2x8xf32> to vector<2x8x1xf32>
    %499 = vector.broadcast %498 : vector<2x8x1xf32> to vector<2x8x8xf32>
    %500 = arith.cmpf oeq, %496, %499 : vector<2x8x8xf32>
    %c8_i32 = arith.constant 8 : i32
    %501 = vector.broadcast %c8_i32 : i32 to vector<2x8x8xi32>
    %502 = arith.select %500, %485, %501 : vector<2x8x8xi1>, vector<2x8x8xi32>
    %cst_193 = arith.constant dense<2147483647> : vector<2x8xi32>
    %503 = vector.multi_reduction <minsi>, %502, %cst_193 [2] : vector<2x8x8xi32> to vector<2x8xi32>
    %c1 = arith.constant 1 : index
    %c0_194 = arith.constant 0 : index
    %c0_195 = arith.constant 0 : index
    %504 = vector.load %arg17[%c1, %c0_194, %c0_195] : memref<8x2x8xi32, #tpu.memory_space<vmem>>, vector<1x2x8xi32>
    %505 = vector.shape_cast %504 : vector<1x2x8xi32> to vector<2x8xi32>
    %506 = vector.shape_cast %503 : vector<2x8xi32> to vector<1x2x8xi32>
    tpu.vector_store %arg17[%c1, %c0_194, %c0_195], %506 {strides = array<i32>} : memref<8x2x8xi32, #tpu.memory_space<vmem>>, vector<1x2x8xi32>,
    %507 = arith.addf %497, %491 : vector<2x8xf32>
    %508 = vector.extract_strided_slice %482 {offsets = [4, 0], sizes = [2, 8], strides = [1, 1]} : vector<16x8xf32> to vector<2x8xf32>
    %509 = vector.shape_cast %507 : vector<2x8xf32> to vector<2x1x8xf32>
    %510 = vector.shape_cast %484 : vector<8x8xf32> to vector<1x8x8xf32>
    %511 = vector.broadcast %509 : vector<2x1x8xf32> to vector<2x8x8xf32>
    %512 = vector.broadcast %510 : vector<1x8x8xf32> to vector<2x8x8xf32>
    %513 = arith.addf %511, %512 : vector<2x8x8xf32>
    %cst_196 = arith.constant dense<0xFF800000> : vector<2x8xf32>
    %514 = vector.multi_reduction <maximumf>, %513, %cst_196 [2] : vector<2x8x8xf32> to vector<2x8xf32>
    %515 = vector.shape_cast %514 : vector<2x8xf32> to vector<2x8x1xf32>
    %516 = vector.broadcast %515 : vector<2x8x1xf32> to vector<2x8x8xf32>
    %517 = arith.cmpf oeq, %513, %516 : vector<2x8x8xf32>
    %c8_i32_197 = arith.constant 8 : i32
    %518 = vector.broadcast %c8_i32_197 : i32 to vector<2x8x8xi32>
    %519 = arith.select %517, %485, %518 : vector<2x8x8xi1>, vector<2x8x8xi32>
    %cst_198 = arith.constant dense<2147483647> : vector<2x8xi32>
    %520 = vector.multi_reduction <minsi>, %519, %cst_198 [2] : vector<2x8x8xi32> to vector<2x8xi32>
    %c2_199 = arith.constant 2 : index
    %c0_200 = arith.constant 0 : index
    %c0_201 = arith.constant 0 : index
    %521 = vector.load %arg17[%c2_199, %c0_200, %c0_201] : memref<8x2x8xi32, #tpu.memory_space<vmem>>, vector<1x2x8xi32>
    %522 = vector.shape_cast %521 : vector<1x2x8xi32> to vector<2x8xi32>
    %523 = vector.shape_cast %520 : vector<2x8xi32> to vector<1x2x8xi32>
    tpu.vector_store %arg17[%c2_199, %c0_200, %c0_201], %523 {strides = array<i32>} : memref<8x2x8xi32, #tpu.memory_space<vmem>>, vector<1x2x8xi32>,
    %524 = arith.addf %514, %508 : vector<2x8xf32>
    %525 = vector.extract_strided_slice %482 {offsets = [6, 0], sizes = [2, 8], strides = [1, 1]} : vector<16x8xf32> to vector<2x8xf32>
    %526 = vector.shape_cast %524 : vector<2x8xf32> to vector<2x1x8xf32>
    %527 = vector.shape_cast %484 : vector<8x8xf32> to vector<1x8x8xf32>
    %528 = vector.broadcast %526 : vector<2x1x8xf32> to vector<2x8x8xf32>
    %529 = vector.broadcast %527 : vector<1x8x8xf32> to vector<2x8x8xf32>
    %530 = arith.addf %528, %529 : vector<2x8x8xf32>
    %cst_202 = arith.constant dense<0xFF800000> : vector<2x8xf32>
    %531 = vector.multi_reduction <maximumf>, %530, %cst_202 [2] : vector<2x8x8xf32> to vector<2x8xf32>
    %532 = vector.shape_cast %531 : vector<2x8xf32> to vector<2x8x1xf32>
    %533 = vector.broadcast %532 : vector<2x8x1xf32> to vector<2x8x8xf32>
    %534 = arith.cmpf oeq, %530, %533 : vector<2x8x8xf32>
    %c8_i32_203 = arith.constant 8 : i32
    %535 = vector.broadcast %c8_i32_203 : i32 to vector<2x8x8xi32>
    %536 = arith.select %534, %485, %535 : vector<2x8x8xi1>, vector<2x8x8xi32>
    %cst_204 = arith.constant dense<2147483647> : vector<2x8xi32>
    %537 = vector.multi_reduction <minsi>, %536, %cst_204 [2] : vector<2x8x8xi32> to vector<2x8xi32>
    %c3 = arith.constant 3 : index
    %c0_205 = arith.constant 0 : index
    %c0_206 = arith.constant 0 : index
    %538 = vector.load %arg17[%c3, %c0_205, %c0_206] : memref<8x2x8xi32, #tpu.memory_space<vmem>>, vector<1x2x8xi32>
    %539 = vector.shape_cast %538 : vector<1x2x8xi32> to vector<2x8xi32>
    %540 = vector.shape_cast %537 : vector<2x8xi32> to vector<1x2x8xi32>
    tpu.vector_store %arg17[%c3, %c0_205, %c0_206], %540 {strides = array<i32>} : memref<8x2x8xi32, #tpu.memory_space<vmem>>, vector<1x2x8xi32>,
    %541 = arith.addf %531, %525 : vector<2x8xf32>
    %542 = vector.extract_strided_slice %482 {offsets = [8, 0], sizes = [2, 8], strides = [1, 1]} : vector<16x8xf32> to vector<2x8xf32>
    %543 = vector.shape_cast %541 : vector<2x8xf32> to vector<2x1x8xf32>
    %544 = vector.shape_cast %484 : vector<8x8xf32> to vector<1x8x8xf32>
    %545 = vector.broadcast %543 : vector<2x1x8xf32> to vector<2x8x8xf32>
    %546 = vector.broadcast %544 : vector<1x8x8xf32> to vector<2x8x8xf32>
    %547 = arith.addf %545, %546 : vector<2x8x8xf32>
    %cst_207 = arith.constant dense<0xFF800000> : vector<2x8xf32>
    %548 = vector.multi_reduction <maximumf>, %547, %cst_207 [2] : vector<2x8x8xf32> to vector<2x8xf32>
    %549 = vector.shape_cast %548 : vector<2x8xf32> to vector<2x8x1xf32>
    %550 = vector.broadcast %549 : vector<2x8x1xf32> to vector<2x8x8xf32>
    %551 = arith.cmpf oeq, %547, %550 : vector<2x8x8xf32>
    %c8_i32_208 = arith.constant 8 : i32
    %552 = vector.broadcast %c8_i32_208 : i32 to vector<2x8x8xi32>
    %553 = arith.select %551, %485, %552 : vector<2x8x8xi1>, vector<2x8x8xi32>
    %cst_209 = arith.constant dense<2147483647> : vector<2x8xi32>
    %554 = vector.multi_reduction <minsi>, %553, %cst_209 [2] : vector<2x8x8xi32> to vector<2x8xi32>
    %c4_210 = arith.constant 4 : index
    %c0_211 = arith.constant 0 : index
    %c0_212 = arith.constant 0 : index
    %555 = vector.load %arg17[%c4_210, %c0_211, %c0_212] : memref<8x2x8xi32, #tpu.memory_space<vmem>>, vector<1x2x8xi32>
    %556 = vector.shape_cast %555 : vector<1x2x8xi32> to vector<2x8xi32>
    %557 = vector.shape_cast %554 : vector<2x8xi32> to vector<1x2x8xi32>
    tpu.vector_store %arg17[%c4_210, %c0_211, %c0_212], %557 {strides = array<i32>} : memref<8x2x8xi32, #tpu.memory_space<vmem>>, vector<1x2x8xi32>,
    %558 = arith.addf %548, %542 : vector<2x8xf32>
    %559 = vector.extract_strided_slice %482 {offsets = [10, 0], sizes = [2, 8], strides = [1, 1]} : vector<16x8xf32> to vector<2x8xf32>
    %560 = vector.shape_cast %558 : vector<2x8xf32> to vector<2x1x8xf32>
    %561 = vector.shape_cast %484 : vector<8x8xf32> to vector<1x8x8xf32>
    %562 = vector.broadcast %560 : vector<2x1x8xf32> to vector<2x8x8xf32>
    %563 = vector.broadcast %561 : vector<1x8x8xf32> to vector<2x8x8xf32>
    %564 = arith.addf %562, %563 : vector<2x8x8xf32>
    %cst_213 = arith.constant dense<0xFF800000> : vector<2x8xf32>
    %565 = vector.multi_reduction <maximumf>, %564, %cst_213 [2] : vector<2x8x8xf32> to vector<2x8xf32>
    %566 = vector.shape_cast %565 : vector<2x8xf32> to vector<2x8x1xf32>
    %567 = vector.broadcast %566 : vector<2x8x1xf32> to vector<2x8x8xf32>
    %568 = arith.cmpf oeq, %564, %567 : vector<2x8x8xf32>
    %c8_i32_214 = arith.constant 8 : i32
    %569 = vector.broadcast %c8_i32_214 : i32 to vector<2x8x8xi32>
    %570 = arith.select %568, %485, %569 : vector<2x8x8xi1>, vector<2x8x8xi32>
    %cst_215 = arith.constant dense<2147483647> : vector<2x8xi32>
    %571 = vector.multi_reduction <minsi>, %570, %cst_215 [2] : vector<2x8x8xi32> to vector<2x8xi32>
    %c5 = arith.constant 5 : index
    %c0_216 = arith.constant 0 : index
    %c0_217 = arith.constant 0 : index
    %572 = vector.load %arg17[%c5, %c0_216, %c0_217] : memref<8x2x8xi32, #tpu.memory_space<vmem>>, vector<1x2x8xi32>
    %573 = vector.shape_cast %572 : vector<1x2x8xi32> to vector<2x8xi32>
    %574 = vector.shape_cast %571 : vector<2x8xi32> to vector<1x2x8xi32>
    tpu.vector_store %arg17[%c5, %c0_216, %c0_217], %574 {strides = array<i32>} : memref<8x2x8xi32, #tpu.memory_space<vmem>>, vector<1x2x8xi32>,
    %575 = arith.addf %565, %559 : vector<2x8xf32>
    %576 = vector.extract_strided_slice %482 {offsets = [12, 0], sizes = [2, 8], strides = [1, 1]} : vector<16x8xf32> to vector<2x8xf32>
    %577 = vector.shape_cast %575 : vector<2x8xf32> to vector<2x1x8xf32>
    %578 = vector.shape_cast %484 : vector<8x8xf32> to vector<1x8x8xf32>
    %579 = vector.broadcast %577 : vector<2x1x8xf32> to vector<2x8x8xf32>
    %580 = vector.broadcast %578 : vector<1x8x8xf32> to vector<2x8x8xf32>
    %581 = arith.addf %579, %580 : vector<2x8x8xf32>
    %cst_218 = arith.constant dense<0xFF800000> : vector<2x8xf32>
    %582 = vector.multi_reduction <maximumf>, %581, %cst_218 [2] : vector<2x8x8xf32> to vector<2x8xf32>
    %583 = vector.shape_cast %582 : vector<2x8xf32> to vector<2x8x1xf32>
    %584 = vector.broadcast %583 : vector<2x8x1xf32> to vector<2x8x8xf32>
    %585 = arith.cmpf oeq, %581, %584 : vector<2x8x8xf32>
    %c8_i32_219 = arith.constant 8 : i32
    %586 = vector.broadcast %c8_i32_219 : i32 to vector<2x8x8xi32>
    %587 = arith.select %585, %485, %586 : vector<2x8x8xi1>, vector<2x8x8xi32>
    %cst_220 = arith.constant dense<2147483647> : vector<2x8xi32>
    %588 = vector.multi_reduction <minsi>, %587, %cst_220 [2] : vector<2x8x8xi32> to vector<2x8xi32>
    %c6_221 = arith.constant 6 : index
    %c0_222 = arith.constant 0 : index
    %c0_223 = arith.constant 0 : index
    %589 = vector.load %arg17[%c6_221, %c0_222, %c0_223] : memref<8x2x8xi32, #tpu.memory_space<vmem>>, vector<1x2x8xi32>
    %590 = vector.shape_cast %589 : vector<1x2x8xi32> to vector<2x8xi32>
    %591 = vector.shape_cast %588 : vector<2x8xi32> to vector<1x2x8xi32>
    tpu.vector_store %arg17[%c6_221, %c0_222, %c0_223], %591 {strides = array<i32>} : memref<8x2x8xi32, #tpu.memory_space<vmem>>, vector<1x2x8xi32>,
    %592 = arith.addf %582, %576 : vector<2x8xf32>
    %593 = vector.extract_strided_slice %482 {offsets = [14, 0], sizes = [2, 8], strides = [1, 1]} : vector<16x8xf32> to vector<2x8xf32>
    %594 = vector.shape_cast %592 : vector<2x8xf32> to vector<2x1x8xf32>
    %595 = vector.shape_cast %484 : vector<8x8xf32> to vector<1x8x8xf32>
    %596 = vector.broadcast %594 : vector<2x1x8xf32> to vector<2x8x8xf32>
    %597 = vector.broadcast %595 : vector<1x8x8xf32> to vector<2x8x8xf32>
    %598 = arith.addf %596, %597 : vector<2x8x8xf32>
    %cst_224 = arith.constant dense<0xFF800000> : vector<2x8xf32>
    %599 = vector.multi_reduction <maximumf>, %598, %cst_224 [2] : vector<2x8x8xf32> to vector<2x8xf32>
    %600 = vector.shape_cast %599 : vector<2x8xf32> to vector<2x8x1xf32>
    %601 = vector.broadcast %600 : vector<2x8x1xf32> to vector<2x8x8xf32>
    %602 = arith.cmpf oeq, %598, %601 : vector<2x8x8xf32>
    %c8_i32_225 = arith.constant 8 : i32
    %603 = vector.broadcast %c8_i32_225 : i32 to vector<2x8x8xi32>
    %604 = arith.select %602, %485, %603 : vector<2x8x8xi1>, vector<2x8x8xi32>
    %cst_226 = arith.constant dense<2147483647> : vector<2x8xi32>
    %605 = vector.multi_reduction <minsi>, %604, %cst_226 [2] : vector<2x8x8xi32> to vector<2x8xi32>
    %c7 = arith.constant 7 : index
    %c0_227 = arith.constant 0 : index
    %c0_228 = arith.constant 0 : index
    %606 = vector.load %arg17[%c7, %c0_227, %c0_228] : memref<8x2x8xi32, #tpu.memory_space<vmem>>, vector<1x2x8xi32>
    %607 = vector.shape_cast %606 : vector<1x2x8xi32> to vector<2x8xi32>
    %608 = vector.shape_cast %605 : vector<2x8xi32> to vector<1x2x8xi32>
    tpu.vector_store %arg17[%c7, %c0_227, %c0_228], %608 {strides = array<i32>} : memref<8x2x8xi32, #tpu.memory_space<vmem>>, vector<1x2x8xi32>,
    %609 = arith.addf %599, %593 : vector<2x8xf32>
    %c0_229 = arith.constant 0 : index
    %c0_230 = arith.constant 0 : index
    %610 = vector.load %arg10[%c0_229, %c0_230] : memref<1x8xf32, #tpu.memory_space<vmem>>, vector<1x8xf32>
    %611 = vector.broadcast %610 : vector<1x8xf32> to vector<2x8xf32>
    %612 = arith.addf %609, %611 : vector<2x8xf32>
    %cst_231 = arith.constant dense<0xFF800000> : vector<2xf32>
    %613 = vector.multi_reduction <maximumf>, %612, %cst_231 [1] : vector<2x8xf32> to vector<2xf32>
    %614 = vector.shape_cast %613 : vector<2xf32> to vector<2x1xf32>
    %615 = vector.broadcast %614 : vector<2x1xf32> to vector<2x8xf32>
    %616 = arith.cmpf oeq, %612, %615 : vector<2x8xf32>
    %c8_i32_232 = arith.constant 8 : i32
    %617 = vector.broadcast %c8_i32_232 : i32 to vector<2x8xi32>
    %618 = arith.select %616, %486, %617 : vector<2x8xi1>, vector<2x8xi32>
    %cst_233 = arith.constant dense<2147483647> : vector<2xi32>
    %619 = vector.multi_reduction <minsi>, %618, %cst_233 [1] : vector<2x8xi32> to vector<2xi32>
    %620 = vector.shape_cast %619 : vector<2xi32> to vector<2x1xi32>
    %c7_234 = arith.constant 7 : index
    %c0_235 = arith.constant 0 : index
    %c0_236 = arith.constant 0 : index
    %621 = vector.load %arg13[%c7_234, %c0_235, %c0_236] : memref<8x2x1xi32, #tpu.memory_space<vmem>>, vector<1x2x1xi32>
    %622 = vector.shape_cast %621 : vector<1x2x1xi32> to vector<2x1xi32>
    %623 = vector.shape_cast %620 : vector<2x1xi32> to vector<1x2x1xi32>
    tpu.vector_store %arg13[%c7_234, %c0_235, %c0_236], %623 {strides = array<i32>} : memref<8x2x1xi32, #tpu.memory_space<vmem>>, vector<1x2x1xi32>,
    %c7_237 = arith.constant 7 : index
    %c0_238 = arith.constant 0 : index
    %c0_239 = arith.constant 0 : index
    %624 = vector.load %arg17[%c7_237, %c0_238, %c0_239] : memref<8x2x8xi32, #tpu.memory_space<vmem>>, vector<1x2x8xi32>
    %625 = vector.shape_cast %624 : vector<1x2x8xi32> to vector<2x8xi32>
    %626 = vector.broadcast %620 : vector<2x1xi32> to vector<2x8xi32>
    %627 = arith.cmpi eq, %486, %626 : vector<2x8xi32>
    %628 = arith.extui %627 : vector<2x8xi1> to vector<2x8xi32>
    %629 = arith.muli %625, %628 : vector<2x8xi32>
    %cst_240 = arith.constant dense<0> : vector<2xi32>
    %630 = vector.multi_reduction <add>, %629, %cst_240 [1] : vector<2x8xi32> to vector<2xi32>
    %631 = vector.shape_cast %630 : vector<2xi32> to vector<2x1xi32>
    %c6_241 = arith.constant 6 : index
    %c0_242 = arith.constant 0 : index
    %c0_243 = arith.constant 0 : index
    %632 = vector.load %arg13[%c6_241, %c0_242, %c0_243] : memref<8x2x1xi32, #tpu.memory_space<vmem>>, vector<1x2x1xi32>
    %633 = vector.shape_cast %632 : vector<1x2x1xi32> to vector<2x1xi32>
    %634 = vector.shape_cast %631 : vector<2x1xi32> to vector<1x2x1xi32>
    tpu.vector_store %arg13[%c6_241, %c0_242, %c0_243], %634 {strides = array<i32>} : memref<8x2x1xi32, #tpu.memory_space<vmem>>, vector<1x2x1xi32>,
    %c6_244 = arith.constant 6 : index
    %c0_245 = arith.constant 0 : index
    %c0_246 = arith.constant 0 : index
    %635 = vector.load %arg17[%c6_244, %c0_245, %c0_246] : memref<8x2x8xi32, #tpu.memory_space<vmem>>, vector<1x2x8xi32>
    %636 = vector.shape_cast %635 : vector<1x2x8xi32> to vector<2x8xi32>
    %637 = vector.broadcast %631 : vector<2x1xi32> to vector<2x8xi32>
    %638 = arith.cmpi eq, %486, %637 : vector<2x8xi32>
    %639 = arith.extui %638 : vector<2x8xi1> to vector<2x8xi32>
    %640 = arith.muli %636, %639 : vector<2x8xi32>
    %cst_247 = arith.constant dense<0> : vector<2xi32>
    %641 = vector.multi_reduction <add>, %640, %cst_247 [1] : vector<2x8xi32> to vector<2xi32>
    %642 = vector.shape_cast %641 : vector<2xi32> to vector<2x1xi32>
    %c5_248 = arith.constant 5 : index
    %c0_249 = arith.constant 0 : index
    %c0_250 = arith.constant 0 : index
    %643 = vector.load %arg13[%c5_248, %c0_249, %c0_250] : memref<8x2x1xi32, #tpu.memory_space<vmem>>, vector<1x2x1xi32>
    %644 = vector.shape_cast %643 : vector<1x2x1xi32> to vector<2x1xi32>
    %645 = vector.shape_cast %642 : vector<2x1xi32> to vector<1x2x1xi32>
    tpu.vector_store %arg13[%c5_248, %c0_249, %c0_250], %645 {strides = array<i32>} : memref<8x2x1xi32, #tpu.memory_space<vmem>>, vector<1x2x1xi32>,
    %c5_251 = arith.constant 5 : index
    %c0_252 = arith.constant 0 : index
    %c0_253 = arith.constant 0 : index
    %646 = vector.load %arg17[%c5_251, %c0_252, %c0_253] : memref<8x2x8xi32, #tpu.memory_space<vmem>>, vector<1x2x8xi32>
    %647 = vector.shape_cast %646 : vector<1x2x8xi32> to vector<2x8xi32>
    %648 = vector.broadcast %642 : vector<2x1xi32> to vector<2x8xi32>
    %649 = arith.cmpi eq, %486, %648 : vector<2x8xi32>
    %650 = arith.extui %649 : vector<2x8xi1> to vector<2x8xi32>
    %651 = arith.muli %647, %650 : vector<2x8xi32>
    %cst_254 = arith.constant dense<0> : vector<2xi32>
    %652 = vector.multi_reduction <add>, %651, %cst_254 [1] : vector<2x8xi32> to vector<2xi32>
    %653 = vector.shape_cast %652 : vector<2xi32> to vector<2x1xi32>
    %c4_255 = arith.constant 4 : index
    %c0_256 = arith.constant 0 : index
    %c0_257 = arith.constant 0 : index
    %654 = vector.load %arg13[%c4_255, %c0_256, %c0_257] : memref<8x2x1xi32, #tpu.memory_space<vmem>>, vector<1x2x1xi32>
    %655 = vector.shape_cast %654 : vector<1x2x1xi32> to vector<2x1xi32>
    %656 = vector.shape_cast %653 : vector<2x1xi32> to vector<1x2x1xi32>
    tpu.vector_store %arg13[%c4_255, %c0_256, %c0_257], %656 {strides = array<i32>} : memref<8x2x1xi32, #tpu.memory_space<vmem>>, vector<1x2x1xi32>,
    %c4_258 = arith.constant 4 : index
    %c0_259 = arith.constant 0 : index
    %c0_260 = arith.constant 0 : index
    %657 = vector.load %arg17[%c4_258, %c0_259, %c0_260] : memref<8x2x8xi32, #tpu.memory_space<vmem>>, vector<1x2x8xi32>
    %658 = vector.shape_cast %657 : vector<1x2x8xi32> to vector<2x8xi32>
    %659 = vector.broadcast %653 : vector<2x1xi32> to vector<2x8xi32>
    %660 = arith.cmpi eq, %486, %659 : vector<2x8xi32>
    %661 = arith.extui %660 : vector<2x8xi1> to vector<2x8xi32>
    %662 = arith.muli %658, %661 : vector<2x8xi32>
    %cst_261 = arith.constant dense<0> : vector<2xi32>
    %663 = vector.multi_reduction <add>, %662, %cst_261 [1] : vector<2x8xi32> to vector<2xi32>
    %664 = vector.shape_cast %663 : vector<2xi32> to vector<2x1xi32>
    %c3_262 = arith.constant 3 : index
    %c0_263 = arith.constant 0 : index
    %c0_264 = arith.constant 0 : index
    %665 = vector.load %arg13[%c3_262, %c0_263, %c0_264] : memref<8x2x1xi32, #tpu.memory_space<vmem>>, vector<1x2x1xi32>
    %666 = vector.shape_cast %665 : vector<1x2x1xi32> to vector<2x1xi32>
    %667 = vector.shape_cast %664 : vector<2x1xi32> to vector<1x2x1xi32>
    tpu.vector_store %arg13[%c3_262, %c0_263, %c0_264], %667 {strides = array<i32>} : memref<8x2x1xi32, #tpu.memory_space<vmem>>, vector<1x2x1xi32>,
    %c3_265 = arith.constant 3 : index
    %c0_266 = arith.constant 0 : index
    %c0_267 = arith.constant 0 : index
    %668 = vector.load %arg17[%c3_265, %c0_266, %c0_267] : memref<8x2x8xi32, #tpu.memory_space<vmem>>, vector<1x2x8xi32>
    %669 = vector.shape_cast %668 : vector<1x2x8xi32> to vector<2x8xi32>
    %670 = vector.broadcast %664 : vector<2x1xi32> to vector<2x8xi32>
    %671 = arith.cmpi eq, %486, %670 : vector<2x8xi32>
    %672 = arith.extui %671 : vector<2x8xi1> to vector<2x8xi32>
    %673 = arith.muli %669, %672 : vector<2x8xi32>
    %cst_268 = arith.constant dense<0> : vector<2xi32>
    %674 = vector.multi_reduction <add>, %673, %cst_268 [1] : vector<2x8xi32> to vector<2xi32>
    %675 = vector.shape_cast %674 : vector<2xi32> to vector<2x1xi32>
    %c2_269 = arith.constant 2 : index
    %c0_270 = arith.constant 0 : index
    %c0_271 = arith.constant 0 : index
    %676 = vector.load %arg13[%c2_269, %c0_270, %c0_271] : memref<8x2x1xi32, #tpu.memory_space<vmem>>, vector<1x2x1xi32>
    %677 = vector.shape_cast %676 : vector<1x2x1xi32> to vector<2x1xi32>
    %678 = vector.shape_cast %675 : vector<2x1xi32> to vector<1x2x1xi32>
    tpu.vector_store %arg13[%c2_269, %c0_270, %c0_271], %678 {strides = array<i32>} : memref<8x2x1xi32, #tpu.memory_space<vmem>>, vector<1x2x1xi32>,
    %c2_272 = arith.constant 2 : index
    %c0_273 = arith.constant 0 : index
    %c0_274 = arith.constant 0 : index
    %679 = vector.load %arg17[%c2_272, %c0_273, %c0_274] : memref<8x2x8xi32, #tpu.memory_space<vmem>>, vector<1x2x8xi32>
    %680 = vector.shape_cast %679 : vector<1x2x8xi32> to vector<2x8xi32>
    %681 = vector.broadcast %675 : vector<2x1xi32> to vector<2x8xi32>
    %682 = arith.cmpi eq, %486, %681 : vector<2x8xi32>
    %683 = arith.extui %682 : vector<2x8xi1> to vector<2x8xi32>
    %684 = arith.muli %680, %683 : vector<2x8xi32>
    %cst_275 = arith.constant dense<0> : vector<2xi32>
    %685 = vector.multi_reduction <add>, %684, %cst_275 [1] : vector<2x8xi32> to vector<2xi32>
    %686 = vector.shape_cast %685 : vector<2xi32> to vector<2x1xi32>
    %c1_276 = arith.constant 1 : index
    %c0_277 = arith.constant 0 : index
    %c0_278 = arith.constant 0 : index
    %687 = vector.load %arg13[%c1_276, %c0_277, %c0_278] : memref<8x2x1xi32, #tpu.memory_space<vmem>>, vector<1x2x1xi32>
    %688 = vector.shape_cast %687 : vector<1x2x1xi32> to vector<2x1xi32>
    %689 = vector.shape_cast %686 : vector<2x1xi32> to vector<1x2x1xi32>
    tpu.vector_store %arg13[%c1_276, %c0_277, %c0_278], %689 {strides = array<i32>} : memref<8x2x1xi32, #tpu.memory_space<vmem>>, vector<1x2x1xi32>,
    %c1_279 = arith.constant 1 : index
    %c0_280 = arith.constant 0 : index
    %c0_281 = arith.constant 0 : index
    %690 = vector.load %arg17[%c1_279, %c0_280, %c0_281] : memref<8x2x8xi32, #tpu.memory_space<vmem>>, vector<1x2x8xi32>
    %691 = vector.shape_cast %690 : vector<1x2x8xi32> to vector<2x8xi32>
    %692 = vector.broadcast %686 : vector<2x1xi32> to vector<2x8xi32>
    %693 = arith.cmpi eq, %486, %692 : vector<2x8xi32>
    %694 = arith.extui %693 : vector<2x8xi1> to vector<2x8xi32>
    %695 = arith.muli %691, %694 : vector<2x8xi32>
    %cst_282 = arith.constant dense<0> : vector<2xi32>
    %696 = vector.multi_reduction <add>, %695, %cst_282 [1] : vector<2x8xi32> to vector<2xi32>
    %697 = vector.shape_cast %696 : vector<2xi32> to vector<2x1xi32>
    %c0_283 = arith.constant 0 : index
    %c0_284 = arith.constant 0 : index
    %c0_285 = arith.constant 0 : index
    %698 = vector.load %arg13[%c0_283, %c0_284, %c0_285] : memref<8x2x1xi32, #tpu.memory_space<vmem>>, vector<1x2x1xi32>
    %699 = vector.shape_cast %698 : vector<1x2x1xi32> to vector<2x1xi32>
    %700 = vector.shape_cast %697 : vector<2x1xi32> to vector<1x2x1xi32>
    tpu.vector_store %arg13[%c0_283, %c0_284, %c0_285], %700 {strides = array<i32>} : memref<8x2x1xi32, #tpu.memory_space<vmem>>, vector<1x2x1xi32>,
    return
  }
}

</mosaic_0001>

<llo_original>
// kernel: ner_bilstm_crf_forward.1
$region0: #{ner_bilstm_crf_forward.1}
  #allocation0 [shape = 'u32[]', space=smem, size = 0x4, offset = 0x4, fixed_abs, tag = 'smem constant byte address 0x4 - core index']
  #allocation1 [shape = 'u32[144,128]{1,0:T(1,128)}', space=vmem, size = 0x12000, scoped, tag = 'internal scratch']
  #allocation2 [shape = 'f32[16,32]{1,0:T(8,128)}', space=vmem, size = 0x2000, scoped, tag = 'scratch operand']
  #allocation3 [shape = 'f32[16,32]{1,0:T(8,128)}', space=vmem, size = 0x2000, scoped, tag = 'scratch operand']
  #allocation4 [shape = 'f32[16,128]{1,0:T(8,128)}', space=vmem, size = 0x2000, scoped, tag = 'scratch operand']
  #allocation5 [shape = 's32[8,2,8]{2,1,0:T(2,128)}', space=vmem, size = 0x2000, scoped, tag = 'scratch operand']
  %s0 = inlined_call_operand.vmem [shape: s32[16,1], index: 0, kind: input, shape index: {}]
  %s1 = inlined_call_operand.vmem [shape: f32[50,128], index: 1, kind: input, shape index: {}]
  %s2 = inlined_call_operand.vmem [shape: f32[32,128], index: 2, kind: input, shape index: {}]
  %s3 = inlined_call_operand.hbm [shape: f32[1,128], index: 3, kind: input, shape index: {}]
  %s4 = inlined_call_operand.hbm [shape: f32[32,128], index: 4, kind: input, shape index: {}]
  %s5 = inlined_call_operand.hbm [shape: f32[32,128], index: 5, kind: input, shape index: {}]
  %s6 = inlined_call_operand.hbm [shape: f32[1,128], index: 6, kind: input, shape index: {}]
  %s7 = inlined_call_operand.vmem [shape: f32[32,8], index: 7, kind: input, shape index: {}]
  %s8 = inlined_call_operand.hbm [shape: f32[1,8], index: 8, kind: input, shape index: {}]
  %s9 = inlined_call_operand.hbm [shape: f32[1,8], index: 9, kind: input, shape index: {}]
  %s10 = inlined_call_operand.hbm [shape: f32[1,8], index: 10, kind: input, shape index: {}]
  %s11 = inlined_call_operand.hbm [shape: f32[8,8], index: 11, kind: input, shape index: {}]
  %s12 = inlined_call_operand.vmem [shape: f32[16,8], index: 12, kind: output, shape index: {0}]
  %s13 = inlined_call_operand.vmem [shape: s32[8,2,1], index: 13, kind: output, shape index: {1}]
  %14 = xla_tuple %s12, %s13
  %s15 = sld [smem:[#allocation0]]
  $region98: #{ner_bilstm_crf_forward.1} parent=0
    _
  %s17 = ssub.s32 1, %s15
  %s18 = scalar_select 0, %s17, %s15
  $region1: #{ner_bilstm_crf_forward.1} parent=0
    #allocation6 [shape = 'u8[512]{0}', space=vmem, size = 0x400, scoped, tag = 'input window, operand 3, single buffered']
    #allocation7 [shape = 's32[1]{0}', space=sflag, size = 0x4, scoped, tag = 'scoped memory for ner_bilstm_crf_forward.1']
    #allocation8 [shape = 'u8[16384]{0}', space=vmem, size = 0x4000, scoped, tag = 'input window, operand 4, single buffered']
    #allocation9 [shape = 's32[1]{0}', space=sflag, size = 0x4, scoped, tag = 'scoped memory for ner_bilstm_crf_forward.1']
    #allocation10 [shape = 'u8[16384]{0}', space=vmem, size = 0x4000, scoped, tag = 'input window, operand 5, single buffered']
    #allocation11 [shape = 'u8[512]{0}', space=vmem, size = 0x400, scoped, tag = 'input window, operand 6, single buffered']
    #allocation12 [shape = 's32[1]{0}', space=sflag, size = 0x4, scoped, tag = 'scoped memory for ner_bilstm_crf_forward.1']
    #allocation13 [shape = 'u8[512]{0}', space=vmem, size = 0x400, scoped, tag = 'input window, operand 8, single buffered']
    #allocation14 [shape = 'u8[512]{0}', space=vmem, size = 0x400, scoped, tag = 'input window, operand 9, single buffered']
    #allocation15 [shape = 's32[1]{0}', space=sflag, size = 0x4, scoped, tag = 'scoped memory for ner_bilstm_crf_forward.1']
    #allocation16 [shape = 'u8[512]{0}', space=vmem, size = 0x400, scoped, tag = 'input window, operand 10, single buffered']
    #allocation17 [shape = 'u8[4096]{0}', space=vmem, size = 0x1000, scoped, tag = 'input window, operand 11, single buffered']
    #allocation18 [shape = 's32[1]{0}', space=sflag, size = 0x4, scoped, tag = 'scoped memory for ner_bilstm_crf_forward.1']
    %19 = vsyncpa [#allocation7], 0
    %20 = vsyncpa [#allocation9], 0
    %21 = vsyncpa [#allocation12], 0
    %22 = vsyncpa [#allocation15], 0
    %23 = vsyncpa [#allocation18], 0
    // Predicated region
    $region2: #{ner_bilstm_crf_forward.1} parent=1 // pred_check
      _
    $region3: #{ner_bilstm_crf_forward.1} parent=1 // pred_check_branch
      %25 = sbr.rel (0) target = $region5
    $region4: #{ner_bilstm_crf_forward.1} parent=1 // pred_region
      _
    $region5: #{ner_bilstm_crf_forward.1} parent=1 // pred_fallthru
      _
    // Predicated region
    $region6: #{ner_bilstm_crf_forward.1} parent=1 // pred_check
      _
    $region7: #{ner_bilstm_crf_forward.1} parent=1 // pred_check_branch
      %27 = sbr.rel (0) target = $region9
    $region8: #{ner_bilstm_crf_forward.1} parent=1 // pred_region
      _
    $region9: #{ner_bilstm_crf_forward.1} parent=1 // pred_fallthru
      _
    // Predicated region
    $region10: #{ner_bilstm_crf_forward.1} parent=1 // pred_check
      _
    $region11: #{ner_bilstm_crf_forward.1} parent=1 // pred_check_branch
      %29 = sbr.rel (0) target = $region13
    $region12: #{ner_bilstm_crf_forward.1} parent=1 // pred_region
      _
    $region13: #{ner_bilstm_crf_forward.1} parent=1 // pred_fallthru
      _
    // Predicated region
    $region14: #{ner_bilstm_crf_forward.1} parent=1 // pred_check
      _
    $region15: #{ner_bilstm_crf_forward.1} parent=1 // pred_check_branch
      %31 = sbr.rel (0) target = $region17
    $region16: #{ner_bilstm_crf_forward.1} parent=1 // pred_region
      %s33 = ssub.s32 16, 16
      %34 = vsyncadd [#allocation7], %s33
      %s36 = sshll.u32 [#allocation6], 4
      %s37 = int_to_ptr.vmem [resolvable:$true] %s36
      %39 = dma.hbm_to_vmem [thread:$0]  %s3, 16, %s37, [#allocation7]
    $region17: #{ner_bilstm_crf_forward.1} parent=1 // pred_fallthru
      _
    // Predicated region
    $region18: #{ner_bilstm_crf_forward.1} parent=1 // pred_check
      _
    $region19: #{ner_bilstm_crf_forward.1} parent=1 // pred_check_branch
      %41 = sbr.rel (0) target = $region21
    $region20: #{ner_bilstm_crf_forward.1} parent=1 // pred_region
      %s43 = ssub.s32 512, 512
      %44 = vsyncadd [#allocation9], %s43
      %s45 = sshll.u32 [#allocation8], 4
      %s46 = int_to_ptr.vmem [resolvable:$true] %s45
      %51 = dma.hbm_to_vmem [thread:$0]  %s4, 512, %s46, [#allocation9], 128, 128, 8
    $region21: #{ner_bilstm_crf_forward.1} parent=1 // pred_fallthru
      _
    // Predicated region
    $region22: #{ner_bilstm_crf_forward.1} parent=1 // pred_check
      _
    $region23: #{ner_bilstm_crf_forward.1} parent=1 // pred_check_branch
      %53 = sbr.rel (0) target = $region25
    $region24: #{ner_bilstm_crf_forward.1} parent=1 // pred_region
      %s55 = ssub.s32 512, 512
      %56 = vsyncadd [#allocation9], %s55
      %s57 = sshll.u32 [#allocation10], 4
      %s58 = int_to_ptr.vmem [resolvable:$true] %s57
      %63 = dma.hbm_to_vmem [thread:$0]  %s5, 512, %s58, [#allocation9], 128, 128, 8
    $region25: #{ner_bilstm_crf_forward.1} parent=1 // pred_fallthru
      _
    // Predicated region
    $region26: #{ner_bilstm_crf_forward.1} parent=1 // pred_check
      _
    $region27: #{ner_bilstm_crf_forward.1} parent=1 // pred_check_branch
      %65 = sbr.rel (0) target = $region29
    $region28: #{ner_bilstm_crf_forward.1} parent=1 // pred_region
      %s67 = ssub.s32 16, 16
      %68 = vsyncadd [#allocation12], %s67
      %s70 = sshll.u32 [#allocation11], 4
      %s71 = int_to_ptr.vmem [resolvable:$true] %s70
      %73 = dma.hbm_to_vmem [thread:$0]  %s6, 16, %s71, [#allocation12]
    $region29: #{ner_bilstm_crf_forward.1} parent=1 // pred_fallthru
      _
    // Predicated region
    $region30: #{ner_bilstm_crf_forward.1} parent=1 // pred_check
      _
    $region31: #{ner_bilstm_crf_forward.1} parent=1 // pred_check_branch
      %75 = sbr.rel (0) target = $region33
    $region32: #{ner_bilstm_crf_forward.1} parent=1 // pred_region
      _
    $region33: #{ner_bilstm_crf_forward.1} parent=1 // pred_fallthru
      _
    // Predicated region
    $region34: #{ner_bilstm_crf_forward.1} parent=1 // pred_check
      _
    $region35: #{ner_bilstm_crf_forward.1} parent=1 // pred_check_branch
      %77 = sbr.rel (0) target = $region37
    $region36: #{ner_bilstm_crf_forward.1} parent=1 // pred_region
      %s79 = ssub.s32 16, 16
      %80 = vsyncadd [#allocation12], %s79
      %s82 = sshll.u32 [#allocation13], 4
      %s83 = int_to_ptr.vmem [resolvable:$true] %s82
      %85 = dma.hbm_to_vmem [thread:$0]  %s8, 16, %s83, [#allocation12]
    $region37: #{ner_bilstm_crf_forward.1} parent=1 // pred_fallthru
      _
    // Predicated region
    $region38: #{ner_bilstm_crf_forward.1} parent=1 // pred_check
      _
    $region39: #{ner_bilstm_crf_forward.1} parent=1 // pred_check_branch
      %87 = sbr.rel (0) target = $region41
    $region40: #{ner_bilstm_crf_forward.1} parent=1 // pred_region
      %s89 = ssub.s32 16, 16
      %90 = vsyncadd [#allocation15], %s89
      %s92 = sshll.u32 [#allocation14], 4
      %s93 = int_to_ptr.vmem [resolvable:$true] %s92
      %95 = dma.hbm_to_vmem [thread:$0]  %s9, 16, %s93, [#allocation15]
    $region41: #{ner_bilstm_crf_forward.1} parent=1 // pred_fallthru
      _
    // Predicated region
    $region42: #{ner_bilstm_crf_forward.1} parent=1 // pred_check
      _
    $region43: #{ner_bilstm_crf_forward.1} parent=1 // pred_check_branch
      %97 = sbr.rel (0) target = $region45
    $region44: #{ner_bilstm_crf_forward.1} parent=1 // pred_region
      %s99 = ssub.s32 16, 16
      %100 = vsyncadd [#allocation15], %s99
      %s102 = sshll.u32 [#allocation16], 4
      %s103 = int_to_ptr.vmem [resolvable:$true] %s102
      %105 = dma.hbm_to_vmem [thread:$0]  %s10, 16, %s103, [#allocation15]
    $region45: #{ner_bilstm_crf_forward.1} parent=1 // pred_fallthru
      _
    // Predicated region
    $region46: #{ner_bilstm_crf_forward.1} parent=1 // pred_check
      _
    $region47: #{ner_bilstm_crf_forward.1} parent=1 // pred_check_branch
      %107 = sbr.rel (0) target = $region49
    $region48: #{ner_bilstm_crf_forward.1} parent=1 // pred_region
      %s109 = ssub.s32 128, 128
      %110 = vsyncadd [#allocation18], %s109
      %s112 = sshll.u32 [#allocation17], 4
      %s113 = int_to_ptr.vmem [resolvable:$true] %s112
      %115 = dma.hbm_to_vmem [thread:$0]  %s11, 128, %s113, [#allocation18]
    $region49: #{ner_bilstm_crf_forward.1} parent=1 // pred_fallthru
      _
    // Predicated region
    $region50: #{ner_bilstm_crf_forward.1} parent=1 // pred_check
      _
    $region51: #{ner_bilstm_crf_forward.1} parent=1 // pred_check_branch
      %117 = sbr.rel (0) target = $region53
    $region52: #{ner_bilstm_crf_forward.1} parent=1 // pred_region
      %118 = dma.done [#allocation7], 16
    $region53: #{ner_bilstm_crf_forward.1} parent=1 // pred_fallthru
      _
    // Predicated region
    $region54: #{ner_bilstm_crf_forward.1} parent=1 // pred_check
      _
    $region55: #{ner_bilstm_crf_forward.1} parent=1 // pred_check_branch
      %120 = sbr.rel (0) target = $region57
    $region56: #{ner_bilstm_crf_forward.1} parent=1 // pred_region
      %121 = dma.done [#allocation9], 512
    $region57: #{ner_bilstm_crf_forward.1} parent=1 // pred_fallthru
      _
    // Predicated region
    $region58: #{ner_bilstm_crf_forward.1} parent=1 // pred_check
      _
    $region59: #{ner_bilstm_crf_forward.1} parent=1 // pred_check_branch
      %123 = sbr.rel (0) target = $region61
    $region60: #{ner_bilstm_crf_forward.1} parent=1 // pred_region
      %124 = dma.done [#allocation9], 512
    $region61: #{ner_bilstm_crf_forward.1} parent=1 // pred_fallthru
      _
    // Predicated region
    $region62: #{ner_bilstm_crf_forward.1} parent=1 // pred_check
      _
    $region63: #{ner_bilstm_crf_forward.1} parent=1 // pred_check_branch
      %126 = sbr.rel (0) target = $region65
    $region64: #{ner_bilstm_crf_forward.1} parent=1 // pred_region
      %127 = dma.done [#allocation12], 16
    $region65: #{ner_bilstm_crf_forward.1} parent=1 // pred_fallthru
      _
    // Predicated region
    $region66: #{ner_bilstm_crf_forward.1} parent=1 // pred_check
      _
    $region67: #{ner_bilstm_crf_forward.1} parent=1 // pred_check_branch
      %129 = sbr.rel (0) target = $region69
    $region68: #{ner_bilstm_crf_forward.1} parent=1 // pred_region
      %130 = dma.done [#allocation12], 16
    $region69: #{ner_bilstm_crf_forward.1} parent=1 // pred_fallthru
      _
    // Predicated region
    $region70: #{ner_bilstm_crf_forward.1} parent=1 // pred_check
      _
    $region71: #{ner_bilstm_crf_forward.1} parent=1 // pred_check_branch
      %132 = sbr.rel (0) target = $region73
    $region72: #{ner_bilstm_crf_forward.1} parent=1 // pred_region
      %133 = dma.done [#allocation15], 16
    $region73: #{ner_bilstm_crf_forward.1} parent=1 // pred_fallthru
      _
    // Predicated region
    $region74: #{ner_bilstm_crf_forward.1} parent=1 // pred_check
      _
    $region75: #{ner_bilstm_crf_forward.1} parent=1 // pred_check_branch
      %135 = sbr.rel (0) target = $region77
    $region76: #{ner_bilstm_crf_forward.1} parent=1 // pred_region
      %136 = dma.done [#allocation15], 16
    $region77: #{ner_bilstm_crf_forward.1} parent=1 // pred_fallthru
      _
    // Predicated region
    $region78: #{ner_bilstm_crf_forward.1} parent=1 // pred_check
      _
    $region79: #{ner_bilstm_crf_forward.1} parent=1 // pred_check_branch
      %138 = sbr.rel (0) target = $region81
    $region80: #{ner_bilstm_crf_forward.1} parent=1 // pred_region
      %139 = dma.done [#allocation18], 128
    $region81: #{ner_bilstm_crf_forward.1} parent=1 // pred_fallthru
      _
    %v140 = vld [vmem:[%s0] sm:$0xff]
    %v141 = vld [vmem:[%s0 + $0x8] sm:$0xff]
    %v142 = vlaneseq
    %v143 = vand.u32 %v142, 127
    %144 = vset.pattern.permute.xlu0 0
    %145 = vperm.xlu0 %144, %v140
    %v146 = vpop.permute.xlu0 %145
    %147 = vset.pattern.permute.xlu0 0
    %148 = vperm.xlu0 %147, %v141
    %v149 = vpop.permute.xlu0 %148
    %vm150 = vcmp.eq.s32.totalorder %v143, %v146
    %vm151 = vcmp.eq.s32.totalorder %v143, %v149
    %v152 = vsel %vm150, 1, 0
    %v153 = vsel %vm151, 1, 0
    %v154 = vcvt.s32.f32 %v152
    %v155 = vcvt.s32.f32 %v153
    %v156 = vld [vmem:[%s1] sm:$0xff]
    %v157 = vld [vmem:[%s1 + $0x8] sm:$0xff]
    %v158 = vld [vmem:[%s1 + $0x10] sm:$0xff]
    %v159 = vld [vmem:[%s1 + $0x18] sm:$0xff]
    %v160 = vld [vmem:[%s1 + $0x20] sm:$0xff]
    %v161 = vld [vmem:[%s1 + $0x28] sm:$0xff]
    %v162 = vld [vmem:[%s1 + $0x30] sm:$0x3]
    %vm163 = vcmask 408576
    %v165 = vsel %vm163, %v154, 0
    %v168 = vsel %vm163, %v155, 0
    %vm170 = vcmask 1041408
    %v172 = vsel %vm170, %v162, 0
    %174 = vmatprep.subr.mxu0 0.0
    %175 = vmatpush1.msra.mxu0 0.0
    %176 = vmatprep.subr.mxu0 0.0
    %177 = vmatpush1.msra.mxu0 0.0
    %178 = vmatprep.subr.mxu0 0.0
    %179 = vmatpush1.msra.mxu0 0.0
    %180 = vmatprep.subr.mxu0 0.0
    %181 = vmatpush1.msra.mxu0 0.0
    %182 = vmatprep.subr.mxu0 0.0
    %183 = vmatpush1.msra.mxu0 0.0
    %184 = vmatprep.subr.mxu0 0.0
    %185 = vmatpush1.msra.mxu0 0.0
    %186 = vmatprep.subr.mxu0 0.0
    %187 = vmatpush1.msra.mxu0 0.0
    %188 = vmatprep.subr.mxu0 0.0
    %189 = vmatpush1.msra.mxu0 0.0
    %190 = vmatprep.subr.mxu0 0.0
    %191 = vmatpush1.msra.mxu0 0.0
    %192 = vmatprep.subr.mxu0 0.0
    %193 = vmatpush1.msra.mxu0 %v172
    %194 = vmatprep.subr.mxu0 0.0
    %195 = vmatpush1.msra.mxu0 %v161
    %196 = vmatprep.subr.mxu0 0.0
    %197 = vmatpush1.msra.mxu0 %v160
    %198 = vmatprep.subr.mxu0 0.0
    %199 = vmatpush1.msra.mxu0 %v159
    %200 = vmatprep.subr.mxu0 0.0
    %201 = vmatpush1.msra.mxu0 %v158
    %202 = vmatprep.subr.mxu0 0.0
    %203 = vmatpush1.msra.mxu0 %v157
    %204 = vmatprep.subr.mxu0 0.0
    %205 = vmatpush1.msra.mxu0 %v156
    %206 = vmatprep.subr.mxu0 0.0
    %207 = vmatpush2.msra.mxu0 0.0
    %208 = vmatprep.subr.mxu0 0.0
    %209 = vmatpush2.msra.mxu0 0.0
    %210 = vmatprep.subr.mxu0 0.0
    %211 = vmatpush2.msra.mxu0 0.0
    %212 = vmatprep.subr.mxu0 0.0
    %213 = vmatpush2.msra.mxu0 0.0
    %214 = vmatprep.subr.mxu0 0.0
    %215 = vmatpush2.msra.mxu0 0.0
    %216 = vmatprep.subr.mxu0 0.0
    %217 = vmatpush2.msra.mxu0 0.0
    %218 = vmatprep.subr.mxu0 0.0
    %219 = vmatpush2.msra.mxu0 0.0
    %220 = vmatprep.subr.mxu0 0.0
    %221 = vmatpush2.msra.mxu0 0.0
    %222 = vmatprep.subr.mxu0 0.0
    %223 = vmatpush2.msra.mxu0 0.0
    %224 = vmatprep.subr.mxu0 0.0
    %225 = vmatpush2.msra.mxu0 0.0
    %226 = vmatprep.subr.mxu0 0.0
    %227 = vmatpush2.msra.mxu0 0.0
    %228 = vmatprep.subr.mxu0 0.0
    %229 = vmatpush2.msra.mxu0 0.0
    %230 = vmatprep.subr.mxu0 0.0
    %231 = vmatpush2.msra.mxu0 0.0
    %232 = vmatprep.subr.mxu0 0.0
    %233 = vmatpush2.msra.mxu0 0.0
    %234 = vmatprep.subr.mxu0 0.0
    %235 = vmatpush2.msra.mxu0 0.0
    %236 = vmatprep.subr.mxu0 0.0
    %237 = vmatpush2.msra.mxu0 0.0
    %238 = vmatprep.mubr.f32.mxu0 0.0
    %239 = vmatmul.mubr.f32.gmra.mxu0 %v165
    %v240 = vpop.f32.mrf.mxu0
    %v241 = vadd.f32 0.0, %v240
    %v242 = vpop.f32.mrf.mxu0
    %243 = vmatprep.mubr.f32.mxu0 0.0
    %244 = vmatmul.mubr.f32.gmra.mxu0 %v168
    %v245 = vpop.f32.mrf.mxu0
    %v246 = vadd.f32 0.0, %v245
    %v247 = vpop.f32.mrf.mxu0
    %248 = vdwg.mxu0
    %249 = vst [vmem:[#allocation4] sm:$0xff] %v241
    %250 = vst [vmem:[#allocation4 + $0x8] sm:$0xff] %v246
    %vm251 = vcmp.lt.s32.totalorder %v143, 0
    %v252 = vsub.s32 0, %v143
    %v253 = vsel %vm251, %v252, %v143
    %v254 = vshrl.u32 %v253, 5
    %v255 = vand.u32 %v253, 31
    %v256 = vsub.s32 0, %v255
    %v257 = vsel %vm251, %v256, %v255
    %vm258 = vcmp.ne.s32.totalorder %v257, 0
    %vm259 = vcmp.lt.s32.totalorder %v257, 0
    %vm260 = vmand %vm259, %vm258
    %v261 = vadd.s32 %v257, 32
    %v262 = vsel %vm260, %v261, %v257
    %vm263 = vcmp.lt.s32.totalorder %v262, 16
    %vm264 = vcmp.ge.s32.totalorder %v143, 64
    %vm265 = vcmp.lt.s32.totalorder %v143, 96
    %vm266 = vmand %vm264, %vm265
    %v267 = vld [vmem:[%s2] sm:$0xff]
    %v268 = vld [vmem:[%s2 + $0x8] sm:$0xff]
    %v269 = vld [vmem:[%s2 + $0x10] sm:$0xff]
    %v270 = vld [vmem:[%s2 + $0x18] sm:$0xff]
    %v271 = vld [vmem:[#allocation6] sm:$0x1]
    %v272 = vld [vmem:[#allocation4] sm:$0x3]
    %v273 = vld [vmem:[#allocation4 + $0xe] sm:$0x3]
    %v274 = vsel %vm263, %v272, %v273
    %vm275 = vcmask 261120
    %v277 = vsel %vm275, 0.0, 0
    %279 = vmatprep.subr.mxu0 0.0
    %280 = vmatpush1.msra.mxu0 0.0
    %281 = vmatprep.subr.mxu0 0.0
    %282 = vmatpush1.msra.mxu0 0.0
    %283 = vmatprep.subr.mxu0 0.0
    %284 = vmatpush1.msra.mxu0 0.0
    %285 = vmatprep.subr.mxu0 0.0
    %286 = vmatpush1.msra.mxu0 0.0
    %287 = vmatprep.subr.mxu0 0.0
    %288 = vmatpush1.msra.mxu0 0.0
    %289 = vmatprep.subr.mxu0 0.0
    %290 = vmatpush1.msra.mxu0 0.0
    %291 = vmatprep.subr.mxu0 0.0
    %292 = vmatpush1.msra.mxu0 0.0
    %293 = vmatprep.subr.mxu0 0.0
    %294 = vmatpush1.msra.mxu0 0.0
    %295 = vmatprep.subr.mxu0 0.0
    %296 = vmatpush1.msra.mxu0 0.0
    %297 = vmatprep.subr.mxu0 0.0
    %298 = vmatpush1.msra.mxu0 0.0
    %299 = vmatprep.subr.mxu0 0.0
    %300 = vmatpush1.msra.mxu0 0.0
    %301 = vmatprep.subr.mxu0 0.0
    %302 = vmatpush1.msra.mxu0 0.0
    %303 = vmatprep.subr.mxu0 0.0
    %304 = vmatpush1.msra.mxu0 %v270
    %305 = vmatprep.subr.mxu0 0.0
    %306 = vmatpush1.msra.mxu0 %v269
    %307 = vmatprep.subr.mxu0 0.0
    %308 = vmatpush1.msra.mxu0 %v268
    %309 = vmatprep.subr.mxu0 0.0
    %310 = vmatpush1.msra.mxu0 %v267
    %311 = vmatprep.subr.mxu0 0.0
    %312 = vmatpush2.msra.mxu0 0.0
    %313 = vmatprep.subr.mxu0 0.0
    %314 = vmatpush2.msra.mxu0 0.0
    %315 = vmatprep.subr.mxu0 0.0
    %316 = vmatpush2.msra.mxu0 0.0
    %317 = vmatprep.subr.mxu0 0.0
    %318 = vmatpush2.msra.mxu0 0.0
    %319 = vmatprep.subr.mxu0 0.0
    %320 = vmatpush2.msra.mxu0 0.0
    %321 = vmatprep.subr.mxu0 0.0
    %322 = vmatpush2.msra.mxu0 0.0
    %323 = vmatprep.subr.mxu0 0.0
    %324 = vmatpush2.msra.mxu0 0.0
    %325 = vmatprep.subr.mxu0 0.0
    %326 = vmatpush2.msra.mxu0 0.0
    %327 = vmatprep.subr.mxu0 0.0
    %328 = vmatpush2.msra.mxu0 0.0
    %329 = vmatprep.subr.mxu0 0.0
    %330 = vmatpush2.msra.mxu0 0.0
    %331 = vmatprep.subr.mxu0 0.0
    %332 = vmatpush2.msra.mxu0 0.0
    %333 = vmatprep.subr.mxu0 0.0
    %334 = vmatpush2.msra.mxu0 0.0
    %335 = vmatprep.subr.mxu0 0.0
    %336 = vmatpush2.msra.mxu0 0.0
    %337 = vmatprep.subr.mxu0 0.0
    %338 = vmatpush2.msra.mxu0 0.0
    %339 = vmatprep.subr.mxu0 0.0
    %340 = vmatpush2.msra.mxu0 0.0
    %341 = vmatprep.subr.mxu0 0.0
    %342 = vmatpush2.msra.mxu0 0.0
    %343 = vmatprep.mubr.f32.mxu0 0.0
    %344 = vmatmul.mubr.f32.gmra.mxu0 %v277
    %v345 = vpop.f32.mrf.mxu0
    %v346 = vadd.f32 0.0, %v345
    %v347 = vpop.f32.mrf.mxu0
    %348 = vdwg.mxu0
    %v349 = vadd.f32 %v274, %v346
    %v351 = vlaneseq
    %v352 = vshrl.u32 %v351, 7
    %v353 = vsub.s32 0, %v352
    %v354 = vrot.slane %v271, %v353
    %v356 = vadd.f32 %v349, %v354
    %v357 = vxor.u32 %v356, 2147483648
    %v358 = vmul.f32 %v357, 1.442695
    %v359 = vpow.pop %v358
    %v360 = vadd.f32 %v359, 1.0
    %v361 = vrcp.pop %v360
    %v362 = vmul.f32 1.0, %v361
    %v363 = vtanh.pop %v356
    %v364 = vsel %vm266, %v363, %v362
    %v365 = vmul.f32 %v364, 0.0
    %367 = vrot.lane.b32.xlu0 %v364, 64
    %v368 = vpop.permute.xlu0 %367
    %v370 = vmul.f32 %v364, %v368
    %372 = vrot.lane.b32.xlu0 %v370, 32
    %v373 = vpop.permute.xlu0 %372
    %v375 = vadd.f32 %v365, %v373
    %v376 = vtanh.pop %v375
    %378 = vrot.lane.b32.xlu0 %v376, 64
    %v379 = vpop.permute.xlu0 %378
    %v381 = vmul.f32 %v364, %v379
    %383 = vrot.lane.b32.xlu0 %v381, 32
    %v384 = vpop.permute.xlu0 %383
    %vm386 = vcmask 123904
    %387 = vst.msk [vmem:[#allocation2] sm:$0x3] %vm386, %v384
    %vm388 = vcmask 255104
    %389 = vst.msk [vmem:[#allocation2 + $0xe] sm:$0x3] %vm388, %v384
    %v390 = vld [vmem:[#allocation4 + $0x2] sm:$0x3]
    %v391 = vld [vmem:[#allocation4 + $0xc] sm:$0x3]
    %v392 = vsel %vm263, %v390, %v391
    %v393 = vsel %vm275, %v384, 0
    %395 = vmatprep.subr.mxu0 0.0
    %396 = vmatpush1.msra.mxu0 0.0
    %397 = vmatprep.subr.mxu0 0.0
    %398 = vmatpush1.msra.mxu0 0.0
    %399 = vmatprep.subr.mxu0 0.0
    %400 = vmatpush1.msra.mxu0 0.0
    %401 = vmatprep.subr.mxu0 0.0
    %402 = vmatpush1.msra.mxu0 0.0
    %403 = vmatprep.subr.mxu0 0.0
    %404 = vmatpush1.msra.mxu0 0.0
    %405 = vmatprep.subr.mxu0 0.0
    %406 = vmatpush1.msra.mxu0 0.0
    %407 = vmatprep.subr.mxu0 0.0
    %408 = vmatpush1.msra.mxu0 0.0
    %409 = vmatprep.subr.mxu0 0.0
    %410 = vmatpush1.msra.mxu0 0.0
    %411 = vmatprep.subr.mxu0 0.0
    %412 = vmatpush1.msra.mxu0 0.0
    %413 = vmatprep.subr.mxu0 0.0
    %414 = vmatpush1.msra.mxu0 0.0
    %415 = vmatprep.subr.mxu0 0.0
    %416 = vmatpush1.msra.mxu0 0.0
    %417 = vmatprep.subr.mxu0 0.0
    %418 = vmatpush1.msra.mxu0 0.0
    %419 = vmatprep.subr.mxu0 0.0
    %420 = vmatpush1.msra.mxu0 %v270
    %421 = vmatprep.subr.mxu0 0.0
    %422 = vmatpush1.msra.mxu0 %v269
    %423 = vmatprep.subr.mxu0 0.0
    %424 = vmatpush1.msra.mxu0 %v268
    %425 = vmatprep.subr.mxu0 0.0
    %426 = vmatpush1.msra.mxu0 %v267
    %427 = vmatprep.subr.mxu0 0.0
    %428 = vmatpush2.msra.mxu0 0.0
    %429 = vmatprep.subr.mxu0 0.0
    %430 = vmatpush2.msra.mxu0 0.0
    %431 = vmatprep.subr.mxu0 0.0
    %432 = vmatpush2.msra.mxu0 0.0
    %433 = vmatprep.subr.mxu0 0.0
    %434 = vmatpush2.msra.mxu0 0.0
    %435 = vmatprep.subr.mxu0 0.0
    %436 = vmatpush2.msra.mxu0 0.0
    %437 = vmatprep.subr.mxu0 0.0
    %438 = vmatpush2.msra.mxu0 0.0
    %439 = vmatprep.subr.mxu0 0.0
    %440 = vmatpush2.msra.mxu0 0.0
    %441 = vmatprep.subr.mxu0 0.0
    %442 = vmatpush2.msra.mxu0 0.0
    %443 = vmatprep.subr.mxu0 0.0
    %444 = vmatpush2.msra.mxu0 0.0
    %445 = vmatprep.subr.mxu0 0.0
    %446 = vmatpush2.msra.mxu0 0.0
    %447 = vmatprep.subr.mxu0 0.0
    %448 = vmatpush2.msra.mxu0 0.0
    %449 = vmatprep.subr.mxu0 0.0
    %450 = vmatpush2.msra.mxu0 0.0
    %451 = vmatprep.subr.mxu0 0.0
    %452 = vmatpush2.msra.mxu0 0.0
    %453 = vmatprep.subr.mxu0 0.0
    %454 = vmatpush2.msra.mxu0 0.0
    %455 = vmatprep.subr.mxu0 0.0
    %456 = vmatpush2.msra.mxu0 0.0
    %457 = vmatprep.subr.mxu0 0.0
    %458 = vmatpush2.msra.mxu0 0.0
    %459 = vmatprep.mubr.f32.mxu0 0.0
    %460 = vmatmul.mubr.f32.gmra.mxu0 %v393
    %v461 = vpop.f32.mrf.mxu0
    %v462 = vadd.f32 0.0, %v461
    %v463 = vpop.f32.mrf.mxu0
    %464 = vdwg.mxu0
    %v465 = vadd.f32 %v392, %v462
    %v466 = vadd.f32 %v465, %v354
    %v467 = vxor.u32 %v466, 2147483648
    %v468 = vmul.f32 %v467, 1.442695
    %v469 = vpow.pop %v468
    %v470 = vadd.f32 %v469, 1.0
    %v471 = vrcp.pop %v470
    %v472 = vmul.f32 1.0, %v471
    %v473 = vtanh.pop %v466
    %v474 = vsel %vm266, %v473, %v472
    %v475 = vmul.f32 %v474, %v375
    %477 = vrot.lane.b32.xlu0 %v474, 64
    %v478 = vpop.permute.xlu0 %477
    %v480 = vmul.f32 %v474, %v478
    %482 = vrot.lane.b32.xlu0 %v480, 32
    %v483 = vpop.permute.xlu0 %482
    %v485 = vadd.f32 %v475, %v483
    %v486 = vtanh.pop %v485
    %488 = vrot.lane.b32.xlu0 %v486, 64
    %v489 = vpop.permute.xlu0 %488
    %v491 = vmul.f32 %v474, %v489
    %493 = vrot.lane.b32.xlu0 %v491, 32
    %v494 = vpop.permute.xlu0 %493
    %496 = vst.msk [vmem:[#allocation2 + $0x2] sm:$0x3] %vm386, %v494
    %497 = vst.msk [vmem:[#allocation2 + $0xc] sm:$0x3] %vm388, %v494
    %v498 = vld [vmem:[#allocation4 + $0x4] sm:$0x3]
    %v499 = vld [vmem:[#allocation4 + $0xa] sm:$0x3]
    %v500 = vsel %vm263, %v498, %v499
    %v501 = vsel %vm275, %v494, 0
    %503 = vmatprep.subr.mxu0 0.0
    %504 = vmatpush1.msra.mxu0 0.0
    %505 = vmatprep.subr.mxu0 0.0
    %506 = vmatpush1.msra.mxu0 0.0
    %507 = vmatprep.subr.mxu0 0.0
    %508 = vmatpush1.msra.mxu0 0.0
    %509 = vmatprep.subr.mxu0 0.0
    %510 = vmatpush1.msra.mxu0 0.0
    %511 = vmatprep.subr.mxu0 0.0
    %512 = vmatpush1.msra.mxu0 0.0
    %513 = vmatprep.subr.mxu0 0.0
    %514 = vmatpush1.msra.mxu0 0.0
    %515 = vmatprep.subr.mxu0 0.0
    %516 = vmatpush1.msra.mxu0 0.0
    %517 = vmatprep.subr.mxu0 0.0
    %518 = vmatpush1.msra.mxu0 0.0
    %519 = vmatprep.subr.mxu0 0.0
    %520 = vmatpush1.msra.mxu0 0.0
    %521 = vmatprep.subr.mxu0 0.0
    %522 = vmatpush1.msra.mxu0 0.0
    %523 = vmatprep.subr.mxu0 0.0
    %524 = vmatpush1.msra.mxu0 0.0
    %525 = vmatprep.subr.mxu0 0.0
    %526 = vmatpush1.msra.mxu0 0.0
    %527 = vmatprep.subr.mxu0 0.0
    %528 = vmatpush1.msra.mxu0 %v270
    %529 = vmatprep.subr.mxu0 0.0
    %530 = vmatpush1.msra.mxu0 %v269
    %531 = vmatprep.subr.mxu0 0.0
    %532 = vmatpush1.msra.mxu0 %v268
    %533 = vmatprep.subr.mxu0 0.0
    %534 = vmatpush1.msra.mxu0 %v267
    %535 = vmatprep.subr.mxu0 0.0
    %536 = vmatpush2.msra.mxu0 0.0
    %537 = vmatprep.subr.mxu0 0.0
    %538 = vmatpush2.msra.mxu0 0.0
    %539 = vmatprep.subr.mxu0 0.0
    %540 = vmatpush2.msra.mxu0 0.0
    %541 = vmatprep.subr.mxu0 0.0
    %542 = vmatpush2.msra.mxu0 0.0
    %543 = vmatprep.subr.mxu0 0.0
    %544 = vmatpush2.msra.mxu0 0.0
    %545 = vmatprep.subr.mxu0 0.0
    %546 = vmatpush2.msra.mxu0 0.0
    %547 = vmatprep.subr.mxu0 0.0
    %548 = vmatpush2.msra.mxu0 0.0
    %549 = vmatprep.subr.mxu0 0.0
    %550 = vmatpush2.msra.mxu0 0.0
    %551 = vmatprep.subr.mxu0 0.0
    %552 = vmatpush2.msra.mxu0 0.0
    %553 = vmatprep.subr.mxu0 0.0
    %554 = vmatpush2.msra.mxu0 0.0
    %555 = vmatprep.subr.mxu0 0.0
    %556 = vmatpush2.msra.mxu0 0.0
    %557 = vmatprep.subr.mxu0 0.0
    %558 = vmatpush2.msra.mxu0 0.0
    %559 = vmatprep.subr.mxu0 0.0
    %560 = vmatpush2.msra.mxu0 0.0
    %561 = vmatprep.subr.mxu0 0.0
    %562 = vmatpush2.msra.mxu0 0.0
    %563 = vmatprep.subr.mxu0 0.0
    %564 = vmatpush2.msra.mxu0 0.0
    %565 = vmatprep.subr.mxu0 0.0
    %566 = vmatpush2.msra.mxu0 0.0
    %567 = vmatprep.mubr.f32.mxu0 0.0
    %568 = vmatmul.mubr.f32.gmra.mxu0 %v501
    %v569 = vpop.f32.mrf.mxu0
    %v570 = vadd.f32 0.0, %v569
    %v571 = vpop.f32.mrf.mxu0
    %572 = vdwg.mxu0
    %v573 = vadd.f32 %v500, %v570
    %v574 = vadd.f32 %v573, %v354
    %v575 = vxor.u32 %v574, 2147483648
    %v576 = vmul.f32 %v575, 1.442695
    %v577 = vpow.pop %v576
    %v578 = vadd.f32 %v577, 1.0
    %v579 = vrcp.pop %v578
    %v580 = vmul.f32 1.0, %v579
    %v581 = vtanh.pop %v574
    %v582 = vsel %vm266, %v581, %v580
    %v583 = vmul.f32 %v582, %v485
    %585 = vrot.lane.b32.xlu0 %v582, 64
    %v586 = vpop.permute.xlu0 %585
    %v588 = vmul.f32 %v582, %v586
    %590 = vrot.lane.b32.xlu0 %v588, 32
    %v591 = vpop.permute.xlu0 %590
    %v593 = vadd.f32 %v583, %v591
    %v594 = vtanh.pop %v593
    %596 = vrot.lane.b32.xlu0 %v594, 64
    %v597 = vpop.permute.xlu0 %596
    %v599 = vmul.f32 %v582, %v597
    %601 = vrot.lane.b32.xlu0 %v599, 32
    %v602 = vpop.permute.xlu0 %601
    %604 = vst.msk [vmem:[#allocation2 + $0x4] sm:$0x3] %vm386, %v602
    %605 = vst.msk [vmem:[#allocation2 + $0xa] sm:$0x3] %vm388, %v602
    %v606 = vld [vmem:[#allocation4 + $0x6] sm:$0x3]
    %v607 = vld [vmem:[#allocation4 + $0x8] sm:$0x3]
    %v608 = vsel %vm263, %v606, %v607
    %v609 = vsel %vm275, %v602, 0
    %611 = vmatprep.subr.mxu0 0.0
    %612 = vmatpush1.msra.mxu0 0.0
    %613 = vmatprep.subr.mxu0 0.0
    %614 = vmatpush1.msra.mxu0 0.0
    %615 = vmatprep.subr.mxu0 0.0
    %616 = vmatpush1.msra.mxu0 0.0
    %617 = vmatprep.subr.mxu0 0.0
    %618 = vmatpush1.msra.mxu0 0.0
    %619 = vmatprep.subr.mxu0 0.0
    %620 = vmatpush1.msra.mxu0 0.0
    %621 = vmatprep.subr.mxu0 0.0
    %622 = vmatpush1.msra.mxu0 0.0
    %623 = vmatprep.subr.mxu0 0.0
    %624 = vmatpush1.msra.mxu0 0.0
    %625 = vmatprep.subr.mxu0 0.0
    %626 = vmatpush1.msra.mxu0 0.0
    %627 = vmatprep.subr.mxu0 0.0
    %628 = vmatpush1.msra.mxu0 0.0
    %629 = vmatprep.subr.mxu0 0.0
    %630 = vmatpush1.msra.mxu0 0.0
    %631 = vmatprep.subr.mxu0 0.0
    %632 = vmatpush1.msra.mxu0 0.0
    %633 = vmatprep.subr.mxu0 0.0
    %634 = vmatpush1.msra.mxu0 0.0
    %635 = vmatprep.subr.mxu0 0.0
    %636 = vmatpush1.msra.mxu0 %v270
    %637 = vmatprep.subr.mxu0 0.0
    %638 = vmatpush1.msra.mxu0 %v269
    %639 = vmatprep.subr.mxu0 0.0
    %640 = vmatpush1.msra.mxu0 %v268
    %641 = vmatprep.subr.mxu0 0.0
    %642 = vmatpush1.msra.mxu0 %v267
    %643 = vmatprep.subr.mxu0 0.0
    %644 = vmatpush2.msra.mxu0 0.0
    %645 = vmatprep.subr.mxu0 0.0
    %646 = vmatpush2.msra.mxu0 0.0
    %647 = vmatprep.subr.mxu0 0.0
    %648 = vmatpush2.msra.mxu0 0.0
    %649 = vmatprep.subr.mxu0 0.0
    %650 = vmatpush2.msra.mxu0 0.0
    %651 = vmatprep.subr.mxu0 0.0
    %652 = vmatpush2.msra.mxu0 0.0
    %653 = vmatprep.subr.mxu0 0.0
    %654 = vmatpush2.msra.mxu0 0.0
    %655 = vmatprep.subr.mxu0 0.0
    %656 = vmatpush2.msra.mxu0 0.0
    %657 = vmatprep.subr.mxu0 0.0
    %658 = vmatpush2.msra.mxu0 0.0
    %659 = vmatprep.subr.mxu0 0.0
    %660 = vmatpush2.msra.mxu0 0.0
    %661 = vmatprep.subr.mxu0 0.0
    %662 = vmatpush2.msra.mxu0 0.0
    %663 = vmatprep.subr.mxu0 0.0
    %664 = vmatpush2.msra.mxu0 0.0
    %665 = vmatprep.subr.mxu0 0.0
    %666 = vmatpush2.msra.mxu0 0.0
    %667 = vmatprep.subr.mxu0 0.0
    %668 = vmatpush2.msra.mxu0 0.0
    %669 = vmatprep.subr.mxu0 0.0
    %670 = vmatpush2.msra.mxu0 0.0
    %671 = vmatprep.subr.mxu0 0.0
    %672 = vmatpush2.msra.mxu0 0.0
    %673 = vmatprep.subr.mxu0 0.0
    %674 = vmatpush2.msra.mxu0 0.0
    %675 = vmatprep.mubr.f32.mxu0 0.0
    %676 = vmatmul.mubr.f32.gmra.mxu0 %v609
    %v677 = vpop.f32.mrf.mxu0
    %v678 = vadd.f32 0.0, %v677
    %v679 = vpop.f32.mrf.mxu0
    %680 = vdwg.mxu0
    %v681 = vadd.f32 %v608, %v678
    %v682 = vadd.f32 %v681, %v354
    %v683 = vxor.u32 %v682, 2147483648
    %v684 = vmul.f32 %v683, 1.442695
    %v685 = vpow.pop %v684
    %v686 = vadd.f32 %v685, 1.0
    %v687 = vrcp.pop %v686
    %v688 = vmul.f32 1.0, %v687
    %v689 = vtanh.pop %v682
    %v690 = vsel %vm266, %v689, %v688
    %v691 = vmul.f32 %v690, %v593
    %693 = vrot.lane.b32.xlu0 %v690, 64
    %v694 = vpop.permute.xlu0 %693
    %v696 = vmul.f32 %v690, %v694
    %698 = vrot.lane.b32.xlu0 %v696, 32
    %v699 = vpop.permute.xlu0 %698
    %v701 = vadd.f32 %v691, %v699
    %v702 = vtanh.pop %v701
    %704 = vrot.lane.b32.xlu0 %v702, 64
    %v705 = vpop.permute.xlu0 %704
    %v707 = vmul.f32 %v690, %v705
    %709 = vrot.lane.b32.xlu0 %v707, 32
    %v710 = vpop.permute.xlu0 %709
    %712 = vst.msk [vmem:[#allocation2 + $0x6] sm:$0x3] %vm386, %v710
    %713 = vst.msk [vmem:[#allocation2 + $0x8] sm:$0x3] %vm388, %v710
    %v714 = vld [vmem:[#allocation4 + $0x8] sm:$0x3]
    %v715 = vld [vmem:[#allocation4 + $0x6] sm:$0x3]
    %v716 = vsel %vm263, %v714, %v715
    %v717 = vsel %vm275, %v710, 0
    %719 = vmatprep.subr.mxu0 0.0
    %720 = vmatpush1.msra.mxu0 0.0
    %721 = vmatprep.subr.mxu0 0.0
    %722 = vmatpush1.msra.mxu0 0.0
    %723 = vmatprep.subr.mxu0 0.0
    %724 = vmatpush1.msra.mxu0 0.0
    %725 = vmatprep.subr.mxu0 0.0
    %726 = vmatpush1.msra.mxu0 0.0
    %727 = vmatprep.subr.mxu0 0.0
    %728 = vmatpush1.msra.mxu0 0.0
    %729 = vmatprep.subr.mxu0 0.0
    %730 = vmatpush1.msra.mxu0 0.0
    %731 = vmatprep.subr.mxu0 0.0
    %732 = vmatpush1.msra.mxu0 0.0
    %733 = vmatprep.subr.mxu0 0.0
    %734 = vmatpush1.msra.mxu0 0.0
    %735 = vmatprep.subr.mxu0 0.0
    %736 = vmatpush1.msra.mxu0 0.0
    %737 = vmatprep.subr.mxu0 0.0
    %738 = vmatpush1.msra.mxu0 0.0
    %739 = vmatprep.subr.mxu0 0.0
    %740 = vmatpush1.msra.mxu0 0.0
    %741 = vmatprep.subr.mxu0 0.0
    %742 = vmatpush1.msra.mxu0 0.0
    %743 = vmatprep.subr.mxu0 0.0
    %744 = vmatpush1.msra.mxu0 %v270
    %745 = vmatprep.subr.mxu0 0.0
    %746 = vmatpush1.msra.mxu0 %v269
    %747 = vmatprep.subr.mxu0 0.0
    %748 = vmatpush1.msra.mxu0 %v268
    %749 = vmatprep.subr.mxu0 0.0
    %750 = vmatpush1.msra.mxu0 %v267
    %751 = vmatprep.subr.mxu0 0.0
    %752 = vmatpush2.msra.mxu0 0.0
    %753 = vmatprep.subr.mxu0 0.0
    %754 = vmatpush2.msra.mxu0 0.0
    %755 = vmatprep.subr.mxu0 0.0
    %756 = vmatpush2.msra.mxu0 0.0
    %757 = vmatprep.subr.mxu0 0.0
    %758 = vmatpush2.msra.mxu0 0.0
    %759 = vmatprep.subr.mxu0 0.0
    %760 = vmatpush2.msra.mxu0 0.0
    %761 = vmatprep.subr.mxu0 0.0
    %762 = vmatpush2.msra.mxu0 0.0
    %763 = vmatprep.subr.mxu0 0.0
    %764 = vmatpush2.msra.mxu0 0.0
    %765 = vmatprep.subr.mxu0 0.0
    %766 = vmatpush2.msra.mxu0 0.0
    %767 = vmatprep.subr.mxu0 0.0
    %768 = vmatpush2.msra.mxu0 0.0
    %769 = vmatprep.subr.mxu0 0.0
    %770 = vmatpush2.msra.mxu0 0.0
    %771 = vmatprep.subr.mxu0 0.0
    %772 = vmatpush2.msra.mxu0 0.0
    %773 = vmatprep.subr.mxu0 0.0
    %774 = vmatpush2.msra.mxu0 0.0
    %775 = vmatprep.subr.mxu0 0.0
    %776 = vmatpush2.msra.mxu0 0.0
    %777 = vmatprep.subr.mxu0 0.0
    %778 = vmatpush2.msra.mxu0 0.0
    %779 = vmatprep.subr.mxu0 0.0
    %780 = vmatpush2.msra.mxu0 0.0
    %781 = vmatprep.subr.mxu0 0.0
    %782 = vmatpush2.msra.mxu0 0.0
    %783 = vmatprep.mubr.f32.mxu0 0.0
    %784 = vmatmul.mubr.f32.gmra.mxu0 %v717
    %v785 = vpop.f32.mrf.mxu0
    %v786 = vadd.f32 0.0, %v785
    %v787 = vpop.f32.mrf.mxu0
    %788 = vdwg.mxu0
    %v789 = vadd.f32 %v716, %v786
    %v790 = vadd.f32 %v789, %v354
    %v791 = vxor.u32 %v790, 2147483648
    %v792 = vmul.f32 %v791, 1.442695
    %v793 = vpow.pop %v792
    %v794 = vadd.f32 %v793, 1.0
    %v795 = vrcp.pop %v794
    %v796 = vmul.f32 1.0, %v795
    %v797 = vtanh.pop %v790
    %v798 = vsel %vm266, %v797, %v796
    %v799 = vmul.f32 %v798, %v701
    %801 = vrot.lane.b32.xlu0 %v798, 64
    %v802 = vpop.permute.xlu0 %801
    %v804 = vmul.f32 %v798, %v802
    %806 = vrot.lane.b32.xlu0 %v804, 32
    %v807 = vpop.permute.xlu0 %806
    %v809 = vadd.f32 %v799, %v807
    %v810 = vtanh.pop %v809
    %812 = vrot.lane.b32.xlu0 %v810, 64
    %v813 = vpop.permute.xlu0 %812
    %v815 = vmul.f32 %v798, %v813
    %817 = vrot.lane.b32.xlu0 %v815, 32
    %v818 = vpop.permute.xlu0 %817
    %820 = vst.msk [vmem:[#allocation2 + $0x8] sm:$0x3] %vm386, %v818
    %821 = vst.msk [vmem:[#allocation2 + $0x6] sm:$0x3] %vm388, %v818
    %v822 = vld [vmem:[#allocation4 + $0xa] sm:$0x3]
    %v823 = vld [vmem:[#allocation4 + $0x4] sm:$0x3]
    %v824 = vsel %vm263, %v822, %v823
    %v825 = vsel %vm275, %v818, 0
    %827 = vmatprep.subr.mxu0 0.0
    %828 = vmatpush1.msra.mxu0 0.0
    %829 = vmatprep.subr.mxu0 0.0
    %830 = vmatpush1.msra.mxu0 0.0
    %831 = vmatprep.subr.mxu0 0.0
    %832 = vmatpush1.msra.mxu0 0.0
    %833 = vmatprep.subr.mxu0 0.0
    %834 = vmatpush1.msra.mxu0 0.0
    %835 = vmatprep.subr.mxu0 0.0
    %836 = vmatpush1.msra.mxu0 0.0
    %837 = vmatprep.subr.mxu0 0.0
    %838 = vmatpush1.msra.mxu0 0.0
    %839 = vmatprep.subr.mxu0 0.0
    %840 = vmatpush1.msra.mxu0 0.0
    %841 = vmatprep.subr.mxu0 0.0
    %842 = vmatpush1.msra.mxu0 0.0
    %843 = vmatprep.subr.mxu0 0.0
    %844 = vmatpush1.msra.mxu0 0.0
    %845 = vmatprep.subr.mxu0 0.0
    %846 = vmatpush1.msra.mxu0 0.0
    %847 = vmatprep.subr.mxu0 0.0
    %848 = vmatpush1.msra.mxu0 0.0
    %849 = vmatprep.subr.mxu0 0.0
    %850 = vmatpush1.msra.mxu0 0.0
    %851 = vmatprep.subr.mxu0 0.0
    %852 = vmatpush1.msra.mxu0 %v270
    %853 = vmatprep.subr.mxu0 0.0
    %854 = vmatpush1.msra.mxu0 %v269
    %855 = vmatprep.subr.mxu0 0.0
    %856 = vmatpush1.msra.mxu0 %v268
    %857 = vmatprep.subr.mxu0 0.0
    %858 = vmatpush1.msra.mxu0 %v267
    %859 = vmatprep.subr.mxu0 0.0
    %860 = vmatpush2.msra.mxu0 0.0
    %861 = vmatprep.subr.mxu0 0.0
    %862 = vmatpush2.msra.mxu0 0.0
    %863 = vmatprep.subr.mxu0 0.0
    %864 = vmatpush2.msra.mxu0 0.0
    %865 = vmatprep.subr.mxu0 0.0
    %866 = vmatpush2.msra.mxu0 0.0
    %867 = vmatprep.subr.mxu0 0.0
    %868 = vmatpush2.msra.mxu0 0.0
    %869 = vmatprep.subr.mxu0 0.0
    %870 = vmatpush2.msra.mxu0 0.0
    %871 = vmatprep.subr.mxu0 0.0
    %872 = vmatpush2.msra.mxu0 0.0
    %873 = vmatprep.subr.mxu0 0.0
    %874 = vmatpush2.msra.mxu0 0.0
    %875 = vmatprep.subr.mxu0 0.0
    %876 = vmatpush2.msra.mxu0 0.0
    %877 = vmatprep.subr.mxu0 0.0
    %878 = vmatpush2.msra.mxu0 0.0
    %879 = vmatprep.subr.mxu0 0.0
    %880 = vmatpush2.msra.mxu0 0.0
    %881 = vmatprep.subr.mxu0 0.0
    %882 = vmatpush2.msra.mxu0 0.0
    %883 = vmatprep.subr.mxu0 0.0
    %884 = vmatpush2.msra.mxu0 0.0
    %885 = vmatprep.subr.mxu0 0.0
    %886 = vmatpush2.msra.mxu0 0.0
    %887 = vmatprep.subr.mxu0 0.0
    %888 = vmatpush2.msra.mxu0 0.0
    %889 = vmatprep.subr.mxu0 0.0
    %890 = vmatpush2.msra.mxu0 0.0
    %891 = vmatprep.mubr.f32.mxu0 0.0
    %892 = vmatmul.mubr.f32.gmra.mxu0 %v825
    %v893 = vpop.f32.mrf.mxu0
    %v894 = vadd.f32 0.0, %v893
    %v895 = vpop.f32.mrf.mxu0
    %896 = vdwg.mxu0
    %v897 = vadd.f32 %v824, %v894
    %v898 = vadd.f32 %v897, %v354
    %v899 = vxor.u32 %v898, 2147483648
    %v900 = vmul.f32 %v899, 1.442695
    %v901 = vpow.pop %v900
    %v902 = vadd.f32 %v901, 1.0
    %v903 = vrcp.pop %v902
    %v904 = vmul.f32 1.0, %v903
    %v905 = vtanh.pop %v898
    %v906 = vsel %vm266, %v905, %v904
    %v907 = vmul.f32 %v906, %v809
    %909 = vrot.lane.b32.xlu0 %v906, 64
    %v910 = vpop.permute.xlu0 %909
    %v912 = vmul.f32 %v906, %v910
    %914 = vrot.lane.b32.xlu0 %v912, 32
    %v915 = vpop.permute.xlu0 %914
    %v917 = vadd.f32 %v907, %v915
    %v918 = vtanh.pop %v917
    %920 = vrot.lane.b32.xlu0 %v918, 64
    %v921 = vpop.permute.xlu0 %920
    %v923 = vmul.f32 %v906, %v921
    %925 = vrot.lane.b32.xlu0 %v923, 32
    %v926 = vpop.permute.xlu0 %925
    %928 = vst.msk [vmem:[#allocation2 + $0xa] sm:$0x3] %vm386, %v926
    %929 = vst.msk [vmem:[#allocation2 + $0x4] sm:$0x3] %vm388, %v926
    %v930 = vld [vmem:[#allocation4 + $0xc] sm:$0x3]
    %v931 = vld [vmem:[#allocation4 + $0x2] sm:$0x3]
    %v932 = vsel %vm263, %v930, %v931
    %v933 = vsel %vm275, %v926, 0
    %935 = vmatprep.subr.mxu0 0.0
    %936 = vmatpush1.msra.mxu0 0.0
    %937 = vmatprep.subr.mxu0 0.0
    %938 = vmatpush1.msra.mxu0 0.0
    %939 = vmatprep.subr.mxu0 0.0
    %940 = vmatpush1.msra.mxu0 0.0
    %941 = vmatprep.subr.mxu0 0.0
    %942 = vmatpush1.msra.mxu0 0.0
    %943 = vmatprep.subr.mxu0 0.0
    %944 = vmatpush1.msra.mxu0 0.0
    %945 = vmatprep.subr.mxu0 0.0
    %946 = vmatpush1.msra.mxu0 0.0
    %947 = vmatprep.subr.mxu0 0.0
    %948 = vmatpush1.msra.mxu0 0.0
    %949 = vmatprep.subr.mxu0 0.0
    %950 = vmatpush1.msra.mxu0 0.0
    %951 = vmatprep.subr.mxu0 0.0
    %952 = vmatpush1.msra.mxu0 0.0
    %953 = vmatprep.subr.mxu0 0.0
    %954 = vmatpush1.msra.mxu0 0.0
    %955 = vmatprep.subr.mxu0 0.0
    %956 = vmatpush1.msra.mxu0 0.0
    %957 = vmatprep.subr.mxu0 0.0
    %958 = vmatpush1.msra.mxu0 0.0
    %959 = vmatprep.subr.mxu0 0.0
    %960 = vmatpush1.msra.mxu0 %v270
    %961 = vmatprep.subr.mxu0 0.0
    %962 = vmatpush1.msra.mxu0 %v269
    %963 = vmatprep.subr.mxu0 0.0
    %964 = vmatpush1.msra.mxu0 %v268
    %965 = vmatprep.subr.mxu0 0.0
    %966 = vmatpush1.msra.mxu0 %v267
    %967 = vmatprep.subr.mxu0 0.0
    %968 = vmatpush2.msra.mxu0 0.0
    %969 = vmatprep.subr.mxu0 0.0
    %970 = vmatpush2.msra.mxu0 0.0
    %971 = vmatprep.subr.mxu0 0.0
    %972 = vmatpush2.msra.mxu0 0.0
    %973 = vmatprep.subr.mxu0 0.0
    %974 = vmatpush2.msra.mxu0 0.0
    %975 = vmatprep.subr.mxu0 0.0
    %976 = vmatpush2.msra.mxu0 0.0
    %977 = vmatprep.subr.mxu0 0.0
    %978 = vmatpush2.msra.mxu0 0.0
    %979 = vmatprep.subr.mxu0 0.0
    %980 = vmatpush2.msra.mxu0 0.0
    %981 = vmatprep.subr.mxu0 0.0
    %982 = vmatpush2.msra.mxu0 0.0
    %983 = vmatprep.subr.mxu0 0.0
    %984 = vmatpush2.msra.mxu0 0.0
    %985 = vmatprep.subr.mxu0 0.0
    %986 = vmatpush2.msra.mxu0 0.0
    %987 = vmatprep.subr.mxu0 0.0
    %988 = vmatpush2.msra.mxu0 0.0
    %989 = vmatprep.subr.mxu0 0.0
    %990 = vmatpush2.msra.mxu0 0.0
    %991 = vmatprep.subr.mxu0 0.0
    %992 = vmatpush2.msra.mxu0 0.0
    %993 = vmatprep.subr.mxu0 0.0
    %994 = vmatpush2.msra.mxu0 0.0
    %995 = vmatprep.subr.mxu0 0.0
    %996 = vmatpush2.msra.mxu0 0.0
    %997 = vmatprep.subr.mxu0 0.0
    %998 = vmatpush2.msra.mxu0 0.0
    %999 = vmatprep.mubr.f32.mxu0 0.0
    %1000 = vmatmul.mubr.f32.gmra.mxu0 %v933
    %v1001 = vpop.f32.mrf.mxu0
    %v1002 = vadd.f32 0.0, %v1001
    %v1003 = vpop.f32.mrf.mxu0
    %1004 = vdwg.mxu0
    %v1005 = vadd.f32 %v932, %v1002
    %v1006 = vadd.f32 %v1005, %v354
    %v1007 = vxor.u32 %v1006, 2147483648
    %v1008 = vmul.f32 %v1007, 1.442695
    %v1009 = vpow.pop %v1008
    %v1010 = vadd.f32 %v1009, 1.0
    %v1011 = vrcp.pop %v1010
    %v1012 = vmul.f32 1.0, %v1011
    %v1013 = vtanh.pop %v1006
    %v1014 = vsel %vm266, %v1013, %v1012
    %v1015 = vmul.f32 %v1014, %v917
    %1017 = vrot.lane.b32.xlu0 %v1014, 64
    %v1018 = vpop.permute.xlu0 %1017
    %v1020 = vmul.f32 %v1014, %v1018
    %1022 = vrot.lane.b32.xlu0 %v1020, 32
    %v1023 = vpop.permute.xlu0 %1022
    %v1025 = vadd.f32 %v1015, %v1023
    %v1026 = vtanh.pop %v1025
    %1028 = vrot.lane.b32.xlu0 %v1026, 64
    %v1029 = vpop.permute.xlu0 %1028
    %v1031 = vmul.f32 %v1014, %v1029
    %1033 = vrot.lane.b32.xlu0 %v1031, 32
    %v1034 = vpop.permute.xlu0 %1033
    %1036 = vst.msk [vmem:[#allocation2 + $0xc] sm:$0x3] %vm386, %v1034
    %1037 = vst.msk [vmem:[#allocation2 + $0x2] sm:$0x3] %vm388, %v1034
    %v1038 = vld [vmem:[#allocation4 + $0xe] sm:$0x3]
    %v1039 = vld [vmem:[#allocation4] sm:$0x3]
    %v1040 = vsel %vm263, %v1038, %v1039
    %v1041 = vsel %vm275, %v1034, 0
    %1043 = vmatprep.subr.mxu0 0.0
    %1044 = vmatpush1.msra.mxu0 0.0
    %1045 = vmatprep.subr.mxu0 0.0
    %1046 = vmatpush1.msra.mxu0 0.0
    %1047 = vmatprep.subr.mxu0 0.0
    %1048 = vmatpush1.msra.mxu0 0.0
    %1049 = vmatprep.subr.mxu0 0.0
    %1050 = vmatpush1.msra.mxu0 0.0
    %1051 = vmatprep.subr.mxu0 0.0
    %1052 = vmatpush1.msra.mxu0 0.0
    %1053 = vmatprep.subr.mxu0 0.0
    %1054 = vmatpush1.msra.mxu0 0.0
    %1055 = vmatprep.subr.mxu0 0.0
    %1056 = vmatpush1.msra.mxu0 0.0
    %1057 = vmatprep.subr.mxu0 0.0
    %1058 = vmatpush1.msra.mxu0 0.0
    %1059 = vmatprep.subr.mxu0 0.0
    %1060 = vmatpush1.msra.mxu0 0.0
    %1061 = vmatprep.subr.mxu0 0.0
    %1062 = vmatpush1.msra.mxu0 0.0
    %1063 = vmatprep.subr.mxu0 0.0
    %1064 = vmatpush1.msra.mxu0 0.0
    %1065 = vmatprep.subr.mxu0 0.0
    %1066 = vmatpush1.msra.mxu0 0.0
    %1067 = vmatprep.subr.mxu0 0.0
    %1068 = vmatpush1.msra.mxu0 %v270
    %1069 = vmatprep.subr.mxu0 0.0
    %1070 = vmatpush1.msra.mxu0 %v269
    %1071 = vmatprep.subr.mxu0 0.0
    %1072 = vmatpush1.msra.mxu0 %v268
    %1073 = vmatprep.subr.mxu0 0.0
    %1074 = vmatpush1.msra.mxu0 %v267
    %1075 = vmatprep.subr.mxu0 0.0
    %1076 = vmatpush2.msra.mxu0 0.0
    %1077 = vmatprep.subr.mxu0 0.0
    %1078 = vmatpush2.msra.mxu0 0.0
    %1079 = vmatprep.subr.mxu0 0.0
    %1080 = vmatpush2.msra.mxu0 0.0
    %1081 = vmatprep.subr.mxu0 0.0
    %1082 = vmatpush2.msra.mxu0 0.0
    %1083 = vmatprep.subr.mxu0 0.0
    %1084 = vmatpush2.msra.mxu0 0.0
    %1085 = vmatprep.subr.mxu0 0.0
    %1086 = vmatpush2.msra.mxu0 0.0
    %1087 = vmatprep.subr.mxu0 0.0
    %1088 = vmatpush2.msra.mxu0 0.0
    %1089 = vmatprep.subr.mxu0 0.0
    %1090 = vmatpush2.msra.mxu0 0.0
    %1091 = vmatprep.subr.mxu0 0.0
    %1092 = vmatpush2.msra.mxu0 0.0
    %1093 = vmatprep.subr.mxu0 0.0
    %1094 = vmatpush2.msra.mxu0 0.0
    %1095 = vmatprep.subr.mxu0 0.0
    %1096 = vmatpush2.msra.mxu0 0.0
    %1097 = vmatprep.subr.mxu0 0.0
    %1098 = vmatpush2.msra.mxu0 0.0
    %1099 = vmatprep.subr.mxu0 0.0
    %1100 = vmatpush2.msra.mxu0 0.0
    %1101 = vmatprep.subr.mxu0 0.0
    %1102 = vmatpush2.msra.mxu0 0.0
    %1103 = vmatprep.subr.mxu0 0.0
    %1104 = vmatpush2.msra.mxu0 0.0
    %1105 = vmatprep.subr.mxu0 0.0
    %1106 = vmatpush2.msra.mxu0 0.0
    %1107 = vmatprep.mubr.f32.mxu0 0.0
    %1108 = vmatmul.mubr.f32.gmra.mxu0 %v1041
    %v1109 = vpop.f32.mrf.mxu0
    %v1110 = vadd.f32 0.0, %v1109
    %v1111 = vpop.f32.mrf.mxu0
    %1112 = vdwg.mxu0
    %v1113 = vadd.f32 %v1040, %v1110
    %v1114 = vadd.f32 %v1113, %v354
    %v1115 = vxor.u32 %v1114, 2147483648
    %v1116 = vmul.f32 %v1115, 1.442695
    %v1117 = vpow.pop %v1116
    %v1118 = vadd.f32 %v1117, 1.0
    %v1119 = vrcp.pop %v1118
    %v1120 = vmul.f32 1.0, %v1119
    %v1121 = vtanh.pop %v1114
    %v1122 = vsel %vm266, %v1121, %v1120
    %v1123 = vmul.f32 %v1122, %v1025
    %1125 = vrot.lane.b32.xlu0 %v1122, 64
    %v1126 = vpop.permute.xlu0 %1125
    %v1128 = vmul.f32 %v1122, %v1126
    %1130 = vrot.lane.b32.xlu0 %v1128, 32
    %v1131 = vpop.permute.xlu0 %1130
    %v1133 = vadd.f32 %v1123, %v1131
    %v1134 = vtanh.pop %v1133
    %1136 = vrot.lane.b32.xlu0 %v1134, 64
    %v1137 = vpop.permute.xlu0 %1136
    %v1139 = vmul.f32 %v1122, %v1137
    %1141 = vrot.lane.b32.xlu0 %v1139, 32
    %v1142 = vpop.permute.xlu0 %1141
    %1144 = vst.msk [vmem:[#allocation2 + $0xe] sm:$0x3] %vm386, %v1142
    %1145 = vst.msk [vmem:[#allocation2] sm:$0x3] %vm388, %v1142
    %v1146 = vld [vmem:[#allocation2] sm:$0xff]
    %v1147 = vld [vmem:[#allocation2 + $0x8] sm:$0xff]
    %v1148 = vld [vmem:[#allocation8] sm:$0xff]
    %v1149 = vld [vmem:[#allocation8 + $0x8] sm:$0xff]
    %v1150 = vld [vmem:[#allocation8 + $0x10] sm:$0xff]
    %v1151 = vld [vmem:[#allocation8 + $0x18] sm:$0xff]
    %v1153 = vsel %vm275, %v1146, 0
    %v1156 = vsel %vm275, %v1147, 0
    %1158 = vmatprep.subr.mxu0 0.0
    %1159 = vmatpush1.msra.mxu0 0.0
    %1160 = vmatprep.subr.mxu0 0.0
    %1161 = vmatpush1.msra.mxu0 0.0
    %1162 = vmatprep.subr.mxu0 0.0
    %1163 = vmatpush1.msra.mxu0 0.0
    %1164 = vmatprep.subr.mxu0 0.0
    %1165 = vmatpush1.msra.mxu0 0.0
    %1166 = vmatprep.subr.mxu0 0.0
    %1167 = vmatpush1.msra.mxu0 0.0
    %1168 = vmatprep.subr.mxu0 0.0
    %1169 = vmatpush1.msra.mxu0 0.0
    %1170 = vmatprep.subr.mxu0 0.0
    %1171 = vmatpush1.msra.mxu0 0.0
    %1172 = vmatprep.subr.mxu0 0.0
    %1173 = vmatpush1.msra.mxu0 0.0
    %1174 = vmatprep.subr.mxu0 0.0
    %1175 = vmatpush1.msra.mxu0 0.0
    %1176 = vmatprep.subr.mxu0 0.0
    %1177 = vmatpush1.msra.mxu0 0.0
    %1178 = vmatprep.subr.mxu0 0.0
    %1179 = vmatpush1.msra.mxu0 0.0
    %1180 = vmatprep.subr.mxu0 0.0
    %1181 = vmatpush1.msra.mxu0 0.0
    %1182 = vmatprep.subr.mxu0 0.0
    %1183 = vmatpush1.msra.mxu0 %v1151
    %1184 = vmatprep.subr.mxu0 0.0
    %1185 = vmatpush1.msra.mxu0 %v1150
    %1186 = vmatprep.subr.mxu0 0.0
    %1187 = vmatpush1.msra.mxu0 %v1149
    %1188 = vmatprep.subr.mxu0 0.0
    %1189 = vmatpush1.msra.mxu0 %v1148
    %1190 = vmatprep.subr.mxu0 0.0
    %1191 = vmatpush2.msra.mxu0 0.0
    %1192 = vmatprep.subr.mxu0 0.0
    %1193 = vmatpush2.msra.mxu0 0.0
    %1194 = vmatprep.subr.mxu0 0.0
    %1195 = vmatpush2.msra.mxu0 0.0
    %1196 = vmatprep.subr.mxu0 0.0
    %1197 = vmatpush2.msra.mxu0 0.0
    %1198 = vmatprep.subr.mxu0 0.0
    %1199 = vmatpush2.msra.mxu0 0.0
    %1200 = vmatprep.subr.mxu0 0.0
    %1201 = vmatpush2.msra.mxu0 0.0
    %1202 = vmatprep.subr.mxu0 0.0
    %1203 = vmatpush2.msra.mxu0 0.0
    %1204 = vmatprep.subr.mxu0 0.0
    %1205 = vmatpush2.msra.mxu0 0.0
    %1206 = vmatprep.subr.mxu0 0.0
    %1207 = vmatpush2.msra.mxu0 0.0
    %1208 = vmatprep.subr.mxu0 0.0
    %1209 = vmatpush2.msra.mxu0 0.0
    %1210 = vmatprep.subr.mxu0 0.0
    %1211 = vmatpush2.msra.mxu0 0.0
    %1212 = vmatprep.subr.mxu0 0.0
    %1213 = vmatpush2.msra.mxu0 0.0
    %1214 = vmatprep.subr.mxu0 0.0
    %1215 = vmatpush2.msra.mxu0 0.0
    %1216 = vmatprep.subr.mxu0 0.0
    %1217 = vmatpush2.msra.mxu0 0.0
    %1218 = vmatprep.subr.mxu0 0.0
    %1219 = vmatpush2.msra.mxu0 0.0
    %1220 = vmatprep.subr.mxu0 0.0
    %1221 = vmatpush2.msra.mxu0 0.0
    %1222 = vmatprep.mubr.f32.mxu0 0.0
    %1223 = vmatmul.mubr.f32.gmra.mxu0 %v1153
    %v1224 = vpop.f32.mrf.mxu0
    %v1225 = vadd.f32 0.0, %v1224
    %v1226 = vpop.f32.mrf.mxu0
    %1227 = vmatprep.mubr.f32.mxu0 0.0
    %1228 = vmatmul.mubr.f32.gmra.mxu0 %v1156
    %v1229 = vpop.f32.mrf.mxu0
    %v1230 = vadd.f32 0.0, %v1229
    %v1231 = vpop.f32.mrf.mxu0
    %1232 = vdwg.mxu0
    %1233 = vst [vmem:[#allocation4] sm:$0xff] %v1225
    %1234 = vst [vmem:[#allocation4 + $0x8] sm:$0xff] %v1230
    %v1235 = vld [vmem:[#allocation10] sm:$0xff]
    %v1236 = vld [vmem:[#allocation10 + $0x8] sm:$0xff]
    %v1237 = vld [vmem:[#allocation10 + $0x10] sm:$0xff]
    %v1238 = vld [vmem:[#allocation10 + $0x18] sm:$0xff]
    %v1239 = vld [vmem:[#allocation11] sm:$0x1]
    %v1240 = vld [vmem:[#allocation4] sm:$0x3]
    %v1241 = vld [vmem:[#allocation4 + $0xe] sm:$0x3]
    %v1242 = vsel %vm263, %v1240, %v1241
    %1243 = vmatprep.subr.mxu0 0.0
    %1244 = vmatpush1.msra.mxu0 0.0
    %1245 = vmatprep.subr.mxu0 0.0
    %1246 = vmatpush1.msra.mxu0 0.0
    %1247 = vmatprep.subr.mxu0 0.0
    %1248 = vmatpush1.msra.mxu0 0.0
    %1249 = vmatprep.subr.mxu0 0.0
    %1250 = vmatpush1.msra.mxu0 0.0
    %1251 = vmatprep.subr.mxu0 0.0
    %1252 = vmatpush1.msra.mxu0 0.0
    %1253 = vmatprep.subr.mxu0 0.0
    %1254 = vmatpush1.msra.mxu0 0.0
    %1255 = vmatprep.subr.mxu0 0.0
    %1256 = vmatpush1.msra.mxu0 0.0
    %1257 = vmatprep.subr.mxu0 0.0
    %1258 = vmatpush1.msra.mxu0 0.0
    %1259 = vmatprep.subr.mxu0 0.0
    %1260 = vmatpush1.msra.mxu0 0.0
    %1261 = vmatprep.subr.mxu0 0.0
    %1262 = vmatpush1.msra.mxu0 0.0
    %1263 = vmatprep.subr.mxu0 0.0
    %1264 = vmatpush1.msra.mxu0 0.0
    %1265 = vmatprep.subr.mxu0 0.0
    %1266 = vmatpush1.msra.mxu0 0.0
    %1267 = vmatprep.subr.mxu0 0.0
    %1268 = vmatpush1.msra.mxu0 %v1238
    %1269 = vmatprep.subr.mxu0 0.0
    %1270 = vmatpush1.msra.mxu0 %v1237
    %1271 = vmatprep.subr.mxu0 0.0
    %1272 = vmatpush1.msra.mxu0 %v1236
    %1273 = vmatprep.subr.mxu0 0.0
    %1274 = vmatpush1.msra.mxu0 %v1235
    %1275 = vmatprep.subr.mxu0 0.0
    %1276 = vmatpush2.msra.mxu0 0.0
    %1277 = vmatprep.subr.mxu0 0.0
    %1278 = vmatpush2.msra.mxu0 0.0
    %1279 = vmatprep.subr.mxu0 0.0
    %1280 = vmatpush2.msra.mxu0 0.0
    %1281 = vmatprep.subr.mxu0 0.0
    %1282 = vmatpush2.msra.mxu0 0.0
    %1283 = vmatprep.subr.mxu0 0.0
    %1284 = vmatpush2.msra.mxu0 0.0
    %1285 = vmatprep.subr.mxu0 0.0
    %1286 = vmatpush2.msra.mxu0 0.0
    %1287 = vmatprep.subr.mxu0 0.0
    %1288 = vmatpush2.msra.mxu0 0.0
    %1289 = vmatprep.subr.mxu0 0.0
    %1290 = vmatpush2.msra.mxu0 0.0
    %1291 = vmatprep.subr.mxu0 0.0
    %1292 = vmatpush2.msra.mxu0 0.0
    %1293 = vmatprep.subr.mxu0 0.0
    %1294 = vmatpush2.msra.mxu0 0.0
    %1295 = vmatprep.subr.mxu0 0.0
    %1296 = vmatpush2.msra.mxu0 0.0
    %1297 = vmatprep.subr.mxu0 0.0
    %1298 = vmatpush2.msra.mxu0 0.0
    %1299 = vmatprep.subr.mxu0 0.0
    %1300 = vmatpush2.msra.mxu0 0.0
    %1301 = vmatprep.subr.mxu0 0.0
    %1302 = vmatpush2.msra.mxu0 0.0
    %1303 = vmatprep.subr.mxu0 0.0
    %1304 = vmatpush2.msra.mxu0 0.0
    %1305 = vmatprep.subr.mxu0 0.0
    %1306 = vmatpush2.msra.mxu0 0.0
    %1307 = vmatprep.mubr.f32.mxu0 0.0
    %1308 = vmatmul.mubr.f32.gmra.mxu0 %v277
    %v1309 = vpop.f32.mrf.mxu0
    %v1310 = vadd.f32 0.0, %v1309
    %v1311 = vpop.f32.mrf.mxu0
    %1312 = vdwg.mxu0
    %v1313 = vadd.f32 %v1242, %v1310
    %v1315 = vlaneseq
    %v1316 = vshrl.u32 %v1315, 7
    %v1317 = vsub.s32 0, %v1316
    %v1318 = vrot.slane %v1239, %v1317
    %v1320 = vadd.f32 %v1313, %v1318
    %v1321 = vxor.u32 %v1320, 2147483648
    %v1322 = vmul.f32 %v1321, 1.442695
    %v1323 = vpow.pop %v1322
    %v1324 = vadd.f32 %v1323, 1.0
    %v1325 = vrcp.pop %v1324
    %v1326 = vmul.f32 1.0, %v1325
    %v1327 = vtanh.pop %v1320
    %v1328 = vsel %vm266, %v1327, %v1326
    %v1329 = vmul.f32 %v1328, 0.0
    %1331 = vrot.lane.b32.xlu0 %v1328, 64
    %v1332 = vpop.permute.xlu0 %1331
    %v1334 = vmul.f32 %v1328, %v1332
    %1336 = vrot.lane.b32.xlu0 %v1334, 32
    %v1337 = vpop.permute.xlu0 %1336
    %v1339 = vadd.f32 %v1329, %v1337
    %v1340 = vtanh.pop %v1339
    %1342 = vrot.lane.b32.xlu0 %v1340, 64
    %v1343 = vpop.permute.xlu0 %1342
    %v1345 = vmul.f32 %v1328, %v1343
    %1347 = vrot.lane.b32.xlu0 %v1345, 32
    %v1348 = vpop.permute.xlu0 %1347
    %1350 = vst.msk [vmem:[#allocation3] sm:$0x3] %vm386, %v1348
    %1351 = vst.msk [vmem:[#allocation3 + $0xe] sm:$0x3] %vm388, %v1348
    %v1352 = vld [vmem:[#allocation4 + $0x2] sm:$0x3]
    %v1353 = vld [vmem:[#allocation4 + $0xc] sm:$0x3]
    %v1354 = vsel %vm263, %v1352, %v1353
    %v1355 = vsel %vm275, %v1348, 0
    %1357 = vmatprep.subr.mxu0 0.0
    %1358 = vmatpush1.msra.mxu0 0.0
    %1359 = vmatprep.subr.mxu0 0.0
    %1360 = vmatpush1.msra.mxu0 0.0
    %1361 = vmatprep.subr.mxu0 0.0
    %1362 = vmatpush1.msra.mxu0 0.0
    %1363 = vmatprep.subr.mxu0 0.0
    %1364 = vmatpush1.msra.mxu0 0.0
    %1365 = vmatprep.subr.mxu0 0.0
    %1366 = vmatpush1.msra.mxu0 0.0
    %1367 = vmatprep.subr.mxu0 0.0
    %1368 = vmatpush1.msra.mxu0 0.0
    %1369 = vmatprep.subr.mxu0 0.0
    %1370 = vmatpush1.msra.mxu0 0.0
    %1371 = vmatprep.subr.mxu0 0.0
    %1372 = vmatpush1.msra.mxu0 0.0
    %1373 = vmatprep.subr.mxu0 0.0
    %1374 = vmatpush1.msra.mxu0 0.0
    %1375 = vmatprep.subr.mxu0 0.0
    %1376 = vmatpush1.msra.mxu0 0.0
    %1377 = vmatprep.subr.mxu0 0.0
    %1378 = vmatpush1.msra.mxu0 0.0
    %1379 = vmatprep.subr.mxu0 0.0
    %1380 = vmatpush1.msra.mxu0 0.0
    %1381 = vmatprep.subr.mxu0 0.0
    %1382 = vmatpush1.msra.mxu0 %v1238
    %1383 = vmatprep.subr.mxu0 0.0
    %1384 = vmatpush1.msra.mxu0 %v1237
    %1385 = vmatprep.subr.mxu0 0.0
    %1386 = vmatpush1.msra.mxu0 %v1236
    %1387 = vmatprep.subr.mxu0 0.0
    %1388 = vmatpush1.msra.mxu0 %v1235
    %1389 = vmatprep.subr.mxu0 0.0
    %1390 = vmatpush2.msra.mxu0 0.0
    %1391 = vmatprep.subr.mxu0 0.0
    %1392 = vmatpush2.msra.mxu0 0.0
    %1393 = vmatprep.subr.mxu0 0.0
    %1394 = vmatpush2.msra.mxu0 0.0
    %1395 = vmatprep.subr.mxu0 0.0
    %1396 = vmatpush2.msra.mxu0 0.0
    %1397 = vmatprep.subr.mxu0 0.0
    %1398 = vmatpush2.msra.mxu0 0.0
    %1399 = vmatprep.subr.mxu0 0.0
    %1400 = vmatpush2.msra.mxu0 0.0
    %1401 = vmatprep.subr.mxu0 0.0
    %1402 = vmatpush2.msra.mxu0 0.0
    %1403 = vmatprep.subr.mxu0 0.0
    %1404 = vmatpush2.msra.mxu0 0.0
    %1405 = vmatprep.subr.mxu0 0.0
    %1406 = vmatpush2.msra.mxu0 0.0
    %1407 = vmatprep.subr.mxu0 0.0
    %1408 = vmatpush2.msra.mxu0 0.0
    %1409 = vmatprep.subr.mxu0 0.0
    %1410 = vmatpush2.msra.mxu0 0.0
    %1411 = vmatprep.subr.mxu0 0.0
    %1412 = vmatpush2.msra.mxu0 0.0
    %1413 = vmatprep.subr.mxu0 0.0
    %1414 = vmatpush2.msra.mxu0 0.0
    %1415 = vmatprep.subr.mxu0 0.0
    %1416 = vmatpush2.msra.mxu0 0.0
    %1417 = vmatprep.subr.mxu0 0.0
    %1418 = vmatpush2.msra.mxu0 0.0
    %1419 = vmatprep.subr.mxu0 0.0
    %1420 = vmatpush2.msra.mxu0 0.0
    %1421 = vmatprep.mubr.f32.mxu0 0.0
    %1422 = vmatmul.mubr.f32.gmra.mxu0 %v1355
    %v1423 = vpop.f32.mrf.mxu0
    %v1424 = vadd.f32 0.0, %v1423
    %v1425 = vpop.f32.mrf.mxu0
    %1426 = vdwg.mxu0
    %v1427 = vadd.f32 %v1354, %v1424
    %v1428 = vadd.f32 %v1427, %v1318
    %v1429 = vxor.u32 %v1428, 2147483648
    %v1430 = vmul.f32 %v1429, 1.442695
    %v1431 = vpow.pop %v1430
    %v1432 = vadd.f32 %v1431, 1.0
    %v1433 = vrcp.pop %v1432
    %v1434 = vmul.f32 1.0, %v1433
    %v1435 = vtanh.pop %v1428
    %v1436 = vsel %vm266, %v1435, %v1434
    %v1437 = vmul.f32 %v1436, %v1339
    %1439 = vrot.lane.b32.xlu0 %v1436, 64
    %v1440 = vpop.permute.xlu0 %1439
    %v1442 = vmul.f32 %v1436, %v1440
    %1444 = vrot.lane.b32.xlu0 %v1442, 32
    %v1445 = vpop.permute.xlu0 %1444
    %v1447 = vadd.f32 %v1437, %v1445
    %v1448 = vtanh.pop %v1447
    %1450 = vrot.lane.b32.xlu0 %v1448, 64
    %v1451 = vpop.permute.xlu0 %1450
    %v1453 = vmul.f32 %v1436, %v1451
    %1455 = vrot.lane.b32.xlu0 %v1453, 32
    %v1456 = vpop.permute.xlu0 %1455
    %1458 = vst.msk [vmem:[#allocation3 + $0x2] sm:$0x3] %vm386, %v1456
    %1459 = vst.msk [vmem:[#allocation3 + $0xc] sm:$0x3] %vm388, %v1456
    %v1460 = vld [vmem:[#allocation4 + $0x4] sm:$0x3]
    %v1461 = vld [vmem:[#allocation4 + $0xa] sm:$0x3]
    %v1462 = vsel %vm263, %v1460, %v1461
    %v1463 = vsel %vm275, %v1456, 0
    %1465 = vmatprep.subr.mxu0 0.0
    %1466 = vmatpush1.msra.mxu0 0.0
    %1467 = vmatprep.subr.mxu0 0.0
    %1468 = vmatpush1.msra.mxu0 0.0
    %1469 = vmatprep.subr.mxu0 0.0
    %1470 = vmatpush1.msra.mxu0 0.0
    %1471 = vmatprep.subr.mxu0 0.0
    %1472 = vmatpush1.msra.mxu0 0.0
    %1473 = vmatprep.subr.mxu0 0.0
    %1474 = vmatpush1.msra.mxu0 0.0
    %1475 = vmatprep.subr.mxu0 0.0
    %1476 = vmatpush1.msra.mxu0 0.0
    %1477 = vmatprep.subr.mxu0 0.0
    %1478 = vmatpush1.msra.mxu0 0.0
    %1479 = vmatprep.subr.mxu0 0.0
    %1480 = vmatpush1.msra.mxu0 0.0
    %1481 = vmatprep.subr.mxu0 0.0
    %1482 = vmatpush1.msra.mxu0 0.0
    %1483 = vmatprep.subr.mxu0 0.0
    %1484 = vmatpush1.msra.mxu0 0.0
    %1485 = vmatprep.subr.mxu0 0.0
    %1486 = vmatpush1.msra.mxu0 0.0
    %1487 = vmatprep.subr.mxu0 0.0
    %1488 = vmatpush1.msra.mxu0 0.0
    %1489 = vmatprep.subr.mxu0 0.0
    %1490 = vmatpush1.msra.mxu0 %v1238
    %1491 = vmatprep.subr.mxu0 0.0
    %1492 = vmatpush1.msra.mxu0 %v1237
    %1493 = vmatprep.subr.mxu0 0.0
    %1494 = vmatpush1.msra.mxu0 %v1236
    %1495 = vmatprep.subr.mxu0 0.0
    %1496 = vmatpush1.msra.mxu0 %v1235
    %1497 = vmatprep.subr.mxu0 0.0
    %1498 = vmatpush2.msra.mxu0 0.0
    %1499 = vmatprep.subr.mxu0 0.0
    %1500 = vmatpush2.msra.mxu0 0.0
    %1501 = vmatprep.subr.mxu0 0.0
    %1502 = vmatpush2.msra.mxu0 0.0
    %1503 = vmatprep.subr.mxu0 0.0
    %1504 = vmatpush2.msra.mxu0 0.0
    %1505 = vmatprep.subr.mxu0 0.0
    %1506 = vmatpush2.msra.mxu0 0.0
    %1507 = vmatprep.subr.mxu0 0.0
    %1508 = vmatpush2.msra.mxu0 0.0
    %1509 = vmatprep.subr.mxu0 0.0
    %1510 = vmatpush2.msra.mxu0 0.0
    %1511 = vmatprep.subr.mxu0 0.0
    %1512 = vmatpush2.msra.mxu0 0.0
    %1513 = vmatprep.subr.mxu0 0.0
    %1514 = vmatpush2.msra.mxu0 0.0
    %1515 = vmatprep.subr.mxu0 0.0
    %1516 = vmatpush2.msra.mxu0 0.0
    %1517 = vmatprep.subr.mxu0 0.0
    %1518 = vmatpush2.msra.mxu0 0.0
    %1519 = vmatprep.subr.mxu0 0.0
    %1520 = vmatpush2.msra.mxu0 0.0
    %1521 = vmatprep.subr.mxu0 0.0
    %1522 = vmatpush2.msra.mxu0 0.0
    %1523 = vmatprep.subr.mxu0 0.0
    %1524 = vmatpush2.msra.mxu0 0.0
    %1525 = vmatprep.subr.mxu0 0.0
    %1526 = vmatpush2.msra.mxu0 0.0
    %1527 = vmatprep.subr.mxu0 0.0
    %1528 = vmatpush2.msra.mxu0 0.0
    %1529 = vmatprep.mubr.f32.mxu0 0.0
    %1530 = vmatmul.mubr.f32.gmra.mxu0 %v1463
    %v1531 = vpop.f32.mrf.mxu0
    %v1532 = vadd.f32 0.0, %v1531
    %v1533 = vpop.f32.mrf.mxu0
    %1534 = vdwg.mxu0
    %v1535 = vadd.f32 %v1462, %v1532
    %v1536 = vadd.f32 %v1535, %v1318
    %v1537 = vxor.u32 %v1536, 2147483648
    %v1538 = vmul.f32 %v1537, 1.442695
    %v1539 = vpow.pop %v1538
    %v1540 = vadd.f32 %v1539, 1.0
    %v1541 = vrcp.pop %v1540
    %v1542 = vmul.f32 1.0, %v1541
    %v1543 = vtanh.pop %v1536
    %v1544 = vsel %vm266, %v1543, %v1542
    %v1545 = vmul.f32 %v1544, %v1447
    %1547 = vrot.lane.b32.xlu0 %v1544, 64
    %v1548 = vpop.permute.xlu0 %1547
    %v1550 = vmul.f32 %v1544, %v1548
    %1552 = vrot.lane.b32.xlu0 %v1550, 32
    %v1553 = vpop.permute.xlu0 %1552
    %v1555 = vadd.f32 %v1545, %v1553
    %v1556 = vtanh.pop %v1555
    %1558 = vrot.lane.b32.xlu0 %v1556, 64
    %v1559 = vpop.permute.xlu0 %1558
    %v1561 = vmul.f32 %v1544, %v1559
    %1563 = vrot.lane.b32.xlu0 %v1561, 32
    %v1564 = vpop.permute.xlu0 %1563
    %1566 = vst.msk [vmem:[#allocation3 + $0x4] sm:$0x3] %vm386, %v1564
    %1567 = vst.msk [vmem:[#allocation3 + $0xa] sm:$0x3] %vm388, %v1564
    %v1568 = vld [vmem:[#allocation4 + $0x6] sm:$0x3]
    %v1569 = vld [vmem:[#allocation4 + $0x8] sm:$0x3]
    %v1570 = vsel %vm263, %v1568, %v1569
    %v1571 = vsel %vm275, %v1564, 0
    %1573 = vmatprep.subr.mxu0 0.0
    %1574 = vmatpush1.msra.mxu0 0.0
    %1575 = vmatprep.subr.mxu0 0.0
    %1576 = vmatpush1.msra.mxu0 0.0
    %1577 = vmatprep.subr.mxu0 0.0
    %1578 = vmatpush1.msra.mxu0 0.0
    %1579 = vmatprep.subr.mxu0 0.0
    %1580 = vmatpush1.msra.mxu0 0.0
    %1581 = vmatprep.subr.mxu0 0.0
    %1582 = vmatpush1.msra.mxu0 0.0
    %1583 = vmatprep.subr.mxu0 0.0
    %1584 = vmatpush1.msra.mxu0 0.0
    %1585 = vmatprep.subr.mxu0 0.0
    %1586 = vmatpush1.msra.mxu0 0.0
    %1587 = vmatprep.subr.mxu0 0.0
    %1588 = vmatpush1.msra.mxu0 0.0
    %1589 = vmatprep.subr.mxu0 0.0
    %1590 = vmatpush1.msra.mxu0 0.0
    %1591 = vmatprep.subr.mxu0 0.0
    %1592 = vmatpush1.msra.mxu0 0.0
    %1593 = vmatprep.subr.mxu0 0.0
    %1594 = vmatpush1.msra.mxu0 0.0
    %1595 = vmatprep.subr.mxu0 0.0
    %1596 = vmatpush1.msra.mxu0 0.0
    %1597 = vmatprep.subr.mxu0 0.0
    %1598 = vmatpush1.msra.mxu0 %v1238
    %1599 = vmatprep.subr.mxu0 0.0
    %1600 = vmatpush1.msra.mxu0 %v1237
    %1601 = vmatprep.subr.mxu0 0.0
    %1602 = vmatpush1.msra.mxu0 %v1236
    %1603 = vmatprep.subr.mxu0 0.0
    %1604 = vmatpush1.msra.mxu0 %v1235
    %1605 = vmatprep.subr.mxu0 0.0
    %1606 = vmatpush2.msra.mxu0 0.0
    %1607 = vmatprep.subr.mxu0 0.0
    %1608 = vmatpush2.msra.mxu0 0.0
    %1609 = vmatprep.subr.mxu0 0.0
    %1610 = vmatpush2.msra.mxu0 0.0
    %1611 = vmatprep.subr.mxu0 0.0
    %1612 = vmatpush2.msra.mxu0 0.0
    %1613 = vmatprep.subr.mxu0 0.0
    %1614 = vmatpush2.msra.mxu0 0.0
    %1615 = vmatprep.subr.mxu0 0.0
    %1616 = vmatpush2.msra.mxu0 0.0
    %1617 = vmatprep.subr.mxu0 0.0
    %1618 = vmatpush2.msra.mxu0 0.0
    %1619 = vmatprep.subr.mxu0 0.0
    %1620 = vmatpush2.msra.mxu0 0.0
    %1621 = vmatprep.subr.mxu0 0.0
    %1622 = vmatpush2.msra.mxu0 0.0
    %1623 = vmatprep.subr.mxu0 0.0
    %1624 = vmatpush2.msra.mxu0 0.0
    %1625 = vmatprep.subr.mxu0 0.0
    %1626 = vmatpush2.msra.mxu0 0.0
    %1627 = vmatprep.subr.mxu0 0.0
    %1628 = vmatpush2.msra.mxu0 0.0
    %1629 = vmatprep.subr.mxu0 0.0
    %1630 = vmatpush2.msra.mxu0 0.0
    %1631 = vmatprep.subr.mxu0 0.0
    %1632 = vmatpush2.msra.mxu0 0.0
    %1633 = vmatprep.subr.mxu0 0.0
    %1634 = vmatpush2.msra.mxu0 0.0
    %1635 = vmatprep.subr.mxu0 0.0
    %1636 = vmatpush2.msra.mxu0 0.0
    %1637 = vmatprep.mubr.f32.mxu0 0.0
    %1638 = vmatmul.mubr.f32.gmra.mxu0 %v1571
    %v1639 = vpop.f32.mrf.mxu0
    %v1640 = vadd.f32 0.0, %v1639
    %v1641 = vpop.f32.mrf.mxu0
    %1642 = vdwg.mxu0
    %v1643 = vadd.f32 %v1570, %v1640
    %v1644 = vadd.f32 %v1643, %v1318
    %v1645 = vxor.u32 %v1644, 2147483648
    %v1646 = vmul.f32 %v1645, 1.442695
    %v1647 = vpow.pop %v1646
    %v1648 = vadd.f32 %v1647, 1.0
    %v1649 = vrcp.pop %v1648
    %v1650 = vmul.f32 1.0, %v1649
    %v1651 = vtanh.pop %v1644
    %v1652 = vsel %vm266, %v1651, %v1650
    %v1653 = vmul.f32 %v1652, %v1555
    %1655 = vrot.lane.b32.xlu0 %v1652, 64
    %v1656 = vpop.permute.xlu0 %1655
    %v1658 = vmul.f32 %v1652, %v1656
    %1660 = vrot.lane.b32.xlu0 %v1658, 32
    %v1661 = vpop.permute.xlu0 %1660
    %v1663 = vadd.f32 %v1653, %v1661
    %v1664 = vtanh.pop %v1663
    %1666 = vrot.lane.b32.xlu0 %v1664, 64
    %v1667 = vpop.permute.xlu0 %1666
    %v1669 = vmul.f32 %v1652, %v1667
    %1671 = vrot.lane.b32.xlu0 %v1669, 32
    %v1672 = vpop.permute.xlu0 %1671
    %1674 = vst.msk [vmem:[#allocation3 + $0x6] sm:$0x3] %vm386, %v1672
    %1675 = vst.msk [vmem:[#allocation3 + $0x8] sm:$0x3] %vm388, %v1672
    %v1676 = vld [vmem:[#allocation4 + $0x8] sm:$0x3]
    %v1677 = vld [vmem:[#allocation4 + $0x6] sm:$0x3]
    %v1678 = vsel %vm263, %v1676, %v1677
    %v1679 = vsel %vm275, %v1672, 0
    %1681 = vmatprep.subr.mxu0 0.0
    %1682 = vmatpush1.msra.mxu0 0.0
    %1683 = vmatprep.subr.mxu0 0.0
    %1684 = vmatpush1.msra.mxu0 0.0
    %1685 = vmatprep.subr.mxu0 0.0
    %1686 = vmatpush1.msra.mxu0 0.0
    %1687 = vmatprep.subr.mxu0 0.0
    %1688 = vmatpush1.msra.mxu0 0.0
    %1689 = vmatprep.subr.mxu0 0.0
    %1690 = vmatpush1.msra.mxu0 0.0
    %1691 = vmatprep.subr.mxu0 0.0
    %1692 = vmatpush1.msra.mxu0 0.0
    %1693 = vmatprep.subr.mxu0 0.0
    %1694 = vmatpush1.msra.mxu0 0.0
    %1695 = vmatprep.subr.mxu0 0.0
    %1696 = vmatpush1.msra.mxu0 0.0
    %1697 = vmatprep.subr.mxu0 0.0
    %1698 = vmatpush1.msra.mxu0 0.0
    %1699 = vmatprep.subr.mxu0 0.0
    %1700 = vmatpush1.msra.mxu0 0.0
    %1701 = vmatprep.subr.mxu0 0.0
    %1702 = vmatpush1.msra.mxu0 0.0
    %1703 = vmatprep.subr.mxu0 0.0
    %1704 = vmatpush1.msra.mxu0 0.0
    %1705 = vmatprep.subr.mxu0 0.0
    %1706 = vmatpush1.msra.mxu0 %v1238
    %1707 = vmatprep.subr.mxu0 0.0
    %1708 = vmatpush1.msra.mxu0 %v1237
    %1709 = vmatprep.subr.mxu0 0.0
    %1710 = vmatpush1.msra.mxu0 %v1236
    %1711 = vmatprep.subr.mxu0 0.0
    %1712 = vmatpush1.msra.mxu0 %v1235
    %1713 = vmatprep.subr.mxu0 0.0
    %1714 = vmatpush2.msra.mxu0 0.0
    %1715 = vmatprep.subr.mxu0 0.0
    %1716 = vmatpush2.msra.mxu0 0.0
    %1717 = vmatprep.subr.mxu0 0.0
    %1718 = vmatpush2.msra.mxu0 0.0
    %1719 = vmatprep.subr.mxu0 0.0
    %1720 = vmatpush2.msra.mxu0 0.0
    %1721 = vmatprep.subr.mxu0 0.0
    %1722 = vmatpush2.msra.mxu0 0.0
    %1723 = vmatprep.subr.mxu0 0.0
    %1724 = vmatpush2.msra.mxu0 0.0
    %1725 = vmatprep.subr.mxu0 0.0
    %1726 = vmatpush2.msra.mxu0 0.0
    %1727 = vmatprep.subr.mxu0 0.0
    %1728 = vmatpush2.msra.mxu0 0.0
    %1729 = vmatprep.subr.mxu0 0.0
    %1730 = vmatpush2.msra.mxu0 0.0
    %1731 = vmatprep.subr.mxu0 0.0
    %1732 = vmatpush2.msra.mxu0 0.0
    %1733 = vmatprep.subr.mxu0 0.0
    %1734 = vmatpush2.msra.mxu0 0.0
    %1735 = vmatprep.subr.mxu0 0.0
    %1736 = vmatpush2.msra.mxu0 0.0
    %1737 = vmatprep.subr.mxu0 0.0
    %1738 = vmatpush2.msra.mxu0 0.0
    %1739 = vmatprep.subr.mxu0 0.0
    %1740 = vmatpush2.msra.mxu0 0.0
    %1741 = vmatprep.subr.mxu0 0.0
    %1742 = vmatpush2.msra.mxu0 0.0
    %1743 = vmatprep.subr.mxu0 0.0
    %1744 = vmatpush2.msra.mxu0 0.0
    %1745 = vmatprep.mubr.f32.mxu0 0.0
    %1746 = vmatmul.mubr.f32.gmra.mxu0 %v1679
    %v1747 = vpop.f32.mrf.mxu0
    %v1748 = vadd.f32 0.0, %v1747
    %v1749 = vpop.f32.mrf.mxu0
    %1750 = vdwg.mxu0
    %v1751 = vadd.f32 %v1678, %v1748
    %v1752 = vadd.f32 %v1751, %v1318
    %v1753 = vxor.u32 %v1752, 2147483648
    %v1754 = vmul.f32 %v1753, 1.442695
    %v1755 = vpow.pop %v1754
    %v1756 = vadd.f32 %v1755, 1.0
    %v1757 = vrcp.pop %v1756
    %v1758 = vmul.f32 1.0, %v1757
    %v1759 = vtanh.pop %v1752
    %v1760 = vsel %vm266, %v1759, %v1758
    %v1761 = vmul.f32 %v1760, %v1663
    %1763 = vrot.lane.b32.xlu0 %v1760, 64
    %v1764 = vpop.permute.xlu0 %1763
    %v1766 = vmul.f32 %v1760, %v1764
    %1768 = vrot.lane.b32.xlu0 %v1766, 32
    %v1769 = vpop.permute.xlu0 %1768
    %v1771 = vadd.f32 %v1761, %v1769
    %v1772 = vtanh.pop %v1771
    %1774 = vrot.lane.b32.xlu0 %v1772, 64
    %v1775 = vpop.permute.xlu0 %1774
    %v1777 = vmul.f32 %v1760, %v1775
    %1779 = vrot.lane.b32.xlu0 %v1777, 32
    %v1780 = vpop.permute.xlu0 %1779
    %1782 = vst.msk [vmem:[#allocation3 + $0x8] sm:$0x3] %vm386, %v1780
    %1783 = vst.msk [vmem:[#allocation3 + $0x6] sm:$0x3] %vm388, %v1780
    %v1784 = vld [vmem:[#allocation4 + $0xa] sm:$0x3]
    %v1785 = vld [vmem:[#allocation4 + $0x4] sm:$0x3]
    %v1786 = vsel %vm263, %v1784, %v1785
    %v1787 = vsel %vm275, %v1780, 0
    %1789 = vmatprep.subr.mxu0 0.0
    %1790 = vmatpush1.msra.mxu0 0.0
    %1791 = vmatprep.subr.mxu0 0.0
    %1792 = vmatpush1.msra.mxu0 0.0
    %1793 = vmatprep.subr.mxu0 0.0
    %1794 = vmatpush1.msra.mxu0 0.0
    %1795 = vmatprep.subr.mxu0 0.0
    %1796 = vmatpush1.msra.mxu0 0.0
    %1797 = vmatprep.subr.mxu0 0.0
    %1798 = vmatpush1.msra.mxu0 0.0
    %1799 = vmatprep.subr.mxu0 0.0
    %1800 = vmatpush1.msra.mxu0 0.0
    %1801 = vmatprep.subr.mxu0 0.0
    %1802 = vmatpush1.msra.mxu0 0.0
    %1803 = vmatprep.subr.mxu0 0.0
    %1804 = vmatpush1.msra.mxu0 0.0
    %1805 = vmatprep.subr.mxu0 0.0
    %1806 = vmatpush1.msra.mxu0 0.0
    %1807 = vmatprep.subr.mxu0 0.0
    %1808 = vmatpush1.msra.mxu0 0.0
    %1809 = vmatprep.subr.mxu0 0.0
    %1810 = vmatpush1.msra.mxu0 0.0
    %1811 = vmatprep.subr.mxu0 0.0
    %1812 = vmatpush1.msra.mxu0 0.0
    %1813 = vmatprep.subr.mxu0 0.0
    %1814 = vmatpush1.msra.mxu0 %v1238
    %1815 = vmatprep.subr.mxu0 0.0
    %1816 = vmatpush1.msra.mxu0 %v1237
    %1817 = vmatprep.subr.mxu0 0.0
    %1818 = vmatpush1.msra.mxu0 %v1236
    %1819 = vmatprep.subr.mxu0 0.0
    %1820 = vmatpush1.msra.mxu0 %v1235
    %1821 = vmatprep.subr.mxu0 0.0
    %1822 = vmatpush2.msra.mxu0 0.0
    %1823 = vmatprep.subr.mxu0 0.0
    %1824 = vmatpush2.msra.mxu0 0.0
    %1825 = vmatprep.subr.mxu0 0.0
    %1826 = vmatpush2.msra.mxu0 0.0
    %1827 = vmatprep.subr.mxu0 0.0
    %1828 = vmatpush2.msra.mxu0 0.0
    %1829 = vmatprep.subr.mxu0 0.0
    %1830 = vmatpush2.msra.mxu0 0.0
    %1831 = vmatprep.subr.mxu0 0.0
    %1832 = vmatpush2.msra.mxu0 0.0
    %1833 = vmatprep.subr.mxu0 0.0
    %1834 = vmatpush2.msra.mxu0 0.0
    %1835 = vmatprep.subr.mxu0 0.0
    %1836 = vmatpush2.msra.mxu0 0.0
    %1837 = vmatprep.subr.mxu0 0.0
    %1838 = vmatpush2.msra.mxu0 0.0
    %1839 = vmatprep.subr.mxu0 0.0
    %1840 = vmatpush2.msra.mxu0 0.0
    %1841 = vmatprep.subr.mxu0 0.0
    %1842 = vmatpush2.msra.mxu0 0.0
    %1843 = vmatprep.subr.mxu0 0.0
    %1844 = vmatpush2.msra.mxu0 0.0
    %1845 = vmatprep.subr.mxu0 0.0
    %1846 = vmatpush2.msra.mxu0 0.0
    %1847 = vmatprep.subr.mxu0 0.0
    %1848 = vmatpush2.msra.mxu0 0.0
    %1849 = vmatprep.subr.mxu0 0.0
    %1850 = vmatpush2.msra.mxu0 0.0
    %1851 = vmatprep.subr.mxu0 0.0
    %1852 = vmatpush2.msra.mxu0 0.0
    %1853 = vmatprep.mubr.f32.mxu0 0.0
    %1854 = vmatmul.mubr.f32.gmra.mxu0 %v1787
    %v1855 = vpop.f32.mrf.mxu0
    %v1856 = vadd.f32 0.0, %v1855
    %v1857 = vpop.f32.mrf.mxu0
    %1858 = vdwg.mxu0
    %v1859 = vadd.f32 %v1786, %v1856
    %v1860 = vadd.f32 %v1859, %v1318
    %v1861 = vxor.u32 %v1860, 2147483648
    %v1862 = vmul.f32 %v1861, 1.442695
    %v1863 = vpow.pop %v1862
    %v1864 = vadd.f32 %v1863, 1.0
    %v1865 = vrcp.pop %v1864
    %v1866 = vmul.f32 1.0, %v1865
    %v1867 = vtanh.pop %v1860
    %v1868 = vsel %vm266, %v1867, %v1866
    %v1869 = vmul.f32 %v1868, %v1771
    %1871 = vrot.lane.b32.xlu0 %v1868, 64
    %v1872 = vpop.permute.xlu0 %1871
    %v1874 = vmul.f32 %v1868, %v1872
    %1876 = vrot.lane.b32.xlu0 %v1874, 32
    %v1877 = vpop.permute.xlu0 %1876
    %v1879 = vadd.f32 %v1869, %v1877
    %v1880 = vtanh.pop %v1879
    %1882 = vrot.lane.b32.xlu0 %v1880, 64
    %v1883 = vpop.permute.xlu0 %1882
    %v1885 = vmul.f32 %v1868, %v1883
    %1887 = vrot.lane.b32.xlu0 %v1885, 32
    %v1888 = vpop.permute.xlu0 %1887
    %1890 = vst.msk [vmem:[#allocation3 + $0xa] sm:$0x3] %vm386, %v1888
    %1891 = vst.msk [vmem:[#allocation3 + $0x4] sm:$0x3] %vm388, %v1888
    %v1892 = vld [vmem:[#allocation4 + $0xc] sm:$0x3]
    %v1893 = vld [vmem:[#allocation4 + $0x2] sm:$0x3]
    %v1894 = vsel %vm263, %v1892, %v1893
    %v1895 = vsel %vm275, %v1888, 0
    %1897 = vmatprep.subr.mxu0 0.0
    %1898 = vmatpush1.msra.mxu0 0.0
    %1899 = vmatprep.subr.mxu0 0.0
    %1900 = vmatpush1.msra.mxu0 0.0
    %1901 = vmatprep.subr.mxu0 0.0
    %1902 = vmatpush1.msra.mxu0 0.0
    %1903 = vmatprep.subr.mxu0 0.0
    %1904 = vmatpush1.msra.mxu0 0.0
    %1905 = vmatprep.subr.mxu0 0.0
    %1906 = vmatpush1.msra.mxu0 0.0
    %1907 = vmatprep.subr.mxu0 0.0
    %1908 = vmatpush1.msra.mxu0 0.0
    %1909 = vmatprep.subr.mxu0 0.0
    %1910 = vmatpush1.msra.mxu0 0.0
    %1911 = vmatprep.subr.mxu0 0.0
    %1912 = vmatpush1.msra.mxu0 0.0
    %1913 = vmatprep.subr.mxu0 0.0
    %1914 = vmatpush1.msra.mxu0 0.0
    %1915 = vmatprep.subr.mxu0 0.0
    %1916 = vmatpush1.msra.mxu0 0.0
    %1917 = vmatprep.subr.mxu0 0.0
    %1918 = vmatpush1.msra.mxu0 0.0
    %1919 = vmatprep.subr.mxu0 0.0
    %1920 = vmatpush1.msra.mxu0 0.0
    %1921 = vmatprep.subr.mxu0 0.0
    %1922 = vmatpush1.msra.mxu0 %v1238
    %1923 = vmatprep.subr.mxu0 0.0
    %1924 = vmatpush1.msra.mxu0 %v1237
    %1925 = vmatprep.subr.mxu0 0.0
    %1926 = vmatpush1.msra.mxu0 %v1236
    %1927 = vmatprep.subr.mxu0 0.0
    %1928 = vmatpush1.msra.mxu0 %v1235
    %1929 = vmatprep.subr.mxu0 0.0
    %1930 = vmatpush2.msra.mxu0 0.0
    %1931 = vmatprep.subr.mxu0 0.0
    %1932 = vmatpush2.msra.mxu0 0.0
    %1933 = vmatprep.subr.mxu0 0.0
    %1934 = vmatpush2.msra.mxu0 0.0
    %1935 = vmatprep.subr.mxu0 0.0
    %1936 = vmatpush2.msra.mxu0 0.0
    %1937 = vmatprep.subr.mxu0 0.0
    %1938 = vmatpush2.msra.mxu0 0.0
    %1939 = vmatprep.subr.mxu0 0.0
    %1940 = vmatpush2.msra.mxu0 0.0
    %1941 = vmatprep.subr.mxu0 0.0
    %1942 = vmatpush2.msra.mxu0 0.0
    %1943 = vmatprep.subr.mxu0 0.0
    %1944 = vmatpush2.msra.mxu0 0.0
    %1945 = vmatprep.subr.mxu0 0.0
    %1946 = vmatpush2.msra.mxu0 0.0
    %1947 = vmatprep.subr.mxu0 0.0
    %1948 = vmatpush2.msra.mxu0 0.0
    %1949 = vmatprep.subr.mxu0 0.0
    %1950 = vmatpush2.msra.mxu0 0.0
    %1951 = vmatprep.subr.mxu0 0.0
    %1952 = vmatpush2.msra.mxu0 0.0
    %1953 = vmatprep.subr.mxu0 0.0
    %1954 = vmatpush2.msra.mxu0 0.0
    %1955 = vmatprep.subr.mxu0 0.0
    %1956 = vmatpush2.msra.mxu0 0.0
    %1957 = vmatprep.subr.mxu0 0.0
    %1958 = vmatpush2.msra.mxu0 0.0
    %1959 = vmatprep.subr.mxu0 0.0
    %1960 = vmatpush2.msra.mxu0 0.0
    %1961 = vmatprep.mubr.f32.mxu0 0.0
    %1962 = vmatmul.mubr.f32.gmra.mxu0 %v1895
    %v1963 = vpop.f32.mrf.mxu0
    %v1964 = vadd.f32 0.0, %v1963
    %v1965 = vpop.f32.mrf.mxu0
    %1966 = vdwg.mxu0
    %v1967 = vadd.f32 %v1894, %v1964
    %v1968 = vadd.f32 %v1967, %v1318
    %v1969 = vxor.u32 %v1968, 2147483648
    %v1970 = vmul.f32 %v1969, 1.442695
    %v1971 = vpow.pop %v1970
    %v1972 = vadd.f32 %v1971, 1.0
    %v1973 = vrcp.pop %v1972
    %v1974 = vmul.f32 1.0, %v1973
    %v1975 = vtanh.pop %v1968
    %v1976 = vsel %vm266, %v1975, %v1974
    %v1977 = vmul.f32 %v1976, %v1879
    %1979 = vrot.lane.b32.xlu0 %v1976, 64
    %v1980 = vpop.permute.xlu0 %1979
    %v1982 = vmul.f32 %v1976, %v1980
    %1984 = vrot.lane.b32.xlu0 %v1982, 32
    %v1985 = vpop.permute.xlu0 %1984
    %v1987 = vadd.f32 %v1977, %v1985
    %v1988 = vtanh.pop %v1987
    %1990 = vrot.lane.b32.xlu0 %v1988, 64
    %v1991 = vpop.permute.xlu0 %1990
    %v1993 = vmul.f32 %v1976, %v1991
    %1995 = vrot.lane.b32.xlu0 %v1993, 32
    %v1996 = vpop.permute.xlu0 %1995
    %1998 = vst.msk [vmem:[#allocation3 + $0xc] sm:$0x3] %vm386, %v1996
    %1999 = vst.msk [vmem:[#allocation3 + $0x2] sm:$0x3] %vm388, %v1996
    %v2000 = vld [vmem:[#allocation4 + $0xe] sm:$0x3]
    %v2001 = vld [vmem:[#allocation4] sm:$0x3]
    %v2002 = vsel %vm263, %v2000, %v2001
    %v2003 = vsel %vm275, %v1996, 0
    %2005 = vmatprep.subr.mxu0 0.0
    %2006 = vmatpush1.msra.mxu0 0.0
    %2007 = vmatprep.subr.mxu0 0.0
    %2008 = vmatpush1.msra.mxu0 0.0
    %2009 = vmatprep.subr.mxu0 0.0
    %2010 = vmatpush1.msra.mxu0 0.0
    %2011 = vmatprep.subr.mxu0 0.0
    %2012 = vmatpush1.msra.mxu0 0.0
    %2013 = vmatprep.subr.mxu0 0.0
    %2014 = vmatpush1.msra.mxu0 0.0
    %2015 = vmatprep.subr.mxu0 0.0
    %2016 = vmatpush1.msra.mxu0 0.0
    %2017 = vmatprep.subr.mxu0 0.0
    %2018 = vmatpush1.msra.mxu0 0.0
    %2019 = vmatprep.subr.mxu0 0.0
    %2020 = vmatpush1.msra.mxu0 0.0
    %2021 = vmatprep.subr.mxu0 0.0
    %2022 = vmatpush1.msra.mxu0 0.0
    %2023 = vmatprep.subr.mxu0 0.0
    %2024 = vmatpush1.msra.mxu0 0.0
    %2025 = vmatprep.subr.mxu0 0.0
    %2026 = vmatpush1.msra.mxu0 0.0
    %2027 = vmatprep.subr.mxu0 0.0
    %2028 = vmatpush1.msra.mxu0 0.0
    %2029 = vmatprep.subr.mxu0 0.0
    %2030 = vmatpush1.msra.mxu0 %v1238
    %2031 = vmatprep.subr.mxu0 0.0
    %2032 = vmatpush1.msra.mxu0 %v1237
    %2033 = vmatprep.subr.mxu0 0.0
    %2034 = vmatpush1.msra.mxu0 %v1236
    %2035 = vmatprep.subr.mxu0 0.0
    %2036 = vmatpush1.msra.mxu0 %v1235
    %2037 = vmatprep.subr.mxu0 0.0
    %2038 = vmatpush2.msra.mxu0 0.0
    %2039 = vmatprep.subr.mxu0 0.0
    %2040 = vmatpush2.msra.mxu0 0.0
    %2041 = vmatprep.subr.mxu0 0.0
    %2042 = vmatpush2.msra.mxu0 0.0
    %2043 = vmatprep.subr.mxu0 0.0
    %2044 = vmatpush2.msra.mxu0 0.0
    %2045 = vmatprep.subr.mxu0 0.0
    %2046 = vmatpush2.msra.mxu0 0.0
    %2047 = vmatprep.subr.mxu0 0.0
    %2048 = vmatpush2.msra.mxu0 0.0
    %2049 = vmatprep.subr.mxu0 0.0
    %2050 = vmatpush2.msra.mxu0 0.0
    %2051 = vmatprep.subr.mxu0 0.0
    %2052 = vmatpush2.msra.mxu0 0.0
    %2053 = vmatprep.subr.mxu0 0.0
    %2054 = vmatpush2.msra.mxu0 0.0
    %2055 = vmatprep.subr.mxu0 0.0
    %2056 = vmatpush2.msra.mxu0 0.0
    %2057 = vmatprep.subr.mxu0 0.0
    %2058 = vmatpush2.msra.mxu0 0.0
    %2059 = vmatprep.subr.mxu0 0.0
    %2060 = vmatpush2.msra.mxu0 0.0
    %2061 = vmatprep.subr.mxu0 0.0
    %2062 = vmatpush2.msra.mxu0 0.0
    %2063 = vmatprep.subr.mxu0 0.0
    %2064 = vmatpush2.msra.mxu0 0.0
    %2065 = vmatprep.subr.mxu0 0.0
    %2066 = vmatpush2.msra.mxu0 0.0
    %2067 = vmatprep.subr.mxu0 0.0
    %2068 = vmatpush2.msra.mxu0 0.0
    %2069 = vmatprep.mubr.f32.mxu0 0.0
    %2070 = vmatmul.mubr.f32.gmra.mxu0 %v2003
    %v2071 = vpop.f32.mrf.mxu0
    %v2072 = vadd.f32 0.0, %v2071
    %v2073 = vpop.f32.mrf.mxu0
    %2074 = vdwg.mxu0
    %v2075 = vadd.f32 %v2002, %v2072
    %v2076 = vadd.f32 %v2075, %v1318
    %v2077 = vxor.u32 %v2076, 2147483648
    %v2078 = vmul.f32 %v2077, 1.442695
    %v2079 = vpow.pop %v2078
    %v2080 = vadd.f32 %v2079, 1.0
    %v2081 = vrcp.pop %v2080
    %v2082 = vmul.f32 1.0, %v2081
    %v2083 = vtanh.pop %v2076
    %v2084 = vsel %vm266, %v2083, %v2082
    %v2085 = vmul.f32 %v2084, %v1987
    %2087 = vrot.lane.b32.xlu0 %v2084, 64
    %v2088 = vpop.permute.xlu0 %2087
    %v2090 = vmul.f32 %v2084, %v2088
    %2092 = vrot.lane.b32.xlu0 %v2090, 32
    %v2093 = vpop.permute.xlu0 %2092
    %v2095 = vadd.f32 %v2085, %v2093
    %v2096 = vtanh.pop %v2095
    %2098 = vrot.lane.b32.xlu0 %v2096, 64
    %v2099 = vpop.permute.xlu0 %2098
    %v2101 = vmul.f32 %v2084, %v2099
    %2103 = vrot.lane.b32.xlu0 %v2101, 32
    %v2104 = vpop.permute.xlu0 %2103
    %2106 = vst.msk [vmem:[#allocation3 + $0xe] sm:$0x3] %vm386, %v2104
    %2107 = vst.msk [vmem:[#allocation3] sm:$0x3] %vm388, %v2104
    %v2108 = vld [vmem:[#allocation3] sm:$0xff]
    %v2109 = vld [vmem:[#allocation3 + $0x8] sm:$0xff]
    %v2110 = vld [vmem:[%s7] sm:$0xff]
    %v2111 = vld [vmem:[%s7 + $0x8] sm:$0xff]
    %v2112 = vld [vmem:[%s7 + $0x10] sm:$0xff]
    %v2113 = vld [vmem:[%s7 + $0x18] sm:$0xff]
    %v2114 = vld [vmem:[#allocation13] sm:$0x1]
    %v2116 = vlaneseq
    %v2117 = vshrl.u32 %v2116, 7
    %v2118 = vsub.s32 0, %v2117
    %v2119 = vrot.slane %v2114, %v2118
    %v2122 = vsel %vm275, %v2108, 0
    %v2125 = vsel %vm275, %v2109, 0
    %2127 = vmatprep.subr.mxu0 0.0
    %2128 = vmatpush1.msra.mxu0 0.0
    %2129 = vmatprep.subr.mxu0 0.0
    %2130 = vmatpush1.msra.mxu0 0.0
    %2131 = vmatprep.subr.mxu0 0.0
    %2132 = vmatpush1.msra.mxu0 0.0
    %2133 = vmatprep.subr.mxu0 0.0
    %2134 = vmatpush1.msra.mxu0 0.0
    %2135 = vmatprep.subr.mxu0 0.0
    %2136 = vmatpush1.msra.mxu0 0.0
    %2137 = vmatprep.subr.mxu0 0.0
    %2138 = vmatpush1.msra.mxu0 0.0
    %2139 = vmatprep.subr.mxu0 0.0
    %2140 = vmatpush1.msra.mxu0 0.0
    %2141 = vmatprep.subr.mxu0 0.0
    %2142 = vmatpush1.msra.mxu0 0.0
    %2143 = vmatprep.subr.mxu0 0.0
    %2144 = vmatpush1.msra.mxu0 0.0
    %2145 = vmatprep.subr.mxu0 0.0
    %2146 = vmatpush1.msra.mxu0 0.0
    %2147 = vmatprep.subr.mxu0 0.0
    %2148 = vmatpush1.msra.mxu0 0.0
    %2149 = vmatprep.subr.mxu0 0.0
    %2150 = vmatpush1.msra.mxu0 0.0
    %2151 = vmatprep.subr.mxu0 0.0
    %2152 = vmatpush1.msra.mxu0 %v2113
    %2153 = vmatprep.subr.mxu0 0.0
    %2154 = vmatpush1.msra.mxu0 %v2112
    %2155 = vmatprep.subr.mxu0 0.0
    %2156 = vmatpush1.msra.mxu0 %v2111
    %2157 = vmatprep.subr.mxu0 0.0
    %2158 = vmatpush1.msra.mxu0 %v2110
    %2159 = vmatprep.subr.mxu0 0.0
    %2160 = vmatpush2.msra.mxu0 0.0
    %2161 = vmatprep.subr.mxu0 0.0
    %2162 = vmatpush2.msra.mxu0 0.0
    %2163 = vmatprep.subr.mxu0 0.0
    %2164 = vmatpush2.msra.mxu0 0.0
    %2165 = vmatprep.subr.mxu0 0.0
    %2166 = vmatpush2.msra.mxu0 0.0
    %2167 = vmatprep.subr.mxu0 0.0
    %2168 = vmatpush2.msra.mxu0 0.0
    %2169 = vmatprep.subr.mxu0 0.0
    %2170 = vmatpush2.msra.mxu0 0.0
    %2171 = vmatprep.subr.mxu0 0.0
    %2172 = vmatpush2.msra.mxu0 0.0
    %2173 = vmatprep.subr.mxu0 0.0
    %2174 = vmatpush2.msra.mxu0 0.0
    %2175 = vmatprep.subr.mxu0 0.0
    %2176 = vmatpush2.msra.mxu0 0.0
    %2177 = vmatprep.subr.mxu0 0.0
    %2178 = vmatpush2.msra.mxu0 0.0
    %2179 = vmatprep.subr.mxu0 0.0
    %2180 = vmatpush2.msra.mxu0 0.0
    %2181 = vmatprep.subr.mxu0 0.0
    %2182 = vmatpush2.msra.mxu0 0.0
    %2183 = vmatprep.subr.mxu0 0.0
    %2184 = vmatpush2.msra.mxu0 0.0
    %2185 = vmatprep.subr.mxu0 0.0
    %2186 = vmatpush2.msra.mxu0 0.0
    %2187 = vmatprep.subr.mxu0 0.0
    %2188 = vmatpush2.msra.mxu0 0.0
    %2189 = vmatprep.subr.mxu0 0.0
    %2190 = vmatpush2.msra.mxu0 0.0
    %2191 = vmatprep.mubr.f32.mxu0 0.0
    %2192 = vmatmul.mubr.f32.gmra.mxu0 %v2122
    %v2193 = vpop.f32.mrf.mxu0
    %v2194 = vadd.f32 %v2119, %v2193
    %v2195 = vpop.f32.mrf.mxu0
    %2196 = vmatprep.mubr.f32.mxu0 0.0
    %2197 = vmatmul.mubr.f32.gmra.mxu0 %v2125
    %v2198 = vpop.f32.mrf.mxu0
    %v2199 = vadd.f32 %v2119, %v2198
    %v2200 = vpop.f32.mrf.mxu0
    %2201 = vdwg.mxu0
    %vm2202 = vcmask 64512
    %2203 = vst.msk [vmem:[%s12] sm:$0xff] %vm2202, %v2194
    %2204 = vst.msk [vmem:[%s12 + $0x8] sm:$0xff] %vm2202, %v2199
    %v2205 = vld [vmem:[#allocation17] sm:$0xff]
    %v2206 = vld [vmem:[#allocation14] sm:$0x1]
    %v2208 = vlaneseq
    %v2209 = vshrl.u32 %v2208, 7
    %v2210 = vsub.s32 0, %v2209
    %v2211 = vrot.slane %v2206, %v2210
    %v2213 = vadd.f32 %v2211, %v2194
    %v2216 = vunpack.c.l.s4 1966171168
    %v2217 = vunpack.c.0.s8 %v2216
    %v2218 = vlaneseq
    %v2219 = vshrl.u32 %v2218, 7
    %v2220 = vsub.s32 %v2217, %v2219
    %v2221 = vrot.slane %v2213, %v2220
    %v2222 = vcombine.high %v2221, %v2221
    %v2224 = vunpack.c.l.s4 1966171168
    %v2225 = vunpack.c.0.s8 %v2224
    %v2226 = vlaneseq
    %v2227 = vshrl.u32 %v2226, 7
    %v2228 = vsub.s32 %v2225, %v2227
    %v2229 = vrot.slane %v2221, %v2228
    %v2231 = vunpack.c.l.s4 1966171168
    %v2232 = vunpack.c.0.s8 %v2231
    %v2233 = vlaneseq
    %v2234 = vshrl.u32 %v2233, 7
    %v2235 = vsub.s32 %v2232, %v2234
    %v2236 = vrot.slane %v2222, %v2235
    %v2237 = vlaneseq
    %v2238 = vshrl.u32 %v2237, 7
    %v2239 = vsub.s32 0, %v2238
    %v2240 = vrot.slane %v2229, %v2239
    %v2241 = vlaneseq
    %v2242 = vshrl.u32 %v2241, 7
    %v2243 = vsub.s32 0, %v2242
    %v2244 = vrot.slane %v2236, %v2243
    %v2247 = vadd.f32 %v2240, %v2205
    %v2248 = vadd.f32 %v2244, %v2205
    %v2249 = vsel %vm2202, %v2247, -inf
    %2250 = vmax.xlane.f32.xlu0 %v2249
    %v2251 = vpop.xlane.xlu0 %2250
    %v2252 = vsel %vm2202, %v2248, -inf
    %2253 = vmax.xlane.f32.xlu0 %v2252
    %v2254 = vpop.xlane.xlu0 %2253
    %vm2255 = vcmp.eq.f32.partialorder %v2247, %v2251
    %vm2256 = vcmp.eq.f32.partialorder %v2248, %v2254
    %v2257 = vsel %vm2255, %v143, 8
    %v2258 = vsel %vm2256, %v143, 8
    %v2259 = vsel %vm2202, %v2257, 2147483647
    %v2260 = vand.u32 %v2259, 65535
    %v2261 = vshra.s32 %v2259, 16
    %v2262 = vcvt.s32.f32 %v2260
    %v2263 = vcvt.s32.f32 %v2261
    %2264 = vmin.xlane.f32.xlu0 %v2263
    %v2265 = vpop.xlane.xlu0 %2264
    %vm2266 = vcmp.eq.f32.partialorder %v2263, %v2265
    %v2267 = vsel %vm2266, %v2262, inf
    %2268 = vmin.xlane.f32.xlu0 %v2267
    %v2269 = vpop.xlane.xlu0 %2268
    %v2270 = vcvt.f32.s32 %v2269
    %v2271 = vcvt.f32.s32 %v2265
    %v2272 = vshll.u32 %v2271, 16
    %v2273 = vadd.s32 %v2272, %v2270
    %v2274 = vsel %vm2202, %v2258, 2147483647
    %v2275 = vand.u32 %v2274, 65535
    %v2276 = vshra.s32 %v2274, 16
    %v2277 = vcvt.s32.f32 %v2275
    %v2278 = vcvt.s32.f32 %v2276
    %2279 = vmin.xlane.f32.xlu0 %v2278
    %v2280 = vpop.xlane.xlu0 %2279
    %vm2281 = vcmp.eq.f32.partialorder %v2278, %v2280
    %v2282 = vsel %vm2281, %v2277, inf
    %2283 = vmin.xlane.f32.xlu0 %v2282
    %v2284 = vpop.xlane.xlu0 %2283
    %v2285 = vcvt.f32.s32 %v2284
    %v2286 = vcvt.f32.s32 %v2280
    %v2287 = vshll.u32 %v2286, 16
    %v2288 = vadd.s32 %v2287, %v2285
    %v2289 = vlaneseq
    %v2290 = vshrl.u32 %v2289, 7
    %v2291 = vsub.s32 %v143, %v2290
    %v2292 = vrot.slane %v2273, %v2291
    %v2293 = vlaneseq
    %v2294 = vshrl.u32 %v2293, 7
    %v2295 = vsub.s32 %v143, %v2294
    %v2296 = vrot.slane %v2288, %v2295
    %vm2297 = vcmask 1041409
    %v2298 = vsel %vm2297, %v2296, %v2292
    %s2299 = scalar_lea.vmem [#allocation5], 2
    %vm2300 = vcmask 58368
    %2301 = vst.msk [vmem:[%s2299] sm:$0x3] %vm2300, %v2298
    %v2303 = vlaneseq
    %v2304 = vshrl.u32 %v2303, 7
    %v2305 = vsub.s32 2, %v2304
    %v2306 = vrot.slane %v2194, %v2305
    %2308 = vbcast.lane.b32.xlu0 %v2306, 256
    %v2309 = vpop.permute.xlu0 %2308
    %v2310 = vlaneseq
    %v2311 = vshrl.u32 %v2310, 7
    %v2312 = vsub.s32 3, %v2311
    %v2313 = vrot.slane %v2194, %v2312
    %2315 = vbcast.lane.b32.xlu0 %v2313, 256
    %v2316 = vpop.permute.xlu0 %2315
    %v2319 = vadd.f32 %v2251, %v2309
    %v2320 = vadd.f32 %v2254, %v2316
    %v2322 = vlaneseq
    %v2323 = vshrl.u32 %v2322, 7
    %v2324 = vsub.s32 0, %v2323
    %v2325 = vrot.slane %v2205, %v2324
    %2327 = vbcast.lane.b32.xlu0 %v2325, 256
    %v2328 = vpop.permute.xlu0 %2327
    %v2329 = vlaneseq
    %v2330 = vshrl.u32 %v2329, 7
    %v2331 = vsub.s32 1, %v2330
    %v2332 = vrot.slane %v2205, %v2331
    %2334 = vbcast.lane.b32.xlu0 %v2332, 256
    %v2335 = vpop.permute.xlu0 %2334
    %v2336 = vlaneseq
    %v2337 = vshrl.u32 %v2336, 7
    %v2338 = vsub.s32 2, %v2337
    %v2339 = vrot.slane %v2205, %v2338
    %2341 = vbcast.lane.b32.xlu0 %v2339, 256
    %v2342 = vpop.permute.xlu0 %2341
    %v2343 = vlaneseq
    %v2344 = vshrl.u32 %v2343, 7
    %v2345 = vsub.s32 3, %v2344
    %v2346 = vrot.slane %v2205, %v2345
    %2348 = vbcast.lane.b32.xlu0 %v2346, 256
    %v2349 = vpop.permute.xlu0 %2348
    %v2350 = vlaneseq
    %v2351 = vshrl.u32 %v2350, 7
    %v2352 = vsub.s32 4, %v2351
    %v2353 = vrot.slane %v2205, %v2352
    %2355 = vbcast.lane.b32.xlu0 %v2353, 256
    %v2356 = vpop.permute.xlu0 %2355
    %v2357 = vlaneseq
    %v2358 = vshrl.u32 %v2357, 7
    %v2359 = vsub.s32 5, %v2358
    %v2360 = vrot.slane %v2205, %v2359
    %2362 = vbcast.lane.b32.xlu0 %v2360, 256
    %v2363 = vpop.permute.xlu0 %2362
    %v2364 = vlaneseq
    %v2365 = vshrl.u32 %v2364, 7
    %v2366 = vsub.s32 6, %v2365
    %v2367 = vrot.slane %v2205, %v2366
    %2369 = vbcast.lane.b32.xlu0 %v2367, 256
    %v2370 = vpop.permute.xlu0 %2369
    %v2371 = vlaneseq
    %v2372 = vshrl.u32 %v2371, 7
    %v2373 = vsub.s32 7, %v2372
    %v2374 = vrot.slane %v2205, %v2373
    %2376 = vbcast.lane.b32.xlu0 %v2374, 256
    %v2377 = vpop.permute.xlu0 %2376
    %v2386 = vadd.f32 %v2319, %v2328
    %v2387 = vadd.f32 %v2319, %v2335
    %v2388 = vadd.f32 %v2319, %v2342
    %v2389 = vadd.f32 %v2319, %v2349
    %v2390 = vadd.f32 %v2319, %v2356
    %v2391 = vadd.f32 %v2319, %v2363
    %v2392 = vadd.f32 %v2319, %v2370
    %v2393 = vadd.f32 %v2319, %v2377
    %v2394 = vadd.f32 %v2320, %v2328
    %v2395 = vadd.f32 %v2320, %v2335
    %v2396 = vadd.f32 %v2320, %v2342
    %v2397 = vadd.f32 %v2320, %v2349
    %v2398 = vadd.f32 %v2320, %v2356
    %v2399 = vadd.f32 %v2320, %v2363
    %v2400 = vadd.f32 %v2320, %v2370
    %v2401 = vadd.f32 %v2320, %v2377
    %2418 = vset.pattern.permute.xlu0 0
    %2419 = vperm.xlu0 %2418, %v2386
    %v2420 = vpop.permute.xlu0 %2419
    %2421 = vset.pattern.permute.xlu0 0
    %2422 = vperm.xlu0 %2421, %v2387
    %v2423 = vpop.permute.xlu0 %2422
    %2424 = vset.pattern.permute.xlu0 0
    %2425 = vperm.xlu0 %2424, %v2388
    %v2426 = vpop.permute.xlu0 %2425
    %2427 = vset.pattern.permute.xlu0 0
    %2428 = vperm.xlu0 %2427, %v2389
    %v2429 = vpop.permute.xlu0 %2428
    %2430 = vset.pattern.permute.xlu0 0
    %2431 = vperm.xlu0 %2430, %v2390
    %v2432 = vpop.permute.xlu0 %2431
    %2433 = vset.pattern.permute.xlu0 0
    %2434 = vperm.xlu0 %2433, %v2391
    %v2435 = vpop.permute.xlu0 %2434
    %2436 = vset.pattern.permute.xlu0 0
    %2437 = vperm.xlu0 %2436, %v2392
    %v2438 = vpop.permute.xlu0 %2437
    %2439 = vset.pattern.permute.xlu0 0
    %2440 = vperm.xlu0 %2439, %v2393
    %v2441 = vpop.permute.xlu0 %2440
    %2442 = vset.pattern.permute.xlu0 0
    %2443 = vperm.xlu0 %2442, %v2394
    %v2444 = vpop.permute.xlu0 %2443
    %2445 = vset.pattern.permute.xlu0 0
    %2446 = vperm.xlu0 %2445, %v2395
    %v2447 = vpop.permute.xlu0 %2446
    %2448 = vset.pattern.permute.xlu0 0
    %2449 = vperm.xlu0 %2448, %v2396
    %v2450 = vpop.permute.xlu0 %2449
    %2451 = vset.pattern.permute.xlu0 0
    %2452 = vperm.xlu0 %2451, %v2397
    %v2453 = vpop.permute.xlu0 %2452
    %2454 = vset.pattern.permute.xlu0 0
    %2455 = vperm.xlu0 %2454, %v2398
    %v2456 = vpop.permute.xlu0 %2455
    %2457 = vset.pattern.permute.xlu0 0
    %2458 = vperm.xlu0 %2457, %v2399
    %v2459 = vpop.permute.xlu0 %2458
    %2460 = vset.pattern.permute.xlu0 0
    %2461 = vperm.xlu0 %2460, %v2400
    %v2462 = vpop.permute.xlu0 %2461
    %2463 = vset.pattern.permute.xlu0 0
    %2464 = vperm.xlu0 %2463, %v2401
    %v2465 = vpop.permute.xlu0 %2464
    %v2466 = vlaneseq
    %v2467 = vshrl.u32 %v2466, 7
    %v2468 = vsub.s32 %v143, %v2467
    %v2469 = vrot.slane %v2420, %v2468
    %v2470 = vlaneseq
    %v2471 = vshrl.u32 %v2470, 7
    %v2472 = vsub.s32 %v143, %v2471
    %v2473 = vrot.slane %v2423, %v2472
    %v2474 = vlaneseq
    %v2475 = vshrl.u32 %v2474, 7
    %v2476 = vsub.s32 %v143, %v2475
    %v2477 = vrot.slane %v2426, %v2476
    %v2478 = vlaneseq
    %v2479 = vshrl.u32 %v2478, 7
    %v2480 = vsub.s32 %v143, %v2479
    %v2481 = vrot.slane %v2429, %v2480
    %v2482 = vlaneseq
    %v2483 = vshrl.u32 %v2482, 7
    %v2484 = vsub.s32 %v143, %v2483
    %v2485 = vrot.slane %v2432, %v2484
    %v2486 = vlaneseq
    %v2487 = vshrl.u32 %v2486, 7
    %v2488 = vsub.s32 %v143, %v2487
    %v2489 = vrot.slane %v2435, %v2488
    %v2490 = vlaneseq
    %v2491 = vshrl.u32 %v2490, 7
    %v2492 = vsub.s32 %v143, %v2491
    %v2493 = vrot.slane %v2438, %v2492
    %v2494 = vlaneseq
    %v2495 = vshrl.u32 %v2494, 7
    %v2496 = vsub.s32 %v143, %v2495
    %v2497 = vrot.slane %v2441, %v2496
    %v2498 = vlaneseq
    %v2499 = vshrl.u32 %v2498, 7
    %v2500 = vsub.s32 %v143, %v2499
    %v2501 = vrot.slane %v2444, %v2500
    %v2502 = vlaneseq
    %v2503 = vshrl.u32 %v2502, 7
    %v2504 = vsub.s32 %v143, %v2503
    %v2505 = vrot.slane %v2447, %v2504
    %v2506 = vlaneseq
    %v2507 = vshrl.u32 %v2506, 7
    %v2508 = vsub.s32 %v143, %v2507
    %v2509 = vrot.slane %v2450, %v2508
    %v2510 = vlaneseq
    %v2511 = vshrl.u32 %v2510, 7
    %v2512 = vsub.s32 %v143, %v2511
    %v2513 = vrot.slane %v2453, %v2512
    %v2514 = vlaneseq
    %v2515 = vshrl.u32 %v2514, 7
    %v2516 = vsub.s32 %v143, %v2515
    %v2517 = vrot.slane %v2456, %v2516
    %v2518 = vlaneseq
    %v2519 = vshrl.u32 %v2518, 7
    %v2520 = vsub.s32 %v143, %v2519
    %v2521 = vrot.slane %v2459, %v2520
    %v2522 = vlaneseq
    %v2523 = vshrl.u32 %v2522, 7
    %v2524 = vsub.s32 %v143, %v2523
    %v2525 = vrot.slane %v2462, %v2524
    %v2526 = vlaneseq
    %v2527 = vshrl.u32 %v2526, 7
    %v2528 = vsub.s32 %v143, %v2527
    %v2529 = vrot.slane %v2465, %v2528
    %v2530 = vsel %vm2297, %v2473, %v2469
    %vm2531 = vcmask 1042434
    %v2532 = vsel %vm2531, %v2477, %v2530
    %vm2533 = vcmask 1043459
    %v2534 = vsel %vm2533, %v2481, %v2532
    %vm2535 = vcmask 1044484
    %v2536 = vsel %vm2535, %v2485, %v2534
    %vm2537 = vcmask 1045509
    %v2538 = vsel %vm2537, %v2489, %v2536
    %vm2539 = vcmask 1046534
    %v2540 = vsel %vm2539, %v2493, %v2538
    %vm2541 = vcmask 1047559
    %v2542 = vsel %vm2541, %v2497, %v2540
    %v2543 = vsel %vm2297, %v2505, %v2501
    %v2544 = vsel %vm2531, %v2509, %v2543
    %v2545 = vsel %vm2533, %v2513, %v2544
    %v2546 = vsel %vm2535, %v2517, %v2545
    %v2547 = vsel %vm2537, %v2521, %v2546
    %v2548 = vsel %vm2539, %v2525, %v2547
    %v2549 = vsel %vm2541, %v2529, %v2548
    %v2552 = vsel %vm2202, %v2542, -inf
    %2553 = vmax.xlane.f32.xlu0 %v2552
    %v2554 = vpop.xlane.xlu0 %2553
    %v2555 = vsel %vm2202, %v2549, -inf
    %2556 = vmax.xlane.f32.xlu0 %v2555
    %v2557 = vpop.xlane.xlu0 %2556
    %v2560 = vlaneseq
    %v2561 = vshrl.u32 %v2560, 7
    %v2562 = vsub.s32 0, %v2561
    %v2563 = vrot.slane %v2554, %v2562
    %v2564 = vlaneseq
    %v2565 = vshrl.u32 %v2564, 7
    %v2566 = vsub.s32 1, %v2565
    %v2567 = vrot.slane %v2554, %v2566
    %v2568 = vlaneseq
    %v2569 = vshrl.u32 %v2568, 7
    %v2570 = vsub.s32 2, %v2569
    %v2571 = vrot.slane %v2554, %v2570
    %v2572 = vlaneseq
    %v2573 = vshrl.u32 %v2572, 7
    %v2574 = vsub.s32 3, %v2573
    %v2575 = vrot.slane %v2554, %v2574
    %v2576 = vlaneseq
    %v2577 = vshrl.u32 %v2576, 7
    %v2578 = vsub.s32 4, %v2577
    %v2579 = vrot.slane %v2554, %v2578
    %v2580 = vlaneseq
    %v2581 = vshrl.u32 %v2580, 7
    %v2582 = vsub.s32 5, %v2581
    %v2583 = vrot.slane %v2554, %v2582
    %v2584 = vlaneseq
    %v2585 = vshrl.u32 %v2584, 7
    %v2586 = vsub.s32 6, %v2585
    %v2587 = vrot.slane %v2554, %v2586
    %v2588 = vlaneseq
    %v2589 = vshrl.u32 %v2588, 7
    %v2590 = vsub.s32 7, %v2589
    %v2591 = vrot.slane %v2554, %v2590
    %v2592 = vlaneseq
    %v2593 = vshrl.u32 %v2592, 7
    %v2594 = vsub.s32 0, %v2593
    %v2595 = vrot.slane %v2557, %v2594
    %v2596 = vlaneseq
    %v2597 = vshrl.u32 %v2596, 7
    %v2598 = vsub.s32 1, %v2597
    %v2599 = vrot.slane %v2557, %v2598
    %v2600 = vlaneseq
    %v2601 = vshrl.u32 %v2600, 7
    %v2602 = vsub.s32 2, %v2601
    %v2603 = vrot.slane %v2557, %v2602
    %v2604 = vlaneseq
    %v2605 = vshrl.u32 %v2604, 7
    %v2606 = vsub.s32 3, %v2605
    %v2607 = vrot.slane %v2557, %v2606
    %v2608 = vlaneseq
    %v2609 = vshrl.u32 %v2608, 7
    %v2610 = vsub.s32 4, %v2609
    %v2611 = vrot.slane %v2557, %v2610
    %v2612 = vlaneseq
    %v2613 = vshrl.u32 %v2612, 7
    %v2614 = vsub.s32 5, %v2613
    %v2615 = vrot.slane %v2557, %v2614
    %v2616 = vlaneseq
    %v2617 = vshrl.u32 %v2616, 7
    %v2618 = vsub.s32 6, %v2617
    %v2619 = vrot.slane %v2557, %v2618
    %v2620 = vlaneseq
    %v2621 = vshrl.u32 %v2620, 7
    %v2622 = vsub.s32 7, %v2621
    %v2623 = vrot.slane %v2557, %v2622
    %vm2640 = vcmp.eq.f32.partialorder %v2386, %v2563
    %vm2641 = vcmp.eq.f32.partialorder %v2387, %v2567
    %vm2642 = vcmp.eq.f32.partialorder %v2388, %v2571
    %vm2643 = vcmp.eq.f32.partialorder %v2389, %v2575
    %vm2644 = vcmp.eq.f32.partialorder %v2390, %v2579
    %vm2645 = vcmp.eq.f32.partialorder %v2391, %v2583
    %vm2646 = vcmp.eq.f32.partialorder %v2392, %v2587
    %vm2647 = vcmp.eq.f32.partialorder %v2393, %v2591
    %vm2648 = vcmp.eq.f32.partialorder %v2394, %v2595
    %vm2649 = vcmp.eq.f32.partialorder %v2395, %v2599
    %vm2650 = vcmp.eq.f32.partialorder %v2396, %v2603
    %vm2651 = vcmp.eq.f32.partialorder %v2397, %v2607
    %vm2652 = vcmp.eq.f32.partialorder %v2398, %v2611
    %vm2653 = vcmp.eq.f32.partialorder %v2399, %v2615
    %vm2654 = vcmp.eq.f32.partialorder %v2400, %v2619
    %vm2655 = vcmp.eq.f32.partialorder %v2401, %v2623
    %2657 = vbcast.lane.b32.xlu0 %v143, 256
    %v2658 = vpop.permute.xlu0 %2657
    %v2659 = vsel %vm2640, %v2658, 8
    %v2660 = vsel %vm2641, %v2658, 8
    %v2661 = vsel %vm2642, %v2658, 8
    %v2662 = vsel %vm2643, %v2658, 8
    %v2663 = vsel %vm2644, %v2658, 8
    %v2664 = vsel %vm2645, %v2658, 8
    %v2665 = vsel %vm2646, %v2658, 8
    %v2666 = vsel %vm2647, %v2658, 8
    %v2667 = vsel %vm2648, %v2658, 8
    %v2668 = vsel %vm2649, %v2658, 8
    %v2669 = vsel %vm2650, %v2658, 8
    %v2670 = vsel %vm2651, %v2658, 8
    %v2671 = vsel %vm2652, %v2658, 8
    %v2672 = vsel %vm2653, %v2658, 8
    %v2673 = vsel %vm2654, %v2658, 8
    %v2674 = vsel %vm2655, %v2658, 8
    %2675 = vset.pattern.permute.xlu0 0
    %2676 = vperm.xlu0 %2675, %v2659
    %v2677 = vpop.permute.xlu0 %2676
    %2678 = vset.pattern.permute.xlu0 0
    %2679 = vperm.xlu0 %2678, %v2660
    %v2680 = vpop.permute.xlu0 %2679
    %2681 = vset.pattern.permute.xlu0 0
    %2682 = vperm.xlu0 %2681, %v2661
    %v2683 = vpop.permute.xlu0 %2682
    %2684 = vset.pattern.permute.xlu0 0
    %2685 = vperm.xlu0 %2684, %v2662
    %v2686 = vpop.permute.xlu0 %2685
    %2687 = vset.pattern.permute.xlu0 0
    %2688 = vperm.xlu0 %2687, %v2663
    %v2689 = vpop.permute.xlu0 %2688
    %2690 = vset.pattern.permute.xlu0 0
    %2691 = vperm.xlu0 %2690, %v2664
    %v2692 = vpop.permute.xlu0 %2691
    %2693 = vset.pattern.permute.xlu0 0
    %2694 = vperm.xlu0 %2693, %v2665
    %v2695 = vpop.permute.xlu0 %2694
    %2696 = vset.pattern.permute.xlu0 0
    %2697 = vperm.xlu0 %2696, %v2666
    %v2698 = vpop.permute.xlu0 %2697
    %2699 = vset.pattern.permute.xlu0 0
    %2700 = vperm.xlu0 %2699, %v2667
    %v2701 = vpop.permute.xlu0 %2700
    %2702 = vset.pattern.permute.xlu0 0
    %2703 = vperm.xlu0 %2702, %v2668
    %v2704 = vpop.permute.xlu0 %2703
    %2705 = vset.pattern.permute.xlu0 0
    %2706 = vperm.xlu0 %2705, %v2669
    %v2707 = vpop.permute.xlu0 %2706
    %2708 = vset.pattern.permute.xlu0 0
    %2709 = vperm.xlu0 %2708, %v2670
    %v2710 = vpop.permute.xlu0 %2709
    %2711 = vset.pattern.permute.xlu0 0
    %2712 = vperm.xlu0 %2711, %v2671
    %v2713 = vpop.permute.xlu0 %2712
    %2714 = vset.pattern.permute.xlu0 0
    %2715 = vperm.xlu0 %2714, %v2672
    %v2716 = vpop.permute.xlu0 %2715
    %2717 = vset.pattern.permute.xlu0 0
    %2718 = vperm.xlu0 %2717, %v2673
    %v2719 = vpop.permute.xlu0 %2718
    %2720 = vset.pattern.permute.xlu0 0
    %2721 = vperm.xlu0 %2720, %v2674
    %v2722 = vpop.permute.xlu0 %2721
    %v2723 = vlaneseq
    %v2724 = vshrl.u32 %v2723, 7
    %v2725 = vsub.s32 %v143, %v2724
    %v2726 = vrot.slane %v2677, %v2725
    %v2727 = vlaneseq
    %v2728 = vshrl.u32 %v2727, 7
    %v2729 = vsub.s32 %v143, %v2728
    %v2730 = vrot.slane %v2680, %v2729
    %v2731 = vlaneseq
    %v2732 = vshrl.u32 %v2731, 7
    %v2733 = vsub.s32 %v143, %v2732
    %v2734 = vrot.slane %v2683, %v2733
    %v2735 = vlaneseq
    %v2736 = vshrl.u32 %v2735, 7
    %v2737 = vsub.s32 %v143, %v2736
    %v2738 = vrot.slane %v2686, %v2737
    %v2739 = vlaneseq
    %v2740 = vshrl.u32 %v2739, 7
    %v2741 = vsub.s32 %v143, %v2740
    %v2742 = vrot.slane %v2689, %v2741
    %v2743 = vlaneseq
    %v2744 = vshrl.u32 %v2743, 7
    %v2745 = vsub.s32 %v143, %v2744
    %v2746 = vrot.slane %v2692, %v2745
    %v2747 = vlaneseq
    %v2748 = vshrl.u32 %v2747, 7
    %v2749 = vsub.s32 %v143, %v2748
    %v2750 = vrot.slane %v2695, %v2749
    %v2751 = vlaneseq
    %v2752 = vshrl.u32 %v2751, 7
    %v2753 = vsub.s32 %v143, %v2752
    %v2754 = vrot.slane %v2698, %v2753
    %v2755 = vlaneseq
    %v2756 = vshrl.u32 %v2755, 7
    %v2757 = vsub.s32 %v143, %v2756
    %v2758 = vrot.slane %v2701, %v2757
    %v2759 = vlaneseq
    %v2760 = vshrl.u32 %v2759, 7
    %v2761 = vsub.s32 %v143, %v2760
    %v2762 = vrot.slane %v2704, %v2761
    %v2763 = vlaneseq
    %v2764 = vshrl.u32 %v2763, 7
    %v2765 = vsub.s32 %v143, %v2764
    %v2766 = vrot.slane %v2707, %v2765
    %v2767 = vlaneseq
    %v2768 = vshrl.u32 %v2767, 7
    %v2769 = vsub.s32 %v143, %v2768
    %v2770 = vrot.slane %v2710, %v2769
    %v2771 = vlaneseq
    %v2772 = vshrl.u32 %v2771, 7
    %v2773 = vsub.s32 %v143, %v2772
    %v2774 = vrot.slane %v2713, %v2773
    %v2775 = vlaneseq
    %v2776 = vshrl.u32 %v2775, 7
    %v2777 = vsub.s32 %v143, %v2776
    %v2778 = vrot.slane %v2716, %v2777
    %v2779 = vlaneseq
    %v2780 = vshrl.u32 %v2779, 7
    %v2781 = vsub.s32 %v143, %v2780
    %v2782 = vrot.slane %v2719, %v2781
    %v2783 = vlaneseq
    %v2784 = vshrl.u32 %v2783, 7
    %v2785 = vsub.s32 %v143, %v2784
    %v2786 = vrot.slane %v2722, %v2785
    %v2787 = vsel %vm2297, %v2730, %v2726
    %v2788 = vsel %vm2531, %v2734, %v2787
    %v2789 = vsel %vm2533, %v2738, %v2788
    %v2790 = vsel %vm2535, %v2742, %v2789
    %v2791 = vsel %vm2537, %v2746, %v2790
    %v2792 = vsel %vm2539, %v2750, %v2791
    %v2793 = vsel %vm2541, %v2754, %v2792
    %v2794 = vsel %vm2297, %v2762, %v2758
    %v2795 = vsel %vm2531, %v2766, %v2794
    %v2796 = vsel %vm2533, %v2770, %v2795
    %v2797 = vsel %vm2535, %v2774, %v2796
    %v2798 = vsel %vm2537, %v2778, %v2797
    %v2799 = vsel %vm2539, %v2782, %v2798
    %v2800 = vsel %vm2541, %v2786, %v2799
    %v2801 = vsel %vm2202, %v2793, 2147483647
    %v2802 = vand.u32 %v2801, 65535
    %v2803 = vshra.s32 %v2801, 16
    %v2804 = vcvt.s32.f32 %v2802
    %v2805 = vcvt.s32.f32 %v2803
    %2806 = vmin.xlane.f32.xlu0 %v2805
    %v2807 = vpop.xlane.xlu0 %2806
    %vm2808 = vcmp.eq.f32.partialorder %v2805, %v2807
    %v2809 = vsel %vm2808, %v2804, inf
    %2810 = vmin.xlane.f32.xlu0 %v2809
    %v2811 = vpop.xlane.xlu0 %2810
    %v2812 = vcvt.f32.s32 %v2811
    %v2813 = vcvt.f32.s32 %v2807
    %v2814 = vshll.u32 %v2813, 16
    %v2815 = vadd.s32 %v2814, %v2812
    %v2816 = vsel %vm2202, %v2800, 2147483647
    %v2817 = vand.u32 %v2816, 65535
    %v2818 = vshra.s32 %v2816, 16
    %v2819 = vcvt.s32.f32 %v2817
    %v2820 = vcvt.s32.f32 %v2818
    %2821 = vmin.xlane.f32.xlu0 %v2820
    %v2822 = vpop.xlane.xlu0 %2821
    %vm2823 = vcmp.eq.f32.partialorder %v2820, %v2822
    %v2824 = vsel %vm2823, %v2819, inf
    %2825 = vmin.xlane.f32.xlu0 %v2824
    %v2826 = vpop.xlane.xlu0 %2825
    %v2827 = vcvt.f32.s32 %v2826
    %v2828 = vcvt.f32.s32 %v2822
    %v2829 = vshll.u32 %v2828, 16
    %v2830 = vadd.s32 %v2829, %v2827
    %v2831 = vlaneseq
    %v2832 = vshrl.u32 %v2831, 7
    %v2833 = vsub.s32 %v143, %v2832
    %v2834 = vrot.slane %v2815, %v2833
    %v2835 = vlaneseq
    %v2836 = vshrl.u32 %v2835, 7
    %v2837 = vsub.s32 %v143, %v2836
    %v2838 = vrot.slane %v2830, %v2837
    %v2839 = vsel %vm2297, %v2838, %v2834
    %s2840 = scalar_lea.vmem [#allocation5], 4
    %2841 = vst.msk [vmem:[%s2840] sm:$0x3] %vm2300, %v2839
    %v2842 = vlaneseq
    %v2843 = vshrl.u32 %v2842, 7
    %v2844 = vsub.s32 4, %v2843
    %v2845 = vrot.slane %v2194, %v2844
    %2847 = vbcast.lane.b32.xlu0 %v2845, 256
    %v2848 = vpop.permute.xlu0 %2847
    %v2849 = vlaneseq
    %v2850 = vshrl.u32 %v2849, 7
    %v2851 = vsub.s32 5, %v2850
    %v2852 = vrot.slane %v2194, %v2851
    %2854 = vbcast.lane.b32.xlu0 %v2852, 256
    %v2855 = vpop.permute.xlu0 %2854
    %v2858 = vadd.f32 %v2554, %v2848
    %v2859 = vadd.f32 %v2557, %v2855
    %v2860 = vadd.f32 %v2858, %v2328
    %v2861 = vadd.f32 %v2858, %v2335
    %v2862 = vadd.f32 %v2858, %v2342
    %v2863 = vadd.f32 %v2858, %v2349
    %v2864 = vadd.f32 %v2858, %v2356
    %v2865 = vadd.f32 %v2858, %v2363
    %v2866 = vadd.f32 %v2858, %v2370
    %v2867 = vadd.f32 %v2858, %v2377
    %v2868 = vadd.f32 %v2859, %v2328
    %v2869 = vadd.f32 %v2859, %v2335
    %v2870 = vadd.f32 %v2859, %v2342
    %v2871 = vadd.f32 %v2859, %v2349
    %v2872 = vadd.f32 %v2859, %v2356
    %v2873 = vadd.f32 %v2859, %v2363
    %v2874 = vadd.f32 %v2859, %v2370
    %v2875 = vadd.f32 %v2859, %v2377
    %2892 = vset.pattern.permute.xlu0 0
    %2893 = vperm.xlu0 %2892, %v2860
    %v2894 = vpop.permute.xlu0 %2893
    %2895 = vset.pattern.permute.xlu0 0
    %2896 = vperm.xlu0 %2895, %v2861
    %v2897 = vpop.permute.xlu0 %2896
    %2898 = vset.pattern.permute.xlu0 0
    %2899 = vperm.xlu0 %2898, %v2862
    %v2900 = vpop.permute.xlu0 %2899
    %2901 = vset.pattern.permute.xlu0 0
    %2902 = vperm.xlu0 %2901, %v2863
    %v2903 = vpop.permute.xlu0 %2902
    %2904 = vset.pattern.permute.xlu0 0
    %2905 = vperm.xlu0 %2904, %v2864
    %v2906 = vpop.permute.xlu0 %2905
    %2907 = vset.pattern.permute.xlu0 0
    %2908 = vperm.xlu0 %2907, %v2865
    %v2909 = vpop.permute.xlu0 %2908
    %2910 = vset.pattern.permute.xlu0 0
    %2911 = vperm.xlu0 %2910, %v2866
    %v2912 = vpop.permute.xlu0 %2911
    %2913 = vset.pattern.permute.xlu0 0
    %2914 = vperm.xlu0 %2913, %v2867
    %v2915 = vpop.permute.xlu0 %2914
    %2916 = vset.pattern.permute.xlu0 0
    %2917 = vperm.xlu0 %2916, %v2868
    %v2918 = vpop.permute.xlu0 %2917
    %2919 = vset.pattern.permute.xlu0 0
    %2920 = vperm.xlu0 %2919, %v2869
    %v2921 = vpop.permute.xlu0 %2920
    %2922 = vset.pattern.permute.xlu0 0
    %2923 = vperm.xlu0 %2922, %v2870
    %v2924 = vpop.permute.xlu0 %2923
    %2925 = vset.pattern.permute.xlu0 0
    %2926 = vperm.xlu0 %2925, %v2871
    %v2927 = vpop.permute.xlu0 %2926
    %2928 = vset.pattern.permute.xlu0 0
    %2929 = vperm.xlu0 %2928, %v2872
    %v2930 = vpop.permute.xlu0 %2929
    %2931 = vset.pattern.permute.xlu0 0
    %2932 = vperm.xlu0 %2931, %v2873
    %v2933 = vpop.permute.xlu0 %2932
    %2934 = vset.pattern.permute.xlu0 0
    %2935 = vperm.xlu0 %2934, %v2874
    %v2936 = vpop.permute.xlu0 %2935
    %2937 = vset.pattern.permute.xlu0 0
    %2938 = vperm.xlu0 %2937, %v2875
    %v2939 = vpop.permute.xlu0 %2938
    %v2940 = vlaneseq
    %v2941 = vshrl.u32 %v2940, 7
    %v2942 = vsub.s32 %v143, %v2941
    %v2943 = vrot.slane %v2894, %v2942
    %v2944 = vlaneseq
    %v2945 = vshrl.u32 %v2944, 7
    %v2946 = vsub.s32 %v143, %v2945
    %v2947 = vrot.slane %v2897, %v2946
    %v2948 = vlaneseq
    %v2949 = vshrl.u32 %v2948, 7
    %v2950 = vsub.s32 %v143, %v2949
    %v2951 = vrot.slane %v2900, %v2950
    %v2952 = vlaneseq
    %v2953 = vshrl.u32 %v2952, 7
    %v2954 = vsub.s32 %v143, %v2953
    %v2955 = vrot.slane %v2903, %v2954
    %v2956 = vlaneseq
    %v2957 = vshrl.u32 %v2956, 7
    %v2958 = vsub.s32 %v143, %v2957
    %v2959 = vrot.slane %v2906, %v2958
    %v2960 = vlaneseq
    %v2961 = vshrl.u32 %v2960, 7
    %v2962 = vsub.s32 %v143, %v2961
    %v2963 = vrot.slane %v2909, %v2962
    %v2964 = vlaneseq
    %v2965 = vshrl.u32 %v2964, 7
    %v2966 = vsub.s32 %v143, %v2965
    %v2967 = vrot.slane %v2912, %v2966
    %v2968 = vlaneseq
    %v2969 = vshrl.u32 %v2968, 7
    %v2970 = vsub.s32 %v143, %v2969
    %v2971 = vrot.slane %v2915, %v2970
    %v2972 = vlaneseq
    %v2973 = vshrl.u32 %v2972, 7
    %v2974 = vsub.s32 %v143, %v2973
    %v2975 = vrot.slane %v2918, %v2974
    %v2976 = vlaneseq
    %v2977 = vshrl.u32 %v2976, 7
    %v2978 = vsub.s32 %v143, %v2977
    %v2979 = vrot.slane %v2921, %v2978
    %v2980 = vlaneseq
    %v2981 = vshrl.u32 %v2980, 7
    %v2982 = vsub.s32 %v143, %v2981
    %v2983 = vrot.slane %v2924, %v2982
    %v2984 = vlaneseq
    %v2985 = vshrl.u32 %v2984, 7
    %v2986 = vsub.s32 %v143, %v2985
    %v2987 = vrot.slane %v2927, %v2986
    %v2988 = vlaneseq
    %v2989 = vshrl.u32 %v2988, 7
    %v2990 = vsub.s32 %v143, %v2989
    %v2991 = vrot.slane %v2930, %v2990
    %v2992 = vlaneseq
    %v2993 = vshrl.u32 %v2992, 7
    %v2994 = vsub.s32 %v143, %v2993
    %v2995 = vrot.slane %v2933, %v2994
    %v2996 = vlaneseq
    %v2997 = vshrl.u32 %v2996, 7
    %v2998 = vsub.s32 %v143, %v2997
    %v2999 = vrot.slane %v2936, %v2998
    %v3000 = vlaneseq
    %v3001 = vshrl.u32 %v3000, 7
    %v3002 = vsub.s32 %v143, %v3001
    %v3003 = vrot.slane %v2939, %v3002
    %v3004 = vsel %vm2297, %v2947, %v2943
    %v3005 = vsel %vm2531, %v2951, %v3004
    %v3006 = vsel %vm2533, %v2955, %v3005
    %v3007 = vsel %vm2535, %v2959, %v3006
    %v3008 = vsel %vm2537, %v2963, %v3007
    %v3009 = vsel %vm2539, %v2967, %v3008
    %v3010 = vsel %vm2541, %v2971, %v3009
    %v3011 = vsel %vm2297, %v2979, %v2975
    %v3012 = vsel %vm2531, %v2983, %v3011
    %v3013 = vsel %vm2533, %v2987, %v3012
    %v3014 = vsel %vm2535, %v2991, %v3013
    %v3015 = vsel %vm2537, %v2995, %v3014
    %v3016 = vsel %vm2539, %v2999, %v3015
    %v3017 = vsel %vm2541, %v3003, %v3016
    %v3020 = vsel %vm2202, %v3010, -inf
    %3021 = vmax.xlane.f32.xlu0 %v3020
    %v3022 = vpop.xlane.xlu0 %3021
    %v3023 = vsel %vm2202, %v3017, -inf
    %3024 = vmax.xlane.f32.xlu0 %v3023
    %v3025 = vpop.xlane.xlu0 %3024
    %v3028 = vlaneseq
    %v3029 = vshrl.u32 %v3028, 7
    %v3030 = vsub.s32 0, %v3029
    %v3031 = vrot.slane %v3022, %v3030
    %v3032 = vlaneseq
    %v3033 = vshrl.u32 %v3032, 7
    %v3034 = vsub.s32 1, %v3033
    %v3035 = vrot.slane %v3022, %v3034
    %v3036 = vlaneseq
    %v3037 = vshrl.u32 %v3036, 7
    %v3038 = vsub.s32 2, %v3037
    %v3039 = vrot.slane %v3022, %v3038
    %v3040 = vlaneseq
    %v3041 = vshrl.u32 %v3040, 7
    %v3042 = vsub.s32 3, %v3041
    %v3043 = vrot.slane %v3022, %v3042
    %v3044 = vlaneseq
    %v3045 = vshrl.u32 %v3044, 7
    %v3046 = vsub.s32 4, %v3045
    %v3047 = vrot.slane %v3022, %v3046
    %v3048 = vlaneseq
    %v3049 = vshrl.u32 %v3048, 7
    %v3050 = vsub.s32 5, %v3049
    %v3051 = vrot.slane %v3022, %v3050
    %v3052 = vlaneseq
    %v3053 = vshrl.u32 %v3052, 7
    %v3054 = vsub.s32 6, %v3053
    %v3055 = vrot.slane %v3022, %v3054
    %v3056 = vlaneseq
    %v3057 = vshrl.u32 %v3056, 7
    %v3058 = vsub.s32 7, %v3057
    %v3059 = vrot.slane %v3022, %v3058
    %v3060 = vlaneseq
    %v3061 = vshrl.u32 %v3060, 7
    %v3062 = vsub.s32 0, %v3061
    %v3063 = vrot.slane %v3025, %v3062
    %v3064 = vlaneseq
    %v3065 = vshrl.u32 %v3064, 7
    %v3066 = vsub.s32 1, %v3065
    %v3067 = vrot.slane %v3025, %v3066
    %v3068 = vlaneseq
    %v3069 = vshrl.u32 %v3068, 7
    %v3070 = vsub.s32 2, %v3069
    %v3071 = vrot.slane %v3025, %v3070
    %v3072 = vlaneseq
    %v3073 = vshrl.u32 %v3072, 7
    %v3074 = vsub.s32 3, %v3073
    %v3075 = vrot.slane %v3025, %v3074
    %v3076 = vlaneseq
    %v3077 = vshrl.u32 %v3076, 7
    %v3078 = vsub.s32 4, %v3077
    %v3079 = vrot.slane %v3025, %v3078
    %v3080 = vlaneseq
    %v3081 = vshrl.u32 %v3080, 7
    %v3082 = vsub.s32 5, %v3081
    %v3083 = vrot.slane %v3025, %v3082
    %v3084 = vlaneseq
    %v3085 = vshrl.u32 %v3084, 7
    %v3086 = vsub.s32 6, %v3085
    %v3087 = vrot.slane %v3025, %v3086
    %v3088 = vlaneseq
    %v3089 = vshrl.u32 %v3088, 7
    %v3090 = vsub.s32 7, %v3089
    %v3091 = vrot.slane %v3025, %v3090
    %vm3108 = vcmp.eq.f32.partialorder %v2860, %v3031
    %vm3109 = vcmp.eq.f32.partialorder %v2861, %v3035
    %vm3110 = vcmp.eq.f32.partialorder %v2862, %v3039
    %vm3111 = vcmp.eq.f32.partialorder %v2863, %v3043
    %vm3112 = vcmp.eq.f32.partialorder %v2864, %v3047
    %vm3113 = vcmp.eq.f32.partialorder %v2865, %v3051
    %vm3114 = vcmp.eq.f32.partialorder %v2866, %v3055
    %vm3115 = vcmp.eq.f32.partialorder %v2867, %v3059
    %vm3116 = vcmp.eq.f32.partialorder %v2868, %v3063
    %vm3117 = vcmp.eq.f32.partialorder %v2869, %v3067
    %vm3118 = vcmp.eq.f32.partialorder %v2870, %v3071
    %vm3119 = vcmp.eq.f32.partialorder %v2871, %v3075
    %vm3120 = vcmp.eq.f32.partialorder %v2872, %v3079
    %vm3121 = vcmp.eq.f32.partialorder %v2873, %v3083
    %vm3122 = vcmp.eq.f32.partialorder %v2874, %v3087
    %vm3123 = vcmp.eq.f32.partialorder %v2875, %v3091
    %v3124 = vsel %vm3108, %v2658, 8
    %v3125 = vsel %vm3109, %v2658, 8
    %v3126 = vsel %vm3110, %v2658, 8
    %v3127 = vsel %vm3111, %v2658, 8
    %v3128 = vsel %vm3112, %v2658, 8
    %v3129 = vsel %vm3113, %v2658, 8
    %v3130 = vsel %vm3114, %v2658, 8
    %v3131 = vsel %vm3115, %v2658, 8
    %v3132 = vsel %vm3116, %v2658, 8
    %v3133 = vsel %vm3117, %v2658, 8
    %v3134 = vsel %vm3118, %v2658, 8
    %v3135 = vsel %vm3119, %v2658, 8
    %v3136 = vsel %vm3120, %v2658, 8
    %v3137 = vsel %vm3121, %v2658, 8
    %v3138 = vsel %vm3122, %v2658, 8
    %v3139 = vsel %vm3123, %v2658, 8
    %3140 = vset.pattern.permute.xlu0 0
    %3141 = vperm.xlu0 %3140, %v3124
    %v3142 = vpop.permute.xlu0 %3141
    %3143 = vset.pattern.permute.xlu0 0
    %3144 = vperm.xlu0 %3143, %v3125
    %v3145 = vpop.permute.xlu0 %3144
    %3146 = vset.pattern.permute.xlu0 0
    %3147 = vperm.xlu0 %3146, %v3126
    %v3148 = vpop.permute.xlu0 %3147
    %3149 = vset.pattern.permute.xlu0 0
    %3150 = vperm.xlu0 %3149, %v3127
    %v3151 = vpop.permute.xlu0 %3150
    %3152 = vset.pattern.permute.xlu0 0
    %3153 = vperm.xlu0 %3152, %v3128
    %v3154 = vpop.permute.xlu0 %3153
    %3155 = vset.pattern.permute.xlu0 0
    %3156 = vperm.xlu0 %3155, %v3129
    %v3157 = vpop.permute.xlu0 %3156
    %3158 = vset.pattern.permute.xlu0 0
    %3159 = vperm.xlu0 %3158, %v3130
    %v3160 = vpop.permute.xlu0 %3159
    %3161 = vset.pattern.permute.xlu0 0
    %3162 = vperm.xlu0 %3161, %v3131
    %v3163 = vpop.permute.xlu0 %3162
    %3164 = vset.pattern.permute.xlu0 0
    %3165 = vperm.xlu0 %3164, %v3132
    %v3166 = vpop.permute.xlu0 %3165
    %3167 = vset.pattern.permute.xlu0 0
    %3168 = vperm.xlu0 %3167, %v3133
    %v3169 = vpop.permute.xlu0 %3168
    %3170 = vset.pattern.permute.xlu0 0
    %3171 = vperm.xlu0 %3170, %v3134
    %v3172 = vpop.permute.xlu0 %3171
    %3173 = vset.pattern.permute.xlu0 0
    %3174 = vperm.xlu0 %3173, %v3135
    %v3175 = vpop.permute.xlu0 %3174
    %3176 = vset.pattern.permute.xlu0 0
    %3177 = vperm.xlu0 %3176, %v3136
    %v3178 = vpop.permute.xlu0 %3177
    %3179 = vset.pattern.permute.xlu0 0
    %3180 = vperm.xlu0 %3179, %v3137
    %v3181 = vpop.permute.xlu0 %3180
    %3182 = vset.pattern.permute.xlu0 0
    %3183 = vperm.xlu0 %3182, %v3138
    %v3184 = vpop.permute.xlu0 %3183
    %3185 = vset.pattern.permute.xlu0 0
    %3186 = vperm.xlu0 %3185, %v3139
    %v3187 = vpop.permute.xlu0 %3186
    %v3188 = vlaneseq
    %v3189 = vshrl.u32 %v3188, 7
    %v3190 = vsub.s32 %v143, %v3189
    %v3191 = vrot.slane %v3142, %v3190
    %v3192 = vlaneseq
    %v3193 = vshrl.u32 %v3192, 7
    %v3194 = vsub.s32 %v143, %v3193
    %v3195 = vrot.slane %v3145, %v3194
    %v3196 = vlaneseq
    %v3197 = vshrl.u32 %v3196, 7
    %v3198 = vsub.s32 %v143, %v3197
    %v3199 = vrot.slane %v3148, %v3198
    %v3200 = vlaneseq
    %v3201 = vshrl.u32 %v3200, 7
    %v3202 = vsub.s32 %v143, %v3201
    %v3203 = vrot.slane %v3151, %v3202
    %v3204 = vlaneseq
    %v3205 = vshrl.u32 %v3204, 7
    %v3206 = vsub.s32 %v143, %v3205
    %v3207 = vrot.slane %v3154, %v3206
    %v3208 = vlaneseq
    %v3209 = vshrl.u32 %v3208, 7
    %v3210 = vsub.s32 %v143, %v3209
    %v3211 = vrot.slane %v3157, %v3210
    %v3212 = vlaneseq
    %v3213 = vshrl.u32 %v3212, 7
    %v3214 = vsub.s32 %v143, %v3213
    %v3215 = vrot.slane %v3160, %v3214
    %v3216 = vlaneseq
    %v3217 = vshrl.u32 %v3216, 7
    %v3218 = vsub.s32 %v143, %v3217
    %v3219 = vrot.slane %v3163, %v3218
    %v3220 = vlaneseq
    %v3221 = vshrl.u32 %v3220, 7
    %v3222 = vsub.s32 %v143, %v3221
    %v3223 = vrot.slane %v3166, %v3222
    %v3224 = vlaneseq
    %v3225 = vshrl.u32 %v3224, 7
    %v3226 = vsub.s32 %v143, %v3225
    %v3227 = vrot.slane %v3169, %v3226
    %v3228 = vlaneseq
    %v3229 = vshrl.u32 %v3228, 7
    %v3230 = vsub.s32 %v143, %v3229
    %v3231 = vrot.slane %v3172, %v3230
    %v3232 = vlaneseq
    %v3233 = vshrl.u32 %v3232, 7
    %v3234 = vsub.s32 %v143, %v3233
    %v3235 = vrot.slane %v3175, %v3234
    %v3236 = vlaneseq
    %v3237 = vshrl.u32 %v3236, 7
    %v3238 = vsub.s32 %v143, %v3237
    %v3239 = vrot.slane %v3178, %v3238
    %v3240 = vlaneseq
    %v3241 = vshrl.u32 %v3240, 7
    %v3242 = vsub.s32 %v143, %v3241
    %v3243 = vrot.slane %v3181, %v3242
    %v3244 = vlaneseq
    %v3245 = vshrl.u32 %v3244, 7
    %v3246 = vsub.s32 %v143, %v3245
    %v3247 = vrot.slane %v3184, %v3246
    %v3248 = vlaneseq
    %v3249 = vshrl.u32 %v3248, 7
    %v3250 = vsub.s32 %v143, %v3249
    %v3251 = vrot.slane %v3187, %v3250
    %v3252 = vsel %vm2297, %v3195, %v3191
    %v3253 = vsel %vm2531, %v3199, %v3252
    %v3254 = vsel %vm2533, %v3203, %v3253
    %v3255 = vsel %vm2535, %v3207, %v3254
    %v3256 = vsel %vm2537, %v3211, %v3255
    %v3257 = vsel %vm2539, %v3215, %v3256
    %v3258 = vsel %vm2541, %v3219, %v3257
    %v3259 = vsel %vm2297, %v3227, %v3223
    %v3260 = vsel %vm2531, %v3231, %v3259
    %v3261 = vsel %vm2533, %v3235, %v3260
    %v3262 = vsel %vm2535, %v3239, %v3261
    %v3263 = vsel %vm2537, %v3243, %v3262
    %v3264 = vsel %vm2539, %v3247, %v3263
    %v3265 = vsel %vm2541, %v3251, %v3264
    %v3266 = vsel %vm2202, %v3258, 2147483647
    %v3267 = vand.u32 %v3266, 65535
    %v3268 = vshra.s32 %v3266, 16
    %v3269 = vcvt.s32.f32 %v3267
    %v3270 = vcvt.s32.f32 %v3268
    %3271 = vmin.xlane.f32.xlu0 %v3270
    %v3272 = vpop.xlane.xlu0 %3271
    %vm3273 = vcmp.eq.f32.partialorder %v3270, %v3272
    %v3274 = vsel %vm3273, %v3269, inf
    %3275 = vmin.xlane.f32.xlu0 %v3274
    %v3276 = vpop.xlane.xlu0 %3275
    %v3277 = vcvt.f32.s32 %v3276
    %v3278 = vcvt.f32.s32 %v3272
    %v3279 = vshll.u32 %v3278, 16
    %v3280 = vadd.s32 %v3279, %v3277
    %v3281 = vsel %vm2202, %v3265, 2147483647
    %v3282 = vand.u32 %v3281, 65535
    %v3283 = vshra.s32 %v3281, 16
    %v3284 = vcvt.s32.f32 %v3282
    %v3285 = vcvt.s32.f32 %v3283
    %3286 = vmin.xlane.f32.xlu0 %v3285
    %v3287 = vpop.xlane.xlu0 %3286
    %vm3288 = vcmp.eq.f32.partialorder %v3285, %v3287
    %v3289 = vsel %vm3288, %v3284, inf
    %3290 = vmin.xlane.f32.xlu0 %v3289
    %v3291 = vpop.xlane.xlu0 %3290
    %v3292 = vcvt.f32.s32 %v3291
    %v3293 = vcvt.f32.s32 %v3287
    %v3294 = vshll.u32 %v3293, 16
    %v3295 = vadd.s32 %v3294, %v3292
    %v3296 = vlaneseq
    %v3297 = vshrl.u32 %v3296, 7
    %v3298 = vsub.s32 %v143, %v3297
    %v3299 = vrot.slane %v3280, %v3298
    %v3300 = vlaneseq
    %v3301 = vshrl.u32 %v3300, 7
    %v3302 = vsub.s32 %v143, %v3301
    %v3303 = vrot.slane %v3295, %v3302
    %v3304 = vsel %vm2297, %v3303, %v3299
    %s3305 = scalar_lea.vmem [#allocation5], 6
    %3306 = vst.msk [vmem:[%s3305] sm:$0x3] %vm2300, %v3304
    %v3307 = vlaneseq
    %v3308 = vshrl.u32 %v3307, 7
    %v3309 = vsub.s32 6, %v3308
    %v3310 = vrot.slane %v2194, %v3309
    %3312 = vbcast.lane.b32.xlu0 %v3310, 256
    %v3313 = vpop.permute.xlu0 %3312
    %v3314 = vlaneseq
    %v3315 = vshrl.u32 %v3314, 7
    %v3316 = vsub.s32 7, %v3315
    %v3317 = vrot.slane %v2194, %v3316
    %3319 = vbcast.lane.b32.xlu0 %v3317, 256
    %v3320 = vpop.permute.xlu0 %3319
    %v3323 = vadd.f32 %v3022, %v3313
    %v3324 = vadd.f32 %v3025, %v3320
    %v3325 = vadd.f32 %v3323, %v2328
    %v3326 = vadd.f32 %v3323, %v2335
    %v3327 = vadd.f32 %v3323, %v2342
    %v3328 = vadd.f32 %v3323, %v2349
    %v3329 = vadd.f32 %v3323, %v2356
    %v3330 = vadd.f32 %v3323, %v2363
    %v3331 = vadd.f32 %v3323, %v2370
    %v3332 = vadd.f32 %v3323, %v2377
    %v3333 = vadd.f32 %v3324, %v2328
    %v3334 = vadd.f32 %v3324, %v2335
    %v3335 = vadd.f32 %v3324, %v2342
    %v3336 = vadd.f32 %v3324, %v2349
    %v3337 = vadd.f32 %v3324, %v2356
    %v3338 = vadd.f32 %v3324, %v2363
    %v3339 = vadd.f32 %v3324, %v2370
    %v3340 = vadd.f32 %v3324, %v2377
    %3357 = vset.pattern.permute.xlu0 0
    %3358 = vperm.xlu0 %3357, %v3325
    %v3359 = vpop.permute.xlu0 %3358
    %3360 = vset.pattern.permute.xlu0 0
    %3361 = vperm.xlu0 %3360, %v3326
    %v3362 = vpop.permute.xlu0 %3361
    %3363 = vset.pattern.permute.xlu0 0
    %3364 = vperm.xlu0 %3363, %v3327
    %v3365 = vpop.permute.xlu0 %3364
    %3366 = vset.pattern.permute.xlu0 0
    %3367 = vperm.xlu0 %3366, %v3328
    %v3368 = vpop.permute.xlu0 %3367
    %3369 = vset.pattern.permute.xlu0 0
    %3370 = vperm.xlu0 %3369, %v3329
    %v3371 = vpop.permute.xlu0 %3370
    %3372 = vset.pattern.permute.xlu0 0
    %3373 = vperm.xlu0 %3372, %v3330
    %v3374 = vpop.permute.xlu0 %3373
    %3375 = vset.pattern.permute.xlu0 0
    %3376 = vperm.xlu0 %3375, %v3331
    %v3377 = vpop.permute.xlu0 %3376
    %3378 = vset.pattern.permute.xlu0 0
    %3379 = vperm.xlu0 %3378, %v3332
    %v3380 = vpop.permute.xlu0 %3379
    %3381 = vset.pattern.permute.xlu0 0
    %3382 = vperm.xlu0 %3381, %v3333
    %v3383 = vpop.permute.xlu0 %3382
    %3384 = vset.pattern.permute.xlu0 0
    %3385 = vperm.xlu0 %3384, %v3334
    %v3386 = vpop.permute.xlu0 %3385
    %3387 = vset.pattern.permute.xlu0 0
    %3388 = vperm.xlu0 %3387, %v3335
    %v3389 = vpop.permute.xlu0 %3388
    %3390 = vset.pattern.permute.xlu0 0
    %3391 = vperm.xlu0 %3390, %v3336
    %v3392 = vpop.permute.xlu0 %3391
    %3393 = vset.pattern.permute.xlu0 0
    %3394 = vperm.xlu0 %3393, %v3337
    %v3395 = vpop.permute.xlu0 %3394
    %3396 = vset.pattern.permute.xlu0 0
    %3397 = vperm.xlu0 %3396, %v3338
    %v3398 = vpop.permute.xlu0 %3397
    %3399 = vset.pattern.permute.xlu0 0
    %3400 = vperm.xlu0 %3399, %v3339
    %v3401 = vpop.permute.xlu0 %3400
    %3402 = vset.pattern.permute.xlu0 0
    %3403 = vperm.xlu0 %3402, %v3340
    %v3404 = vpop.permute.xlu0 %3403
    %v3405 = vlaneseq
    %v3406 = vshrl.u32 %v3405, 7
    %v3407 = vsub.s32 %v143, %v3406
    %v3408 = vrot.slane %v3359, %v3407
    %v3409 = vlaneseq
    %v3410 = vshrl.u32 %v3409, 7
    %v3411 = vsub.s32 %v143, %v3410
    %v3412 = vrot.slane %v3362, %v3411
    %v3413 = vlaneseq
    %v3414 = vshrl.u32 %v3413, 7
    %v3415 = vsub.s32 %v143, %v3414
    %v3416 = vrot.slane %v3365, %v3415
    %v3417 = vlaneseq
    %v3418 = vshrl.u32 %v3417, 7
    %v3419 = vsub.s32 %v143, %v3418
    %v3420 = vrot.slane %v3368, %v3419
    %v3421 = vlaneseq
    %v3422 = vshrl.u32 %v3421, 7
    %v3423 = vsub.s32 %v143, %v3422
    %v3424 = vrot.slane %v3371, %v3423
    %v3425 = vlaneseq
    %v3426 = vshrl.u32 %v3425, 7
    %v3427 = vsub.s32 %v143, %v3426
    %v3428 = vrot.slane %v3374, %v3427
    %v3429 = vlaneseq
    %v3430 = vshrl.u32 %v3429, 7
    %v3431 = vsub.s32 %v143, %v3430
    %v3432 = vrot.slane %v3377, %v3431
    %v3433 = vlaneseq
    %v3434 = vshrl.u32 %v3433, 7
    %v3435 = vsub.s32 %v143, %v3434
    %v3436 = vrot.slane %v3380, %v3435
    %v3437 = vlaneseq
    %v3438 = vshrl.u32 %v3437, 7
    %v3439 = vsub.s32 %v143, %v3438
    %v3440 = vrot.slane %v3383, %v3439
    %v3441 = vlaneseq
    %v3442 = vshrl.u32 %v3441, 7
    %v3443 = vsub.s32 %v143, %v3442
    %v3444 = vrot.slane %v3386, %v3443
    %v3445 = vlaneseq
    %v3446 = vshrl.u32 %v3445, 7
    %v3447 = vsub.s32 %v143, %v3446
    %v3448 = vrot.slane %v3389, %v3447
    %v3449 = vlaneseq
    %v3450 = vshrl.u32 %v3449, 7
    %v3451 = vsub.s32 %v143, %v3450
    %v3452 = vrot.slane %v3392, %v3451
    %v3453 = vlaneseq
    %v3454 = vshrl.u32 %v3453, 7
    %v3455 = vsub.s32 %v143, %v3454
    %v3456 = vrot.slane %v3395, %v3455
    %v3457 = vlaneseq
    %v3458 = vshrl.u32 %v3457, 7
    %v3459 = vsub.s32 %v143, %v3458
    %v3460 = vrot.slane %v3398, %v3459
    %v3461 = vlaneseq
    %v3462 = vshrl.u32 %v3461, 7
    %v3463 = vsub.s32 %v143, %v3462
    %v3464 = vrot.slane %v3401, %v3463
    %v3465 = vlaneseq
    %v3466 = vshrl.u32 %v3465, 7
    %v3467 = vsub.s32 %v143, %v3466
    %v3468 = vrot.slane %v3404, %v3467
    %v3469 = vsel %vm2297, %v3412, %v3408
    %v3470 = vsel %vm2531, %v3416, %v3469
    %v3471 = vsel %vm2533, %v3420, %v3470
    %v3472 = vsel %vm2535, %v3424, %v3471
    %v3473 = vsel %vm2537, %v3428, %v3472
    %v3474 = vsel %vm2539, %v3432, %v3473
    %v3475 = vsel %vm2541, %v3436, %v3474
    %v3476 = vsel %vm2297, %v3444, %v3440
    %v3477 = vsel %vm2531, %v3448, %v3476
    %v3478 = vsel %vm2533, %v3452, %v3477
    %v3479 = vsel %vm2535, %v3456, %v3478
    %v3480 = vsel %vm2537, %v3460, %v3479
    %v3481 = vsel %vm2539, %v3464, %v3480
    %v3482 = vsel %vm2541, %v3468, %v3481
    %v3485 = vsel %vm2202, %v3475, -inf
    %3486 = vmax.xlane.f32.xlu0 %v3485
    %v3487 = vpop.xlane.xlu0 %3486
    %v3488 = vsel %vm2202, %v3482, -inf
    %3489 = vmax.xlane.f32.xlu0 %v3488
    %v3490 = vpop.xlane.xlu0 %3489
    %v3493 = vlaneseq
    %v3494 = vshrl.u32 %v3493, 7
    %v3495 = vsub.s32 0, %v3494
    %v3496 = vrot.slane %v3487, %v3495
    %v3497 = vlaneseq
    %v3498 = vshrl.u32 %v3497, 7
    %v3499 = vsub.s32 1, %v3498
    %v3500 = vrot.slane %v3487, %v3499
    %v3501 = vlaneseq
    %v3502 = vshrl.u32 %v3501, 7
    %v3503 = vsub.s32 2, %v3502
    %v3504 = vrot.slane %v3487, %v3503
    %v3505 = vlaneseq
    %v3506 = vshrl.u32 %v3505, 7
    %v3507 = vsub.s32 3, %v3506
    %v3508 = vrot.slane %v3487, %v3507
    %v3509 = vlaneseq
    %v3510 = vshrl.u32 %v3509, 7
    %v3511 = vsub.s32 4, %v3510
    %v3512 = vrot.slane %v3487, %v3511
    %v3513 = vlaneseq
    %v3514 = vshrl.u32 %v3513, 7
    %v3515 = vsub.s32 5, %v3514
    %v3516 = vrot.slane %v3487, %v3515
    %v3517 = vlaneseq
    %v3518 = vshrl.u32 %v3517, 7
    %v3519 = vsub.s32 6, %v3518
    %v3520 = vrot.slane %v3487, %v3519
    %v3521 = vlaneseq
    %v3522 = vshrl.u32 %v3521, 7
    %v3523 = vsub.s32 7, %v3522
    %v3524 = vrot.slane %v3487, %v3523
    %v3525 = vlaneseq
    %v3526 = vshrl.u32 %v3525, 7
    %v3527 = vsub.s32 0, %v3526
    %v3528 = vrot.slane %v3490, %v3527
    %v3529 = vlaneseq
    %v3530 = vshrl.u32 %v3529, 7
    %v3531 = vsub.s32 1, %v3530
    %v3532 = vrot.slane %v3490, %v3531
    %v3533 = vlaneseq
    %v3534 = vshrl.u32 %v3533, 7
    %v3535 = vsub.s32 2, %v3534
    %v3536 = vrot.slane %v3490, %v3535
    %v3537 = vlaneseq
    %v3538 = vshrl.u32 %v3537, 7
    %v3539 = vsub.s32 3, %v3538
    %v3540 = vrot.slane %v3490, %v3539
    %v3541 = vlaneseq
    %v3542 = vshrl.u32 %v3541, 7
    %v3543 = vsub.s32 4, %v3542
    %v3544 = vrot.slane %v3490, %v3543
    %v3545 = vlaneseq
    %v3546 = vshrl.u32 %v3545, 7
    %v3547 = vsub.s32 5, %v3546
    %v3548 = vrot.slane %v3490, %v3547
    %v3549 = vlaneseq
    %v3550 = vshrl.u32 %v3549, 7
    %v3551 = vsub.s32 6, %v3550
    %v3552 = vrot.slane %v3490, %v3551
    %v3553 = vlaneseq
    %v3554 = vshrl.u32 %v3553, 7
    %v3555 = vsub.s32 7, %v3554
    %v3556 = vrot.slane %v3490, %v3555
    %vm3573 = vcmp.eq.f32.partialorder %v3325, %v3496
    %vm3574 = vcmp.eq.f32.partialorder %v3326, %v3500
    %vm3575 = vcmp.eq.f32.partialorder %v3327, %v3504
    %vm3576 = vcmp.eq.f32.partialorder %v3328, %v3508
    %vm3577 = vcmp.eq.f32.partialorder %v3329, %v3512
    %vm3578 = vcmp.eq.f32.partialorder %v3330, %v3516
    %vm3579 = vcmp.eq.f32.partialorder %v3331, %v3520
    %vm3580 = vcmp.eq.f32.partialorder %v3332, %v3524
    %vm3581 = vcmp.eq.f32.partialorder %v3333, %v3528
    %vm3582 = vcmp.eq.f32.partialorder %v3334, %v3532
    %vm3583 = vcmp.eq.f32.partialorder %v3335, %v3536
    %vm3584 = vcmp.eq.f32.partialorder %v3336, %v3540
    %vm3585 = vcmp.eq.f32.partialorder %v3337, %v3544
    %vm3586 = vcmp.eq.f32.partialorder %v3338, %v3548
    %vm3587 = vcmp.eq.f32.partialorder %v3339, %v3552
    %vm3588 = vcmp.eq.f32.partialorder %v3340, %v3556
    %v3589 = vsel %vm3573, %v2658, 8
    %v3590 = vsel %vm3574, %v2658, 8
    %v3591 = vsel %vm3575, %v2658, 8
    %v3592 = vsel %vm3576, %v2658, 8
    %v3593 = vsel %vm3577, %v2658, 8
    %v3594 = vsel %vm3578, %v2658, 8
    %v3595 = vsel %vm3579, %v2658, 8
    %v3596 = vsel %vm3580, %v2658, 8
    %v3597 = vsel %vm3581, %v2658, 8
    %v3598 = vsel %vm3582, %v2658, 8
    %v3599 = vsel %vm3583, %v2658, 8
    %v3600 = vsel %vm3584, %v2658, 8
    %v3601 = vsel %vm3585, %v2658, 8
    %v3602 = vsel %vm3586, %v2658, 8
    %v3603 = vsel %vm3587, %v2658, 8
    %v3604 = vsel %vm3588, %v2658, 8
    %3605 = vset.pattern.permute.xlu0 0
    %3606 = vperm.xlu0 %3605, %v3589
    %v3607 = vpop.permute.xlu0 %3606
    %3608 = vset.pattern.permute.xlu0 0
    %3609 = vperm.xlu0 %3608, %v3590
    %v3610 = vpop.permute.xlu0 %3609
    %3611 = vset.pattern.permute.xlu0 0
    %3612 = vperm.xlu0 %3611, %v3591
    %v3613 = vpop.permute.xlu0 %3612
    %3614 = vset.pattern.permute.xlu0 0
    %3615 = vperm.xlu0 %3614, %v3592
    %v3616 = vpop.permute.xlu0 %3615
    %3617 = vset.pattern.permute.xlu0 0
    %3618 = vperm.xlu0 %3617, %v3593
    %v3619 = vpop.permute.xlu0 %3618
    %3620 = vset.pattern.permute.xlu0 0
    %3621 = vperm.xlu0 %3620, %v3594
    %v3622 = vpop.permute.xlu0 %3621
    %3623 = vset.pattern.permute.xlu0 0
    %3624 = vperm.xlu0 %3623, %v3595
    %v3625 = vpop.permute.xlu0 %3624
    %3626 = vset.pattern.permute.xlu0 0
    %3627 = vperm.xlu0 %3626, %v3596
    %v3628 = vpop.permute.xlu0 %3627
    %3629 = vset.pattern.permute.xlu0 0
    %3630 = vperm.xlu0 %3629, %v3597
    %v3631 = vpop.permute.xlu0 %3630
    %3632 = vset.pattern.permute.xlu0 0
    %3633 = vperm.xlu0 %3632, %v3598
    %v3634 = vpop.permute.xlu0 %3633
    %3635 = vset.pattern.permute.xlu0 0
    %3636 = vperm.xlu0 %3635, %v3599
    %v3637 = vpop.permute.xlu0 %3636
    %3638 = vset.pattern.permute.xlu0 0
    %3639 = vperm.xlu0 %3638, %v3600
    %v3640 = vpop.permute.xlu0 %3639
    %3641 = vset.pattern.permute.xlu0 0
    %3642 = vperm.xlu0 %3641, %v3601
    %v3643 = vpop.permute.xlu0 %3642
    %3644 = vset.pattern.permute.xlu0 0
    %3645 = vperm.xlu0 %3644, %v3602
    %v3646 = vpop.permute.xlu0 %3645
    %3647 = vset.pattern.permute.xlu0 0
    %3648 = vperm.xlu0 %3647, %v3603
    %v3649 = vpop.permute.xlu0 %3648
    %3650 = vset.pattern.permute.xlu0 0
    %3651 = vperm.xlu0 %3650, %v3604
    %v3652 = vpop.permute.xlu0 %3651
    %v3653 = vlaneseq
    %v3654 = vshrl.u32 %v3653, 7
    %v3655 = vsub.s32 %v143, %v3654
    %v3656 = vrot.slane %v3607, %v3655
    %v3657 = vlaneseq
    %v3658 = vshrl.u32 %v3657, 7
    %v3659 = vsub.s32 %v143, %v3658
    %v3660 = vrot.slane %v3610, %v3659
    %v3661 = vlaneseq
    %v3662 = vshrl.u32 %v3661, 7
    %v3663 = vsub.s32 %v143, %v3662
    %v3664 = vrot.slane %v3613, %v3663
    %v3665 = vlaneseq
    %v3666 = vshrl.u32 %v3665, 7
    %v3667 = vsub.s32 %v143, %v3666
    %v3668 = vrot.slane %v3616, %v3667
    %v3669 = vlaneseq
    %v3670 = vshrl.u32 %v3669, 7
    %v3671 = vsub.s32 %v143, %v3670
    %v3672 = vrot.slane %v3619, %v3671
    %v3673 = vlaneseq
    %v3674 = vshrl.u32 %v3673, 7
    %v3675 = vsub.s32 %v143, %v3674
    %v3676 = vrot.slane %v3622, %v3675
    %v3677 = vlaneseq
    %v3678 = vshrl.u32 %v3677, 7
    %v3679 = vsub.s32 %v143, %v3678
    %v3680 = vrot.slane %v3625, %v3679
    %v3681 = vlaneseq
    %v3682 = vshrl.u32 %v3681, 7
    %v3683 = vsub.s32 %v143, %v3682
    %v3684 = vrot.slane %v3628, %v3683
    %v3685 = vlaneseq
    %v3686 = vshrl.u32 %v3685, 7
    %v3687 = vsub.s32 %v143, %v3686
    %v3688 = vrot.slane %v3631, %v3687
    %v3689 = vlaneseq
    %v3690 = vshrl.u32 %v3689, 7
    %v3691 = vsub.s32 %v143, %v3690
    %v3692 = vrot.slane %v3634, %v3691
    %v3693 = vlaneseq
    %v3694 = vshrl.u32 %v3693, 7
    %v3695 = vsub.s32 %v143, %v3694
    %v3696 = vrot.slane %v3637, %v3695
    %v3697 = vlaneseq
    %v3698 = vshrl.u32 %v3697, 7
    %v3699 = vsub.s32 %v143, %v3698
    %v3700 = vrot.slane %v3640, %v3699
    %v3701 = vlaneseq
    %v3702 = vshrl.u32 %v3701, 7
    %v3703 = vsub.s32 %v143, %v3702
    %v3704 = vrot.slane %v3643, %v3703
    %v3705 = vlaneseq
    %v3706 = vshrl.u32 %v3705, 7
    %v3707 = vsub.s32 %v143, %v3706
    %v3708 = vrot.slane %v3646, %v3707
    %v3709 = vlaneseq
    %v3710 = vshrl.u32 %v3709, 7
    %v3711 = vsub.s32 %v143, %v3710
    %v3712 = vrot.slane %v3649, %v3711
    %v3713 = vlaneseq
    %v3714 = vshrl.u32 %v3713, 7
    %v3715 = vsub.s32 %v143, %v3714
    %v3716 = vrot.slane %v3652, %v3715
    %v3717 = vsel %vm2297, %v3660, %v3656
    %v3718 = vsel %vm2531, %v3664, %v3717
    %v3719 = vsel %vm2533, %v3668, %v3718
    %v3720 = vsel %vm2535, %v3672, %v3719
    %v3721 = vsel %vm2537, %v3676, %v3720
    %v3722 = vsel %vm2539, %v3680, %v3721
    %v3723 = vsel %vm2541, %v3684, %v3722
    %v3724 = vsel %vm2297, %v3692, %v3688
    %v3725 = vsel %vm2531, %v3696, %v3724
    %v3726 = vsel %vm2533, %v3700, %v3725
    %v3727 = vsel %vm2535, %v3704, %v3726
    %v3728 = vsel %vm2537, %v3708, %v3727
    %v3729 = vsel %vm2539, %v3712, %v3728
    %v3730 = vsel %vm2541, %v3716, %v3729
    %v3731 = vsel %vm2202, %v3723, 2147483647
    %v3732 = vand.u32 %v3731, 65535
    %v3733 = vshra.s32 %v3731, 16
    %v3734 = vcvt.s32.f32 %v3732
    %v3735 = vcvt.s32.f32 %v3733
    %3736 = vmin.xlane.f32.xlu0 %v3735
    %v3737 = vpop.xlane.xlu0 %3736
    %vm3738 = vcmp.eq.f32.partialorder %v3735, %v3737
    %v3739 = vsel %vm3738, %v3734, inf
    %3740 = vmin.xlane.f32.xlu0 %v3739
    %v3741 = vpop.xlane.xlu0 %3740
    %v3742 = vcvt.f32.s32 %v3741
    %v3743 = vcvt.f32.s32 %v3737
    %v3744 = vshll.u32 %v3743, 16
    %v3745 = vadd.s32 %v3744, %v3742
    %v3746 = vsel %vm2202, %v3730, 2147483647
    %v3747 = vand.u32 %v3746, 65535
    %v3748 = vshra.s32 %v3746, 16
    %v3749 = vcvt.s32.f32 %v3747
    %v3750 = vcvt.s32.f32 %v3748
    %3751 = vmin.xlane.f32.xlu0 %v3750
    %v3752 = vpop.xlane.xlu0 %3751
    %vm3753 = vcmp.eq.f32.partialorder %v3750, %v3752
    %v3754 = vsel %vm3753, %v3749, inf
    %3755 = vmin.xlane.f32.xlu0 %v3754
    %v3756 = vpop.xlane.xlu0 %3755
    %v3757 = vcvt.f32.s32 %v3756
    %v3758 = vcvt.f32.s32 %v3752
    %v3759 = vshll.u32 %v3758, 16
    %v3760 = vadd.s32 %v3759, %v3757
    %v3761 = vlaneseq
    %v3762 = vshrl.u32 %v3761, 7
    %v3763 = vsub.s32 %v143, %v3762
    %v3764 = vrot.slane %v3745, %v3763
    %v3765 = vlaneseq
    %v3766 = vshrl.u32 %v3765, 7
    %v3767 = vsub.s32 %v143, %v3766
    %v3768 = vrot.slane %v3760, %v3767
    %v3769 = vsel %vm2297, %v3768, %v3764
    %s3770 = scalar_lea.vmem [#allocation5], 8
    %3771 = vst.msk [vmem:[%s3770] sm:$0x3] %vm2300, %v3769
    %v3773 = vlaneseq
    %v3774 = vshrl.u32 %v3773, 7
    %v3775 = vsub.s32 0, %v3774
    %v3776 = vrot.slane %v2199, %v3775
    %3778 = vbcast.lane.b32.xlu0 %v3776, 256
    %v3779 = vpop.permute.xlu0 %3778
    %v3780 = vlaneseq
    %v3781 = vshrl.u32 %v3780, 7
    %v3782 = vsub.s32 1, %v3781
    %v3783 = vrot.slane %v2199, %v3782
    %3785 = vbcast.lane.b32.xlu0 %v3783, 256
    %v3786 = vpop.permute.xlu0 %3785
    %v3789 = vadd.f32 %v3487, %v3779
    %v3790 = vadd.f32 %v3490, %v3786
    %v3791 = vadd.f32 %v3789, %v2328
    %v3792 = vadd.f32 %v3789, %v2335
    %v3793 = vadd.f32 %v3789, %v2342
    %v3794 = vadd.f32 %v3789, %v2349
    %v3795 = vadd.f32 %v3789, %v2356
    %v3796 = vadd.f32 %v3789, %v2363
    %v3797 = vadd.f32 %v3789, %v2370
    %v3798 = vadd.f32 %v3789, %v2377
    %v3799 = vadd.f32 %v3790, %v2328
    %v3800 = vadd.f32 %v3790, %v2335
    %v3801 = vadd.f32 %v3790, %v2342
    %v3802 = vadd.f32 %v3790, %v2349
    %v3803 = vadd.f32 %v3790, %v2356
    %v3804 = vadd.f32 %v3790, %v2363
    %v3805 = vadd.f32 %v3790, %v2370
    %v3806 = vadd.f32 %v3790, %v2377
    %3823 = vset.pattern.permute.xlu0 0
    %3824 = vperm.xlu0 %3823, %v3791
    %v3825 = vpop.permute.xlu0 %3824
    %3826 = vset.pattern.permute.xlu0 0
    %3827 = vperm.xlu0 %3826, %v3792
    %v3828 = vpop.permute.xlu0 %3827
    %3829 = vset.pattern.permute.xlu0 0
    %3830 = vperm.xlu0 %3829, %v3793
    %v3831 = vpop.permute.xlu0 %3830
    %3832 = vset.pattern.permute.xlu0 0
    %3833 = vperm.xlu0 %3832, %v3794
    %v3834 = vpop.permute.xlu0 %3833
    %3835 = vset.pattern.permute.xlu0 0
    %3836 = vperm.xlu0 %3835, %v3795
    %v3837 = vpop.permute.xlu0 %3836
    %3838 = vset.pattern.permute.xlu0 0
    %3839 = vperm.xlu0 %3838, %v3796
    %v3840 = vpop.permute.xlu0 %3839
    %3841 = vset.pattern.permute.xlu0 0
    %3842 = vperm.xlu0 %3841, %v3797
    %v3843 = vpop.permute.xlu0 %3842
    %3844 = vset.pattern.permute.xlu0 0
    %3845 = vperm.xlu0 %3844, %v3798
    %v3846 = vpop.permute.xlu0 %3845
    %3847 = vset.pattern.permute.xlu0 0
    %3848 = vperm.xlu0 %3847, %v3799
    %v3849 = vpop.permute.xlu0 %3848
    %3850 = vset.pattern.permute.xlu0 0
    %3851 = vperm.xlu0 %3850, %v3800
    %v3852 = vpop.permute.xlu0 %3851
    %3853 = vset.pattern.permute.xlu0 0
    %3854 = vperm.xlu0 %3853, %v3801
    %v3855 = vpop.permute.xlu0 %3854
    %3856 = vset.pattern.permute.xlu0 0
    %3857 = vperm.xlu0 %3856, %v3802
    %v3858 = vpop.permute.xlu0 %3857
    %3859 = vset.pattern.permute.xlu0 0
    %3860 = vperm.xlu0 %3859, %v3803
    %v3861 = vpop.permute.xlu0 %3860
    %3862 = vset.pattern.permute.xlu0 0
    %3863 = vperm.xlu0 %3862, %v3804
    %v3864 = vpop.permute.xlu0 %3863
    %3865 = vset.pattern.permute.xlu0 0
    %3866 = vperm.xlu0 %3865, %v3805
    %v3867 = vpop.permute.xlu0 %3866
    %3868 = vset.pattern.permute.xlu0 0
    %3869 = vperm.xlu0 %3868, %v3806
    %v3870 = vpop.permute.xlu0 %3869
    %v3871 = vlaneseq
    %v3872 = vshrl.u32 %v3871, 7
    %v3873 = vsub.s32 %v143, %v3872
    %v3874 = vrot.slane %v3825, %v3873
    %v3875 = vlaneseq
    %v3876 = vshrl.u32 %v3875, 7
    %v3877 = vsub.s32 %v143, %v3876
    %v3878 = vrot.slane %v3828, %v3877
    %v3879 = vlaneseq
    %v3880 = vshrl.u32 %v3879, 7
    %v3881 = vsub.s32 %v143, %v3880
    %v3882 = vrot.slane %v3831, %v3881
    %v3883 = vlaneseq
    %v3884 = vshrl.u32 %v3883, 7
    %v3885 = vsub.s32 %v143, %v3884
    %v3886 = vrot.slane %v3834, %v3885
    %v3887 = vlaneseq
    %v3888 = vshrl.u32 %v3887, 7
    %v3889 = vsub.s32 %v143, %v3888
    %v3890 = vrot.slane %v3837, %v3889
    %v3891 = vlaneseq
    %v3892 = vshrl.u32 %v3891, 7
    %v3893 = vsub.s32 %v143, %v3892
    %v3894 = vrot.slane %v3840, %v3893
    %v3895 = vlaneseq
    %v3896 = vshrl.u32 %v3895, 7
    %v3897 = vsub.s32 %v143, %v3896
    %v3898 = vrot.slane %v3843, %v3897
    %v3899 = vlaneseq
    %v3900 = vshrl.u32 %v3899, 7
    %v3901 = vsub.s32 %v143, %v3900
    %v3902 = vrot.slane %v3846, %v3901
    %v3903 = vlaneseq
    %v3904 = vshrl.u32 %v3903, 7
    %v3905 = vsub.s32 %v143, %v3904
    %v3906 = vrot.slane %v3849, %v3905
    %v3907 = vlaneseq
    %v3908 = vshrl.u32 %v3907, 7
    %v3909 = vsub.s32 %v143, %v3908
    %v3910 = vrot.slane %v3852, %v3909
    %v3911 = vlaneseq
    %v3912 = vshrl.u32 %v3911, 7
    %v3913 = vsub.s32 %v143, %v3912
    %v3914 = vrot.slane %v3855, %v3913
    %v3915 = vlaneseq
    %v3916 = vshrl.u32 %v3915, 7
    %v3917 = vsub.s32 %v143, %v3916
    %v3918 = vrot.slane %v3858, %v3917
    %v3919 = vlaneseq
    %v3920 = vshrl.u32 %v3919, 7
    %v3921 = vsub.s32 %v143, %v3920
    %v3922 = vrot.slane %v3861, %v3921
    %v3923 = vlaneseq
    %v3924 = vshrl.u32 %v3923, 7
    %v3925 = vsub.s32 %v143, %v3924
    %v3926 = vrot.slane %v3864, %v3925
    %v3927 = vlaneseq
    %v3928 = vshrl.u32 %v3927, 7
    %v3929 = vsub.s32 %v143, %v3928
    %v3930 = vrot.slane %v3867, %v3929
    %v3931 = vlaneseq
    %v3932 = vshrl.u32 %v3931, 7
    %v3933 = vsub.s32 %v143, %v3932
    %v3934 = vrot.slane %v3870, %v3933
    %v3935 = vsel %vm2297, %v3878, %v3874
    %v3936 = vsel %vm2531, %v3882, %v3935
    %v3937 = vsel %vm2533, %v3886, %v3936
    %v3938 = vsel %vm2535, %v3890, %v3937
    %v3939 = vsel %vm2537, %v3894, %v3938
    %v3940 = vsel %vm2539, %v3898, %v3939
    %v3941 = vsel %vm2541, %v3902, %v3940
    %v3942 = vsel %vm2297, %v3910, %v3906
    %v3943 = vsel %vm2531, %v3914, %v3942
    %v3944 = vsel %vm2533, %v3918, %v3943
    %v3945 = vsel %vm2535, %v3922, %v3944
    %v3946 = vsel %vm2537, %v3926, %v3945
    %v3947 = vsel %vm2539, %v3930, %v3946
    %v3948 = vsel %vm2541, %v3934, %v3947
    %v3951 = vsel %vm2202, %v3941, -inf
    %3952 = vmax.xlane.f32.xlu0 %v3951
    %v3953 = vpop.xlane.xlu0 %3952
    %v3954 = vsel %vm2202, %v3948, -inf
    %3955 = vmax.xlane.f32.xlu0 %v3954
    %v3956 = vpop.xlane.xlu0 %3955
    %v3959 = vlaneseq
    %v3960 = vshrl.u32 %v3959, 7
    %v3961 = vsub.s32 0, %v3960
    %v3962 = vrot.slane %v3953, %v3961
    %v3963 = vlaneseq
    %v3964 = vshrl.u32 %v3963, 7
    %v3965 = vsub.s32 1, %v3964
    %v3966 = vrot.slane %v3953, %v3965
    %v3967 = vlaneseq
    %v3968 = vshrl.u32 %v3967, 7
    %v3969 = vsub.s32 2, %v3968
    %v3970 = vrot.slane %v3953, %v3969
    %v3971 = vlaneseq
    %v3972 = vshrl.u32 %v3971, 7
    %v3973 = vsub.s32 3, %v3972
    %v3974 = vrot.slane %v3953, %v3973
    %v3975 = vlaneseq
    %v3976 = vshrl.u32 %v3975, 7
    %v3977 = vsub.s32 4, %v3976
    %v3978 = vrot.slane %v3953, %v3977
    %v3979 = vlaneseq
    %v3980 = vshrl.u32 %v3979, 7
    %v3981 = vsub.s32 5, %v3980
    %v3982 = vrot.slane %v3953, %v3981
    %v3983 = vlaneseq
    %v3984 = vshrl.u32 %v3983, 7
    %v3985 = vsub.s32 6, %v3984
    %v3986 = vrot.slane %v3953, %v3985
    %v3987 = vlaneseq
    %v3988 = vshrl.u32 %v3987, 7
    %v3989 = vsub.s32 7, %v3988
    %v3990 = vrot.slane %v3953, %v3989
    %v3991 = vlaneseq
    %v3992 = vshrl.u32 %v3991, 7
    %v3993 = vsub.s32 0, %v3992
    %v3994 = vrot.slane %v3956, %v3993
    %v3995 = vlaneseq
    %v3996 = vshrl.u32 %v3995, 7
    %v3997 = vsub.s32 1, %v3996
    %v3998 = vrot.slane %v3956, %v3997
    %v3999 = vlaneseq
    %v4000 = vshrl.u32 %v3999, 7
    %v4001 = vsub.s32 2, %v4000
    %v4002 = vrot.slane %v3956, %v4001
    %v4003 = vlaneseq
    %v4004 = vshrl.u32 %v4003, 7
    %v4005 = vsub.s32 3, %v4004
    %v4006 = vrot.slane %v3956, %v4005
    %v4007 = vlaneseq
    %v4008 = vshrl.u32 %v4007, 7
    %v4009 = vsub.s32 4, %v4008
    %v4010 = vrot.slane %v3956, %v4009
    %v4011 = vlaneseq
    %v4012 = vshrl.u32 %v4011, 7
    %v4013 = vsub.s32 5, %v4012
    %v4014 = vrot.slane %v3956, %v4013
    %v4015 = vlaneseq
    %v4016 = vshrl.u32 %v4015, 7
    %v4017 = vsub.s32 6, %v4016
    %v4018 = vrot.slane %v3956, %v4017
    %v4019 = vlaneseq
    %v4020 = vshrl.u32 %v4019, 7
    %v4021 = vsub.s32 7, %v4020
    %v4022 = vrot.slane %v3956, %v4021
    %vm4039 = vcmp.eq.f32.partialorder %v3791, %v3962
    %vm4040 = vcmp.eq.f32.partialorder %v3792, %v3966
    %vm4041 = vcmp.eq.f32.partialorder %v3793, %v3970
    %vm4042 = vcmp.eq.f32.partialorder %v3794, %v3974
    %vm4043 = vcmp.eq.f32.partialorder %v3795, %v3978
    %vm4044 = vcmp.eq.f32.partialorder %v3796, %v3982
    %vm4045 = vcmp.eq.f32.partialorder %v3797, %v3986
    %vm4046 = vcmp.eq.f32.partialorder %v3798, %v3990
    %vm4047 = vcmp.eq.f32.partialorder %v3799, %v3994
    %vm4048 = vcmp.eq.f32.partialorder %v3800, %v3998
    %vm4049 = vcmp.eq.f32.partialorder %v3801, %v4002
    %vm4050 = vcmp.eq.f32.partialorder %v3802, %v4006
    %vm4051 = vcmp.eq.f32.partialorder %v3803, %v4010
    %vm4052 = vcmp.eq.f32.partialorder %v3804, %v4014
    %vm4053 = vcmp.eq.f32.partialorder %v3805, %v4018
    %vm4054 = vcmp.eq.f32.partialorder %v3806, %v4022
    %v4055 = vsel %vm4039, %v2658, 8
    %v4056 = vsel %vm4040, %v2658, 8
    %v4057 = vsel %vm4041, %v2658, 8
    %v4058 = vsel %vm4042, %v2658, 8
    %v4059 = vsel %vm4043, %v2658, 8
    %v4060 = vsel %vm4044, %v2658, 8
    %v4061 = vsel %vm4045, %v2658, 8
    %v4062 = vsel %vm4046, %v2658, 8
    %v4063 = vsel %vm4047, %v2658, 8
    %v4064 = vsel %vm4048, %v2658, 8
    %v4065 = vsel %vm4049, %v2658, 8
    %v4066 = vsel %vm4050, %v2658, 8
    %v4067 = vsel %vm4051, %v2658, 8
    %v4068 = vsel %vm4052, %v2658, 8
    %v4069 = vsel %vm4053, %v2658, 8
    %v4070 = vsel %vm4054, %v2658, 8
    %4071 = vset.pattern.permute.xlu0 0
    %4072 = vperm.xlu0 %4071, %v4055
    %v4073 = vpop.permute.xlu0 %4072
    %4074 = vset.pattern.permute.xlu0 0
    %4075 = vperm.xlu0 %4074, %v4056
    %v4076 = vpop.permute.xlu0 %4075
    %4077 = vset.pattern.permute.xlu0 0
    %4078 = vperm.xlu0 %4077, %v4057
    %v4079 = vpop.permute.xlu0 %4078
    %4080 = vset.pattern.permute.xlu0 0
    %4081 = vperm.xlu0 %4080, %v4058
    %v4082 = vpop.permute.xlu0 %4081
    %4083 = vset.pattern.permute.xlu0 0
    %4084 = vperm.xlu0 %4083, %v4059
    %v4085 = vpop.permute.xlu0 %4084
    %4086 = vset.pattern.permute.xlu0 0
    %4087 = vperm.xlu0 %4086, %v4060
    %v4088 = vpop.permute.xlu0 %4087
    %4089 = vset.pattern.permute.xlu0 0
    %4090 = vperm.xlu0 %4089, %v4061
    %v4091 = vpop.permute.xlu0 %4090
    %4092 = vset.pattern.permute.xlu0 0
    %4093 = vperm.xlu0 %4092, %v4062
    %v4094 = vpop.permute.xlu0 %4093
    %4095 = vset.pattern.permute.xlu0 0
    %4096 = vperm.xlu0 %4095, %v4063
    %v4097 = vpop.permute.xlu0 %4096
    %4098 = vset.pattern.permute.xlu0 0
    %4099 = vperm.xlu0 %4098, %v4064
    %v4100 = vpop.permute.xlu0 %4099
    %4101 = vset.pattern.permute.xlu0 0
    %4102 = vperm.xlu0 %4101, %v4065
    %v4103 = vpop.permute.xlu0 %4102
    %4104 = vset.pattern.permute.xlu0 0
    %4105 = vperm.xlu0 %4104, %v4066
    %v4106 = vpop.permute.xlu0 %4105
    %4107 = vset.pattern.permute.xlu0 0
    %4108 = vperm.xlu0 %4107, %v4067
    %v4109 = vpop.permute.xlu0 %4108
    %4110 = vset.pattern.permute.xlu0 0
    %4111 = vperm.xlu0 %4110, %v4068
    %v4112 = vpop.permute.xlu0 %4111
    %4113 = vset.pattern.permute.xlu0 0
    %4114 = vperm.xlu0 %4113, %v4069
    %v4115 = vpop.permute.xlu0 %4114
    %4116 = vset.pattern.permute.xlu0 0
    %4117 = vperm.xlu0 %4116, %v4070
    %v4118 = vpop.permute.xlu0 %4117
    %v4119 = vlaneseq
    %v4120 = vshrl.u32 %v4119, 7
    %v4121 = vsub.s32 %v143, %v4120
    %v4122 = vrot.slane %v4073, %v4121
    %v4123 = vlaneseq
    %v4124 = vshrl.u32 %v4123, 7
    %v4125 = vsub.s32 %v143, %v4124
    %v4126 = vrot.slane %v4076, %v4125
    %v4127 = vlaneseq
    %v4128 = vshrl.u32 %v4127, 7
    %v4129 = vsub.s32 %v143, %v4128
    %v4130 = vrot.slane %v4079, %v4129
    %v4131 = vlaneseq
    %v4132 = vshrl.u32 %v4131, 7
    %v4133 = vsub.s32 %v143, %v4132
    %v4134 = vrot.slane %v4082, %v4133
    %v4135 = vlaneseq
    %v4136 = vshrl.u32 %v4135, 7
    %v4137 = vsub.s32 %v143, %v4136
    %v4138 = vrot.slane %v4085, %v4137
    %v4139 = vlaneseq
    %v4140 = vshrl.u32 %v4139, 7
    %v4141 = vsub.s32 %v143, %v4140
    %v4142 = vrot.slane %v4088, %v4141
    %v4143 = vlaneseq
    %v4144 = vshrl.u32 %v4143, 7
    %v4145 = vsub.s32 %v143, %v4144
    %v4146 = vrot.slane %v4091, %v4145
    %v4147 = vlaneseq
    %v4148 = vshrl.u32 %v4147, 7
    %v4149 = vsub.s32 %v143, %v4148
    %v4150 = vrot.slane %v4094, %v4149
    %v4151 = vlaneseq
    %v4152 = vshrl.u32 %v4151, 7
    %v4153 = vsub.s32 %v143, %v4152
    %v4154 = vrot.slane %v4097, %v4153
    %v4155 = vlaneseq
    %v4156 = vshrl.u32 %v4155, 7
    %v4157 = vsub.s32 %v143, %v4156
    %v4158 = vrot.slane %v4100, %v4157
    %v4159 = vlaneseq
    %v4160 = vshrl.u32 %v4159, 7
    %v4161 = vsub.s32 %v143, %v4160
    %v4162 = vrot.slane %v4103, %v4161
    %v4163 = vlaneseq
    %v4164 = vshrl.u32 %v4163, 7
    %v4165 = vsub.s32 %v143, %v4164
    %v4166 = vrot.slane %v4106, %v4165
    %v4167 = vlaneseq
    %v4168 = vshrl.u32 %v4167, 7
    %v4169 = vsub.s32 %v143, %v4168
    %v4170 = vrot.slane %v4109, %v4169
    %v4171 = vlaneseq
    %v4172 = vshrl.u32 %v4171, 7
    %v4173 = vsub.s32 %v143, %v4172
    %v4174 = vrot.slane %v4112, %v4173
    %v4175 = vlaneseq
    %v4176 = vshrl.u32 %v4175, 7
    %v4177 = vsub.s32 %v143, %v4176
    %v4178 = vrot.slane %v4115, %v4177
    %v4179 = vlaneseq
    %v4180 = vshrl.u32 %v4179, 7
    %v4181 = vsub.s32 %v143, %v4180
    %v4182 = vrot.slane %v4118, %v4181
    %v4183 = vsel %vm2297, %v4126, %v4122
    %v4184 = vsel %vm2531, %v4130, %v4183
    %v4185 = vsel %vm2533, %v4134, %v4184
    %v4186 = vsel %vm2535, %v4138, %v4185
    %v4187 = vsel %vm2537, %v4142, %v4186
    %v4188 = vsel %vm2539, %v4146, %v4187
    %v4189 = vsel %vm2541, %v4150, %v4188
    %v4190 = vsel %vm2297, %v4158, %v4154
    %v4191 = vsel %vm2531, %v4162, %v4190
    %v4192 = vsel %vm2533, %v4166, %v4191
    %v4193 = vsel %vm2535, %v4170, %v4192
    %v4194 = vsel %vm2537, %v4174, %v4193
    %v4195 = vsel %vm2539, %v4178, %v4194
    %v4196 = vsel %vm2541, %v4182, %v4195
    %v4197 = vsel %vm2202, %v4189, 2147483647
    %v4198 = vand.u32 %v4197, 65535
    %v4199 = vshra.s32 %v4197, 16
    %v4200 = vcvt.s32.f32 %v4198
    %v4201 = vcvt.s32.f32 %v4199
    %4202 = vmin.xlane.f32.xlu0 %v4201
    %v4203 = vpop.xlane.xlu0 %4202
    %vm4204 = vcmp.eq.f32.partialorder %v4201, %v4203
    %v4205 = vsel %vm4204, %v4200, inf
    %4206 = vmin.xlane.f32.xlu0 %v4205
    %v4207 = vpop.xlane.xlu0 %4206
    %v4208 = vcvt.f32.s32 %v4207
    %v4209 = vcvt.f32.s32 %v4203
    %v4210 = vshll.u32 %v4209, 16
    %v4211 = vadd.s32 %v4210, %v4208
    %v4212 = vsel %vm2202, %v4196, 2147483647
    %v4213 = vand.u32 %v4212, 65535
    %v4214 = vshra.s32 %v4212, 16
    %v4215 = vcvt.s32.f32 %v4213
    %v4216 = vcvt.s32.f32 %v4214
    %4217 = vmin.xlane.f32.xlu0 %v4216
    %v4218 = vpop.xlane.xlu0 %4217
    %vm4219 = vcmp.eq.f32.partialorder %v4216, %v4218
    %v4220 = vsel %vm4219, %v4215, inf
    %4221 = vmin.xlane.f32.xlu0 %v4220
    %v4222 = vpop.xlane.xlu0 %4221
    %v4223 = vcvt.f32.s32 %v4222
    %v4224 = vcvt.f32.s32 %v4218
    %v4225 = vshll.u32 %v4224, 16
    %v4226 = vadd.s32 %v4225, %v4223
    %v4227 = vlaneseq
    %v4228 = vshrl.u32 %v4227, 7
    %v4229 = vsub.s32 %v143, %v4228
    %v4230 = vrot.slane %v4211, %v4229
    %v4231 = vlaneseq
    %v4232 = vshrl.u32 %v4231, 7
    %v4233 = vsub.s32 %v143, %v4232
    %v4234 = vrot.slane %v4226, %v4233
    %v4235 = vsel %vm2297, %v4234, %v4230
    %s4236 = scalar_lea.vmem [#allocation5], 10
    %4237 = vst.msk [vmem:[%s4236] sm:$0x3] %vm2300, %v4235
    %v4238 = vlaneseq
    %v4239 = vshrl.u32 %v4238, 7
    %v4240 = vsub.s32 2, %v4239
    %v4241 = vrot.slane %v2199, %v4240
    %4243 = vbcast.lane.b32.xlu0 %v4241, 256
    %v4244 = vpop.permute.xlu0 %4243
    %v4245 = vlaneseq
    %v4246 = vshrl.u32 %v4245, 7
    %v4247 = vsub.s32 3, %v4246
    %v4248 = vrot.slane %v2199, %v4247
    %4250 = vbcast.lane.b32.xlu0 %v4248, 256
    %v4251 = vpop.permute.xlu0 %4250
    %v4254 = vadd.f32 %v3953, %v4244
    %v4255 = vadd.f32 %v3956, %v4251
    %v4256 = vadd.f32 %v4254, %v2328
    %v4257 = vadd.f32 %v4254, %v2335
    %v4258 = vadd.f32 %v4254, %v2342
    %v4259 = vadd.f32 %v4254, %v2349
    %v4260 = vadd.f32 %v4254, %v2356
    %v4261 = vadd.f32 %v4254, %v2363
    %v4262 = vadd.f32 %v4254, %v2370
    %v4263 = vadd.f32 %v4254, %v2377
    %v4264 = vadd.f32 %v4255, %v2328
    %v4265 = vadd.f32 %v4255, %v2335
    %v4266 = vadd.f32 %v4255, %v2342
    %v4267 = vadd.f32 %v4255, %v2349
    %v4268 = vadd.f32 %v4255, %v2356
    %v4269 = vadd.f32 %v4255, %v2363
    %v4270 = vadd.f32 %v4255, %v2370
    %v4271 = vadd.f32 %v4255, %v2377
    %4288 = vset.pattern.permute.xlu0 0
    %4289 = vperm.xlu0 %4288, %v4256
    %v4290 = vpop.permute.xlu0 %4289
    %4291 = vset.pattern.permute.xlu0 0
    %4292 = vperm.xlu0 %4291, %v4257
    %v4293 = vpop.permute.xlu0 %4292
    %4294 = vset.pattern.permute.xlu0 0
    %4295 = vperm.xlu0 %4294, %v4258
    %v4296 = vpop.permute.xlu0 %4295
    %4297 = vset.pattern.permute.xlu0 0
    %4298 = vperm.xlu0 %4297, %v4259
    %v4299 = vpop.permute.xlu0 %4298
    %4300 = vset.pattern.permute.xlu0 0
    %4301 = vperm.xlu0 %4300, %v4260
    %v4302 = vpop.permute.xlu0 %4301
    %4303 = vset.pattern.permute.xlu0 0
    %4304 = vperm.xlu0 %4303, %v4261
    %v4305 = vpop.permute.xlu0 %4304
    %4306 = vset.pattern.permute.xlu0 0
    %4307 = vperm.xlu0 %4306, %v4262
    %v4308 = vpop.permute.xlu0 %4307
    %4309 = vset.pattern.permute.xlu0 0
    %4310 = vperm.xlu0 %4309, %v4263
    %v4311 = vpop.permute.xlu0 %4310
    %4312 = vset.pattern.permute.xlu0 0
    %4313 = vperm.xlu0 %4312, %v4264
    %v4314 = vpop.permute.xlu0 %4313
    %4315 = vset.pattern.permute.xlu0 0
    %4316 = vperm.xlu0 %4315, %v4265
    %v4317 = vpop.permute.xlu0 %4316
    %4318 = vset.pattern.permute.xlu0 0
    %4319 = vperm.xlu0 %4318, %v4266
    %v4320 = vpop.permute.xlu0 %4319
    %4321 = vset.pattern.permute.xlu0 0
    %4322 = vperm.xlu0 %4321, %v4267
    %v4323 = vpop.permute.xlu0 %4322
    %4324 = vset.pattern.permute.xlu0 0
    %4325 = vperm.xlu0 %4324, %v4268
    %v4326 = vpop.permute.xlu0 %4325
    %4327 = vset.pattern.permute.xlu0 0
    %4328 = vperm.xlu0 %4327, %v4269
    %v4329 = vpop.permute.xlu0 %4328
    %4330 = vset.pattern.permute.xlu0 0
    %4331 = vperm.xlu0 %4330, %v4270
    %v4332 = vpop.permute.xlu0 %4331
    %4333 = vset.pattern.permute.xlu0 0
    %4334 = vperm.xlu0 %4333, %v4271
    %v4335 = vpop.permute.xlu0 %4334
    %v4336 = vlaneseq
    %v4337 = vshrl.u32 %v4336, 7
    %v4338 = vsub.s32 %v143, %v4337
    %v4339 = vrot.slane %v4290, %v4338
    %v4340 = vlaneseq
    %v4341 = vshrl.u32 %v4340, 7
    %v4342 = vsub.s32 %v143, %v4341
    %v4343 = vrot.slane %v4293, %v4342
    %v4344 = vlaneseq
    %v4345 = vshrl.u32 %v4344, 7
    %v4346 = vsub.s32 %v143, %v4345
    %v4347 = vrot.slane %v4296, %v4346
    %v4348 = vlaneseq
    %v4349 = vshrl.u32 %v4348, 7
    %v4350 = vsub.s32 %v143, %v4349
    %v4351 = vrot.slane %v4299, %v4350
    %v4352 = vlaneseq
    %v4353 = vshrl.u32 %v4352, 7
    %v4354 = vsub.s32 %v143, %v4353
    %v4355 = vrot.slane %v4302, %v4354
    %v4356 = vlaneseq
    %v4357 = vshrl.u32 %v4356, 7
    %v4358 = vsub.s32 %v143, %v4357
    %v4359 = vrot.slane %v4305, %v4358
    %v4360 = vlaneseq
    %v4361 = vshrl.u32 %v4360, 7
    %v4362 = vsub.s32 %v143, %v4361
    %v4363 = vrot.slane %v4308, %v4362
    %v4364 = vlaneseq
    %v4365 = vshrl.u32 %v4364, 7
    %v4366 = vsub.s32 %v143, %v4365
    %v4367 = vrot.slane %v4311, %v4366
    %v4368 = vlaneseq
    %v4369 = vshrl.u32 %v4368, 7
    %v4370 = vsub.s32 %v143, %v4369
    %v4371 = vrot.slane %v4314, %v4370
    %v4372 = vlaneseq
    %v4373 = vshrl.u32 %v4372, 7
    %v4374 = vsub.s32 %v143, %v4373
    %v4375 = vrot.slane %v4317, %v4374
    %v4376 = vlaneseq
    %v4377 = vshrl.u32 %v4376, 7
    %v4378 = vsub.s32 %v143, %v4377
    %v4379 = vrot.slane %v4320, %v4378
    %v4380 = vlaneseq
    %v4381 = vshrl.u32 %v4380, 7
    %v4382 = vsub.s32 %v143, %v4381
    %v4383 = vrot.slane %v4323, %v4382
    %v4384 = vlaneseq
    %v4385 = vshrl.u32 %v4384, 7
    %v4386 = vsub.s32 %v143, %v4385
    %v4387 = vrot.slane %v4326, %v4386
    %v4388 = vlaneseq
    %v4389 = vshrl.u32 %v4388, 7
    %v4390 = vsub.s32 %v143, %v4389
    %v4391 = vrot.slane %v4329, %v4390
    %v4392 = vlaneseq
    %v4393 = vshrl.u32 %v4392, 7
    %v4394 = vsub.s32 %v143, %v4393
    %v4395 = vrot.slane %v4332, %v4394
    %v4396 = vlaneseq
    %v4397 = vshrl.u32 %v4396, 7
    %v4398 = vsub.s32 %v143, %v4397
    %v4399 = vrot.slane %v4335, %v4398
    %v4400 = vsel %vm2297, %v4343, %v4339
    %v4401 = vsel %vm2531, %v4347, %v4400
    %v4402 = vsel %vm2533, %v4351, %v4401
    %v4403 = vsel %vm2535, %v4355, %v4402
    %v4404 = vsel %vm2537, %v4359, %v4403
    %v4405 = vsel %vm2539, %v4363, %v4404
    %v4406 = vsel %vm2541, %v4367, %v4405
    %v4407 = vsel %vm2297, %v4375, %v4371
    %v4408 = vsel %vm2531, %v4379, %v4407
    %v4409 = vsel %vm2533, %v4383, %v4408
    %v4410 = vsel %vm2535, %v4387, %v4409
    %v4411 = vsel %vm2537, %v4391, %v4410
    %v4412 = vsel %vm2539, %v4395, %v4411
    %v4413 = vsel %vm2541, %v4399, %v4412
    %v4416 = vsel %vm2202, %v4406, -inf
    %4417 = vmax.xlane.f32.xlu0 %v4416
    %v4418 = vpop.xlane.xlu0 %4417
    %v4419 = vsel %vm2202, %v4413, -inf
    %4420 = vmax.xlane.f32.xlu0 %v4419
    %v4421 = vpop.xlane.xlu0 %4420
    %v4424 = vlaneseq
    %v4425 = vshrl.u32 %v4424, 7
    %v4426 = vsub.s32 0, %v4425
    %v4427 = vrot.slane %v4418, %v4426
    %v4428 = vlaneseq
    %v4429 = vshrl.u32 %v4428, 7
    %v4430 = vsub.s32 1, %v4429
    %v4431 = vrot.slane %v4418, %v4430
    %v4432 = vlaneseq
    %v4433 = vshrl.u32 %v4432, 7
    %v4434 = vsub.s32 2, %v4433
    %v4435 = vrot.slane %v4418, %v4434
    %v4436 = vlaneseq
    %v4437 = vshrl.u32 %v4436, 7
    %v4438 = vsub.s32 3, %v4437
    %v4439 = vrot.slane %v4418, %v4438
    %v4440 = vlaneseq
    %v4441 = vshrl.u32 %v4440, 7
    %v4442 = vsub.s32 4, %v4441
    %v4443 = vrot.slane %v4418, %v4442
    %v4444 = vlaneseq
    %v4445 = vshrl.u32 %v4444, 7
    %v4446 = vsub.s32 5, %v4445
    %v4447 = vrot.slane %v4418, %v4446
    %v4448 = vlaneseq
    %v4449 = vshrl.u32 %v4448, 7
    %v4450 = vsub.s32 6, %v4449
    %v4451 = vrot.slane %v4418, %v4450
    %v4452 = vlaneseq
    %v4453 = vshrl.u32 %v4452, 7
    %v4454 = vsub.s32 7, %v4453
    %v4455 = vrot.slane %v4418, %v4454
    %v4456 = vlaneseq
    %v4457 = vshrl.u32 %v4456, 7
    %v4458 = vsub.s32 0, %v4457
    %v4459 = vrot.slane %v4421, %v4458
    %v4460 = vlaneseq
    %v4461 = vshrl.u32 %v4460, 7
    %v4462 = vsub.s32 1, %v4461
    %v4463 = vrot.slane %v4421, %v4462
    %v4464 = vlaneseq
    %v4465 = vshrl.u32 %v4464, 7
    %v4466 = vsub.s32 2, %v4465
    %v4467 = vrot.slane %v4421, %v4466
    %v4468 = vlaneseq
    %v4469 = vshrl.u32 %v4468, 7
    %v4470 = vsub.s32 3, %v4469
    %v4471 = vrot.slane %v4421, %v4470
    %v4472 = vlaneseq
    %v4473 = vshrl.u32 %v4472, 7
    %v4474 = vsub.s32 4, %v4473
    %v4475 = vrot.slane %v4421, %v4474
    %v4476 = vlaneseq
    %v4477 = vshrl.u32 %v4476, 7
    %v4478 = vsub.s32 5, %v4477
    %v4479 = vrot.slane %v4421, %v4478
    %v4480 = vlaneseq
    %v4481 = vshrl.u32 %v4480, 7
    %v4482 = vsub.s32 6, %v4481
    %v4483 = vrot.slane %v4421, %v4482
    %v4484 = vlaneseq
    %v4485 = vshrl.u32 %v4484, 7
    %v4486 = vsub.s32 7, %v4485
    %v4487 = vrot.slane %v4421, %v4486
    %vm4504 = vcmp.eq.f32.partialorder %v4256, %v4427
    %vm4505 = vcmp.eq.f32.partialorder %v4257, %v4431
    %vm4506 = vcmp.eq.f32.partialorder %v4258, %v4435
    %vm4507 = vcmp.eq.f32.partialorder %v4259, %v4439
    %vm4508 = vcmp.eq.f32.partialorder %v4260, %v4443
    %vm4509 = vcmp.eq.f32.partialorder %v4261, %v4447
    %vm4510 = vcmp.eq.f32.partialorder %v4262, %v4451
    %vm4511 = vcmp.eq.f32.partialorder %v4263, %v4455
    %vm4512 = vcmp.eq.f32.partialorder %v4264, %v4459
    %vm4513 = vcmp.eq.f32.partialorder %v4265, %v4463
    %vm4514 = vcmp.eq.f32.partialorder %v4266, %v4467
    %vm4515 = vcmp.eq.f32.partialorder %v4267, %v4471
    %vm4516 = vcmp.eq.f32.partialorder %v4268, %v4475
    %vm4517 = vcmp.eq.f32.partialorder %v4269, %v4479
    %vm4518 = vcmp.eq.f32.partialorder %v4270, %v4483
    %vm4519 = vcmp.eq.f32.partialorder %v4271, %v4487
    %v4520 = vsel %vm4504, %v2658, 8
    %v4521 = vsel %vm4505, %v2658, 8
    %v4522 = vsel %vm4506, %v2658, 8
    %v4523 = vsel %vm4507, %v2658, 8
    %v4524 = vsel %vm4508, %v2658, 8
    %v4525 = vsel %vm4509, %v2658, 8
    %v4526 = vsel %vm4510, %v2658, 8
    %v4527 = vsel %vm4511, %v2658, 8
    %v4528 = vsel %vm4512, %v2658, 8
    %v4529 = vsel %vm4513, %v2658, 8
    %v4530 = vsel %vm4514, %v2658, 8
    %v4531 = vsel %vm4515, %v2658, 8
    %v4532 = vsel %vm4516, %v2658, 8
    %v4533 = vsel %vm4517, %v2658, 8
    %v4534 = vsel %vm4518, %v2658, 8
    %v4535 = vsel %vm4519, %v2658, 8
    %4536 = vset.pattern.permute.xlu0 0
    %4537 = vperm.xlu0 %4536, %v4520
    %v4538 = vpop.permute.xlu0 %4537
    %4539 = vset.pattern.permute.xlu0 0
    %4540 = vperm.xlu0 %4539, %v4521
    %v4541 = vpop.permute.xlu0 %4540
    %4542 = vset.pattern.permute.xlu0 0
    %4543 = vperm.xlu0 %4542, %v4522
    %v4544 = vpop.permute.xlu0 %4543
    %4545 = vset.pattern.permute.xlu0 0
    %4546 = vperm.xlu0 %4545, %v4523
    %v4547 = vpop.permute.xlu0 %4546
    %4548 = vset.pattern.permute.xlu0 0
    %4549 = vperm.xlu0 %4548, %v4524
    %v4550 = vpop.permute.xlu0 %4549
    %4551 = vset.pattern.permute.xlu0 0
    %4552 = vperm.xlu0 %4551, %v4525
    %v4553 = vpop.permute.xlu0 %4552
    %4554 = vset.pattern.permute.xlu0 0
    %4555 = vperm.xlu0 %4554, %v4526
    %v4556 = vpop.permute.xlu0 %4555
    %4557 = vset.pattern.permute.xlu0 0
    %4558 = vperm.xlu0 %4557, %v4527
    %v4559 = vpop.permute.xlu0 %4558
    %4560 = vset.pattern.permute.xlu0 0
    %4561 = vperm.xlu0 %4560, %v4528
    %v4562 = vpop.permute.xlu0 %4561
    %4563 = vset.pattern.permute.xlu0 0
    %4564 = vperm.xlu0 %4563, %v4529
    %v4565 = vpop.permute.xlu0 %4564
    %4566 = vset.pattern.permute.xlu0 0
    %4567 = vperm.xlu0 %4566, %v4530
    %v4568 = vpop.permute.xlu0 %4567
    %4569 = vset.pattern.permute.xlu0 0
    %4570 = vperm.xlu0 %4569, %v4531
    %v4571 = vpop.permute.xlu0 %4570
    %4572 = vset.pattern.permute.xlu0 0
    %4573 = vperm.xlu0 %4572, %v4532
    %v4574 = vpop.permute.xlu0 %4573
    %4575 = vset.pattern.permute.xlu0 0
    %4576 = vperm.xlu0 %4575, %v4533
    %v4577 = vpop.permute.xlu0 %4576
    %4578 = vset.pattern.permute.xlu0 0
    %4579 = vperm.xlu0 %4578, %v4534
    %v4580 = vpop.permute.xlu0 %4579
    %4581 = vset.pattern.permute.xlu0 0
    %4582 = vperm.xlu0 %4581, %v4535
    %v4583 = vpop.permute.xlu0 %4582
    %v4584 = vlaneseq
    %v4585 = vshrl.u32 %v4584, 7
    %v4586 = vsub.s32 %v143, %v4585
    %v4587 = vrot.slane %v4538, %v4586
    %v4588 = vlaneseq
    %v4589 = vshrl.u32 %v4588, 7
    %v4590 = vsub.s32 %v143, %v4589
    %v4591 = vrot.slane %v4541, %v4590
    %v4592 = vlaneseq
    %v4593 = vshrl.u32 %v4592, 7
    %v4594 = vsub.s32 %v143, %v4593
    %v4595 = vrot.slane %v4544, %v4594
    %v4596 = vlaneseq
    %v4597 = vshrl.u32 %v4596, 7
    %v4598 = vsub.s32 %v143, %v4597
    %v4599 = vrot.slane %v4547, %v4598
    %v4600 = vlaneseq
    %v4601 = vshrl.u32 %v4600, 7
    %v4602 = vsub.s32 %v143, %v4601
    %v4603 = vrot.slane %v4550, %v4602
    %v4604 = vlaneseq
    %v4605 = vshrl.u32 %v4604, 7
    %v4606 = vsub.s32 %v143, %v4605
    %v4607 = vrot.slane %v4553, %v4606
    %v4608 = vlaneseq
    %v4609 = vshrl.u32 %v4608, 7
    %v4610 = vsub.s32 %v143, %v4609
    %v4611 = vrot.slane %v4556, %v4610
    %v4612 = vlaneseq
    %v4613 = vshrl.u32 %v4612, 7
    %v4614 = vsub.s32 %v143, %v4613
    %v4615 = vrot.slane %v4559, %v4614
    %v4616 = vlaneseq
    %v4617 = vshrl.u32 %v4616, 7
    %v4618 = vsub.s32 %v143, %v4617
    %v4619 = vrot.slane %v4562, %v4618
    %v4620 = vlaneseq
    %v4621 = vshrl.u32 %v4620, 7
    %v4622 = vsub.s32 %v143, %v4621
    %v4623 = vrot.slane %v4565, %v4622
    %v4624 = vlaneseq
    %v4625 = vshrl.u32 %v4624, 7
    %v4626 = vsub.s32 %v143, %v4625
    %v4627 = vrot.slane %v4568, %v4626
    %v4628 = vlaneseq
    %v4629 = vshrl.u32 %v4628, 7
    %v4630 = vsub.s32 %v143, %v4629
    %v4631 = vrot.slane %v4571, %v4630
    %v4632 = vlaneseq
    %v4633 = vshrl.u32 %v4632, 7
    %v4634 = vsub.s32 %v143, %v4633
    %v4635 = vrot.slane %v4574, %v4634
    %v4636 = vlaneseq
    %v4637 = vshrl.u32 %v4636, 7
    %v4638 = vsub.s32 %v143, %v4637
    %v4639 = vrot.slane %v4577, %v4638
    %v4640 = vlaneseq
    %v4641 = vshrl.u32 %v4640, 7
    %v4642 = vsub.s32 %v143, %v4641
    %v4643 = vrot.slane %v4580, %v4642
    %v4644 = vlaneseq
    %v4645 = vshrl.u32 %v4644, 7
    %v4646 = vsub.s32 %v143, %v4645
    %v4647 = vrot.slane %v4583, %v4646
    %v4648 = vsel %vm2297, %v4591, %v4587
    %v4649 = vsel %vm2531, %v4595, %v4648
    %v4650 = vsel %vm2533, %v4599, %v4649
    %v4651 = vsel %vm2535, %v4603, %v4650
    %v4652 = vsel %vm2537, %v4607, %v4651
    %v4653 = vsel %vm2539, %v4611, %v4652
    %v4654 = vsel %vm2541, %v4615, %v4653
    %v4655 = vsel %vm2297, %v4623, %v4619
    %v4656 = vsel %vm2531, %v4627, %v4655
    %v4657 = vsel %vm2533, %v4631, %v4656
    %v4658 = vsel %vm2535, %v4635, %v4657
    %v4659 = vsel %vm2537, %v4639, %v4658
    %v4660 = vsel %vm2539, %v4643, %v4659
    %v4661 = vsel %vm2541, %v4647, %v4660
    %v4662 = vsel %vm2202, %v4654, 2147483647
    %v4663 = vand.u32 %v4662, 65535
    %v4664 = vshra.s32 %v4662, 16
    %v4665 = vcvt.s32.f32 %v4663
    %v4666 = vcvt.s32.f32 %v4664
    %4667 = vmin.xlane.f32.xlu0 %v4666
    %v4668 = vpop.xlane.xlu0 %4667
    %vm4669 = vcmp.eq.f32.partialorder %v4666, %v4668
    %v4670 = vsel %vm4669, %v4665, inf
    %4671 = vmin.xlane.f32.xlu0 %v4670
    %v4672 = vpop.xlane.xlu0 %4671
    %v4673 = vcvt.f32.s32 %v4672
    %v4674 = vcvt.f32.s32 %v4668
    %v4675 = vshll.u32 %v4674, 16
    %v4676 = vadd.s32 %v4675, %v4673
    %v4677 = vsel %vm2202, %v4661, 2147483647
    %v4678 = vand.u32 %v4677, 65535
    %v4679 = vshra.s32 %v4677, 16
    %v4680 = vcvt.s32.f32 %v4678
    %v4681 = vcvt.s32.f32 %v4679
    %4682 = vmin.xlane.f32.xlu0 %v4681
    %v4683 = vpop.xlane.xlu0 %4682
    %vm4684 = vcmp.eq.f32.partialorder %v4681, %v4683
    %v4685 = vsel %vm4684, %v4680, inf
    %4686 = vmin.xlane.f32.xlu0 %v4685
    %v4687 = vpop.xlane.xlu0 %4686
    %v4688 = vcvt.f32.s32 %v4687
    %v4689 = vcvt.f32.s32 %v4683
    %v4690 = vshll.u32 %v4689, 16
    %v4691 = vadd.s32 %v4690, %v4688
    %v4692 = vlaneseq
    %v4693 = vshrl.u32 %v4692, 7
    %v4694 = vsub.s32 %v143, %v4693
    %v4695 = vrot.slane %v4676, %v4694
    %v4696 = vlaneseq
    %v4697 = vshrl.u32 %v4696, 7
    %v4698 = vsub.s32 %v143, %v4697
    %v4699 = vrot.slane %v4691, %v4698
    %v4700 = vsel %vm2297, %v4699, %v4695
    %s4701 = scalar_lea.vmem [#allocation5], 12
    %4702 = vst.msk [vmem:[%s4701] sm:$0x3] %vm2300, %v4700
    %v4703 = vlaneseq
    %v4704 = vshrl.u32 %v4703, 7
    %v4705 = vsub.s32 4, %v4704
    %v4706 = vrot.slane %v2199, %v4705
    %4708 = vbcast.lane.b32.xlu0 %v4706, 256
    %v4709 = vpop.permute.xlu0 %4708
    %v4710 = vlaneseq
    %v4711 = vshrl.u32 %v4710, 7
    %v4712 = vsub.s32 5, %v4711
    %v4713 = vrot.slane %v2199, %v4712
    %4715 = vbcast.lane.b32.xlu0 %v4713, 256
    %v4716 = vpop.permute.xlu0 %4715
    %v4719 = vadd.f32 %v4418, %v4709
    %v4720 = vadd.f32 %v4421, %v4716
    %v4721 = vadd.f32 %v4719, %v2328
    %v4722 = vadd.f32 %v4719, %v2335
    %v4723 = vadd.f32 %v4719, %v2342
    %v4724 = vadd.f32 %v4719, %v2349
    %v4725 = vadd.f32 %v4719, %v2356
    %v4726 = vadd.f32 %v4719, %v2363
    %v4727 = vadd.f32 %v4719, %v2370
    %v4728 = vadd.f32 %v4719, %v2377
    %v4729 = vadd.f32 %v4720, %v2328
    %v4730 = vadd.f32 %v4720, %v2335
    %v4731 = vadd.f32 %v4720, %v2342
    %v4732 = vadd.f32 %v4720, %v2349
    %v4733 = vadd.f32 %v4720, %v2356
    %v4734 = vadd.f32 %v4720, %v2363
    %v4735 = vadd.f32 %v4720, %v2370
    %v4736 = vadd.f32 %v4720, %v2377
    %4753 = vset.pattern.permute.xlu0 0
    %4754 = vperm.xlu0 %4753, %v4721
    %v4755 = vpop.permute.xlu0 %4754
    %4756 = vset.pattern.permute.xlu0 0
    %4757 = vperm.xlu0 %4756, %v4722
    %v4758 = vpop.permute.xlu0 %4757
    %4759 = vset.pattern.permute.xlu0 0
    %4760 = vperm.xlu0 %4759, %v4723
    %v4761 = vpop.permute.xlu0 %4760
    %4762 = vset.pattern.permute.xlu0 0
    %4763 = vperm.xlu0 %4762, %v4724
    %v4764 = vpop.permute.xlu0 %4763
    %4765 = vset.pattern.permute.xlu0 0
    %4766 = vperm.xlu0 %4765, %v4725
    %v4767 = vpop.permute.xlu0 %4766
    %4768 = vset.pattern.permute.xlu0 0
    %4769 = vperm.xlu0 %4768, %v4726
    %v4770 = vpop.permute.xlu0 %4769
    %4771 = vset.pattern.permute.xlu0 0
    %4772 = vperm.xlu0 %4771, %v4727
    %v4773 = vpop.permute.xlu0 %4772
    %4774 = vset.pattern.permute.xlu0 0
    %4775 = vperm.xlu0 %4774, %v4728
    %v4776 = vpop.permute.xlu0 %4775
    %4777 = vset.pattern.permute.xlu0 0
    %4778 = vperm.xlu0 %4777, %v4729
    %v4779 = vpop.permute.xlu0 %4778
    %4780 = vset.pattern.permute.xlu0 0
    %4781 = vperm.xlu0 %4780, %v4730
    %v4782 = vpop.permute.xlu0 %4781
    %4783 = vset.pattern.permute.xlu0 0
    %4784 = vperm.xlu0 %4783, %v4731
    %v4785 = vpop.permute.xlu0 %4784
    %4786 = vset.pattern.permute.xlu0 0
    %4787 = vperm.xlu0 %4786, %v4732
    %v4788 = vpop.permute.xlu0 %4787
    %4789 = vset.pattern.permute.xlu0 0
    %4790 = vperm.xlu0 %4789, %v4733
    %v4791 = vpop.permute.xlu0 %4790
    %4792 = vset.pattern.permute.xlu0 0
    %4793 = vperm.xlu0 %4792, %v4734
    %v4794 = vpop.permute.xlu0 %4793
    %4795 = vset.pattern.permute.xlu0 0
    %4796 = vperm.xlu0 %4795, %v4735
    %v4797 = vpop.permute.xlu0 %4796
    %4798 = vset.pattern.permute.xlu0 0
    %4799 = vperm.xlu0 %4798, %v4736
    %v4800 = vpop.permute.xlu0 %4799
    %v4801 = vlaneseq
    %v4802 = vshrl.u32 %v4801, 7
    %v4803 = vsub.s32 %v143, %v4802
    %v4804 = vrot.slane %v4755, %v4803
    %v4805 = vlaneseq
    %v4806 = vshrl.u32 %v4805, 7
    %v4807 = vsub.s32 %v143, %v4806
    %v4808 = vrot.slane %v4758, %v4807
    %v4809 = vlaneseq
    %v4810 = vshrl.u32 %v4809, 7
    %v4811 = vsub.s32 %v143, %v4810
    %v4812 = vrot.slane %v4761, %v4811
    %v4813 = vlaneseq
    %v4814 = vshrl.u32 %v4813, 7
    %v4815 = vsub.s32 %v143, %v4814
    %v4816 = vrot.slane %v4764, %v4815
    %v4817 = vlaneseq
    %v4818 = vshrl.u32 %v4817, 7
    %v4819 = vsub.s32 %v143, %v4818
    %v4820 = vrot.slane %v4767, %v4819
    %v4821 = vlaneseq
    %v4822 = vshrl.u32 %v4821, 7
    %v4823 = vsub.s32 %v143, %v4822
    %v4824 = vrot.slane %v4770, %v4823
    %v4825 = vlaneseq
    %v4826 = vshrl.u32 %v4825, 7
    %v4827 = vsub.s32 %v143, %v4826
    %v4828 = vrot.slane %v4773, %v4827
    %v4829 = vlaneseq
    %v4830 = vshrl.u32 %v4829, 7
    %v4831 = vsub.s32 %v143, %v4830
    %v4832 = vrot.slane %v4776, %v4831
    %v4833 = vlaneseq
    %v4834 = vshrl.u32 %v4833, 7
    %v4835 = vsub.s32 %v143, %v4834
    %v4836 = vrot.slane %v4779, %v4835
    %v4837 = vlaneseq
    %v4838 = vshrl.u32 %v4837, 7
    %v4839 = vsub.s32 %v143, %v4838
    %v4840 = vrot.slane %v4782, %v4839
    %v4841 = vlaneseq
    %v4842 = vshrl.u32 %v4841, 7
    %v4843 = vsub.s32 %v143, %v4842
    %v4844 = vrot.slane %v4785, %v4843
    %v4845 = vlaneseq
    %v4846 = vshrl.u32 %v4845, 7
    %v4847 = vsub.s32 %v143, %v4846
    %v4848 = vrot.slane %v4788, %v4847
    %v4849 = vlaneseq
    %v4850 = vshrl.u32 %v4849, 7
    %v4851 = vsub.s32 %v143, %v4850
    %v4852 = vrot.slane %v4791, %v4851
    %v4853 = vlaneseq
    %v4854 = vshrl.u32 %v4853, 7
    %v4855 = vsub.s32 %v143, %v4854
    %v4856 = vrot.slane %v4794, %v4855
    %v4857 = vlaneseq
    %v4858 = vshrl.u32 %v4857, 7
    %v4859 = vsub.s32 %v143, %v4858
    %v4860 = vrot.slane %v4797, %v4859
    %v4861 = vlaneseq
    %v4862 = vshrl.u32 %v4861, 7
    %v4863 = vsub.s32 %v143, %v4862
    %v4864 = vrot.slane %v4800, %v4863
    %v4865 = vsel %vm2297, %v4808, %v4804
    %v4866 = vsel %vm2531, %v4812, %v4865
    %v4867 = vsel %vm2533, %v4816, %v4866
    %v4868 = vsel %vm2535, %v4820, %v4867
    %v4869 = vsel %vm2537, %v4824, %v4868
    %v4870 = vsel %vm2539, %v4828, %v4869
    %v4871 = vsel %vm2541, %v4832, %v4870
    %v4872 = vsel %vm2297, %v4840, %v4836
    %v4873 = vsel %vm2531, %v4844, %v4872
    %v4874 = vsel %vm2533, %v4848, %v4873
    %v4875 = vsel %vm2535, %v4852, %v4874
    %v4876 = vsel %vm2537, %v4856, %v4875
    %v4877 = vsel %vm2539, %v4860, %v4876
    %v4878 = vsel %vm2541, %v4864, %v4877
    %v4881 = vsel %vm2202, %v4871, -inf
    %4882 = vmax.xlane.f32.xlu0 %v4881
    %v4883 = vpop.xlane.xlu0 %4882
    %v4884 = vsel %vm2202, %v4878, -inf
    %4885 = vmax.xlane.f32.xlu0 %v4884
    %v4886 = vpop.xlane.xlu0 %4885
    %v4889 = vlaneseq
    %v4890 = vshrl.u32 %v4889, 7
    %v4891 = vsub.s32 0, %v4890
    %v4892 = vrot.slane %v4883, %v4891
    %v4893 = vlaneseq
    %v4894 = vshrl.u32 %v4893, 7
    %v4895 = vsub.s32 1, %v4894
    %v4896 = vrot.slane %v4883, %v4895
    %v4897 = vlaneseq
    %v4898 = vshrl.u32 %v4897, 7
    %v4899 = vsub.s32 2, %v4898
    %v4900 = vrot.slane %v4883, %v4899
    %v4901 = vlaneseq
    %v4902 = vshrl.u32 %v4901, 7
    %v4903 = vsub.s32 3, %v4902
    %v4904 = vrot.slane %v4883, %v4903
    %v4905 = vlaneseq
    %v4906 = vshrl.u32 %v4905, 7
    %v4907 = vsub.s32 4, %v4906
    %v4908 = vrot.slane %v4883, %v4907
    %v4909 = vlaneseq
    %v4910 = vshrl.u32 %v4909, 7
    %v4911 = vsub.s32 5, %v4910
    %v4912 = vrot.slane %v4883, %v4911
    %v4913 = vlaneseq
    %v4914 = vshrl.u32 %v4913, 7
    %v4915 = vsub.s32 6, %v4914
    %v4916 = vrot.slane %v4883, %v4915
    %v4917 = vlaneseq
    %v4918 = vshrl.u32 %v4917, 7
    %v4919 = vsub.s32 7, %v4918
    %v4920 = vrot.slane %v4883, %v4919
    %v4921 = vlaneseq
    %v4922 = vshrl.u32 %v4921, 7
    %v4923 = vsub.s32 0, %v4922
    %v4924 = vrot.slane %v4886, %v4923
    %v4925 = vlaneseq
    %v4926 = vshrl.u32 %v4925, 7
    %v4927 = vsub.s32 1, %v4926
    %v4928 = vrot.slane %v4886, %v4927
    %v4929 = vlaneseq
    %v4930 = vshrl.u32 %v4929, 7
    %v4931 = vsub.s32 2, %v4930
    %v4932 = vrot.slane %v4886, %v4931
    %v4933 = vlaneseq
    %v4934 = vshrl.u32 %v4933, 7
    %v4935 = vsub.s32 3, %v4934
    %v4936 = vrot.slane %v4886, %v4935
    %v4937 = vlaneseq
    %v4938 = vshrl.u32 %v4937, 7
    %v4939 = vsub.s32 4, %v4938
    %v4940 = vrot.slane %v4886, %v4939
    %v4941 = vlaneseq
    %v4942 = vshrl.u32 %v4941, 7
    %v4943 = vsub.s32 5, %v4942
    %v4944 = vrot.slane %v4886, %v4943
    %v4945 = vlaneseq
    %v4946 = vshrl.u32 %v4945, 7
    %v4947 = vsub.s32 6, %v4946
    %v4948 = vrot.slane %v4886, %v4947
    %v4949 = vlaneseq
    %v4950 = vshrl.u32 %v4949, 7
    %v4951 = vsub.s32 7, %v4950
    %v4952 = vrot.slane %v4886, %v4951
    %vm4969 = vcmp.eq.f32.partialorder %v4721, %v4892
    %vm4970 = vcmp.eq.f32.partialorder %v4722, %v4896
    %vm4971 = vcmp.eq.f32.partialorder %v4723, %v4900
    %vm4972 = vcmp.eq.f32.partialorder %v4724, %v4904
    %vm4973 = vcmp.eq.f32.partialorder %v4725, %v4908
    %vm4974 = vcmp.eq.f32.partialorder %v4726, %v4912
    %vm4975 = vcmp.eq.f32.partialorder %v4727, %v4916
    %vm4976 = vcmp.eq.f32.partialorder %v4728, %v4920
    %vm4977 = vcmp.eq.f32.partialorder %v4729, %v4924
    %vm4978 = vcmp.eq.f32.partialorder %v4730, %v4928
    %vm4979 = vcmp.eq.f32.partialorder %v4731, %v4932
    %vm4980 = vcmp.eq.f32.partialorder %v4732, %v4936
    %vm4981 = vcmp.eq.f32.partialorder %v4733, %v4940
    %vm4982 = vcmp.eq.f32.partialorder %v4734, %v4944
    %vm4983 = vcmp.eq.f32.partialorder %v4735, %v4948
    %vm4984 = vcmp.eq.f32.partialorder %v4736, %v4952
    %v4985 = vsel %vm4969, %v2658, 8
    %v4986 = vsel %vm4970, %v2658, 8
    %v4987 = vsel %vm4971, %v2658, 8
    %v4988 = vsel %vm4972, %v2658, 8
    %v4989 = vsel %vm4973, %v2658, 8
    %v4990 = vsel %vm4974, %v2658, 8
    %v4991 = vsel %vm4975, %v2658, 8
    %v4992 = vsel %vm4976, %v2658, 8
    %v4993 = vsel %vm4977, %v2658, 8
    %v4994 = vsel %vm4978, %v2658, 8
    %v4995 = vsel %vm4979, %v2658, 8
    %v4996 = vsel %vm4980, %v2658, 8
    %v4997 = vsel %vm4981, %v2658, 8
    %v4998 = vsel %vm4982, %v2658, 8
    %v4999 = vsel %vm4983, %v2658, 8
    %v5000 = vsel %vm4984, %v2658, 8
    %5001 = vset.pattern.permute.xlu0 0
    %5002 = vperm.xlu0 %5001, %v4985
    %v5003 = vpop.permute.xlu0 %5002
    %5004 = vset.pattern.permute.xlu0 0
    %5005 = vperm.xlu0 %5004, %v4986
    %v5006 = vpop.permute.xlu0 %5005
    %5007 = vset.pattern.permute.xlu0 0
    %5008 = vperm.xlu0 %5007, %v4987
    %v5009 = vpop.permute.xlu0 %5008
    %5010 = vset.pattern.permute.xlu0 0
    %5011 = vperm.xlu0 %5010, %v4988
    %v5012 = vpop.permute.xlu0 %5011
    %5013 = vset.pattern.permute.xlu0 0
    %5014 = vperm.xlu0 %5013, %v4989
    %v5015 = vpop.permute.xlu0 %5014
    %5016 = vset.pattern.permute.xlu0 0
    %5017 = vperm.xlu0 %5016, %v4990
    %v5018 = vpop.permute.xlu0 %5017
    %5019 = vset.pattern.permute.xlu0 0
    %5020 = vperm.xlu0 %5019, %v4991
    %v5021 = vpop.permute.xlu0 %5020
    %5022 = vset.pattern.permute.xlu0 0
    %5023 = vperm.xlu0 %5022, %v4992
    %v5024 = vpop.permute.xlu0 %5023
    %5025 = vset.pattern.permute.xlu0 0
    %5026 = vperm.xlu0 %5025, %v4993
    %v5027 = vpop.permute.xlu0 %5026
    %5028 = vset.pattern.permute.xlu0 0
    %5029 = vperm.xlu0 %5028, %v4994
    %v5030 = vpop.permute.xlu0 %5029
    %5031 = vset.pattern.permute.xlu0 0
    %5032 = vperm.xlu0 %5031, %v4995
    %v5033 = vpop.permute.xlu0 %5032
    %5034 = vset.pattern.permute.xlu0 0
    %5035 = vperm.xlu0 %5034, %v4996
    %v5036 = vpop.permute.xlu0 %5035
    %5037 = vset.pattern.permute.xlu0 0
    %5038 = vperm.xlu0 %5037, %v4997
    %v5039 = vpop.permute.xlu0 %5038
    %5040 = vset.pattern.permute.xlu0 0
    %5041 = vperm.xlu0 %5040, %v4998
    %v5042 = vpop.permute.xlu0 %5041
    %5043 = vset.pattern.permute.xlu0 0
    %5044 = vperm.xlu0 %5043, %v4999
    %v5045 = vpop.permute.xlu0 %5044
    %5046 = vset.pattern.permute.xlu0 0
    %5047 = vperm.xlu0 %5046, %v5000
    %v5048 = vpop.permute.xlu0 %5047
    %v5049 = vlaneseq
    %v5050 = vshrl.u32 %v5049, 7
    %v5051 = vsub.s32 %v143, %v5050
    %v5052 = vrot.slane %v5003, %v5051
    %v5053 = vlaneseq
    %v5054 = vshrl.u32 %v5053, 7
    %v5055 = vsub.s32 %v143, %v5054
    %v5056 = vrot.slane %v5006, %v5055
    %v5057 = vlaneseq
    %v5058 = vshrl.u32 %v5057, 7
    %v5059 = vsub.s32 %v143, %v5058
    %v5060 = vrot.slane %v5009, %v5059
    %v5061 = vlaneseq
    %v5062 = vshrl.u32 %v5061, 7
    %v5063 = vsub.s32 %v143, %v5062
    %v5064 = vrot.slane %v5012, %v5063
    %v5065 = vlaneseq
    %v5066 = vshrl.u32 %v5065, 7
    %v5067 = vsub.s32 %v143, %v5066
    %v5068 = vrot.slane %v5015, %v5067
    %v5069 = vlaneseq
    %v5070 = vshrl.u32 %v5069, 7
    %v5071 = vsub.s32 %v143, %v5070
    %v5072 = vrot.slane %v5018, %v5071
    %v5073 = vlaneseq
    %v5074 = vshrl.u32 %v5073, 7
    %v5075 = vsub.s32 %v143, %v5074
    %v5076 = vrot.slane %v5021, %v5075
    %v5077 = vlaneseq
    %v5078 = vshrl.u32 %v5077, 7
    %v5079 = vsub.s32 %v143, %v5078
    %v5080 = vrot.slane %v5024, %v5079
    %v5081 = vlaneseq
    %v5082 = vshrl.u32 %v5081, 7
    %v5083 = vsub.s32 %v143, %v5082
    %v5084 = vrot.slane %v5027, %v5083
    %v5085 = vlaneseq
    %v5086 = vshrl.u32 %v5085, 7
    %v5087 = vsub.s32 %v143, %v5086
    %v5088 = vrot.slane %v5030, %v5087
    %v5089 = vlaneseq
    %v5090 = vshrl.u32 %v5089, 7
    %v5091 = vsub.s32 %v143, %v5090
    %v5092 = vrot.slane %v5033, %v5091
    %v5093 = vlaneseq
    %v5094 = vshrl.u32 %v5093, 7
    %v5095 = vsub.s32 %v143, %v5094
    %v5096 = vrot.slane %v5036, %v5095
    %v5097 = vlaneseq
    %v5098 = vshrl.u32 %v5097, 7
    %v5099 = vsub.s32 %v143, %v5098
    %v5100 = vrot.slane %v5039, %v5099
    %v5101 = vlaneseq
    %v5102 = vshrl.u32 %v5101, 7
    %v5103 = vsub.s32 %v143, %v5102
    %v5104 = vrot.slane %v5042, %v5103
    %v5105 = vlaneseq
    %v5106 = vshrl.u32 %v5105, 7
    %v5107 = vsub.s32 %v143, %v5106
    %v5108 = vrot.slane %v5045, %v5107
    %v5109 = vlaneseq
    %v5110 = vshrl.u32 %v5109, 7
    %v5111 = vsub.s32 %v143, %v5110
    %v5112 = vrot.slane %v5048, %v5111
    %v5113 = vsel %vm2297, %v5056, %v5052
    %v5114 = vsel %vm2531, %v5060, %v5113
    %v5115 = vsel %vm2533, %v5064, %v5114
    %v5116 = vsel %vm2535, %v5068, %v5115
    %v5117 = vsel %vm2537, %v5072, %v5116
    %v5118 = vsel %vm2539, %v5076, %v5117
    %v5119 = vsel %vm2541, %v5080, %v5118
    %v5120 = vsel %vm2297, %v5088, %v5084
    %v5121 = vsel %vm2531, %v5092, %v5120
    %v5122 = vsel %vm2533, %v5096, %v5121
    %v5123 = vsel %vm2535, %v5100, %v5122
    %v5124 = vsel %vm2537, %v5104, %v5123
    %v5125 = vsel %vm2539, %v5108, %v5124
    %v5126 = vsel %vm2541, %v5112, %v5125
    %v5127 = vsel %vm2202, %v5119, 2147483647
    %v5128 = vand.u32 %v5127, 65535
    %v5129 = vshra.s32 %v5127, 16
    %v5130 = vcvt.s32.f32 %v5128
    %v5131 = vcvt.s32.f32 %v5129
    %5132 = vmin.xlane.f32.xlu0 %v5131
    %v5133 = vpop.xlane.xlu0 %5132
    %vm5134 = vcmp.eq.f32.partialorder %v5131, %v5133
    %v5135 = vsel %vm5134, %v5130, inf
    %5136 = vmin.xlane.f32.xlu0 %v5135
    %v5137 = vpop.xlane.xlu0 %5136
    %v5138 = vcvt.f32.s32 %v5137
    %v5139 = vcvt.f32.s32 %v5133
    %v5140 = vshll.u32 %v5139, 16
    %v5141 = vadd.s32 %v5140, %v5138
    %v5142 = vsel %vm2202, %v5126, 2147483647
    %v5143 = vand.u32 %v5142, 65535
    %v5144 = vshra.s32 %v5142, 16
    %v5145 = vcvt.s32.f32 %v5143
    %v5146 = vcvt.s32.f32 %v5144
    %5147 = vmin.xlane.f32.xlu0 %v5146
    %v5148 = vpop.xlane.xlu0 %5147
    %vm5149 = vcmp.eq.f32.partialorder %v5146, %v5148
    %v5150 = vsel %vm5149, %v5145, inf
    %5151 = vmin.xlane.f32.xlu0 %v5150
    %v5152 = vpop.xlane.xlu0 %5151
    %v5153 = vcvt.f32.s32 %v5152
    %v5154 = vcvt.f32.s32 %v5148
    %v5155 = vshll.u32 %v5154, 16
    %v5156 = vadd.s32 %v5155, %v5153
    %v5157 = vlaneseq
    %v5158 = vshrl.u32 %v5157, 7
    %v5159 = vsub.s32 %v143, %v5158
    %v5160 = vrot.slane %v5141, %v5159
    %v5161 = vlaneseq
    %v5162 = vshrl.u32 %v5161, 7
    %v5163 = vsub.s32 %v143, %v5162
    %v5164 = vrot.slane %v5156, %v5163
    %v5165 = vsel %vm2297, %v5164, %v5160
    %s5166 = scalar_lea.vmem [#allocation5], 14
    %5167 = vst.msk [vmem:[%s5166] sm:$0x3] %vm2300, %v5165
    %v5168 = vlaneseq
    %v5169 = vshrl.u32 %v5168, 7
    %v5170 = vsub.s32 6, %v5169
    %v5171 = vrot.slane %v2199, %v5170
    %5173 = vbcast.lane.b32.xlu0 %v5171, 256
    %v5174 = vpop.permute.xlu0 %5173
    %v5175 = vlaneseq
    %v5176 = vshrl.u32 %v5175, 7
    %v5177 = vsub.s32 7, %v5176
    %v5178 = vrot.slane %v2199, %v5177
    %5180 = vbcast.lane.b32.xlu0 %v5178, 256
    %v5181 = vpop.permute.xlu0 %5180
    %v5184 = vadd.f32 %v4883, %v5174
    %v5185 = vadd.f32 %v4886, %v5181
    %v5186 = vld [vmem:[#allocation16] sm:$0x1]
    %v5188 = vlaneseq
    %v5189 = vshrl.u32 %v5188, 7
    %v5190 = vsub.s32 0, %v5189
    %v5191 = vrot.slane %v5186, %v5190
    %5193 = vbcast.lane.b32.xlu0 %v5191, 256
    %v5194 = vpop.permute.xlu0 %5193
    %v5196 = vadd.f32 %v5184, %v5194
    %v5197 = vadd.f32 %v5185, %v5194
    %5200 = vset.pattern.permute.xlu0 0
    %5201 = vperm.xlu0 %5200, %v5196
    %v5202 = vpop.permute.xlu0 %5201
    %5203 = vset.pattern.permute.xlu0 0
    %5204 = vperm.xlu0 %5203, %v5197
    %v5205 = vpop.permute.xlu0 %5204
    %v5206 = vlaneseq
    %v5207 = vshrl.u32 %v5206, 7
    %v5208 = vsub.s32 %v143, %v5207
    %v5209 = vrot.slane %v5202, %v5208
    %v5210 = vlaneseq
    %v5211 = vshrl.u32 %v5210, 7
    %v5212 = vsub.s32 %v143, %v5211
    %v5213 = vrot.slane %v5205, %v5212
    %v5214 = vsel %vm2297, %v5213, %v5209
    %v5216 = vsel %vm2300, %v5214, -inf
    %5217 = vmax.xlane.f32.xlu0 %v5216
    %v5218 = vpop.xlane.xlu0 %5217
    %v5220 = vlaneseq
    %v5221 = vshrl.u32 %v5220, 7
    %v5222 = vsub.s32 0, %v5221
    %v5223 = vrot.slane %v5218, %v5222
    %v5224 = vlaneseq
    %v5225 = vshrl.u32 %v5224, 7
    %v5226 = vsub.s32 1, %v5225
    %v5227 = vrot.slane %v5218, %v5226
    %vm5230 = vcmp.eq.f32.partialorder %v5196, %v5223
    %vm5231 = vcmp.eq.f32.partialorder %v5197, %v5227
    %v5232 = vsel %vm5230, %v2658, 8
    %v5233 = vsel %vm5231, %v2658, 8
    %5234 = vset.pattern.permute.xlu0 0
    %5235 = vperm.xlu0 %5234, %v5232
    %v5236 = vpop.permute.xlu0 %5235
    %5237 = vset.pattern.permute.xlu0 0
    %5238 = vperm.xlu0 %5237, %v5233
    %v5239 = vpop.permute.xlu0 %5238
    %v5240 = vlaneseq
    %v5241 = vshrl.u32 %v5240, 7
    %v5242 = vsub.s32 %v143, %v5241
    %v5243 = vrot.slane %v5236, %v5242
    %v5244 = vlaneseq
    %v5245 = vshrl.u32 %v5244, 7
    %v5246 = vsub.s32 %v143, %v5245
    %v5247 = vrot.slane %v5239, %v5246
    %v5248 = vsel %vm2297, %v5247, %v5243
    %v5249 = vsel %vm2300, %v5248, 2147483647
    %v5250 = vand.u32 %v5249, 65535
    %v5251 = vshra.s32 %v5249, 16
    %v5252 = vcvt.s32.f32 %v5250
    %v5253 = vcvt.s32.f32 %v5251
    %5254 = vmin.xlane.f32.xlu0 %v5253
    %v5255 = vpop.xlane.xlu0 %5254
    %vm5256 = vcmp.eq.f32.partialorder %v5253, %v5255
    %v5257 = vsel %vm5256, %v5252, inf
    %5258 = vmin.xlane.f32.xlu0 %v5257
    %v5259 = vpop.xlane.xlu0 %5258
    %v5260 = vcvt.f32.s32 %v5259
    %v5261 = vcvt.f32.s32 %v5255
    %v5262 = vshll.u32 %v5261, 16
    %v5263 = vadd.s32 %v5262, %v5260
    %s5264 = scalar_lea.vmem %s13, 14
    %vm5265 = vcmask 1024
    %5266 = vst.msk [vmem:[%s5264] sm:$0x3] %vm5265, %v5263
    %v5267 = vld [vmem:[%s5166] sm:$0x3]
    %vm5268 = vcmp.eq.s32.totalorder %v143, %v5263
    %v5269 = vsel %vm5268, 1, 0
    %v5270 = vmul.u32 %v5267, %v5269
    %v5271 = vsel %vm2300, %v5270, 0
    %v5272 = vand.u32 %v5271, 65535
    %v5273 = vshrl.u32 %v5271, 16
    %v5274 = vcvt.s32.f32 %v5272
    %v5275 = vcvt.s32.f32 %v5273
    %5276 = vadd.xlane.f32.xlu0 %v5274
    %v5277 = vpop.xlane.xlu0 %5276
    %5278 = vadd.xlane.f32.xlu0 %v5275
    %v5279 = vpop.xlane.xlu0 %5278
    %v5280 = vcvt.f32.s32 %v5277
    %v5281 = vcvt.f32.s32 %v5279
    %v5282 = vshll.u32 %v5281, 16
    %v5283 = vadd.s32 %v5282, %v5280
    %s5284 = scalar_lea.vmem %s13, 12
    %5285 = vst.msk [vmem:[%s5284] sm:$0x3] %vm5265, %v5283
    %v5286 = vld [vmem:[%s4701] sm:$0x3]
    %vm5287 = vcmp.eq.s32.totalorder %v143, %v5283
    %v5288 = vsel %vm5287, 1, 0
    %v5289 = vmul.u32 %v5286, %v5288
    %v5290 = vsel %vm2300, %v5289, 0
    %v5291 = vand.u32 %v5290, 65535
    %v5292 = vshrl.u32 %v5290, 16
    %v5293 = vcvt.s32.f32 %v5291
    %v5294 = vcvt.s32.f32 %v5292
    %5295 = vadd.xlane.f32.xlu0 %v5293
    %v5296 = vpop.xlane.xlu0 %5295
    %5297 = vadd.xlane.f32.xlu0 %v5294
    %v5298 = vpop.xlane.xlu0 %5297
    %v5299 = vcvt.f32.s32 %v5296
    %v5300 = vcvt.f32.s32 %v5298
    %v5301 = vshll.u32 %v5300, 16
    %v5302 = vadd.s32 %v5301, %v5299
    %s5303 = scalar_lea.vmem %s13, 10
    %5304 = vst.msk [vmem:[%s5303] sm:$0x3] %vm5265, %v5302
    %v5305 = vld [vmem:[%s4236] sm:$0x3]
    %vm5306 = vcmp.eq.s32.totalorder %v143, %v5302
    %v5307 = vsel %vm5306, 1, 0
    %v5308 = vmul.u32 %v5305, %v5307
    %v5309 = vsel %vm2300, %v5308, 0
    %v5310 = vand.u32 %v5309, 65535
    %v5311 = vshrl.u32 %v5309, 16
    %v5312 = vcvt.s32.f32 %v5310
    %v5313 = vcvt.s32.f32 %v5311
    %5314 = vadd.xlane.f32.xlu0 %v5312
    %v5315 = vpop.xlane.xlu0 %5314
    %5316 = vadd.xlane.f32.xlu0 %v5313
    %v5317 = vpop.xlane.xlu0 %5316
    %v5318 = vcvt.f32.s32 %v5315
    %v5319 = vcvt.f32.s32 %v5317
    %v5320 = vshll.u32 %v5319, 16
    %v5321 = vadd.s32 %v5320, %v5318
    %s5322 = scalar_lea.vmem %s13, 8
    %5323 = vst.msk [vmem:[%s5322] sm:$0x3] %vm5265, %v5321
    %v5324 = vld [vmem:[%s3770] sm:$0x3]
    %vm5325 = vcmp.eq.s32.totalorder %v143, %v5321
    %v5326 = vsel %vm5325, 1, 0
    %v5327 = vmul.u32 %v5324, %v5326
    %v5328 = vsel %vm2300, %v5327, 0
    %v5329 = vand.u32 %v5328, 65535
    %v5330 = vshrl.u32 %v5328, 16
    %v5331 = vcvt.s32.f32 %v5329
    %v5332 = vcvt.s32.f32 %v5330
    %5333 = vadd.xlane.f32.xlu0 %v5331
    %v5334 = vpop.xlane.xlu0 %5333
    %5335 = vadd.xlane.f32.xlu0 %v5332
    %v5336 = vpop.xlane.xlu0 %5335
    %v5337 = vcvt.f32.s32 %v5334
    %v5338 = vcvt.f32.s32 %v5336
    %v5339 = vshll.u32 %v5338, 16
    %v5340 = vadd.s32 %v5339, %v5337
    %s5341 = scalar_lea.vmem %s13, 6
    %5342 = vst.msk [vmem:[%s5341] sm:$0x3] %vm5265, %v5340
    %v5343 = vld [vmem:[%s3305] sm:$0x3]
    %vm5344 = vcmp.eq.s32.totalorder %v143, %v5340
    %v5345 = vsel %vm5344, 1, 0
    %v5346 = vmul.u32 %v5343, %v5345
    %v5347 = vsel %vm2300, %v5346, 0
    %v5348 = vand.u32 %v5347, 65535
    %v5349 = vshrl.u32 %v5347, 16
    %v5350 = vcvt.s32.f32 %v5348
    %v5351 = vcvt.s32.f32 %v5349
    %5352 = vadd.xlane.f32.xlu0 %v5350
    %v5353 = vpop.xlane.xlu0 %5352
    %5354 = vadd.xlane.f32.xlu0 %v5351
    %v5355 = vpop.xlane.xlu0 %5354
    %v5356 = vcvt.f32.s32 %v5353
    %v5357 = vcvt.f32.s32 %v5355
    %v5358 = vshll.u32 %v5357, 16
    %v5359 = vadd.s32 %v5358, %v5356
    %s5360 = scalar_lea.vmem %s13, 4
    %5361 = vst.msk [vmem:[%s5360] sm:$0x3] %vm5265, %v5359
    %v5362 = vld [vmem:[%s2840] sm:$0x3]
    %vm5363 = vcmp.eq.s32.totalorder %v143, %v5359
    %v5364 = vsel %vm5363, 1, 0
    %v5365 = vmul.u32 %v5362, %v5364
    %v5366 = vsel %vm2300, %v5365, 0
    %v5367 = vand.u32 %v5366, 65535
    %v5368 = vshrl.u32 %v5366, 16
    %v5369 = vcvt.s32.f32 %v5367
    %v5370 = vcvt.s32.f32 %v5368
    %5371 = vadd.xlane.f32.xlu0 %v5369
    %v5372 = vpop.xlane.xlu0 %5371
    %5373 = vadd.xlane.f32.xlu0 %v5370
    %v5374 = vpop.xlane.xlu0 %5373
    %v5375 = vcvt.f32.s32 %v5372
    %v5376 = vcvt.f32.s32 %v5374
    %v5377 = vshll.u32 %v5376, 16
    %v5378 = vadd.s32 %v5377, %v5375
    %s5379 = scalar_lea.vmem %s13, 2
    %5380 = vst.msk [vmem:[%s5379] sm:$0x3] %vm5265, %v5378
    %v5381 = vld [vmem:[%s2299] sm:$0x3]
    %vm5382 = vcmp.eq.s32.totalorder %v143, %v5378
    %v5383 = vsel %vm5382, 1, 0
    %v5384 = vmul.u32 %v5381, %v5383
    %v5385 = vsel %vm2300, %v5384, 0
    %v5386 = vand.u32 %v5385, 65535
    %v5387 = vshrl.u32 %v5385, 16
    %v5388 = vcvt.s32.f32 %v5386
    %v5389 = vcvt.s32.f32 %v5387
    %5390 = vadd.xlane.f32.xlu0 %v5388
    %v5391 = vpop.xlane.xlu0 %5390
    %5392 = vadd.xlane.f32.xlu0 %v5389
    %v5393 = vpop.xlane.xlu0 %5392
    %v5394 = vcvt.f32.s32 %v5391
    %v5395 = vcvt.f32.s32 %v5393
    %v5396 = vshll.u32 %v5395, 16
    %v5397 = vadd.s32 %v5396, %v5394
    %5398 = vst.msk [vmem:[%s13] sm:$0x3] %vm5265, %v5397
    // Predicated region
    $region82: #{ner_bilstm_crf_forward.1} parent=1 // pred_check
      _
    $region83: #{ner_bilstm_crf_forward.1} parent=1 // pred_check_branch
      %5400 = sbr.rel (0) target = $region85
    $region84: #{ner_bilstm_crf_forward.1} parent=1 // pred_region
      _
    $region85: #{ner_bilstm_crf_forward.1} parent=1 // pred_fallthru
      _
    // Predicated region
    $region86: #{ner_bilstm_crf_forward.1} parent=1 // pred_check
      _
    $region87: #{ner_bilstm_crf_forward.1} parent=1 // pred_check_branch
      %5402 = sbr.rel (0) target = $region89
    $region88: #{ner_bilstm_crf_forward.1} parent=1 // pred_region
      _
    $region89: #{ner_bilstm_crf_forward.1} parent=1 // pred_fallthru
      _
    // Predicated region
    $region90: #{ner_bilstm_crf_forward.1} parent=1 // pred_check
      _
    $region91: #{ner_bilstm_crf_forward.1} parent=1 // pred_check_branch
      %5404 = sbr.rel (0) target = $region93
    $region92: #{ner_bilstm_crf_forward.1} parent=1 // pred_region
      _
    $region93: #{ner_bilstm_crf_forward.1} parent=1 // pred_fallthru
      _
    // Predicated region
    $region94: #{ner_bilstm_crf_forward.1} parent=1 // pred_check
      _
    $region95: #{ner_bilstm_crf_forward.1} parent=1 // pred_check_branch
      %5406 = sbr.rel (0) target = $region97
    $region96: #{ner_bilstm_crf_forward.1} parent=1 // pred_region
      _
    $region97: #{ner_bilstm_crf_forward.1} parent=1 // pred_fallthru
      _
    %5407 = vsyncpa [#allocation7], 1
    %5408 = vsyncpa [#allocation9], 1
    %5409 = vsyncpa [#allocation12], 1
    %5410 = vsyncpa [#allocation15], 1
    %5411 = vsyncpa [#allocation18], 1

</llo_original>
